<compile_context>
chip_gen: v7x
topology: tpu7x:2x2x1
jax: 0.10.0
libtpu: 0.0.40
codegen_flags: <defaults>
</compile_context>

<pallas_src>
import jax
import jax.numpy as jnp
from jax import lax
from jax.experimental import pallas as pl
from jax.experimental.pallas import tpu as pltpu
import numpy as np


def _sdrb_kernel(xg_ref, mask_ref, w1c_ref, w2c_ref, cols_ref, out_ref, scr_ref):
    N, C, Lg = xg_ref.shape
    L = out_ref.shape[2]
    G = (Lg - L) // 2            # guard width = 2*Wp + 2 (max |tap shift|)
    Wp = (G - 2) // 2
    Hp = L // Wp
    H, W = Hp - 4, Wp - 4
    inv_count = 1.0 / float(N * H * W)
    f32 = jnp.float32

    mask = mask_ref[...]                       # (1, 1, L): 1 on interior pixels, 0 on halo

    # Zero only the guard lanes of the scratch, once.  The interior halo stays
    # zero because every slab written below is pre-masked (no full re-zero per DSC).
    scr_ref[:, :, :G] = jnp.zeros((N, C, G), f32)
    scr_ref[:, :, G + L:] = jnp.zeros((N, C, G), f32)

    x_slab = xg_ref[:, :, G:G + L]             # (N, C, L) original input (zero halo)

    # flat-lane deltas of the 3x3 taps (row-major i, j)
    taps1 = [(i - 1) * Wp + (j - 1) for i in range(3) for j in range(3)]          # dil=1
    taps2 = [2 * (i - 1) * Wp + 2 * (j - 1) for i in range(3) for j in range(3)]  # dil=2

    def conv1(src_ref, dsc):
        # Conv3d(C, 1, [3,3,1], 'same'): 9 taps x C channels of VPU scalar-weight FMAs.
        y = jnp.zeros((N, 1, L), f32)
        for t, d in enumerate(taps1):
            for c in range(C):
                tap = src_ref[:, c:c + 1, G + d:G + d + L]        # (N, 1, L)
                y = y + tap * w1c_ref[dsc, t, c:c + 1]            # (1, 1) scalar weight
        return y                                                   # (N, 1, L)

    def conv2(dsc):
        # Conv2d(C, C, 3, dilation=2, 'same'): broadcast each input-channel tap over the
        # C output-channel sublanes and FMA with a (C, 1) weight column.
        acc = jnp.zeros((N, C, L), f32)
        for t, d in enumerate(taps2):
            for ci in range(C):
                tap = scr_ref[:, ci:ci + 1, G + d:G + d + L]      # (N, 1, L)
                acc = acc + tap * w2c_ref[dsc, t * C + ci]        # (C, 1) col over c_out
        return acc                                                 # (N, C, L)

    def batch_norm(v, gcol, bcol):
        # training-mode BatchNorm2d, fused one-pass stats (sum & sum-of-squares)
        vm = v * mask
        s1 = jnp.sum(vm, axis=(0, 2), keepdims=True)               # (1, C, 1)
        s2 = jnp.sum(vm * vm, axis=(0, 2), keepdims=True)          # (1, C, 1)
        mean = s1 * inv_count
        var = s2 * inv_count - mean * mean
        return (v - mean) * lax.rsqrt(var + 1e-5) * gcol + bcol

    # ---------------- DSC1 ----------------
    y1 = conv1(xg_ref, 0)
    o1 = (x_slab + y1 + cols_ref[0]) * mask                        # + b1a, zero halo
    scr_ref[:, :, G:G + L] = o1
    v1 = conv2(0) + cols_ref[1]                                    # + b2a
    r1 = jnp.maximum(batch_norm(v1, cols_ref[4], cols_ref[5]), 0.0) * mask
    scr_ref[:, :, G:G + L] = r1

    # ---------------- DSC2 ----------------
    y2 = conv1(scr_ref, 1)
    o2 = (scr_ref[:, :, G:G + L] + y2 + cols_ref[2]) * mask        # + b1b, zero halo
    scr_ref[:, :, G:G + L] = o2
    v2 = conv2(1) + cols_ref[3]                                    # + b2b
    out = jnp.maximum(batch_norm(v2, cols_ref[6], cols_ref[7]) + x_slab, 0.0)
    out_ref[...] = out
    # TODO(synk): BatchNorm running-stat updates (training-mode side effect) are
    # not materialized; they do not affect the forward output.


def sdrb_forward(x_nchw, params):
    x = x_nchw.astype(jnp.float32)
    N, C, H, W = x.shape
    Hp, Wp = H + 4, W + 4
    L = Hp * Wp
    G = 2 * Wp + 2
    Lg = L + 2 * G

    # lane-dense slab: zero-pad H/W by 2, flatten spatial into lanes, add guards
    xp = jnp.pad(x, ((0, 0), (0, 0), (2, 2), (2, 2))).reshape(N, C, L)
    xg = jnp.pad(xp, ((0, 0), (0, 0), (G, G)))

    mask = (jnp.zeros((Hp, Wp), jnp.float32)
            .at[2:2 + H, 2:2 + W].set(1.0)
            .reshape(1, 1, L))

    def w1_cols(w):   # Conv3d weight (1, C, 3, 3[,1]) -> (9, C, 1): [tap, in-ch]
        w = w.reshape(1, C, 3, 3)
        return jnp.transpose(w[0], (1, 2, 0)).reshape(9, C, 1)

    def w2_cols(w):   # Conv2d weight (Cout, Cin, 3, 3) -> (9*Cin, Cout, 1)
        return jnp.transpose(w, (2, 3, 1, 0)).reshape(9 * C, C, 1)

    col = lambda v: v.reshape(C, 1).astype(jnp.float32)
    w1c = jnp.stack([w1_cols(params['w1a']), w1_cols(params['w1b'])])    # (2, 9, C, 1)
    w2c = jnp.stack([w2_cols(params['w2a']), w2_cols(params['w2b'])])    # (2, 36, C, 1)
    cols = jnp.stack([
        jnp.full((C, 1), params['b1a'][0], jnp.float32),   # 0: b1a (broadcast to all ch)
        col(params['b2a']),                                # 1: b2a
        jnp.full((C, 1), params['b1b'][0], jnp.float32),   # 2: b1b
        col(params['b2b']),                                # 3: b2b
        col(params['g1']), col(params['be1']),             # 4,5: BN1 gamma/beta
        col(params['g2']), col(params['be2']),             # 6,7: BN2 gamma/beta
    ])                                                     # (8, C, 1)

    vspec = pl.BlockSpec(memory_space=pltpu.MemorySpace.VMEM)
    out_flat = pl.pallas_call(
        _sdrb_kernel,
        out_shape=jax.ShapeDtypeStruct((N, C, L), jnp.float32),
        in_specs=[vspec, vspec, vspec, vspec, vspec],
        out_specs=vspec,
        scratch_shapes=[pltpu.VMEM((N, C, Lg), jnp.float32)],
        compiler_params=pltpu.CompilerParams(vmem_limit_bytes=16 * 1024 * 1024),
    )(xg, mask, w1c, w2c, cols)
    # TODO(synk): for large N*H*W this single-call design should become a tiled
    # two-pass pipeline (conv + partial BN sums, then normalize + residual) with a
    # grid over batch/rows and dimension_semantics=("parallel", ...) for megacore.

    out = out_flat.reshape(N, C, Hp, Wp)[:, :, 2:2 + H, 2:2 + W]   # drop pad, back to NCHW
    return out


# ----------------------- pure-JAX reference (NCHW) -----------------------
def _dsc_ref(x, w1, b1, w2, b2):
    dn = ('NCHW', 'OIHW', 'NCHW')
    y1 = lax.conv_general_dilated(x, w1.reshape(1, x.shape[1], 3, 3), (1, 1),
                                  ((1, 1), (1, 1)), dimension_numbers=dn,
                                  precision=lax.Precision.HIGHEST) + b1.reshape(1, 1, 1, 1)
    o = x + y1
    y2 = lax.conv_general_dilated(o, w2, (1, 1), ((2, 2), (2, 2)),
                                  rhs_dilation=(2, 2), dimension_numbers=dn,
                                  precision=lax.Precision.HIGHEST) + b2.reshape(1, -1, 1, 1)
    return y2


def _bn_ref(x, g, b):
    mean = x.mean(axis=(0, 2, 3), keepdims=True)
    var = ((x - mean) ** 2).mean(axis=(0, 2, 3), keepdims=True)
    return (x - mean) / jnp.sqrt(var + 1e-5) * g.reshape(1, -1, 1, 1) + b.reshape(1, -1, 1, 1)


def sdrb_ref(x, p):
    r1 = jnp.maximum(_bn_ref(_dsc_ref(x, p['w1a'], p['b1a'], p['w2a'], p['b2a']),
                             p['g1'], p['be1']), 0.0)
    r2 = _bn_ref(_dsc_ref(r1, p['w1b'], p['b1b'], p['w2b'], p['b2b']),
                 p['g2'], p['be2'])
    return jnp.maximum(r2 + x, 0.0)


if __name__ == "__main__":
    key = jax.random.PRNGKey(0)
    N, C, H, W = 2, 4, 16, 16
    kx, kp = jax.random.split(key)
    x = jax.random.normal(kx, (N, C, H, W), jnp.float32)

    ks = jax.random.split(kp, 12)

    def rnd(k, shape, scale=0.1):
        return scale * jax.random.normal(k, shape, jnp.float32)

    params = {
        # DSC1: conv3d weight (1,C,3,3,1) stored with the trivial last dim squeezed
        'w1a': rnd(ks[0], (1, C, 3, 3)), 'b1a': rnd(ks[1], (1,)),
        'w2a': rnd(ks[2], (C, C, 3, 3)), 'b2a': rnd(ks[3], (C,)),
        # DSC2
        'w1b': rnd(ks[4], (1, C, 3, 3)), 'b1b': rnd(ks[5], (1,)),
        'w2b': rnd(ks[6], (C, C, 3, 3)), 'b2b': rnd(ks[7], (C,)),
        # BatchNorm affine params
        'g1': 1.0 + rnd(ks[8], (C,)), 'be1': rnd(ks[9], (C,)),
        'g2': 1.0 + rnd(ks[10], (C,)), 'be2': rnd(ks[11], (C,)),
    }

    out = jax.block_until_ready(jax.jit(sdrb_forward)(x, params))
    ref = jax.block_until_ready(sdrb_ref(x, params))
    # pure f32 VPU math in the kernel -> tolerance can be tight (was 5e-2 with MXU bf16)
    np.testing.assert_allclose(np.asarray(out), np.asarray(ref), rtol=1e-3, atol=1e-3)
    print("KERNEL_OK")
</pallas_src>

<mosaic_0001>
module attributes {stable_mosaic.version = 11 : i64} {
  func.func @_sdrb_kernel(%arg0: memref<2x4x484xf32, #tpu.memory_space<vmem>>, %arg1: memref<1x1x400xf32, #tpu.memory_space<vmem>>, %arg2: memref<2x9x4x1xf32, #tpu.memory_space<vmem>>, %arg3: memref<2x36x4x1xf32, #tpu.memory_space<vmem>>, %arg4: memref<8x4x1xf32, #tpu.memory_space<vmem>>, %arg5: memref<2x4x400xf32, #tpu.memory_space<vmem>>, %arg6: memref<2x4x484xf32, #tpu.memory_space<vmem>>) attributes {dimension_semantics = [], scalar_prefetch = 0 : i64, scratch_operands = 1 : i64, tpu.core_type = #tpu.core_type<tc>} {
    %c0 = arith.constant 0 : index
    %c0_0 = arith.constant 0 : index
    %c0_1 = arith.constant 0 : index
    %0 = vector.load %arg1[%c0, %c0_0, %c0_1] : memref<1x1x400xf32, #tpu.memory_space<vmem>>, vector<1x1x400xf32>
    %cst = arith.constant 0.000000e+00 : f32
    %1 = vector.broadcast %cst : f32 to vector<2x4x42xf32>
    %c0_2 = arith.constant 0 : index
    %c0_3 = arith.constant 0 : index
    %c0_4 = arith.constant 0 : index
    %2 = vector.load %arg6[%c0_2, %c0_3, %c0_4] : memref<2x4x484xf32, #tpu.memory_space<vmem>>, vector<2x4x42xf32>
    tpu.vector_store %arg6[%c0_2, %c0_3, %c0_4], %1 {strides = array<i32>} : memref<2x4x484xf32, #tpu.memory_space<vmem>>, vector<2x4x42xf32>,
    %cst_5 = arith.constant 0.000000e+00 : f32
    %3 = vector.broadcast %cst_5 : f32 to vector<2x4x42xf32>
    %c0_6 = arith.constant 0 : index
    %c0_7 = arith.constant 0 : index
    %c442 = arith.constant 442 : index
    %4 = vector.load %arg6[%c0_6, %c0_7, %c442] : memref<2x4x484xf32, #tpu.memory_space<vmem>>, vector<2x4x42xf32>
    tpu.vector_store %arg6[%c0_6, %c0_7, %c442], %3 {strides = array<i32>} : memref<2x4x484xf32, #tpu.memory_space<vmem>>, vector<2x4x42xf32>,
    %c0_8 = arith.constant 0 : index
    %c0_9 = arith.constant 0 : index
    %c42 = arith.constant 42 : index
    %5 = vector.load %arg0[%c0_8, %c0_9, %c42] : memref<2x4x484xf32, #tpu.memory_space<vmem>>, vector<2x4x400xf32>
    %cst_10 = arith.constant 0.000000e+00 : f32
    %6 = vector.broadcast %cst_10 : f32 to vector<2x1x400xf32>
    %c0_11 = arith.constant 0 : index
    %c0_12 = arith.constant 0 : index
    %c21 = arith.constant 21 : index
    %7 = vector.load %arg0[%c0_11, %c0_12, %c21] : memref<2x4x484xf32, #tpu.memory_space<vmem>>, vector<2x1x400xf32>
    %c0_13 = arith.constant 0 : index
    %c0_14 = arith.constant 0 : index
    %c0_15 = arith.constant 0 : index
    %c0_16 = arith.constant 0 : index
    %8 = vector.load %arg2[%c0_13, %c0_14, %c0_15, %c0_16] : memref<2x9x4x1xf32, #tpu.memory_space<vmem>>, vector<1x1x1x1xf32>
    %9 = vector.shape_cast %8 : vector<1x1x1x1xf32> to vector<1x1xf32>
    %10 = vector.shape_cast %9 : vector<1x1xf32> to vector<1x1x1xf32>
    %11 = vector.broadcast %10 : vector<1x1x1xf32> to vector<2x1x400xf32>
    %12 = arith.mulf %7, %11 : vector<2x1x400xf32>
    %13 = arith.addf %6, %12 : vector<2x1x400xf32>
    %c0_17 = arith.constant 0 : index
    %c1 = arith.constant 1 : index
    %c21_18 = arith.constant 21 : index
    %14 = vector.load %arg0[%c0_17, %c1, %c21_18] : memref<2x4x484xf32, #tpu.memory_space<vmem>>, vector<2x1x400xf32>
    %c0_19 = arith.constant 0 : index
    %c0_20 = arith.constant 0 : index
    %c1_21 = arith.constant 1 : index
    %c0_22 = arith.constant 0 : index
    %15 = vector.load %arg2[%c0_19, %c0_20, %c1_21, %c0_22] : memref<2x9x4x1xf32, #tpu.memory_space<vmem>>, vector<1x1x1x1xf32>
    %16 = vector.shape_cast %15 : vector<1x1x1x1xf32> to vector<1x1xf32>
    %17 = vector.shape_cast %16 : vector<1x1xf32> to vector<1x1x1xf32>
    %18 = vector.broadcast %17 : vector<1x1x1xf32> to vector<2x1x400xf32>
    %19 = arith.mulf %14, %18 : vector<2x1x400xf32>
    %20 = arith.addf %13, %19 : vector<2x1x400xf32>
    %c0_23 = arith.constant 0 : index
    %c2 = arith.constant 2 : index
    %c21_24 = arith.constant 21 : index
    %21 = vector.load %arg0[%c0_23, %c2, %c21_24] : memref<2x4x484xf32, #tpu.memory_space<vmem>>, vector<2x1x400xf32>
    %c0_25 = arith.constant 0 : index
    %c0_26 = arith.constant 0 : index
    %c2_27 = arith.constant 2 : index
    %c0_28 = arith.constant 0 : index
    %22 = vector.load %arg2[%c0_25, %c0_26, %c2_27, %c0_28] : memref<2x9x4x1xf32, #tpu.memory_space<vmem>>, vector<1x1x1x1xf32>
    %23 = vector.shape_cast %22 : vector<1x1x1x1xf32> to vector<1x1xf32>
    %24 = vector.shape_cast %23 : vector<1x1xf32> to vector<1x1x1xf32>
    %25 = vector.broadcast %24 : vector<1x1x1xf32> to vector<2x1x400xf32>
    %26 = arith.mulf %21, %25 : vector<2x1x400xf32>
    %27 = arith.addf %20, %26 : vector<2x1x400xf32>
    %c0_29 = arith.constant 0 : index
    %c3 = arith.constant 3 : index
    %c21_30 = arith.constant 21 : index
    %28 = vector.load %arg0[%c0_29, %c3, %c21_30] : memref<2x4x484xf32, #tpu.memory_space<vmem>>, vector<2x1x400xf32>
    %c0_31 = arith.constant 0 : index
    %c0_32 = arith.constant 0 : index
    %c3_33 = arith.constant 3 : index
    %c0_34 = arith.constant 0 : index
    %29 = vector.load %arg2[%c0_31, %c0_32, %c3_33, %c0_34] : memref<2x9x4x1xf32, #tpu.memory_space<vmem>>, vector<1x1x1x1xf32>
    %30 = vector.shape_cast %29 : vector<1x1x1x1xf32> to vector<1x1xf32>
    %31 = vector.shape_cast %30 : vector<1x1xf32> to vector<1x1x1xf32>
    %32 = vector.broadcast %31 : vector<1x1x1xf32> to vector<2x1x400xf32>
    %33 = arith.mulf %28, %32 : vector<2x1x400xf32>
    %34 = arith.addf %27, %33 : vector<2x1x400xf32>
    %c0_35 = arith.constant 0 : index
    %c0_36 = arith.constant 0 : index
    %c22 = arith.constant 22 : index
    %35 = vector.load %arg0[%c0_35, %c0_36, %c22] : memref<2x4x484xf32, #tpu.memory_space<vmem>>, vector<2x1x400xf32>
    %c0_37 = arith.constant 0 : index
    %c1_38 = arith.constant 1 : index
    %c0_39 = arith.constant 0 : index
    %c0_40 = arith.constant 0 : index
    %36 = vector.load %arg2[%c0_37, %c1_38, %c0_39, %c0_40] : memref<2x9x4x1xf32, #tpu.memory_space<vmem>>, vector<1x1x1x1xf32>
    %37 = vector.shape_cast %36 : vector<1x1x1x1xf32> to vector<1x1xf32>
    %38 = vector.shape_cast %37 : vector<1x1xf32> to vector<1x1x1xf32>
    %39 = vector.broadcast %38 : vector<1x1x1xf32> to vector<2x1x400xf32>
    %40 = arith.mulf %35, %39 : vector<2x1x400xf32>
    %41 = arith.addf %34, %40 : vector<2x1x400xf32>
    %c0_41 = arith.constant 0 : index
    %c1_42 = arith.constant 1 : index
    %c22_43 = arith.constant 22 : index
    %42 = vector.load %arg0[%c0_41, %c1_42, %c22_43] : memref<2x4x484xf32, #tpu.memory_space<vmem>>, vector<2x1x400xf32>
    %c0_44 = arith.constant 0 : index
    %c1_45 = arith.constant 1 : index
    %c1_46 = arith.constant 1 : index
    %c0_47 = arith.constant 0 : index
    %43 = vector.load %arg2[%c0_44, %c1_45, %c1_46, %c0_47] : memref<2x9x4x1xf32, #tpu.memory_space<vmem>>, vector<1x1x1x1xf32>
    %44 = vector.shape_cast %43 : vector<1x1x1x1xf32> to vector<1x1xf32>
    %45 = vector.shape_cast %44 : vector<1x1xf32> to vector<1x1x1xf32>
    %46 = vector.broadcast %45 : vector<1x1x1xf32> to vector<2x1x400xf32>
    %47 = arith.mulf %42, %46 : vector<2x1x400xf32>
    %48 = arith.addf %41, %47 : vector<2x1x400xf32>
    %c0_48 = arith.constant 0 : index
    %c2_49 = arith.constant 2 : index
    %c22_50 = arith.constant 22 : index
    %49 = vector.load %arg0[%c0_48, %c2_49, %c22_50] : memref<2x4x484xf32, #tpu.memory_space<vmem>>, vector<2x1x400xf32>
    %c0_51 = arith.constant 0 : index
    %c1_52 = arith.constant 1 : index
    %c2_53 = arith.constant 2 : index
    %c0_54 = arith.constant 0 : index
    %50 = vector.load %arg2[%c0_51, %c1_52, %c2_53, %c0_54] : memref<2x9x4x1xf32, #tpu.memory_space<vmem>>, vector<1x1x1x1xf32>
    %51 = vector.shape_cast %50 : vector<1x1x1x1xf32> to vector<1x1xf32>
    %52 = vector.shape_cast %51 : vector<1x1xf32> to vector<1x1x1xf32>
    %53 = vector.broadcast %52 : vector<1x1x1xf32> to vector<2x1x400xf32>
    %54 = arith.mulf %49, %53 : vector<2x1x400xf32>
    %55 = arith.addf %48, %54 : vector<2x1x400xf32>
    %c0_55 = arith.constant 0 : index
    %c3_56 = arith.constant 3 : index
    %c22_57 = arith.constant 22 : index
    %56 = vector.load %arg0[%c0_55, %c3_56, %c22_57] : memref<2x4x484xf32, #tpu.memory_space<vmem>>, vector<2x1x400xf32>
    %c0_58 = arith.constant 0 : index
    %c1_59 = arith.constant 1 : index
    %c3_60 = arith.constant 3 : index
    %c0_61 = arith.constant 0 : index
    %57 = vector.load %arg2[%c0_58, %c1_59, %c3_60, %c0_61] : memref<2x9x4x1xf32, #tpu.memory_space<vmem>>, vector<1x1x1x1xf32>
    %58 = vector.shape_cast %57 : vector<1x1x1x1xf32> to vector<1x1xf32>
    %59 = vector.shape_cast %58 : vector<1x1xf32> to vector<1x1x1xf32>
    %60 = vector.broadcast %59 : vector<1x1x1xf32> to vector<2x1x400xf32>
    %61 = arith.mulf %56, %60 : vector<2x1x400xf32>
    %62 = arith.addf %55, %61 : vector<2x1x400xf32>
    %c0_62 = arith.constant 0 : index
    %c0_63 = arith.constant 0 : index
    %c23 = arith.constant 23 : index
    %63 = vector.load %arg0[%c0_62, %c0_63, %c23] : memref<2x4x484xf32, #tpu.memory_space<vmem>>, vector<2x1x400xf32>
    %c0_64 = arith.constant 0 : index
    %c2_65 = arith.constant 2 : index
    %c0_66 = arith.constant 0 : index
    %c0_67 = arith.constant 0 : index
    %64 = vector.load %arg2[%c0_64, %c2_65, %c0_66, %c0_67] : memref<2x9x4x1xf32, #tpu.memory_space<vmem>>, vector<1x1x1x1xf32>
    %65 = vector.shape_cast %64 : vector<1x1x1x1xf32> to vector<1x1xf32>
    %66 = vector.shape_cast %65 : vector<1x1xf32> to vector<1x1x1xf32>
    %67 = vector.broadcast %66 : vector<1x1x1xf32> to vector<2x1x400xf32>
    %68 = arith.mulf %63, %67 : vector<2x1x400xf32>
    %69 = arith.addf %62, %68 : vector<2x1x400xf32>
    %c0_68 = arith.constant 0 : index
    %c1_69 = arith.constant 1 : index
    %c23_70 = arith.constant 23 : index
    %70 = vector.load %arg0[%c0_68, %c1_69, %c23_70] : memref<2x4x484xf32, #tpu.memory_space<vmem>>, vector<2x1x400xf32>
    %c0_71 = arith.constant 0 : index
    %c2_72 = arith.constant 2 : index
    %c1_73 = arith.constant 1 : index
    %c0_74 = arith.constant 0 : index
    %71 = vector.load %arg2[%c0_71, %c2_72, %c1_73, %c0_74] : memref<2x9x4x1xf32, #tpu.memory_space<vmem>>, vector<1x1x1x1xf32>
    %72 = vector.shape_cast %71 : vector<1x1x1x1xf32> to vector<1x1xf32>
    %73 = vector.shape_cast %72 : vector<1x1xf32> to vector<1x1x1xf32>
    %74 = vector.broadcast %73 : vector<1x1x1xf32> to vector<2x1x400xf32>
    %75 = arith.mulf %70, %74 : vector<2x1x400xf32>
    %76 = arith.addf %69, %75 : vector<2x1x400xf32>
    %c0_75 = arith.constant 0 : index
    %c2_76 = arith.constant 2 : index
    %c23_77 = arith.constant 23 : index
    %77 = vector.load %arg0[%c0_75, %c2_76, %c23_77] : memref<2x4x484xf32, #tpu.memory_space<vmem>>, vector<2x1x400xf32>
    %c0_78 = arith.constant 0 : index
    %c2_79 = arith.constant 2 : index
    %c2_80 = arith.constant 2 : index
    %c0_81 = arith.constant 0 : index
    %78 = vector.load %arg2[%c0_78, %c2_79, %c2_80, %c0_81] : memref<2x9x4x1xf32, #tpu.memory_space<vmem>>, vector<1x1x1x1xf32>
    %79 = vector.shape_cast %78 : vector<1x1x1x1xf32> to vector<1x1xf32>
    %80 = vector.shape_cast %79 : vector<1x1xf32> to vector<1x1x1xf32>
    %81 = vector.broadcast %80 : vector<1x1x1xf32> to vector<2x1x400xf32>
    %82 = arith.mulf %77, %81 : vector<2x1x400xf32>
    %83 = arith.addf %76, %82 : vector<2x1x400xf32>
    %c0_82 = arith.constant 0 : index
    %c3_83 = arith.constant 3 : index
    %c23_84 = arith.constant 23 : index
    %84 = vector.load %arg0[%c0_82, %c3_83, %c23_84] : memref<2x4x484xf32, #tpu.memory_space<vmem>>, vector<2x1x400xf32>
    %c0_85 = arith.constant 0 : index
    %c2_86 = arith.constant 2 : index
    %c3_87 = arith.constant 3 : index
    %c0_88 = arith.constant 0 : index
    %85 = vector.load %arg2[%c0_85, %c2_86, %c3_87, %c0_88] : memref<2x9x4x1xf32, #tpu.memory_space<vmem>>, vector<1x1x1x1xf32>
    %86 = vector.shape_cast %85 : vector<1x1x1x1xf32> to vector<1x1xf32>
    %87 = vector.shape_cast %86 : vector<1x1xf32> to vector<1x1x1xf32>
    %88 = vector.broadcast %87 : vector<1x1x1xf32> to vector<2x1x400xf32>
    %89 = arith.mulf %84, %88 : vector<2x1x400xf32>
    %90 = arith.addf %83, %89 : vector<2x1x400xf32>
    %c0_89 = arith.constant 0 : index
    %c0_90 = arith.constant 0 : index
    %c41 = arith.constant 41 : index
    %91 = vector.load %arg0[%c0_89, %c0_90, %c41] : memref<2x4x484xf32, #tpu.memory_space<vmem>>, vector<2x1x400xf32>
    %c0_91 = arith.constant 0 : index
    %c3_92 = arith.constant 3 : index
    %c0_93 = arith.constant 0 : index
    %c0_94 = arith.constant 0 : index
    %92 = vector.load %arg2[%c0_91, %c3_92, %c0_93, %c0_94] : memref<2x9x4x1xf32, #tpu.memory_space<vmem>>, vector<1x1x1x1xf32>
    %93 = vector.shape_cast %92 : vector<1x1x1x1xf32> to vector<1x1xf32>
    %94 = vector.shape_cast %93 : vector<1x1xf32> to vector<1x1x1xf32>
    %95 = vector.broadcast %94 : vector<1x1x1xf32> to vector<2x1x400xf32>
    %96 = arith.mulf %91, %95 : vector<2x1x400xf32>
    %97 = arith.addf %90, %96 : vector<2x1x400xf32>
    %c0_95 = arith.constant 0 : index
    %c1_96 = arith.constant 1 : index
    %c41_97 = arith.constant 41 : index
    %98 = vector.load %arg0[%c0_95, %c1_96, %c41_97] : memref<2x4x484xf32, #tpu.memory_space<vmem>>, vector<2x1x400xf32>
    %c0_98 = arith.constant 0 : index
    %c3_99 = arith.constant 3 : index
    %c1_100 = arith.constant 1 : index
    %c0_101 = arith.constant 0 : index
    %99 = vector.load %arg2[%c0_98, %c3_99, %c1_100, %c0_101] : memref<2x9x4x1xf32, #tpu.memory_space<vmem>>, vector<1x1x1x1xf32>
    %100 = vector.shape_cast %99 : vector<1x1x1x1xf32> to vector<1x1xf32>
    %101 = vector.shape_cast %100 : vector<1x1xf32> to vector<1x1x1xf32>
    %102 = vector.broadcast %101 : vector<1x1x1xf32> to vector<2x1x400xf32>
    %103 = arith.mulf %98, %102 : vector<2x1x400xf32>
    %104 = arith.addf %97, %103 : vector<2x1x400xf32>
    %c0_102 = arith.constant 0 : index
    %c2_103 = arith.constant 2 : index
    %c41_104 = arith.constant 41 : index
    %105 = vector.load %arg0[%c0_102, %c2_103, %c41_104] : memref<2x4x484xf32, #tpu.memory_space<vmem>>, vector<2x1x400xf32>
    %c0_105 = arith.constant 0 : index
    %c3_106 = arith.constant 3 : index
    %c2_107 = arith.constant 2 : index
    %c0_108 = arith.constant 0 : index
    %106 = vector.load %arg2[%c0_105, %c3_106, %c2_107, %c0_108] : memref<2x9x4x1xf32, #tpu.memory_space<vmem>>, vector<1x1x1x1xf32>
    %107 = vector.shape_cast %106 : vector<1x1x1x1xf32> to vector<1x1xf32>
    %108 = vector.shape_cast %107 : vector<1x1xf32> to vector<1x1x1xf32>
    %109 = vector.broadcast %108 : vector<1x1x1xf32> to vector<2x1x400xf32>
    %110 = arith.mulf %105, %109 : vector<2x1x400xf32>
    %111 = arith.addf %104, %110 : vector<2x1x400xf32>
    %c0_109 = arith.constant 0 : index
    %c3_110 = arith.constant 3 : index
    %c41_111 = arith.constant 41 : index
    %112 = vector.load %arg0[%c0_109, %c3_110, %c41_111] : memref<2x4x484xf32, #tpu.memory_space<vmem>>, vector<2x1x400xf32>
    %c0_112 = arith.constant 0 : index
    %c3_113 = arith.constant 3 : index
    %c3_114 = arith.constant 3 : index
    %c0_115 = arith.constant 0 : index
    %113 = vector.load %arg2[%c0_112, %c3_113, %c3_114, %c0_115] : memref<2x9x4x1xf32, #tpu.memory_space<vmem>>, vector<1x1x1x1xf32>
    %114 = vector.shape_cast %113 : vector<1x1x1x1xf32> to vector<1x1xf32>
    %115 = vector.shape_cast %114 : vector<1x1xf32> to vector<1x1x1xf32>
    %116 = vector.broadcast %115 : vector<1x1x1xf32> to vector<2x1x400xf32>
    %117 = arith.mulf %112, %116 : vector<2x1x400xf32>
    %118 = arith.addf %111, %117 : vector<2x1x400xf32>
    %c0_116 = arith.constant 0 : index
    %c0_117 = arith.constant 0 : index
    %c42_118 = arith.constant 42 : index
    %119 = vector.load %arg0[%c0_116, %c0_117, %c42_118] : memref<2x4x484xf32, #tpu.memory_space<vmem>>, vector<2x1x400xf32>
    %c0_119 = arith.constant 0 : index
    %c4 = arith.constant 4 : index
    %c0_120 = arith.constant 0 : index
    %c0_121 = arith.constant 0 : index
    %120 = vector.load %arg2[%c0_119, %c4, %c0_120, %c0_121] : memref<2x9x4x1xf32, #tpu.memory_space<vmem>>, vector<1x1x1x1xf32>
    %121 = vector.shape_cast %120 : vector<1x1x1x1xf32> to vector<1x1xf32>
    %122 = vector.shape_cast %121 : vector<1x1xf32> to vector<1x1x1xf32>
    %123 = vector.broadcast %122 : vector<1x1x1xf32> to vector<2x1x400xf32>
    %124 = arith.mulf %119, %123 : vector<2x1x400xf32>
    %125 = arith.addf %118, %124 : vector<2x1x400xf32>
    %c0_122 = arith.constant 0 : index
    %c1_123 = arith.constant 1 : index
    %c42_124 = arith.constant 42 : index
    %126 = vector.load %arg0[%c0_122, %c1_123, %c42_124] : memref<2x4x484xf32, #tpu.memory_space<vmem>>, vector<2x1x400xf32>
    %c0_125 = arith.constant 0 : index
    %c4_126 = arith.constant 4 : index
    %c1_127 = arith.constant 1 : index
    %c0_128 = arith.constant 0 : index
    %127 = vector.load %arg2[%c0_125, %c4_126, %c1_127, %c0_128] : memref<2x9x4x1xf32, #tpu.memory_space<vmem>>, vector<1x1x1x1xf32>
    %128 = vector.shape_cast %127 : vector<1x1x1x1xf32> to vector<1x1xf32>
    %129 = vector.shape_cast %128 : vector<1x1xf32> to vector<1x1x1xf32>
    %130 = vector.broadcast %129 : vector<1x1x1xf32> to vector<2x1x400xf32>
    %131 = arith.mulf %126, %130 : vector<2x1x400xf32>
    %132 = arith.addf %125, %131 : vector<2x1x400xf32>
    %c0_129 = arith.constant 0 : index
    %c2_130 = arith.constant 2 : index
    %c42_131 = arith.constant 42 : index
    %133 = vector.load %arg0[%c0_129, %c2_130, %c42_131] : memref<2x4x484xf32, #tpu.memory_space<vmem>>, vector<2x1x400xf32>
    %c0_132 = arith.constant 0 : index
    %c4_133 = arith.constant 4 : index
    %c2_134 = arith.constant 2 : index
    %c0_135 = arith.constant 0 : index
    %134 = vector.load %arg2[%c0_132, %c4_133, %c2_134, %c0_135] : memref<2x9x4x1xf32, #tpu.memory_space<vmem>>, vector<1x1x1x1xf32>
    %135 = vector.shape_cast %134 : vector<1x1x1x1xf32> to vector<1x1xf32>
    %136 = vector.shape_cast %135 : vector<1x1xf32> to vector<1x1x1xf32>
    %137 = vector.broadcast %136 : vector<1x1x1xf32> to vector<2x1x400xf32>
    %138 = arith.mulf %133, %137 : vector<2x1x400xf32>
    %139 = arith.addf %132, %138 : vector<2x1x400xf32>
    %c0_136 = arith.constant 0 : index
    %c3_137 = arith.constant 3 : index
    %c42_138 = arith.constant 42 : index
    %140 = vector.load %arg0[%c0_136, %c3_137, %c42_138] : memref<2x4x484xf32, #tpu.memory_space<vmem>>, vector<2x1x400xf32>
    %c0_139 = arith.constant 0 : index
    %c4_140 = arith.constant 4 : index
    %c3_141 = arith.constant 3 : index
    %c0_142 = arith.constant 0 : index
    %141 = vector.load %arg2[%c0_139, %c4_140, %c3_141, %c0_142] : memref<2x9x4x1xf32, #tpu.memory_space<vmem>>, vector<1x1x1x1xf32>
    %142 = vector.shape_cast %141 : vector<1x1x1x1xf32> to vector<1x1xf32>
    %143 = vector.shape_cast %142 : vector<1x1xf32> to vector<1x1x1xf32>
    %144 = vector.broadcast %143 : vector<1x1x1xf32> to vector<2x1x400xf32>
    %145 = arith.mulf %140, %144 : vector<2x1x400xf32>
    %146 = arith.addf %139, %145 : vector<2x1x400xf32>
    %c0_143 = arith.constant 0 : index
    %c0_144 = arith.constant 0 : index
    %c43 = arith.constant 43 : index
    %147 = vector.load %arg0[%c0_143, %c0_144, %c43] : memref<2x4x484xf32, #tpu.memory_space<vmem>>, vector<2x1x400xf32>
    %c0_145 = arith.constant 0 : index
    %c5 = arith.constant 5 : index
    %c0_146 = arith.constant 0 : index
    %c0_147 = arith.constant 0 : index
    %148 = vector.load %arg2[%c0_145, %c5, %c0_146, %c0_147] : memref<2x9x4x1xf32, #tpu.memory_space<vmem>>, vector<1x1x1x1xf32>
    %149 = vector.shape_cast %148 : vector<1x1x1x1xf32> to vector<1x1xf32>
    %150 = vector.shape_cast %149 : vector<1x1xf32> to vector<1x1x1xf32>
    %151 = vector.broadcast %150 : vector<1x1x1xf32> to vector<2x1x400xf32>
    %152 = arith.mulf %147, %151 : vector<2x1x400xf32>
    %153 = arith.addf %146, %152 : vector<2x1x400xf32>
    %c0_148 = arith.constant 0 : index
    %c1_149 = arith.constant 1 : index
    %c43_150 = arith.constant 43 : index
    %154 = vector.load %arg0[%c0_148, %c1_149, %c43_150] : memref<2x4x484xf32, #tpu.memory_space<vmem>>, vector<2x1x400xf32>
    %c0_151 = arith.constant 0 : index
    %c5_152 = arith.constant 5 : index
    %c1_153 = arith.constant 1 : index
    %c0_154 = arith.constant 0 : index
    %155 = vector.load %arg2[%c0_151, %c5_152, %c1_153, %c0_154] : memref<2x9x4x1xf32, #tpu.memory_space<vmem>>, vector<1x1x1x1xf32>
    %156 = vector.shape_cast %155 : vector<1x1x1x1xf32> to vector<1x1xf32>
    %157 = vector.shape_cast %156 : vector<1x1xf32> to vector<1x1x1xf32>
    %158 = vector.broadcast %157 : vector<1x1x1xf32> to vector<2x1x400xf32>
    %159 = arith.mulf %154, %158 : vector<2x1x400xf32>
    %160 = arith.addf %153, %159 : vector<2x1x400xf32>
    %c0_155 = arith.constant 0 : index
    %c2_156 = arith.constant 2 : index
    %c43_157 = arith.constant 43 : index
    %161 = vector.load %arg0[%c0_155, %c2_156, %c43_157] : memref<2x4x484xf32, #tpu.memory_space<vmem>>, vector<2x1x400xf32>
    %c0_158 = arith.constant 0 : index
    %c5_159 = arith.constant 5 : index
    %c2_160 = arith.constant 2 : index
    %c0_161 = arith.constant 0 : index
    %162 = vector.load %arg2[%c0_158, %c5_159, %c2_160, %c0_161] : memref<2x9x4x1xf32, #tpu.memory_space<vmem>>, vector<1x1x1x1xf32>
    %163 = vector.shape_cast %162 : vector<1x1x1x1xf32> to vector<1x1xf32>
    %164 = vector.shape_cast %163 : vector<1x1xf32> to vector<1x1x1xf32>
    %165 = vector.broadcast %164 : vector<1x1x1xf32> to vector<2x1x400xf32>
    %166 = arith.mulf %161, %165 : vector<2x1x400xf32>
    %167 = arith.addf %160, %166 : vector<2x1x400xf32>
    %c0_162 = arith.constant 0 : index
    %c3_163 = arith.constant 3 : index
    %c43_164 = arith.constant 43 : index
    %168 = vector.load %arg0[%c0_162, %c3_163, %c43_164] : memref<2x4x484xf32, #tpu.memory_space<vmem>>, vector<2x1x400xf32>
    %c0_165 = arith.constant 0 : index
    %c5_166 = arith.constant 5 : index
    %c3_167 = arith.constant 3 : index
    %c0_168 = arith.constant 0 : index
    %169 = vector.load %arg2[%c0_165, %c5_166, %c3_167, %c0_168] : memref<2x9x4x1xf32, #tpu.memory_space<vmem>>, vector<1x1x1x1xf32>
    %170 = vector.shape_cast %169 : vector<1x1x1x1xf32> to vector<1x1xf32>
    %171 = vector.shape_cast %170 : vector<1x1xf32> to vector<1x1x1xf32>
    %172 = vector.broadcast %171 : vector<1x1x1xf32> to vector<2x1x400xf32>
    %173 = arith.mulf %168, %172 : vector<2x1x400xf32>
    %174 = arith.addf %167, %173 : vector<2x1x400xf32>
    %c0_169 = arith.constant 0 : index
    %c0_170 = arith.constant 0 : index
    %c61 = arith.constant 61 : index
    %175 = vector.load %arg0[%c0_169, %c0_170, %c61] : memref<2x4x484xf32, #tpu.memory_space<vmem>>, vector<2x1x400xf32>
    %c0_171 = arith.constant 0 : index
    %c6 = arith.constant 6 : index
    %c0_172 = arith.constant 0 : index
    %c0_173 = arith.constant 0 : index
    %176 = vector.load %arg2[%c0_171, %c6, %c0_172, %c0_173] : memref<2x9x4x1xf32, #tpu.memory_space<vmem>>, vector<1x1x1x1xf32>
    %177 = vector.shape_cast %176 : vector<1x1x1x1xf32> to vector<1x1xf32>
    %178 = vector.shape_cast %177 : vector<1x1xf32> to vector<1x1x1xf32>
    %179 = vector.broadcast %178 : vector<1x1x1xf32> to vector<2x1x400xf32>
    %180 = arith.mulf %175, %179 : vector<2x1x400xf32>
    %181 = arith.addf %174, %180 : vector<2x1x400xf32>
    %c0_174 = arith.constant 0 : index
    %c1_175 = arith.constant 1 : index
    %c61_176 = arith.constant 61 : index
    %182 = vector.load %arg0[%c0_174, %c1_175, %c61_176] : memref<2x4x484xf32, #tpu.memory_space<vmem>>, vector<2x1x400xf32>
    %c0_177 = arith.constant 0 : index
    %c6_178 = arith.constant 6 : index
    %c1_179 = arith.constant 1 : index
    %c0_180 = arith.constant 0 : index
    %183 = vector.load %arg2[%c0_177, %c6_178, %c1_179, %c0_180] : memref<2x9x4x1xf32, #tpu.memory_space<vmem>>, vector<1x1x1x1xf32>
    %184 = vector.shape_cast %183 : vector<1x1x1x1xf32> to vector<1x1xf32>
    %185 = vector.shape_cast %184 : vector<1x1xf32> to vector<1x1x1xf32>
    %186 = vector.broadcast %185 : vector<1x1x1xf32> to vector<2x1x400xf32>
    %187 = arith.mulf %182, %186 : vector<2x1x400xf32>
    %188 = arith.addf %181, %187 : vector<2x1x400xf32>
    %c0_181 = arith.constant 0 : index
    %c2_182 = arith.constant 2 : index
    %c61_183 = arith.constant 61 : index
    %189 = vector.load %arg0[%c0_181, %c2_182, %c61_183] : memref<2x4x484xf32, #tpu.memory_space<vmem>>, vector<2x1x400xf32>
    %c0_184 = arith.constant 0 : index
    %c6_185 = arith.constant 6 : index
    %c2_186 = arith.constant 2 : index
    %c0_187 = arith.constant 0 : index
    %190 = vector.load %arg2[%c0_184, %c6_185, %c2_186, %c0_187] : memref<2x9x4x1xf32, #tpu.memory_space<vmem>>, vector<1x1x1x1xf32>
    %191 = vector.shape_cast %190 : vector<1x1x1x1xf32> to vector<1x1xf32>
    %192 = vector.shape_cast %191 : vector<1x1xf32> to vector<1x1x1xf32>
    %193 = vector.broadcast %192 : vector<1x1x1xf32> to vector<2x1x400xf32>
    %194 = arith.mulf %189, %193 : vector<2x1x400xf32>
    %195 = arith.addf %188, %194 : vector<2x1x400xf32>
    %c0_188 = arith.constant 0 : index
    %c3_189 = arith.constant 3 : index
    %c61_190 = arith.constant 61 : index
    %196 = vector.load %arg0[%c0_188, %c3_189, %c61_190] : memref<2x4x484xf32, #tpu.memory_space<vmem>>, vector<2x1x400xf32>
    %c0_191 = arith.constant 0 : index
    %c6_192 = arith.constant 6 : index
    %c3_193 = arith.constant 3 : index
    %c0_194 = arith.constant 0 : index
    %197 = vector.load %arg2[%c0_191, %c6_192, %c3_193, %c0_194] : memref<2x9x4x1xf32, #tpu.memory_space<vmem>>, vector<1x1x1x1xf32>
    %198 = vector.shape_cast %197 : vector<1x1x1x1xf32> to vector<1x1xf32>
    %199 = vector.shape_cast %198 : vector<1x1xf32> to vector<1x1x1xf32>
    %200 = vector.broadcast %199 : vector<1x1x1xf32> to vector<2x1x400xf32>
    %201 = arith.mulf %196, %200 : vector<2x1x400xf32>
    %202 = arith.addf %195, %201 : vector<2x1x400xf32>
    %c0_195 = arith.constant 0 : index
    %c0_196 = arith.constant 0 : index
    %c62 = arith.constant 62 : index
    %203 = vector.load %arg0[%c0_195, %c0_196, %c62] : memref<2x4x484xf32, #tpu.memory_space<vmem>>, vector<2x1x400xf32>
    %c0_197 = arith.constant 0 : index
    %c7 = arith.constant 7 : index
    %c0_198 = arith.constant 0 : index
    %c0_199 = arith.constant 0 : index
    %204 = vector.load %arg2[%c0_197, %c7, %c0_198, %c0_199] : memref<2x9x4x1xf32, #tpu.memory_space<vmem>>, vector<1x1x1x1xf32>
    %205 = vector.shape_cast %204 : vector<1x1x1x1xf32> to vector<1x1xf32>
    %206 = vector.shape_cast %205 : vector<1x1xf32> to vector<1x1x1xf32>
    %207 = vector.broadcast %206 : vector<1x1x1xf32> to vector<2x1x400xf32>
    %208 = arith.mulf %203, %207 : vector<2x1x400xf32>
    %209 = arith.addf %202, %208 : vector<2x1x400xf32>
    %c0_200 = arith.constant 0 : index
    %c1_201 = arith.constant 1 : index
    %c62_202 = arith.constant 62 : index
    %210 = vector.load %arg0[%c0_200, %c1_201, %c62_202] : memref<2x4x484xf32, #tpu.memory_space<vmem>>, vector<2x1x400xf32>
    %c0_203 = arith.constant 0 : index
    %c7_204 = arith.constant 7 : index
    %c1_205 = arith.constant 1 : index
    %c0_206 = arith.constant 0 : index
    %211 = vector.load %arg2[%c0_203, %c7_204, %c1_205, %c0_206] : memref<2x9x4x1xf32, #tpu.memory_space<vmem>>, vector<1x1x1x1xf32>
    %212 = vector.shape_cast %211 : vector<1x1x1x1xf32> to vector<1x1xf32>
    %213 = vector.shape_cast %212 : vector<1x1xf32> to vector<1x1x1xf32>
    %214 = vector.broadcast %213 : vector<1x1x1xf32> to vector<2x1x400xf32>
    %215 = arith.mulf %210, %214 : vector<2x1x400xf32>
    %216 = arith.addf %209, %215 : vector<2x1x400xf32>
    %c0_207 = arith.constant 0 : index
    %c2_208 = arith.constant 2 : index
    %c62_209 = arith.constant 62 : index
    %217 = vector.load %arg0[%c0_207, %c2_208, %c62_209] : memref<2x4x484xf32, #tpu.memory_space<vmem>>, vector<2x1x400xf32>
    %c0_210 = arith.constant 0 : index
    %c7_211 = arith.constant 7 : index
    %c2_212 = arith.constant 2 : index
    %c0_213 = arith.constant 0 : index
    %218 = vector.load %arg2[%c0_210, %c7_211, %c2_212, %c0_213] : memref<2x9x4x1xf32, #tpu.memory_space<vmem>>, vector<1x1x1x1xf32>
    %219 = vector.shape_cast %218 : vector<1x1x1x1xf32> to vector<1x1xf32>
    %220 = vector.shape_cast %219 : vector<1x1xf32> to vector<1x1x1xf32>
    %221 = vector.broadcast %220 : vector<1x1x1xf32> to vector<2x1x400xf32>
    %222 = arith.mulf %217, %221 : vector<2x1x400xf32>
    %223 = arith.addf %216, %222 : vector<2x1x400xf32>
    %c0_214 = arith.constant 0 : index
    %c3_215 = arith.constant 3 : index
    %c62_216 = arith.constant 62 : index
    %224 = vector.load %arg0[%c0_214, %c3_215, %c62_216] : memref<2x4x484xf32, #tpu.memory_space<vmem>>, vector<2x1x400xf32>
    %c0_217 = arith.constant 0 : index
    %c7_218 = arith.constant 7 : index
    %c3_219 = arith.constant 3 : index
    %c0_220 = arith.constant 0 : index
    %225 = vector.load %arg2[%c0_217, %c7_218, %c3_219, %c0_220] : memref<2x9x4x1xf32, #tpu.memory_space<vmem>>, vector<1x1x1x1xf32>
    %226 = vector.shape_cast %225 : vector<1x1x1x1xf32> to vector<1x1xf32>
    %227 = vector.shape_cast %226 : vector<1x1xf32> to vector<1x1x1xf32>
    %228 = vector.broadcast %227 : vector<1x1x1xf32> to vector<2x1x400xf32>
    %229 = arith.mulf %224, %228 : vector<2x1x400xf32>
    %230 = arith.addf %223, %229 : vector<2x1x400xf32>
    %c0_221 = arith.constant 0 : index
    %c0_222 = arith.constant 0 : index
    %c63 = arith.constant 63 : index
    %231 = vector.load %arg0[%c0_221, %c0_222, %c63] : memref<2x4x484xf32, #tpu.memory_space<vmem>>, vector<2x1x400xf32>
    %c0_223 = arith.constant 0 : index
    %c8 = arith.constant 8 : index
    %c0_224 = arith.constant 0 : index
    %c0_225 = arith.constant 0 : index
    %232 = vector.load %arg2[%c0_223, %c8, %c0_224, %c0_225] : memref<2x9x4x1xf32, #tpu.memory_space<vmem>>, vector<1x1x1x1xf32>
    %233 = vector.shape_cast %232 : vector<1x1x1x1xf32> to vector<1x1xf32>
    %234 = vector.shape_cast %233 : vector<1x1xf32> to vector<1x1x1xf32>
    %235 = vector.broadcast %234 : vector<1x1x1xf32> to vector<2x1x400xf32>
    %236 = arith.mulf %231, %235 : vector<2x1x400xf32>
    %237 = arith.addf %230, %236 : vector<2x1x400xf32>
    %c0_226 = arith.constant 0 : index
    %c1_227 = arith.constant 1 : index
    %c63_228 = arith.constant 63 : index
    %238 = vector.load %arg0[%c0_226, %c1_227, %c63_228] : memref<2x4x484xf32, #tpu.memory_space<vmem>>, vector<2x1x400xf32>
    %c0_229 = arith.constant 0 : index
    %c8_230 = arith.constant 8 : index
    %c1_231 = arith.constant 1 : index
    %c0_232 = arith.constant 0 : index
    %239 = vector.load %arg2[%c0_229, %c8_230, %c1_231, %c0_232] : memref<2x9x4x1xf32, #tpu.memory_space<vmem>>, vector<1x1x1x1xf32>
    %240 = vector.shape_cast %239 : vector<1x1x1x1xf32> to vector<1x1xf32>
    %241 = vector.shape_cast %240 : vector<1x1xf32> to vector<1x1x1xf32>
    %242 = vector.broadcast %241 : vector<1x1x1xf32> to vector<2x1x400xf32>
    %243 = arith.mulf %238, %242 : vector<2x1x400xf32>
    %244 = arith.addf %237, %243 : vector<2x1x400xf32>
    %c0_233 = arith.constant 0 : index
    %c2_234 = arith.constant 2 : index
    %c63_235 = arith.constant 63 : index
    %245 = vector.load %arg0[%c0_233, %c2_234, %c63_235] : memref<2x4x484xf32, #tpu.memory_space<vmem>>, vector<2x1x400xf32>
    %c0_236 = arith.constant 0 : index
    %c8_237 = arith.constant 8 : index
    %c2_238 = arith.constant 2 : index
    %c0_239 = arith.constant 0 : index
    %246 = vector.load %arg2[%c0_236, %c8_237, %c2_238, %c0_239] : memref<2x9x4x1xf32, #tpu.memory_space<vmem>>, vector<1x1x1x1xf32>
    %247 = vector.shape_cast %246 : vector<1x1x1x1xf32> to vector<1x1xf32>
    %248 = vector.shape_cast %247 : vector<1x1xf32> to vector<1x1x1xf32>
    %249 = vector.broadcast %248 : vector<1x1x1xf32> to vector<2x1x400xf32>
    %250 = arith.mulf %245, %249 : vector<2x1x400xf32>
    %251 = arith.addf %244, %250 : vector<2x1x400xf32>
    %c0_240 = arith.constant 0 : index
    %c3_241 = arith.constant 3 : index
    %c63_242 = arith.constant 63 : index
    %252 = vector.load %arg0[%c0_240, %c3_241, %c63_242] : memref<2x4x484xf32, #tpu.memory_space<vmem>>, vector<2x1x400xf32>
    %c0_243 = arith.constant 0 : index
    %c8_244 = arith.constant 8 : index
    %c3_245 = arith.constant 3 : index
    %c0_246 = arith.constant 0 : index
    %253 = vector.load %arg2[%c0_243, %c8_244, %c3_245, %c0_246] : memref<2x9x4x1xf32, #tpu.memory_space<vmem>>, vector<1x1x1x1xf32>
    %254 = vector.shape_cast %253 : vector<1x1x1x1xf32> to vector<1x1xf32>
    %255 = vector.shape_cast %254 : vector<1x1xf32> to vector<1x1x1xf32>
    %256 = vector.broadcast %255 : vector<1x1x1xf32> to vector<2x1x400xf32>
    %257 = arith.mulf %252, %256 : vector<2x1x400xf32>
    %258 = arith.addf %251, %257 : vector<2x1x400xf32>
    %259 = vector.broadcast %258 : vector<2x1x400xf32> to vector<2x4x400xf32>
    %260 = arith.addf %5, %259 : vector<2x4x400xf32>
    %c0_247 = arith.constant 0 : index
    %c0_248 = arith.constant 0 : index
    %c0_249 = arith.constant 0 : index
    %261 = vector.load %arg4[%c0_247, %c0_248, %c0_249] : memref<8x4x1xf32, #tpu.memory_space<vmem>>, vector<1x4x1xf32>
    %262 = vector.shape_cast %261 : vector<1x4x1xf32> to vector<4x1xf32>
    %263 = vector.shape_cast %262 : vector<4x1xf32> to vector<1x4x1xf32>
    %264 = vector.broadcast %263 : vector<1x4x1xf32> to vector<2x4x400xf32>
    %265 = arith.addf %260, %264 : vector<2x4x400xf32>
    %266 = vector.broadcast %0 : vector<1x1x400xf32> to vector<2x4x400xf32>
    %267 = arith.mulf %265, %266 : vector<2x4x400xf32>
    %c0_250 = arith.constant 0 : index
    %c0_251 = arith.constant 0 : index
    %c42_252 = arith.constant 42 : index
    %268 = vector.load %arg6[%c0_250, %c0_251, %c42_252] : memref<2x4x484xf32, #tpu.memory_space<vmem>>, vector<2x4x400xf32>
    tpu.vector_store %arg6[%c0_250, %c0_251, %c42_252], %267 {strides = array<i32>} : memref<2x4x484xf32, #tpu.memory_space<vmem>>, vector<2x4x400xf32>,
    %cst_253 = arith.constant 0.000000e+00 : f32
    %269 = vector.broadcast %cst_253 : f32 to vector<2x4x400xf32>
    %c0_254 = arith.constant 0 : index
    %c0_255 = arith.constant 0 : index
    %c0_256 = arith.constant 0 : index
    %270 = vector.load %arg6[%c0_254, %c0_255, %c0_256] : memref<2x4x484xf32, #tpu.memory_space<vmem>>, vector<2x1x400xf32>
    %c0_257 = arith.constant 0 : index
    %c0_258 = arith.constant 0 : index
    %c0_259 = arith.constant 0 : index
    %c0_260 = arith.constant 0 : index
    %271 = vector.load %arg3[%c0_257, %c0_258, %c0_259, %c0_260] : memref<2x36x4x1xf32, #tpu.memory_space<vmem>>, vector<1x1x4x1xf32>
    %272 = vector.shape_cast %271 : vector<1x1x4x1xf32> to vector<4x1xf32>
    %273 = vector.shape_cast %272 : vector<4x1xf32> to vector<1x4x1xf32>
    %274 = vector.broadcast %270 : vector<2x1x400xf32> to vector<2x4x400xf32>
    %275 = vector.broadcast %273 : vector<1x4x1xf32> to vector<2x4x400xf32>
    %276 = arith.mulf %274, %275 : vector<2x4x400xf32>
    %277 = arith.addf %269, %276 : vector<2x4x400xf32>
    %c0_261 = arith.constant 0 : index
    %c1_262 = arith.constant 1 : index
    %c0_263 = arith.constant 0 : index
    %278 = vector.load %arg6[%c0_261, %c1_262, %c0_263] : memref<2x4x484xf32, #tpu.memory_space<vmem>>, vector<2x1x400xf32>
    %c0_264 = arith.constant 0 : index
    %c1_265 = arith.constant 1 : index
    %c0_266 = arith.constant 0 : index
    %c0_267 = arith.constant 0 : index
    %279 = vector.load %arg3[%c0_264, %c1_265, %c0_266, %c0_267] : memref<2x36x4x1xf32, #tpu.memory_space<vmem>>, vector<1x1x4x1xf32>
    %280 = vector.shape_cast %279 : vector<1x1x4x1xf32> to vector<4x1xf32>
    %281 = vector.shape_cast %280 : vector<4x1xf32> to vector<1x4x1xf32>
    %282 = vector.broadcast %278 : vector<2x1x400xf32> to vector<2x4x400xf32>
    %283 = vector.broadcast %281 : vector<1x4x1xf32> to vector<2x4x400xf32>
    %284 = arith.mulf %282, %283 : vector<2x4x400xf32>
    %285 = arith.addf %277, %284 : vector<2x4x400xf32>
    %c0_268 = arith.constant 0 : index
    %c2_269 = arith.constant 2 : index
    %c0_270 = arith.constant 0 : index
    %286 = vector.load %arg6[%c0_268, %c2_269, %c0_270] : memref<2x4x484xf32, #tpu.memory_space<vmem>>, vector<2x1x400xf32>
    %c0_271 = arith.constant 0 : index
    %c2_272 = arith.constant 2 : index
    %c0_273 = arith.constant 0 : index
    %c0_274 = arith.constant 0 : index
    %287 = vector.load %arg3[%c0_271, %c2_272, %c0_273, %c0_274] : memref<2x36x4x1xf32, #tpu.memory_space<vmem>>, vector<1x1x4x1xf32>
    %288 = vector.shape_cast %287 : vector<1x1x4x1xf32> to vector<4x1xf32>
    %289 = vector.shape_cast %288 : vector<4x1xf32> to vector<1x4x1xf32>
    %290 = vector.broadcast %286 : vector<2x1x400xf32> to vector<2x4x400xf32>
    %291 = vector.broadcast %289 : vector<1x4x1xf32> to vector<2x4x400xf32>
    %292 = arith.mulf %290, %291 : vector<2x4x400xf32>
    %293 = arith.addf %285, %292 : vector<2x4x400xf32>
    %c0_275 = arith.constant 0 : index
    %c3_276 = arith.constant 3 : index
    %c0_277 = arith.constant 0 : index
    %294 = vector.load %arg6[%c0_275, %c3_276, %c0_277] : memref<2x4x484xf32, #tpu.memory_space<vmem>>, vector<2x1x400xf32>
    %c0_278 = arith.constant 0 : index
    %c3_279 = arith.constant 3 : index
    %c0_280 = arith.constant 0 : index
    %c0_281 = arith.constant 0 : index
    %295 = vector.load %arg3[%c0_278, %c3_279, %c0_280, %c0_281] : memref<2x36x4x1xf32, #tpu.memory_space<vmem>>, vector<1x1x4x1xf32>
    %296 = vector.shape_cast %295 : vector<1x1x4x1xf32> to vector<4x1xf32>
    %297 = vector.shape_cast %296 : vector<4x1xf32> to vector<1x4x1xf32>
    %298 = vector.broadcast %294 : vector<2x1x400xf32> to vector<2x4x400xf32>
    %299 = vector.broadcast %297 : vector<1x4x1xf32> to vector<2x4x400xf32>
    %300 = arith.mulf %298, %299 : vector<2x4x400xf32>
    %301 = arith.addf %293, %300 : vector<2x4x400xf32>
    %c0_282 = arith.constant 0 : index
    %c0_283 = arith.constant 0 : index
    %c2_284 = arith.constant 2 : index
    %302 = vector.load %arg6[%c0_282, %c0_283, %c2_284] : memref<2x4x484xf32, #tpu.memory_space<vmem>>, vector<2x1x400xf32>
    %c0_285 = arith.constant 0 : index
    %c4_286 = arith.constant 4 : index
    %c0_287 = arith.constant 0 : index
    %c0_288 = arith.constant 0 : index
    %303 = vector.load %arg3[%c0_285, %c4_286, %c0_287, %c0_288] : memref<2x36x4x1xf32, #tpu.memory_space<vmem>>, vector<1x1x4x1xf32>
    %304 = vector.shape_cast %303 : vector<1x1x4x1xf32> to vector<4x1xf32>
    %305 = vector.shape_cast %304 : vector<4x1xf32> to vector<1x4x1xf32>
    %306 = vector.broadcast %302 : vector<2x1x400xf32> to vector<2x4x400xf32>
    %307 = vector.broadcast %305 : vector<1x4x1xf32> to vector<2x4x400xf32>
    %308 = arith.mulf %306, %307 : vector<2x4x400xf32>
    %309 = arith.addf %301, %308 : vector<2x4x400xf32>
    %c0_289 = arith.constant 0 : index
    %c1_290 = arith.constant 1 : index
    %c2_291 = arith.constant 2 : index
    %310 = vector.load %arg6[%c0_289, %c1_290, %c2_291] : memref<2x4x484xf32, #tpu.memory_space<vmem>>, vector<2x1x400xf32>
    %c0_292 = arith.constant 0 : index
    %c5_293 = arith.constant 5 : index
    %c0_294 = arith.constant 0 : index
    %c0_295 = arith.constant 0 : index
    %311 = vector.load %arg3[%c0_292, %c5_293, %c0_294, %c0_295] : memref<2x36x4x1xf32, #tpu.memory_space<vmem>>, vector<1x1x4x1xf32>
    %312 = vector.shape_cast %311 : vector<1x1x4x1xf32> to vector<4x1xf32>
    %313 = vector.shape_cast %312 : vector<4x1xf32> to vector<1x4x1xf32>
    %314 = vector.broadcast %310 : vector<2x1x400xf32> to vector<2x4x400xf32>
    %315 = vector.broadcast %313 : vector<1x4x1xf32> to vector<2x4x400xf32>
    %316 = arith.mulf %314, %315 : vector<2x4x400xf32>
    %317 = arith.addf %309, %316 : vector<2x4x400xf32>
    %c0_296 = arith.constant 0 : index
    %c2_297 = arith.constant 2 : index
    %c2_298 = arith.constant 2 : index
    %318 = vector.load %arg6[%c0_296, %c2_297, %c2_298] : memref<2x4x484xf32, #tpu.memory_space<vmem>>, vector<2x1x400xf32>
    %c0_299 = arith.constant 0 : index
    %c6_300 = arith.constant 6 : index
    %c0_301 = arith.constant 0 : index
    %c0_302 = arith.constant 0 : index
    %319 = vector.load %arg3[%c0_299, %c6_300, %c0_301, %c0_302] : memref<2x36x4x1xf32, #tpu.memory_space<vmem>>, vector<1x1x4x1xf32>
    %320 = vector.shape_cast %319 : vector<1x1x4x1xf32> to vector<4x1xf32>
    %321 = vector.shape_cast %320 : vector<4x1xf32> to vector<1x4x1xf32>
    %322 = vector.broadcast %318 : vector<2x1x400xf32> to vector<2x4x400xf32>
    %323 = vector.broadcast %321 : vector<1x4x1xf32> to vector<2x4x400xf32>
    %324 = arith.mulf %322, %323 : vector<2x4x400xf32>
    %325 = arith.addf %317, %324 : vector<2x4x400xf32>
    %c0_303 = arith.constant 0 : index
    %c3_304 = arith.constant 3 : index
    %c2_305 = arith.constant 2 : index
    %326 = vector.load %arg6[%c0_303, %c3_304, %c2_305] : memref<2x4x484xf32, #tpu.memory_space<vmem>>, vector<2x1x400xf32>
    %c0_306 = arith.constant 0 : index
    %c7_307 = arith.constant 7 : index
    %c0_308 = arith.constant 0 : index
    %c0_309 = arith.constant 0 : index
    %327 = vector.load %arg3[%c0_306, %c7_307, %c0_308, %c0_309] : memref<2x36x4x1xf32, #tpu.memory_space<vmem>>, vector<1x1x4x1xf32>
    %328 = vector.shape_cast %327 : vector<1x1x4x1xf32> to vector<4x1xf32>
    %329 = vector.shape_cast %328 : vector<4x1xf32> to vector<1x4x1xf32>
    %330 = vector.broadcast %326 : vector<2x1x400xf32> to vector<2x4x400xf32>
    %331 = vector.broadcast %329 : vector<1x4x1xf32> to vector<2x4x400xf32>
    %332 = arith.mulf %330, %331 : vector<2x4x400xf32>
    %333 = arith.addf %325, %332 : vector<2x4x400xf32>
    %c0_310 = arith.constant 0 : index
    %c0_311 = arith.constant 0 : index
    %c4_312 = arith.constant 4 : index
    %334 = vector.load %arg6[%c0_310, %c0_311, %c4_312] : memref<2x4x484xf32, #tpu.memory_space<vmem>>, vector<2x1x400xf32>
    %c0_313 = arith.constant 0 : index
    %c8_314 = arith.constant 8 : index
    %c0_315 = arith.constant 0 : index
    %c0_316 = arith.constant 0 : index
    %335 = vector.load %arg3[%c0_313, %c8_314, %c0_315, %c0_316] : memref<2x36x4x1xf32, #tpu.memory_space<vmem>>, vector<1x1x4x1xf32>
    %336 = vector.shape_cast %335 : vector<1x1x4x1xf32> to vector<4x1xf32>
    %337 = vector.shape_cast %336 : vector<4x1xf32> to vector<1x4x1xf32>
    %338 = vector.broadcast %334 : vector<2x1x400xf32> to vector<2x4x400xf32>
    %339 = vector.broadcast %337 : vector<1x4x1xf32> to vector<2x4x400xf32>
    %340 = arith.mulf %338, %339 : vector<2x4x400xf32>
    %341 = arith.addf %333, %340 : vector<2x4x400xf32>
    %c0_317 = arith.constant 0 : index
    %c1_318 = arith.constant 1 : index
    %c4_319 = arith.constant 4 : index
    %342 = vector.load %arg6[%c0_317, %c1_318, %c4_319] : memref<2x4x484xf32, #tpu.memory_space<vmem>>, vector<2x1x400xf32>
    %c0_320 = arith.constant 0 : index
    %c9 = arith.constant 9 : index
    %c0_321 = arith.constant 0 : index
    %c0_322 = arith.constant 0 : index
    %343 = vector.load %arg3[%c0_320, %c9, %c0_321, %c0_322] : memref<2x36x4x1xf32, #tpu.memory_space<vmem>>, vector<1x1x4x1xf32>
    %344 = vector.shape_cast %343 : vector<1x1x4x1xf32> to vector<4x1xf32>
    %345 = vector.shape_cast %344 : vector<4x1xf32> to vector<1x4x1xf32>
    %346 = vector.broadcast %342 : vector<2x1x400xf32> to vector<2x4x400xf32>
    %347 = vector.broadcast %345 : vector<1x4x1xf32> to vector<2x4x400xf32>
    %348 = arith.mulf %346, %347 : vector<2x4x400xf32>
    %349 = arith.addf %341, %348 : vector<2x4x400xf32>
    %c0_323 = arith.constant 0 : index
    %c2_324 = arith.constant 2 : index
    %c4_325 = arith.constant 4 : index
    %350 = vector.load %arg6[%c0_323, %c2_324, %c4_325] : memref<2x4x484xf32, #tpu.memory_space<vmem>>, vector<2x1x400xf32>
    %c0_326 = arith.constant 0 : index
    %c10 = arith.constant 10 : index
    %c0_327 = arith.constant 0 : index
    %c0_328 = arith.constant 0 : index
    %351 = vector.load %arg3[%c0_326, %c10, %c0_327, %c0_328] : memref<2x36x4x1xf32, #tpu.memory_space<vmem>>, vector<1x1x4x1xf32>
    %352 = vector.shape_cast %351 : vector<1x1x4x1xf32> to vector<4x1xf32>
    %353 = vector.shape_cast %352 : vector<4x1xf32> to vector<1x4x1xf32>
    %354 = vector.broadcast %350 : vector<2x1x400xf32> to vector<2x4x400xf32>
    %355 = vector.broadcast %353 : vector<1x4x1xf32> to vector<2x4x400xf32>
    %356 = arith.mulf %354, %355 : vector<2x4x400xf32>
    %357 = arith.addf %349, %356 : vector<2x4x400xf32>
    %c0_329 = arith.constant 0 : index
    %c3_330 = arith.constant 3 : index
    %c4_331 = arith.constant 4 : index
    %358 = vector.load %arg6[%c0_329, %c3_330, %c4_331] : memref<2x4x484xf32, #tpu.memory_space<vmem>>, vector<2x1x400xf32>
    %c0_332 = arith.constant 0 : index
    %c11 = arith.constant 11 : index
    %c0_333 = arith.constant 0 : index
    %c0_334 = arith.constant 0 : index
    %359 = vector.load %arg3[%c0_332, %c11, %c0_333, %c0_334] : memref<2x36x4x1xf32, #tpu.memory_space<vmem>>, vector<1x1x4x1xf32>
    %360 = vector.shape_cast %359 : vector<1x1x4x1xf32> to vector<4x1xf32>
    %361 = vector.shape_cast %360 : vector<4x1xf32> to vector<1x4x1xf32>
    %362 = vector.broadcast %358 : vector<2x1x400xf32> to vector<2x4x400xf32>
    %363 = vector.broadcast %361 : vector<1x4x1xf32> to vector<2x4x400xf32>
    %364 = arith.mulf %362, %363 : vector<2x4x400xf32>
    %365 = arith.addf %357, %364 : vector<2x4x400xf32>
    %c0_335 = arith.constant 0 : index
    %c0_336 = arith.constant 0 : index
    %c40 = arith.constant 40 : index
    %366 = vector.load %arg6[%c0_335, %c0_336, %c40] : memref<2x4x484xf32, #tpu.memory_space<vmem>>, vector<2x1x400xf32>
    %c0_337 = arith.constant 0 : index
    %c12 = arith.constant 12 : index
    %c0_338 = arith.constant 0 : index
    %c0_339 = arith.constant 0 : index
    %367 = vector.load %arg3[%c0_337, %c12, %c0_338, %c0_339] : memref<2x36x4x1xf32, #tpu.memory_space<vmem>>, vector<1x1x4x1xf32>
    %368 = vector.shape_cast %367 : vector<1x1x4x1xf32> to vector<4x1xf32>
    %369 = vector.shape_cast %368 : vector<4x1xf32> to vector<1x4x1xf32>
    %370 = vector.broadcast %366 : vector<2x1x400xf32> to vector<2x4x400xf32>
    %371 = vector.broadcast %369 : vector<1x4x1xf32> to vector<2x4x400xf32>
    %372 = arith.mulf %370, %371 : vector<2x4x400xf32>
    %373 = arith.addf %365, %372 : vector<2x4x400xf32>
    %c0_340 = arith.constant 0 : index
    %c1_341 = arith.constant 1 : index
    %c40_342 = arith.constant 40 : index
    %374 = vector.load %arg6[%c0_340, %c1_341, %c40_342] : memref<2x4x484xf32, #tpu.memory_space<vmem>>, vector<2x1x400xf32>
    %c0_343 = arith.constant 0 : index
    %c13 = arith.constant 13 : index
    %c0_344 = arith.constant 0 : index
    %c0_345 = arith.constant 0 : index
    %375 = vector.load %arg3[%c0_343, %c13, %c0_344, %c0_345] : memref<2x36x4x1xf32, #tpu.memory_space<vmem>>, vector<1x1x4x1xf32>
    %376 = vector.shape_cast %375 : vector<1x1x4x1xf32> to vector<4x1xf32>
    %377 = vector.shape_cast %376 : vector<4x1xf32> to vector<1x4x1xf32>
    %378 = vector.broadcast %374 : vector<2x1x400xf32> to vector<2x4x400xf32>
    %379 = vector.broadcast %377 : vector<1x4x1xf32> to vector<2x4x400xf32>
    %380 = arith.mulf %378, %379 : vector<2x4x400xf32>
    %381 = arith.addf %373, %380 : vector<2x4x400xf32>
    %c0_346 = arith.constant 0 : index
    %c2_347 = arith.constant 2 : index
    %c40_348 = arith.constant 40 : index
    %382 = vector.load %arg6[%c0_346, %c2_347, %c40_348] : memref<2x4x484xf32, #tpu.memory_space<vmem>>, vector<2x1x400xf32>
    %c0_349 = arith.constant 0 : index
    %c14 = arith.constant 14 : index
    %c0_350 = arith.constant 0 : index
    %c0_351 = arith.constant 0 : index
    %383 = vector.load %arg3[%c0_349, %c14, %c0_350, %c0_351] : memref<2x36x4x1xf32, #tpu.memory_space<vmem>>, vector<1x1x4x1xf32>
    %384 = vector.shape_cast %383 : vector<1x1x4x1xf32> to vector<4x1xf32>
    %385 = vector.shape_cast %384 : vector<4x1xf32> to vector<1x4x1xf32>
    %386 = vector.broadcast %382 : vector<2x1x400xf32> to vector<2x4x400xf32>
    %387 = vector.broadcast %385 : vector<1x4x1xf32> to vector<2x4x400xf32>
    %388 = arith.mulf %386, %387 : vector<2x4x400xf32>
    %389 = arith.addf %381, %388 : vector<2x4x400xf32>
    %c0_352 = arith.constant 0 : index
    %c3_353 = arith.constant 3 : index
    %c40_354 = arith.constant 40 : index
    %390 = vector.load %arg6[%c0_352, %c3_353, %c40_354] : memref<2x4x484xf32, #tpu.memory_space<vmem>>, vector<2x1x400xf32>
    %c0_355 = arith.constant 0 : index
    %c15 = arith.constant 15 : index
    %c0_356 = arith.constant 0 : index
    %c0_357 = arith.constant 0 : index
    %391 = vector.load %arg3[%c0_355, %c15, %c0_356, %c0_357] : memref<2x36x4x1xf32, #tpu.memory_space<vmem>>, vector<1x1x4x1xf32>
    %392 = vector.shape_cast %391 : vector<1x1x4x1xf32> to vector<4x1xf32>
    %393 = vector.shape_cast %392 : vector<4x1xf32> to vector<1x4x1xf32>
    %394 = vector.broadcast %390 : vector<2x1x400xf32> to vector<2x4x400xf32>
    %395 = vector.broadcast %393 : vector<1x4x1xf32> to vector<2x4x400xf32>
    %396 = arith.mulf %394, %395 : vector<2x4x400xf32>
    %397 = arith.addf %389, %396 : vector<2x4x400xf32>
    %c0_358 = arith.constant 0 : index
    %c0_359 = arith.constant 0 : index
    %c42_360 = arith.constant 42 : index
    %398 = vector.load %arg6[%c0_358, %c0_359, %c42_360] : memref<2x4x484xf32, #tpu.memory_space<vmem>>, vector<2x1x400xf32>
    %c0_361 = arith.constant 0 : index
    %c16 = arith.constant 16 : index
    %c0_362 = arith.constant 0 : index
    %c0_363 = arith.constant 0 : index
    %399 = vector.load %arg3[%c0_361, %c16, %c0_362, %c0_363] : memref<2x36x4x1xf32, #tpu.memory_space<vmem>>, vector<1x1x4x1xf32>
    %400 = vector.shape_cast %399 : vector<1x1x4x1xf32> to vector<4x1xf32>
    %401 = vector.shape_cast %400 : vector<4x1xf32> to vector<1x4x1xf32>
    %402 = vector.broadcast %398 : vector<2x1x400xf32> to vector<2x4x400xf32>
    %403 = vector.broadcast %401 : vector<1x4x1xf32> to vector<2x4x400xf32>
    %404 = arith.mulf %402, %403 : vector<2x4x400xf32>
    %405 = arith.addf %397, %404 : vector<2x4x400xf32>
    %c0_364 = arith.constant 0 : index
    %c1_365 = arith.constant 1 : index
    %c42_366 = arith.constant 42 : index
    %406 = vector.load %arg6[%c0_364, %c1_365, %c42_366] : memref<2x4x484xf32, #tpu.memory_space<vmem>>, vector<2x1x400xf32>
    %c0_367 = arith.constant 0 : index
    %c17 = arith.constant 17 : index
    %c0_368 = arith.constant 0 : index
    %c0_369 = arith.constant 0 : index
    %407 = vector.load %arg3[%c0_367, %c17, %c0_368, %c0_369] : memref<2x36x4x1xf32, #tpu.memory_space<vmem>>, vector<1x1x4x1xf32>
    %408 = vector.shape_cast %407 : vector<1x1x4x1xf32> to vector<4x1xf32>
    %409 = vector.shape_cast %408 : vector<4x1xf32> to vector<1x4x1xf32>
    %410 = vector.broadcast %406 : vector<2x1x400xf32> to vector<2x4x400xf32>
    %411 = vector.broadcast %409 : vector<1x4x1xf32> to vector<2x4x400xf32>
    %412 = arith.mulf %410, %411 : vector<2x4x400xf32>
    %413 = arith.addf %405, %412 : vector<2x4x400xf32>
    %c0_370 = arith.constant 0 : index
    %c2_371 = arith.constant 2 : index
    %c42_372 = arith.constant 42 : index
    %414 = vector.load %arg6[%c0_370, %c2_371, %c42_372] : memref<2x4x484xf32, #tpu.memory_space<vmem>>, vector<2x1x400xf32>
    %c0_373 = arith.constant 0 : index
    %c18 = arith.constant 18 : index
    %c0_374 = arith.constant 0 : index
    %c0_375 = arith.constant 0 : index
    %415 = vector.load %arg3[%c0_373, %c18, %c0_374, %c0_375] : memref<2x36x4x1xf32, #tpu.memory_space<vmem>>, vector<1x1x4x1xf32>
    %416 = vector.shape_cast %415 : vector<1x1x4x1xf32> to vector<4x1xf32>
    %417 = vector.shape_cast %416 : vector<4x1xf32> to vector<1x4x1xf32>
    %418 = vector.broadcast %414 : vector<2x1x400xf32> to vector<2x4x400xf32>
    %419 = vector.broadcast %417 : vector<1x4x1xf32> to vector<2x4x400xf32>
    %420 = arith.mulf %418, %419 : vector<2x4x400xf32>
    %421 = arith.addf %413, %420 : vector<2x4x400xf32>
    %c0_376 = arith.constant 0 : index
    %c3_377 = arith.constant 3 : index
    %c42_378 = arith.constant 42 : index
    %422 = vector.load %arg6[%c0_376, %c3_377, %c42_378] : memref<2x4x484xf32, #tpu.memory_space<vmem>>, vector<2x1x400xf32>
    %c0_379 = arith.constant 0 : index
    %c19 = arith.constant 19 : index
    %c0_380 = arith.constant 0 : index
    %c0_381 = arith.constant 0 : index
    %423 = vector.load %arg3[%c0_379, %c19, %c0_380, %c0_381] : memref<2x36x4x1xf32, #tpu.memory_space<vmem>>, vector<1x1x4x1xf32>
    %424 = vector.shape_cast %423 : vector<1x1x4x1xf32> to vector<4x1xf32>
    %425 = vector.shape_cast %424 : vector<4x1xf32> to vector<1x4x1xf32>
    %426 = vector.broadcast %422 : vector<2x1x400xf32> to vector<2x4x400xf32>
    %427 = vector.broadcast %425 : vector<1x4x1xf32> to vector<2x4x400xf32>
    %428 = arith.mulf %426, %427 : vector<2x4x400xf32>
    %429 = arith.addf %421, %428 : vector<2x4x400xf32>
    %c0_382 = arith.constant 0 : index
    %c0_383 = arith.constant 0 : index
    %c44 = arith.constant 44 : index
    %430 = vector.load %arg6[%c0_382, %c0_383, %c44] : memref<2x4x484xf32, #tpu.memory_space<vmem>>, vector<2x1x400xf32>
    %c0_384 = arith.constant 0 : index
    %c20 = arith.constant 20 : index
    %c0_385 = arith.constant 0 : index
    %c0_386 = arith.constant 0 : index
    %431 = vector.load %arg3[%c0_384, %c20, %c0_385, %c0_386] : memref<2x36x4x1xf32, #tpu.memory_space<vmem>>, vector<1x1x4x1xf32>
    %432 = vector.shape_cast %431 : vector<1x1x4x1xf32> to vector<4x1xf32>
    %433 = vector.shape_cast %432 : vector<4x1xf32> to vector<1x4x1xf32>
    %434 = vector.broadcast %430 : vector<2x1x400xf32> to vector<2x4x400xf32>
    %435 = vector.broadcast %433 : vector<1x4x1xf32> to vector<2x4x400xf32>
    %436 = arith.mulf %434, %435 : vector<2x4x400xf32>
    %437 = arith.addf %429, %436 : vector<2x4x400xf32>
    %c0_387 = arith.constant 0 : index
    %c1_388 = arith.constant 1 : index
    %c44_389 = arith.constant 44 : index
    %438 = vector.load %arg6[%c0_387, %c1_388, %c44_389] : memref<2x4x484xf32, #tpu.memory_space<vmem>>, vector<2x1x400xf32>
    %c0_390 = arith.constant 0 : index
    %c21_391 = arith.constant 21 : index
    %c0_392 = arith.constant 0 : index
    %c0_393 = arith.constant 0 : index
    %439 = vector.load %arg3[%c0_390, %c21_391, %c0_392, %c0_393] : memref<2x36x4x1xf32, #tpu.memory_space<vmem>>, vector<1x1x4x1xf32>
    %440 = vector.shape_cast %439 : vector<1x1x4x1xf32> to vector<4x1xf32>
    %441 = vector.shape_cast %440 : vector<4x1xf32> to vector<1x4x1xf32>
    %442 = vector.broadcast %438 : vector<2x1x400xf32> to vector<2x4x400xf32>
    %443 = vector.broadcast %441 : vector<1x4x1xf32> to vector<2x4x400xf32>
    %444 = arith.mulf %442, %443 : vector<2x4x400xf32>
    %445 = arith.addf %437, %444 : vector<2x4x400xf32>
    %c0_394 = arith.constant 0 : index
    %c2_395 = arith.constant 2 : index
    %c44_396 = arith.constant 44 : index
    %446 = vector.load %arg6[%c0_394, %c2_395, %c44_396] : memref<2x4x484xf32, #tpu.memory_space<vmem>>, vector<2x1x400xf32>
    %c0_397 = arith.constant 0 : index
    %c22_398 = arith.constant 22 : index
    %c0_399 = arith.constant 0 : index
    %c0_400 = arith.constant 0 : index
    %447 = vector.load %arg3[%c0_397, %c22_398, %c0_399, %c0_400] : memref<2x36x4x1xf32, #tpu.memory_space<vmem>>, vector<1x1x4x1xf32>
    %448 = vector.shape_cast %447 : vector<1x1x4x1xf32> to vector<4x1xf32>
    %449 = vector.shape_cast %448 : vector<4x1xf32> to vector<1x4x1xf32>
    %450 = vector.broadcast %446 : vector<2x1x400xf32> to vector<2x4x400xf32>
    %451 = vector.broadcast %449 : vector<1x4x1xf32> to vector<2x4x400xf32>
    %452 = arith.mulf %450, %451 : vector<2x4x400xf32>
    %453 = arith.addf %445, %452 : vector<2x4x400xf32>
    %c0_401 = arith.constant 0 : index
    %c3_402 = arith.constant 3 : index
    %c44_403 = arith.constant 44 : index
    %454 = vector.load %arg6[%c0_401, %c3_402, %c44_403] : memref<2x4x484xf32, #tpu.memory_space<vmem>>, vector<2x1x400xf32>
    %c0_404 = arith.constant 0 : index
    %c23_405 = arith.constant 23 : index
    %c0_406 = arith.constant 0 : index
    %c0_407 = arith.constant 0 : index
    %455 = vector.load %arg3[%c0_404, %c23_405, %c0_406, %c0_407] : memref<2x36x4x1xf32, #tpu.memory_space<vmem>>, vector<1x1x4x1xf32>
    %456 = vector.shape_cast %455 : vector<1x1x4x1xf32> to vector<4x1xf32>
    %457 = vector.shape_cast %456 : vector<4x1xf32> to vector<1x4x1xf32>
    %458 = vector.broadcast %454 : vector<2x1x400xf32> to vector<2x4x400xf32>
    %459 = vector.broadcast %457 : vector<1x4x1xf32> to vector<2x4x400xf32>
    %460 = arith.mulf %458, %459 : vector<2x4x400xf32>
    %461 = arith.addf %453, %460 : vector<2x4x400xf32>
    %c0_408 = arith.constant 0 : index
    %c0_409 = arith.constant 0 : index
    %c80 = arith.constant 80 : index
    %462 = vector.load %arg6[%c0_408, %c0_409, %c80] : memref<2x4x484xf32, #tpu.memory_space<vmem>>, vector<2x1x400xf32>
    %c0_410 = arith.constant 0 : index
    %c24 = arith.constant 24 : index
    %c0_411 = arith.constant 0 : index
    %c0_412 = arith.constant 0 : index
    %463 = vector.load %arg3[%c0_410, %c24, %c0_411, %c0_412] : memref<2x36x4x1xf32, #tpu.memory_space<vmem>>, vector<1x1x4x1xf32>
    %464 = vector.shape_cast %463 : vector<1x1x4x1xf32> to vector<4x1xf32>
    %465 = vector.shape_cast %464 : vector<4x1xf32> to vector<1x4x1xf32>
    %466 = vector.broadcast %462 : vector<2x1x400xf32> to vector<2x4x400xf32>
    %467 = vector.broadcast %465 : vector<1x4x1xf32> to vector<2x4x400xf32>
    %468 = arith.mulf %466, %467 : vector<2x4x400xf32>
    %469 = arith.addf %461, %468 : vector<2x4x400xf32>
    %c0_413 = arith.constant 0 : index
    %c1_414 = arith.constant 1 : index
    %c80_415 = arith.constant 80 : index
    %470 = vector.load %arg6[%c0_413, %c1_414, %c80_415] : memref<2x4x484xf32, #tpu.memory_space<vmem>>, vector<2x1x400xf32>
    %c0_416 = arith.constant 0 : index
    %c25 = arith.constant 25 : index
    %c0_417 = arith.constant 0 : index
    %c0_418 = arith.constant 0 : index
    %471 = vector.load %arg3[%c0_416, %c25, %c0_417, %c0_418] : memref<2x36x4x1xf32, #tpu.memory_space<vmem>>, vector<1x1x4x1xf32>
    %472 = vector.shape_cast %471 : vector<1x1x4x1xf32> to vector<4x1xf32>
    %473 = vector.shape_cast %472 : vector<4x1xf32> to vector<1x4x1xf32>
    %474 = vector.broadcast %470 : vector<2x1x400xf32> to vector<2x4x400xf32>
    %475 = vector.broadcast %473 : vector<1x4x1xf32> to vector<2x4x400xf32>
    %476 = arith.mulf %474, %475 : vector<2x4x400xf32>
    %477 = arith.addf %469, %476 : vector<2x4x400xf32>
    %c0_419 = arith.constant 0 : index
    %c2_420 = arith.constant 2 : index
    %c80_421 = arith.constant 80 : index
    %478 = vector.load %arg6[%c0_419, %c2_420, %c80_421] : memref<2x4x484xf32, #tpu.memory_space<vmem>>, vector<2x1x400xf32>
    %c0_422 = arith.constant 0 : index
    %c26 = arith.constant 26 : index
    %c0_423 = arith.constant 0 : index
    %c0_424 = arith.constant 0 : index
    %479 = vector.load %arg3[%c0_422, %c26, %c0_423, %c0_424] : memref<2x36x4x1xf32, #tpu.memory_space<vmem>>, vector<1x1x4x1xf32>
    %480 = vector.shape_cast %479 : vector<1x1x4x1xf32> to vector<4x1xf32>
    %481 = vector.shape_cast %480 : vector<4x1xf32> to vector<1x4x1xf32>
    %482 = vector.broadcast %478 : vector<2x1x400xf32> to vector<2x4x400xf32>
    %483 = vector.broadcast %481 : vector<1x4x1xf32> to vector<2x4x400xf32>
    %484 = arith.mulf %482, %483 : vector<2x4x400xf32>
    %485 = arith.addf %477, %484 : vector<2x4x400xf32>
    %c0_425 = arith.constant 0 : index
    %c3_426 = arith.constant 3 : index
    %c80_427 = arith.constant 80 : index
    %486 = vector.load %arg6[%c0_425, %c3_426, %c80_427] : memref<2x4x484xf32, #tpu.memory_space<vmem>>, vector<2x1x400xf32>
    %c0_428 = arith.constant 0 : index
    %c27 = arith.constant 27 : index
    %c0_429 = arith.constant 0 : index
    %c0_430 = arith.constant 0 : index
    %487 = vector.load %arg3[%c0_428, %c27, %c0_429, %c0_430] : memref<2x36x4x1xf32, #tpu.memory_space<vmem>>, vector<1x1x4x1xf32>
    %488 = vector.shape_cast %487 : vector<1x1x4x1xf32> to vector<4x1xf32>
    %489 = vector.shape_cast %488 : vector<4x1xf32> to vector<1x4x1xf32>
    %490 = vector.broadcast %486 : vector<2x1x400xf32> to vector<2x4x400xf32>
    %491 = vector.broadcast %489 : vector<1x4x1xf32> to vector<2x4x400xf32>
    %492 = arith.mulf %490, %491 : vector<2x4x400xf32>
    %493 = arith.addf %485, %492 : vector<2x4x400xf32>
    %c0_431 = arith.constant 0 : index
    %c0_432 = arith.constant 0 : index
    %c82 = arith.constant 82 : index
    %494 = vector.load %arg6[%c0_431, %c0_432, %c82] : memref<2x4x484xf32, #tpu.memory_space<vmem>>, vector<2x1x400xf32>
    %c0_433 = arith.constant 0 : index
    %c28 = arith.constant 28 : index
    %c0_434 = arith.constant 0 : index
    %c0_435 = arith.constant 0 : index
    %495 = vector.load %arg3[%c0_433, %c28, %c0_434, %c0_435] : memref<2x36x4x1xf32, #tpu.memory_space<vmem>>, vector<1x1x4x1xf32>
    %496 = vector.shape_cast %495 : vector<1x1x4x1xf32> to vector<4x1xf32>
    %497 = vector.shape_cast %496 : vector<4x1xf32> to vector<1x4x1xf32>
    %498 = vector.broadcast %494 : vector<2x1x400xf32> to vector<2x4x400xf32>
    %499 = vector.broadcast %497 : vector<1x4x1xf32> to vector<2x4x400xf32>
    %500 = arith.mulf %498, %499 : vector<2x4x400xf32>
    %501 = arith.addf %493, %500 : vector<2x4x400xf32>
    %c0_436 = arith.constant 0 : index
    %c1_437 = arith.constant 1 : index
    %c82_438 = arith.constant 82 : index
    %502 = vector.load %arg6[%c0_436, %c1_437, %c82_438] : memref<2x4x484xf32, #tpu.memory_space<vmem>>, vector<2x1x400xf32>
    %c0_439 = arith.constant 0 : index
    %c29 = arith.constant 29 : index
    %c0_440 = arith.constant 0 : index
    %c0_441 = arith.constant 0 : index
    %503 = vector.load %arg3[%c0_439, %c29, %c0_440, %c0_441] : memref<2x36x4x1xf32, #tpu.memory_space<vmem>>, vector<1x1x4x1xf32>
    %504 = vector.shape_cast %503 : vector<1x1x4x1xf32> to vector<4x1xf32>
    %505 = vector.shape_cast %504 : vector<4x1xf32> to vector<1x4x1xf32>
    %506 = vector.broadcast %502 : vector<2x1x400xf32> to vector<2x4x400xf32>
    %507 = vector.broadcast %505 : vector<1x4x1xf32> to vector<2x4x400xf32>
    %508 = arith.mulf %506, %507 : vector<2x4x400xf32>
    %509 = arith.addf %501, %508 : vector<2x4x400xf32>
    %c0_442 = arith.constant 0 : index
    %c2_443 = arith.constant 2 : index
    %c82_444 = arith.constant 82 : index
    %510 = vector.load %arg6[%c0_442, %c2_443, %c82_444] : memref<2x4x484xf32, #tpu.memory_space<vmem>>, vector<2x1x400xf32>
    %c0_445 = arith.constant 0 : index
    %c30 = arith.constant 30 : index
    %c0_446 = arith.constant 0 : index
    %c0_447 = arith.constant 0 : index
    %511 = vector.load %arg3[%c0_445, %c30, %c0_446, %c0_447] : memref<2x36x4x1xf32, #tpu.memory_space<vmem>>, vector<1x1x4x1xf32>
    %512 = vector.shape_cast %511 : vector<1x1x4x1xf32> to vector<4x1xf32>
    %513 = vector.shape_cast %512 : vector<4x1xf32> to vector<1x4x1xf32>
    %514 = vector.broadcast %510 : vector<2x1x400xf32> to vector<2x4x400xf32>
    %515 = vector.broadcast %513 : vector<1x4x1xf32> to vector<2x4x400xf32>
    %516 = arith.mulf %514, %515 : vector<2x4x400xf32>
    %517 = arith.addf %509, %516 : vector<2x4x400xf32>
    %c0_448 = arith.constant 0 : index
    %c3_449 = arith.constant 3 : index
    %c82_450 = arith.constant 82 : index
    %518 = vector.load %arg6[%c0_448, %c3_449, %c82_450] : memref<2x4x484xf32, #tpu.memory_space<vmem>>, vector<2x1x400xf32>
    %c0_451 = arith.constant 0 : index
    %c31 = arith.constant 31 : index
    %c0_452 = arith.constant 0 : index
    %c0_453 = arith.constant 0 : index
    %519 = vector.load %arg3[%c0_451, %c31, %c0_452, %c0_453] : memref<2x36x4x1xf32, #tpu.memory_space<vmem>>, vector<1x1x4x1xf32>
    %520 = vector.shape_cast %519 : vector<1x1x4x1xf32> to vector<4x1xf32>
    %521 = vector.shape_cast %520 : vector<4x1xf32> to vector<1x4x1xf32>
    %522 = vector.broadcast %518 : vector<2x1x400xf32> to vector<2x4x400xf32>
    %523 = vector.broadcast %521 : vector<1x4x1xf32> to vector<2x4x400xf32>
    %524 = arith.mulf %522, %523 : vector<2x4x400xf32>
    %525 = arith.addf %517, %524 : vector<2x4x400xf32>
    %c0_454 = arith.constant 0 : index
    %c0_455 = arith.constant 0 : index
    %c84 = arith.constant 84 : index
    %526 = vector.load %arg6[%c0_454, %c0_455, %c84] : memref<2x4x484xf32, #tpu.memory_space<vmem>>, vector<2x1x400xf32>
    %c0_456 = arith.constant 0 : index
    %c32 = arith.constant 32 : index
    %c0_457 = arith.constant 0 : index
    %c0_458 = arith.constant 0 : index
    %527 = vector.load %arg3[%c0_456, %c32, %c0_457, %c0_458] : memref<2x36x4x1xf32, #tpu.memory_space<vmem>>, vector<1x1x4x1xf32>
    %528 = vector.shape_cast %527 : vector<1x1x4x1xf32> to vector<4x1xf32>
    %529 = vector.shape_cast %528 : vector<4x1xf32> to vector<1x4x1xf32>
    %530 = vector.broadcast %526 : vector<2x1x400xf32> to vector<2x4x400xf32>
    %531 = vector.broadcast %529 : vector<1x4x1xf32> to vector<2x4x400xf32>
    %532 = arith.mulf %530, %531 : vector<2x4x400xf32>
    %533 = arith.addf %525, %532 : vector<2x4x400xf32>
    %c0_459 = arith.constant 0 : index
    %c1_460 = arith.constant 1 : index
    %c84_461 = arith.constant 84 : index
    %534 = vector.load %arg6[%c0_459, %c1_460, %c84_461] : memref<2x4x484xf32, #tpu.memory_space<vmem>>, vector<2x1x400xf32>
    %c0_462 = arith.constant 0 : index
    %c33 = arith.constant 33 : index
    %c0_463 = arith.constant 0 : index
    %c0_464 = arith.constant 0 : index
    %535 = vector.load %arg3[%c0_462, %c33, %c0_463, %c0_464] : memref<2x36x4x1xf32, #tpu.memory_space<vmem>>, vector<1x1x4x1xf32>
    %536 = vector.shape_cast %535 : vector<1x1x4x1xf32> to vector<4x1xf32>
    %537 = vector.shape_cast %536 : vector<4x1xf32> to vector<1x4x1xf32>
    %538 = vector.broadcast %534 : vector<2x1x400xf32> to vector<2x4x400xf32>
    %539 = vector.broadcast %537 : vector<1x4x1xf32> to vector<2x4x400xf32>
    %540 = arith.mulf %538, %539 : vector<2x4x400xf32>
    %541 = arith.addf %533, %540 : vector<2x4x400xf32>
    %c0_465 = arith.constant 0 : index
    %c2_466 = arith.constant 2 : index
    %c84_467 = arith.constant 84 : index
    %542 = vector.load %arg6[%c0_465, %c2_466, %c84_467] : memref<2x4x484xf32, #tpu.memory_space<vmem>>, vector<2x1x400xf32>
    %c0_468 = arith.constant 0 : index
    %c34 = arith.constant 34 : index
    %c0_469 = arith.constant 0 : index
    %c0_470 = arith.constant 0 : index
    %543 = vector.load %arg3[%c0_468, %c34, %c0_469, %c0_470] : memref<2x36x4x1xf32, #tpu.memory_space<vmem>>, vector<1x1x4x1xf32>
    %544 = vector.shape_cast %543 : vector<1x1x4x1xf32> to vector<4x1xf32>
    %545 = vector.shape_cast %544 : vector<4x1xf32> to vector<1x4x1xf32>
    %546 = vector.broadcast %542 : vector<2x1x400xf32> to vector<2x4x400xf32>
    %547 = vector.broadcast %545 : vector<1x4x1xf32> to vector<2x4x400xf32>
    %548 = arith.mulf %546, %547 : vector<2x4x400xf32>
    %549 = arith.addf %541, %548 : vector<2x4x400xf32>
    %c0_471 = arith.constant 0 : index
    %c3_472 = arith.constant 3 : index
    %c84_473 = arith.constant 84 : index
    %550 = vector.load %arg6[%c0_471, %c3_472, %c84_473] : memref<2x4x484xf32, #tpu.memory_space<vmem>>, vector<2x1x400xf32>
    %c0_474 = arith.constant 0 : index
    %c35 = arith.constant 35 : index
    %c0_475 = arith.constant 0 : index
    %c0_476 = arith.constant 0 : index
    %551 = vector.load %arg3[%c0_474, %c35, %c0_475, %c0_476] : memref<2x36x4x1xf32, #tpu.memory_space<vmem>>, vector<1x1x4x1xf32>
    %552 = vector.shape_cast %551 : vector<1x1x4x1xf32> to vector<4x1xf32>
    %553 = vector.shape_cast %552 : vector<4x1xf32> to vector<1x4x1xf32>
    %554 = vector.broadcast %550 : vector<2x1x400xf32> to vector<2x4x400xf32>
    %555 = vector.broadcast %553 : vector<1x4x1xf32> to vector<2x4x400xf32>
    %556 = arith.mulf %554, %555 : vector<2x4x400xf32>
    %557 = arith.addf %549, %556 : vector<2x4x400xf32>
    %c1_477 = arith.constant 1 : index
    %c0_478 = arith.constant 0 : index
    %c0_479 = arith.constant 0 : index
    %558 = vector.load %arg4[%c1_477, %c0_478, %c0_479] : memref<8x4x1xf32, #tpu.memory_space<vmem>>, vector<1x4x1xf32>
    %559 = vector.shape_cast %558 : vector<1x4x1xf32> to vector<4x1xf32>
    %560 = vector.shape_cast %559 : vector<4x1xf32> to vector<1x4x1xf32>
    %561 = vector.broadcast %560 : vector<1x4x1xf32> to vector<2x4x400xf32>
    %562 = arith.addf %557, %561 : vector<2x4x400xf32>
    %c4_480 = arith.constant 4 : index
    %c0_481 = arith.constant 0 : index
    %c0_482 = arith.constant 0 : index
    %563 = vector.load %arg4[%c4_480, %c0_481, %c0_482] : memref<8x4x1xf32, #tpu.memory_space<vmem>>, vector<1x4x1xf32>
    %564 = vector.shape_cast %563 : vector<1x4x1xf32> to vector<4x1xf32>
    %c5_483 = arith.constant 5 : index
    %c0_484 = arith.constant 0 : index
    %c0_485 = arith.constant 0 : index
    %565 = vector.load %arg4[%c5_483, %c0_484, %c0_485] : memref<8x4x1xf32, #tpu.memory_space<vmem>>, vector<1x4x1xf32>
    %566 = vector.shape_cast %565 : vector<1x4x1xf32> to vector<4x1xf32>
    %567 = vector.broadcast %0 : vector<1x1x400xf32> to vector<2x4x400xf32>
    %568 = arith.mulf %562, %567 : vector<2x4x400xf32>
    %cst_486 = arith.constant dense<0.000000e+00> : vector<4xf32>
    %569 = vector.multi_reduction <add>, %568, %cst_486 [0, 2] : vector<2x4x400xf32> to vector<4xf32>
    %570 = vector.shape_cast %569 : vector<4xf32> to vector<1x4x1xf32>
    %571 = arith.mulf %568, %568 : vector<2x4x400xf32>
    %cst_487 = arith.constant dense<0.000000e+00> : vector<4xf32>
    %572 = vector.multi_reduction <add>, %571, %cst_487 [0, 2] : vector<2x4x400xf32> to vector<4xf32>
    %573 = vector.shape_cast %572 : vector<4xf32> to vector<1x4x1xf32>
    %cst_488 = arith.constant 0.001953125 : f32
    %574 = vector.broadcast %cst_488 : f32 to vector<1x4x1xf32>
    %575 = arith.mulf %570, %574 : vector<1x4x1xf32>
    %cst_489 = arith.constant 0.001953125 : f32
    %576 = vector.broadcast %cst_489 : f32 to vector<1x4x1xf32>
    %577 = arith.mulf %573, %576 : vector<1x4x1xf32>
    %578 = arith.mulf %575, %575 : vector<1x4x1xf32>
    %579 = arith.subf %577, %578 : vector<1x4x1xf32>
    %580 = vector.broadcast %575 : vector<1x4x1xf32> to vector<2x4x400xf32>
    %581 = arith.subf %562, %580 : vector<2x4x400xf32>
    %cst_490 = arith.constant 9.99999974E-6 : f32
    %582 = vector.broadcast %cst_490 : f32 to vector<1x4x1xf32>
    %583 = arith.addf %579, %582 : vector<1x4x1xf32>
    %584 = math.rsqrt %583 : vector<1x4x1xf32>
    %585 = vector.broadcast %584 : vector<1x4x1xf32> to vector<2x4x400xf32>
    %586 = arith.mulf %581, %585 : vector<2x4x400xf32>
    %587 = vector.shape_cast %564 : vector<4x1xf32> to vector<1x4x1xf32>
    %588 = vector.broadcast %587 : vector<1x4x1xf32> to vector<2x4x400xf32>
    %589 = arith.mulf %586, %588 : vector<2x4x400xf32>
    %590 = vector.shape_cast %566 : vector<4x1xf32> to vector<1x4x1xf32>
    %591 = vector.broadcast %590 : vector<1x4x1xf32> to vector<2x4x400xf32>
    %592 = arith.addf %589, %591 : vector<2x4x400xf32>
    %cst_491 = arith.constant 0.000000e+00 : f32
    %593 = vector.broadcast %cst_491 : f32 to vector<2x4x400xf32>
    %594 = arith.maximumf %592, %593 : vector<2x4x400xf32>
    %595 = vector.broadcast %0 : vector<1x1x400xf32> to vector<2x4x400xf32>
    %596 = arith.mulf %594, %595 : vector<2x4x400xf32>
    %c0_492 = arith.constant 0 : index
    %c0_493 = arith.constant 0 : index
    %c42_494 = arith.constant 42 : index
    %597 = vector.load %arg6[%c0_492, %c0_493, %c42_494] : memref<2x4x484xf32, #tpu.memory_space<vmem>>, vector<2x4x400xf32>
    tpu.vector_store %arg6[%c0_492, %c0_493, %c42_494], %596 {strides = array<i32>} : memref<2x4x484xf32, #tpu.memory_space<vmem>>, vector<2x4x400xf32>,
    %cst_495 = arith.constant 0.000000e+00 : f32
    %598 = vector.broadcast %cst_495 : f32 to vector<2x1x400xf32>
    %c0_496 = arith.constant 0 : index
    %c0_497 = arith.constant 0 : index
    %c21_498 = arith.constant 21 : index
    %599 = vector.load %arg6[%c0_496, %c0_497, %c21_498] : memref<2x4x484xf32, #tpu.memory_space<vmem>>, vector<2x1x400xf32>
    %c1_499 = arith.constant 1 : index
    %c0_500 = arith.constant 0 : index
    %c0_501 = arith.constant 0 : index
    %c0_502 = arith.constant 0 : index
    %600 = vector.load %arg2[%c1_499, %c0_500, %c0_501, %c0_502] : memref<2x9x4x1xf32, #tpu.memory_space<vmem>>, vector<1x1x1x1xf32>
    %601 = vector.shape_cast %600 : vector<1x1x1x1xf32> to vector<1x1xf32>
    %602 = vector.shape_cast %601 : vector<1x1xf32> to vector<1x1x1xf32>
    %603 = vector.broadcast %602 : vector<1x1x1xf32> to vector<2x1x400xf32>
    %604 = arith.mulf %599, %603 : vector<2x1x400xf32>
    %605 = arith.addf %598, %604 : vector<2x1x400xf32>
    %c0_503 = arith.constant 0 : index
    %c1_504 = arith.constant 1 : index
    %c21_505 = arith.constant 21 : index
    %606 = vector.load %arg6[%c0_503, %c1_504, %c21_505] : memref<2x4x484xf32, #tpu.memory_space<vmem>>, vector<2x1x400xf32>
    %c1_506 = arith.constant 1 : index
    %c0_507 = arith.constant 0 : index
    %c1_508 = arith.constant 1 : index
    %c0_509 = arith.constant 0 : index
    %607 = vector.load %arg2[%c1_506, %c0_507, %c1_508, %c0_509] : memref<2x9x4x1xf32, #tpu.memory_space<vmem>>, vector<1x1x1x1xf32>
    %608 = vector.shape_cast %607 : vector<1x1x1x1xf32> to vector<1x1xf32>
    %609 = vector.shape_cast %608 : vector<1x1xf32> to vector<1x1x1xf32>
    %610 = vector.broadcast %609 : vector<1x1x1xf32> to vector<2x1x400xf32>
    %611 = arith.mulf %606, %610 : vector<2x1x400xf32>
    %612 = arith.addf %605, %611 : vector<2x1x400xf32>
    %c0_510 = arith.constant 0 : index
    %c2_511 = arith.constant 2 : index
    %c21_512 = arith.constant 21 : index
    %613 = vector.load %arg6[%c0_510, %c2_511, %c21_512] : memref<2x4x484xf32, #tpu.memory_space<vmem>>, vector<2x1x400xf32>
    %c1_513 = arith.constant 1 : index
    %c0_514 = arith.constant 0 : index
    %c2_515 = arith.constant 2 : index
    %c0_516 = arith.constant 0 : index
    %614 = vector.load %arg2[%c1_513, %c0_514, %c2_515, %c0_516] : memref<2x9x4x1xf32, #tpu.memory_space<vmem>>, vector<1x1x1x1xf32>
    %615 = vector.shape_cast %614 : vector<1x1x1x1xf32> to vector<1x1xf32>
    %616 = vector.shape_cast %615 : vector<1x1xf32> to vector<1x1x1xf32>
    %617 = vector.broadcast %616 : vector<1x1x1xf32> to vector<2x1x400xf32>
    %618 = arith.mulf %613, %617 : vector<2x1x400xf32>
    %619 = arith.addf %612, %618 : vector<2x1x400xf32>
    %c0_517 = arith.constant 0 : index
    %c3_518 = arith.constant 3 : index
    %c21_519 = arith.constant 21 : index
    %620 = vector.load %arg6[%c0_517, %c3_518, %c21_519] : memref<2x4x484xf32, #tpu.memory_space<vmem>>, vector<2x1x400xf32>
    %c1_520 = arith.constant 1 : index
    %c0_521 = arith.constant 0 : index
    %c3_522 = arith.constant 3 : index
    %c0_523 = arith.constant 0 : index
    %621 = vector.load %arg2[%c1_520, %c0_521, %c3_522, %c0_523] : memref<2x9x4x1xf32, #tpu.memory_space<vmem>>, vector<1x1x1x1xf32>
    %622 = vector.shape_cast %621 : vector<1x1x1x1xf32> to vector<1x1xf32>
    %623 = vector.shape_cast %622 : vector<1x1xf32> to vector<1x1x1xf32>
    %624 = vector.broadcast %623 : vector<1x1x1xf32> to vector<2x1x400xf32>
    %625 = arith.mulf %620, %624 : vector<2x1x400xf32>
    %626 = arith.addf %619, %625 : vector<2x1x400xf32>
    %c0_524 = arith.constant 0 : index
    %c0_525 = arith.constant 0 : index
    %c22_526 = arith.constant 22 : index
    %627 = vector.load %arg6[%c0_524, %c0_525, %c22_526] : memref<2x4x484xf32, #tpu.memory_space<vmem>>, vector<2x1x400xf32>
    %c1_527 = arith.constant 1 : index
    %c1_528 = arith.constant 1 : index
    %c0_529 = arith.constant 0 : index
    %c0_530 = arith.constant 0 : index
    %628 = vector.load %arg2[%c1_527, %c1_528, %c0_529, %c0_530] : memref<2x9x4x1xf32, #tpu.memory_space<vmem>>, vector<1x1x1x1xf32>
    %629 = vector.shape_cast %628 : vector<1x1x1x1xf32> to vector<1x1xf32>
    %630 = vector.shape_cast %629 : vector<1x1xf32> to vector<1x1x1xf32>
    %631 = vector.broadcast %630 : vector<1x1x1xf32> to vector<2x1x400xf32>
    %632 = arith.mulf %627, %631 : vector<2x1x400xf32>
    %633 = arith.addf %626, %632 : vector<2x1x400xf32>
    %c0_531 = arith.constant 0 : index
    %c1_532 = arith.constant 1 : index
    %c22_533 = arith.constant 22 : index
    %634 = vector.load %arg6[%c0_531, %c1_532, %c22_533] : memref<2x4x484xf32, #tpu.memory_space<vmem>>, vector<2x1x400xf32>
    %c1_534 = arith.constant 1 : index
    %c1_535 = arith.constant 1 : index
    %c1_536 = arith.constant 1 : index
    %c0_537 = arith.constant 0 : index
    %635 = vector.load %arg2[%c1_534, %c1_535, %c1_536, %c0_537] : memref<2x9x4x1xf32, #tpu.memory_space<vmem>>, vector<1x1x1x1xf32>
    %636 = vector.shape_cast %635 : vector<1x1x1x1xf32> to vector<1x1xf32>
    %637 = vector.shape_cast %636 : vector<1x1xf32> to vector<1x1x1xf32>
    %638 = vector.broadcast %637 : vector<1x1x1xf32> to vector<2x1x400xf32>
    %639 = arith.mulf %634, %638 : vector<2x1x400xf32>
    %640 = arith.addf %633, %639 : vector<2x1x400xf32>
    %c0_538 = arith.constant 0 : index
    %c2_539 = arith.constant 2 : index
    %c22_540 = arith.constant 22 : index
    %641 = vector.load %arg6[%c0_538, %c2_539, %c22_540] : memref<2x4x484xf32, #tpu.memory_space<vmem>>, vector<2x1x400xf32>
    %c1_541 = arith.constant 1 : index
    %c1_542 = arith.constant 1 : index
    %c2_543 = arith.constant 2 : index
    %c0_544 = arith.constant 0 : index
    %642 = vector.load %arg2[%c1_541, %c1_542, %c2_543, %c0_544] : memref<2x9x4x1xf32, #tpu.memory_space<vmem>>, vector<1x1x1x1xf32>
    %643 = vector.shape_cast %642 : vector<1x1x1x1xf32> to vector<1x1xf32>
    %644 = vector.shape_cast %643 : vector<1x1xf32> to vector<1x1x1xf32>
    %645 = vector.broadcast %644 : vector<1x1x1xf32> to vector<2x1x400xf32>
    %646 = arith.mulf %641, %645 : vector<2x1x400xf32>
    %647 = arith.addf %640, %646 : vector<2x1x400xf32>
    %c0_545 = arith.constant 0 : index
    %c3_546 = arith.constant 3 : index
    %c22_547 = arith.constant 22 : index
    %648 = vector.load %arg6[%c0_545, %c3_546, %c22_547] : memref<2x4x484xf32, #tpu.memory_space<vmem>>, vector<2x1x400xf32>
    %c1_548 = arith.constant 1 : index
    %c1_549 = arith.constant 1 : index
    %c3_550 = arith.constant 3 : index
    %c0_551 = arith.constant 0 : index
    %649 = vector.load %arg2[%c1_548, %c1_549, %c3_550, %c0_551] : memref<2x9x4x1xf32, #tpu.memory_space<vmem>>, vector<1x1x1x1xf32>
    %650 = vector.shape_cast %649 : vector<1x1x1x1xf32> to vector<1x1xf32>
    %651 = vector.shape_cast %650 : vector<1x1xf32> to vector<1x1x1xf32>
    %652 = vector.broadcast %651 : vector<1x1x1xf32> to vector<2x1x400xf32>
    %653 = arith.mulf %648, %652 : vector<2x1x400xf32>
    %654 = arith.addf %647, %653 : vector<2x1x400xf32>
    %c0_552 = arith.constant 0 : index
    %c0_553 = arith.constant 0 : index
    %c23_554 = arith.constant 23 : index
    %655 = vector.load %arg6[%c0_552, %c0_553, %c23_554] : memref<2x4x484xf32, #tpu.memory_space<vmem>>, vector<2x1x400xf32>
    %c1_555 = arith.constant 1 : index
    %c2_556 = arith.constant 2 : index
    %c0_557 = arith.constant 0 : index
    %c0_558 = arith.constant 0 : index
    %656 = vector.load %arg2[%c1_555, %c2_556, %c0_557, %c0_558] : memref<2x9x4x1xf32, #tpu.memory_space<vmem>>, vector<1x1x1x1xf32>
    %657 = vector.shape_cast %656 : vector<1x1x1x1xf32> to vector<1x1xf32>
    %658 = vector.shape_cast %657 : vector<1x1xf32> to vector<1x1x1xf32>
    %659 = vector.broadcast %658 : vector<1x1x1xf32> to vector<2x1x400xf32>
    %660 = arith.mulf %655, %659 : vector<2x1x400xf32>
    %661 = arith.addf %654, %660 : vector<2x1x400xf32>
    %c0_559 = arith.constant 0 : index
    %c1_560 = arith.constant 1 : index
    %c23_561 = arith.constant 23 : index
    %662 = vector.load %arg6[%c0_559, %c1_560, %c23_561] : memref<2x4x484xf32, #tpu.memory_space<vmem>>, vector<2x1x400xf32>
    %c1_562 = arith.constant 1 : index
    %c2_563 = arith.constant 2 : index
    %c1_564 = arith.constant 1 : index
    %c0_565 = arith.constant 0 : index
    %663 = vector.load %arg2[%c1_562, %c2_563, %c1_564, %c0_565] : memref<2x9x4x1xf32, #tpu.memory_space<vmem>>, vector<1x1x1x1xf32>
    %664 = vector.shape_cast %663 : vector<1x1x1x1xf32> to vector<1x1xf32>
    %665 = vector.shape_cast %664 : vector<1x1xf32> to vector<1x1x1xf32>
    %666 = vector.broadcast %665 : vector<1x1x1xf32> to vector<2x1x400xf32>
    %667 = arith.mulf %662, %666 : vector<2x1x400xf32>
    %668 = arith.addf %661, %667 : vector<2x1x400xf32>
    %c0_566 = arith.constant 0 : index
    %c2_567 = arith.constant 2 : index
    %c23_568 = arith.constant 23 : index
    %669 = vector.load %arg6[%c0_566, %c2_567, %c23_568] : memref<2x4x484xf32, #tpu.memory_space<vmem>>, vector<2x1x400xf32>
    %c1_569 = arith.constant 1 : index
    %c2_570 = arith.constant 2 : index
    %c2_571 = arith.constant 2 : index
    %c0_572 = arith.constant 0 : index
    %670 = vector.load %arg2[%c1_569, %c2_570, %c2_571, %c0_572] : memref<2x9x4x1xf32, #tpu.memory_space<vmem>>, vector<1x1x1x1xf32>
    %671 = vector.shape_cast %670 : vector<1x1x1x1xf32> to vector<1x1xf32>
    %672 = vector.shape_cast %671 : vector<1x1xf32> to vector<1x1x1xf32>
    %673 = vector.broadcast %672 : vector<1x1x1xf32> to vector<2x1x400xf32>
    %674 = arith.mulf %669, %673 : vector<2x1x400xf32>
    %675 = arith.addf %668, %674 : vector<2x1x400xf32>
    %c0_573 = arith.constant 0 : index
    %c3_574 = arith.constant 3 : index
    %c23_575 = arith.constant 23 : index
    %676 = vector.load %arg6[%c0_573, %c3_574, %c23_575] : memref<2x4x484xf32, #tpu.memory_space<vmem>>, vector<2x1x400xf32>
    %c1_576 = arith.constant 1 : index
    %c2_577 = arith.constant 2 : index
    %c3_578 = arith.constant 3 : index
    %c0_579 = arith.constant 0 : index
    %677 = vector.load %arg2[%c1_576, %c2_577, %c3_578, %c0_579] : memref<2x9x4x1xf32, #tpu.memory_space<vmem>>, vector<1x1x1x1xf32>
    %678 = vector.shape_cast %677 : vector<1x1x1x1xf32> to vector<1x1xf32>
    %679 = vector.shape_cast %678 : vector<1x1xf32> to vector<1x1x1xf32>
    %680 = vector.broadcast %679 : vector<1x1x1xf32> to vector<2x1x400xf32>
    %681 = arith.mulf %676, %680 : vector<2x1x400xf32>
    %682 = arith.addf %675, %681 : vector<2x1x400xf32>
    %c0_580 = arith.constant 0 : index
    %c0_581 = arith.constant 0 : index
    %c41_582 = arith.constant 41 : index
    %683 = vector.load %arg6[%c0_580, %c0_581, %c41_582] : memref<2x4x484xf32, #tpu.memory_space<vmem>>, vector<2x1x400xf32>
    %c1_583 = arith.constant 1 : index
    %c3_584 = arith.constant 3 : index
    %c0_585 = arith.constant 0 : index
    %c0_586 = arith.constant 0 : index
    %684 = vector.load %arg2[%c1_583, %c3_584, %c0_585, %c0_586] : memref<2x9x4x1xf32, #tpu.memory_space<vmem>>, vector<1x1x1x1xf32>
    %685 = vector.shape_cast %684 : vector<1x1x1x1xf32> to vector<1x1xf32>
    %686 = vector.shape_cast %685 : vector<1x1xf32> to vector<1x1x1xf32>
    %687 = vector.broadcast %686 : vector<1x1x1xf32> to vector<2x1x400xf32>
    %688 = arith.mulf %683, %687 : vector<2x1x400xf32>
    %689 = arith.addf %682, %688 : vector<2x1x400xf32>
    %c0_587 = arith.constant 0 : index
    %c1_588 = arith.constant 1 : index
    %c41_589 = arith.constant 41 : index
    %690 = vector.load %arg6[%c0_587, %c1_588, %c41_589] : memref<2x4x484xf32, #tpu.memory_space<vmem>>, vector<2x1x400xf32>
    %c1_590 = arith.constant 1 : index
    %c3_591 = arith.constant 3 : index
    %c1_592 = arith.constant 1 : index
    %c0_593 = arith.constant 0 : index
    %691 = vector.load %arg2[%c1_590, %c3_591, %c1_592, %c0_593] : memref<2x9x4x1xf32, #tpu.memory_space<vmem>>, vector<1x1x1x1xf32>
    %692 = vector.shape_cast %691 : vector<1x1x1x1xf32> to vector<1x1xf32>
    %693 = vector.shape_cast %692 : vector<1x1xf32> to vector<1x1x1xf32>
    %694 = vector.broadcast %693 : vector<1x1x1xf32> to vector<2x1x400xf32>
    %695 = arith.mulf %690, %694 : vector<2x1x400xf32>
    %696 = arith.addf %689, %695 : vector<2x1x400xf32>
    %c0_594 = arith.constant 0 : index
    %c2_595 = arith.constant 2 : index
    %c41_596 = arith.constant 41 : index
    %697 = vector.load %arg6[%c0_594, %c2_595, %c41_596] : memref<2x4x484xf32, #tpu.memory_space<vmem>>, vector<2x1x400xf32>
    %c1_597 = arith.constant 1 : index
    %c3_598 = arith.constant 3 : index
    %c2_599 = arith.constant 2 : index
    %c0_600 = arith.constant 0 : index
    %698 = vector.load %arg2[%c1_597, %c3_598, %c2_599, %c0_600] : memref<2x9x4x1xf32, #tpu.memory_space<vmem>>, vector<1x1x1x1xf32>
    %699 = vector.shape_cast %698 : vector<1x1x1x1xf32> to vector<1x1xf32>
    %700 = vector.shape_cast %699 : vector<1x1xf32> to vector<1x1x1xf32>
    %701 = vector.broadcast %700 : vector<1x1x1xf32> to vector<2x1x400xf32>
    %702 = arith.mulf %697, %701 : vector<2x1x400xf32>
    %703 = arith.addf %696, %702 : vector<2x1x400xf32>
    %c0_601 = arith.constant 0 : index
    %c3_602 = arith.constant 3 : index
    %c41_603 = arith.constant 41 : index
    %704 = vector.load %arg6[%c0_601, %c3_602, %c41_603] : memref<2x4x484xf32, #tpu.memory_space<vmem>>, vector<2x1x400xf32>
    %c1_604 = arith.constant 1 : index
    %c3_605 = arith.constant 3 : index
    %c3_606 = arith.constant 3 : index
    %c0_607 = arith.constant 0 : index
    %705 = vector.load %arg2[%c1_604, %c3_605, %c3_606, %c0_607] : memref<2x9x4x1xf32, #tpu.memory_space<vmem>>, vector<1x1x1x1xf32>
    %706 = vector.shape_cast %705 : vector<1x1x1x1xf32> to vector<1x1xf32>
    %707 = vector.shape_cast %706 : vector<1x1xf32> to vector<1x1x1xf32>
    %708 = vector.broadcast %707 : vector<1x1x1xf32> to vector<2x1x400xf32>
    %709 = arith.mulf %704, %708 : vector<2x1x400xf32>
    %710 = arith.addf %703, %709 : vector<2x1x400xf32>
    %c0_608 = arith.constant 0 : index
    %c0_609 = arith.constant 0 : index
    %c42_610 = arith.constant 42 : index
    %711 = vector.load %arg6[%c0_608, %c0_609, %c42_610] : memref<2x4x484xf32, #tpu.memory_space<vmem>>, vector<2x1x400xf32>
    %c1_611 = arith.constant 1 : index
    %c4_612 = arith.constant 4 : index
    %c0_613 = arith.constant 0 : index
    %c0_614 = arith.constant 0 : index
    %712 = vector.load %arg2[%c1_611, %c4_612, %c0_613, %c0_614] : memref<2x9x4x1xf32, #tpu.memory_space<vmem>>, vector<1x1x1x1xf32>
    %713 = vector.shape_cast %712 : vector<1x1x1x1xf32> to vector<1x1xf32>
    %714 = vector.shape_cast %713 : vector<1x1xf32> to vector<1x1x1xf32>
    %715 = vector.broadcast %714 : vector<1x1x1xf32> to vector<2x1x400xf32>
    %716 = arith.mulf %711, %715 : vector<2x1x400xf32>
    %717 = arith.addf %710, %716 : vector<2x1x400xf32>
    %c0_615 = arith.constant 0 : index
    %c1_616 = arith.constant 1 : index
    %c42_617 = arith.constant 42 : index
    %718 = vector.load %arg6[%c0_615, %c1_616, %c42_617] : memref<2x4x484xf32, #tpu.memory_space<vmem>>, vector<2x1x400xf32>
    %c1_618 = arith.constant 1 : index
    %c4_619 = arith.constant 4 : index
    %c1_620 = arith.constant 1 : index
    %c0_621 = arith.constant 0 : index
    %719 = vector.load %arg2[%c1_618, %c4_619, %c1_620, %c0_621] : memref<2x9x4x1xf32, #tpu.memory_space<vmem>>, vector<1x1x1x1xf32>
    %720 = vector.shape_cast %719 : vector<1x1x1x1xf32> to vector<1x1xf32>
    %721 = vector.shape_cast %720 : vector<1x1xf32> to vector<1x1x1xf32>
    %722 = vector.broadcast %721 : vector<1x1x1xf32> to vector<2x1x400xf32>
    %723 = arith.mulf %718, %722 : vector<2x1x400xf32>
    %724 = arith.addf %717, %723 : vector<2x1x400xf32>
    %c0_622 = arith.constant 0 : index
    %c2_623 = arith.constant 2 : index
    %c42_624 = arith.constant 42 : index
    %725 = vector.load %arg6[%c0_622, %c2_623, %c42_624] : memref<2x4x484xf32, #tpu.memory_space<vmem>>, vector<2x1x400xf32>
    %c1_625 = arith.constant 1 : index
    %c4_626 = arith.constant 4 : index
    %c2_627 = arith.constant 2 : index
    %c0_628 = arith.constant 0 : index
    %726 = vector.load %arg2[%c1_625, %c4_626, %c2_627, %c0_628] : memref<2x9x4x1xf32, #tpu.memory_space<vmem>>, vector<1x1x1x1xf32>
    %727 = vector.shape_cast %726 : vector<1x1x1x1xf32> to vector<1x1xf32>
    %728 = vector.shape_cast %727 : vector<1x1xf32> to vector<1x1x1xf32>
    %729 = vector.broadcast %728 : vector<1x1x1xf32> to vector<2x1x400xf32>
    %730 = arith.mulf %725, %729 : vector<2x1x400xf32>
    %731 = arith.addf %724, %730 : vector<2x1x400xf32>
    %c0_629 = arith.constant 0 : index
    %c3_630 = arith.constant 3 : index
    %c42_631 = arith.constant 42 : index
    %732 = vector.load %arg6[%c0_629, %c3_630, %c42_631] : memref<2x4x484xf32, #tpu.memory_space<vmem>>, vector<2x1x400xf32>
    %c1_632 = arith.constant 1 : index
    %c4_633 = arith.constant 4 : index
    %c3_634 = arith.constant 3 : index
    %c0_635 = arith.constant 0 : index
    %733 = vector.load %arg2[%c1_632, %c4_633, %c3_634, %c0_635] : memref<2x9x4x1xf32, #tpu.memory_space<vmem>>, vector<1x1x1x1xf32>
    %734 = vector.shape_cast %733 : vector<1x1x1x1xf32> to vector<1x1xf32>
    %735 = vector.shape_cast %734 : vector<1x1xf32> to vector<1x1x1xf32>
    %736 = vector.broadcast %735 : vector<1x1x1xf32> to vector<2x1x400xf32>
    %737 = arith.mulf %732, %736 : vector<2x1x400xf32>
    %738 = arith.addf %731, %737 : vector<2x1x400xf32>
    %c0_636 = arith.constant 0 : index
    %c0_637 = arith.constant 0 : index
    %c43_638 = arith.constant 43 : index
    %739 = vector.load %arg6[%c0_636, %c0_637, %c43_638] : memref<2x4x484xf32, #tpu.memory_space<vmem>>, vector<2x1x400xf32>
    %c1_639 = arith.constant 1 : index
    %c5_640 = arith.constant 5 : index
    %c0_641 = arith.constant 0 : index
    %c0_642 = arith.constant 0 : index
    %740 = vector.load %arg2[%c1_639, %c5_640, %c0_641, %c0_642] : memref<2x9x4x1xf32, #tpu.memory_space<vmem>>, vector<1x1x1x1xf32>
    %741 = vector.shape_cast %740 : vector<1x1x1x1xf32> to vector<1x1xf32>
    %742 = vector.shape_cast %741 : vector<1x1xf32> to vector<1x1x1xf32>
    %743 = vector.broadcast %742 : vector<1x1x1xf32> to vector<2x1x400xf32>
    %744 = arith.mulf %739, %743 : vector<2x1x400xf32>
    %745 = arith.addf %738, %744 : vector<2x1x400xf32>
    %c0_643 = arith.constant 0 : index
    %c1_644 = arith.constant 1 : index
    %c43_645 = arith.constant 43 : index
    %746 = vector.load %arg6[%c0_643, %c1_644, %c43_645] : memref<2x4x484xf32, #tpu.memory_space<vmem>>, vector<2x1x400xf32>
    %c1_646 = arith.constant 1 : index
    %c5_647 = arith.constant 5 : index
    %c1_648 = arith.constant 1 : index
    %c0_649 = arith.constant 0 : index
    %747 = vector.load %arg2[%c1_646, %c5_647, %c1_648, %c0_649] : memref<2x9x4x1xf32, #tpu.memory_space<vmem>>, vector<1x1x1x1xf32>
    %748 = vector.shape_cast %747 : vector<1x1x1x1xf32> to vector<1x1xf32>
    %749 = vector.shape_cast %748 : vector<1x1xf32> to vector<1x1x1xf32>
    %750 = vector.broadcast %749 : vector<1x1x1xf32> to vector<2x1x400xf32>
    %751 = arith.mulf %746, %750 : vector<2x1x400xf32>
    %752 = arith.addf %745, %751 : vector<2x1x400xf32>
    %c0_650 = arith.constant 0 : index
    %c2_651 = arith.constant 2 : index
    %c43_652 = arith.constant 43 : index
    %753 = vector.load %arg6[%c0_650, %c2_651, %c43_652] : memref<2x4x484xf32, #tpu.memory_space<vmem>>, vector<2x1x400xf32>
    %c1_653 = arith.constant 1 : index
    %c5_654 = arith.constant 5 : index
    %c2_655 = arith.constant 2 : index
    %c0_656 = arith.constant 0 : index
    %754 = vector.load %arg2[%c1_653, %c5_654, %c2_655, %c0_656] : memref<2x9x4x1xf32, #tpu.memory_space<vmem>>, vector<1x1x1x1xf32>
    %755 = vector.shape_cast %754 : vector<1x1x1x1xf32> to vector<1x1xf32>
    %756 = vector.shape_cast %755 : vector<1x1xf32> to vector<1x1x1xf32>
    %757 = vector.broadcast %756 : vector<1x1x1xf32> to vector<2x1x400xf32>
    %758 = arith.mulf %753, %757 : vector<2x1x400xf32>
    %759 = arith.addf %752, %758 : vector<2x1x400xf32>
    %c0_657 = arith.constant 0 : index
    %c3_658 = arith.constant 3 : index
    %c43_659 = arith.constant 43 : index
    %760 = vector.load %arg6[%c0_657, %c3_658, %c43_659] : memref<2x4x484xf32, #tpu.memory_space<vmem>>, vector<2x1x400xf32>
    %c1_660 = arith.constant 1 : index
    %c5_661 = arith.constant 5 : index
    %c3_662 = arith.constant 3 : index
    %c0_663 = arith.constant 0 : index
    %761 = vector.load %arg2[%c1_660, %c5_661, %c3_662, %c0_663] : memref<2x9x4x1xf32, #tpu.memory_space<vmem>>, vector<1x1x1x1xf32>
    %762 = vector.shape_cast %761 : vector<1x1x1x1xf32> to vector<1x1xf32>
    %763 = vector.shape_cast %762 : vector<1x1xf32> to vector<1x1x1xf32>
    %764 = vector.broadcast %763 : vector<1x1x1xf32> to vector<2x1x400xf32>
    %765 = arith.mulf %760, %764 : vector<2x1x400xf32>
    %766 = arith.addf %759, %765 : vector<2x1x400xf32>
    %c0_664 = arith.constant 0 : index
    %c0_665 = arith.constant 0 : index
    %c61_666 = arith.constant 61 : index
    %767 = vector.load %arg6[%c0_664, %c0_665, %c61_666] : memref<2x4x484xf32, #tpu.memory_space<vmem>>, vector<2x1x400xf32>
    %c1_667 = arith.constant 1 : index
    %c6_668 = arith.constant 6 : index
    %c0_669 = arith.constant 0 : index
    %c0_670 = arith.constant 0 : index
    %768 = vector.load %arg2[%c1_667, %c6_668, %c0_669, %c0_670] : memref<2x9x4x1xf32, #tpu.memory_space<vmem>>, vector<1x1x1x1xf32>
    %769 = vector.shape_cast %768 : vector<1x1x1x1xf32> to vector<1x1xf32>
    %770 = vector.shape_cast %769 : vector<1x1xf32> to vector<1x1x1xf32>
    %771 = vector.broadcast %770 : vector<1x1x1xf32> to vector<2x1x400xf32>
    %772 = arith.mulf %767, %771 : vector<2x1x400xf32>
    %773 = arith.addf %766, %772 : vector<2x1x400xf32>
    %c0_671 = arith.constant 0 : index
    %c1_672 = arith.constant 1 : index
    %c61_673 = arith.constant 61 : index
    %774 = vector.load %arg6[%c0_671, %c1_672, %c61_673] : memref<2x4x484xf32, #tpu.memory_space<vmem>>, vector<2x1x400xf32>
    %c1_674 = arith.constant 1 : index
    %c6_675 = arith.constant 6 : index
    %c1_676 = arith.constant 1 : index
    %c0_677 = arith.constant 0 : index
    %775 = vector.load %arg2[%c1_674, %c6_675, %c1_676, %c0_677] : memref<2x9x4x1xf32, #tpu.memory_space<vmem>>, vector<1x1x1x1xf32>
    %776 = vector.shape_cast %775 : vector<1x1x1x1xf32> to vector<1x1xf32>
    %777 = vector.shape_cast %776 : vector<1x1xf32> to vector<1x1x1xf32>
    %778 = vector.broadcast %777 : vector<1x1x1xf32> to vector<2x1x400xf32>
    %779 = arith.mulf %774, %778 : vector<2x1x400xf32>
    %780 = arith.addf %773, %779 : vector<2x1x400xf32>
    %c0_678 = arith.constant 0 : index
    %c2_679 = arith.constant 2 : index
    %c61_680 = arith.constant 61 : index
    %781 = vector.load %arg6[%c0_678, %c2_679, %c61_680] : memref<2x4x484xf32, #tpu.memory_space<vmem>>, vector<2x1x400xf32>
    %c1_681 = arith.constant 1 : index
    %c6_682 = arith.constant 6 : index
    %c2_683 = arith.constant 2 : index
    %c0_684 = arith.constant 0 : index
    %782 = vector.load %arg2[%c1_681, %c6_682, %c2_683, %c0_684] : memref<2x9x4x1xf32, #tpu.memory_space<vmem>>, vector<1x1x1x1xf32>
    %783 = vector.shape_cast %782 : vector<1x1x1x1xf32> to vector<1x1xf32>
    %784 = vector.shape_cast %783 : vector<1x1xf32> to vector<1x1x1xf32>
    %785 = vector.broadcast %784 : vector<1x1x1xf32> to vector<2x1x400xf32>
    %786 = arith.mulf %781, %785 : vector<2x1x400xf32>
    %787 = arith.addf %780, %786 : vector<2x1x400xf32>
    %c0_685 = arith.constant 0 : index
    %c3_686 = arith.constant 3 : index
    %c61_687 = arith.constant 61 : index
    %788 = vector.load %arg6[%c0_685, %c3_686, %c61_687] : memref<2x4x484xf32, #tpu.memory_space<vmem>>, vector<2x1x400xf32>
    %c1_688 = arith.constant 1 : index
    %c6_689 = arith.constant 6 : index
    %c3_690 = arith.constant 3 : index
    %c0_691 = arith.constant 0 : index
    %789 = vector.load %arg2[%c1_688, %c6_689, %c3_690, %c0_691] : memref<2x9x4x1xf32, #tpu.memory_space<vmem>>, vector<1x1x1x1xf32>
    %790 = vector.shape_cast %789 : vector<1x1x1x1xf32> to vector<1x1xf32>
    %791 = vector.shape_cast %790 : vector<1x1xf32> to vector<1x1x1xf32>
    %792 = vector.broadcast %791 : vector<1x1x1xf32> to vector<2x1x400xf32>
    %793 = arith.mulf %788, %792 : vector<2x1x400xf32>
    %794 = arith.addf %787, %793 : vector<2x1x400xf32>
    %c0_692 = arith.constant 0 : index
    %c0_693 = arith.constant 0 : index
    %c62_694 = arith.constant 62 : index
    %795 = vector.load %arg6[%c0_692, %c0_693, %c62_694] : memref<2x4x484xf32, #tpu.memory_space<vmem>>, vector<2x1x400xf32>
    %c1_695 = arith.constant 1 : index
    %c7_696 = arith.constant 7 : index
    %c0_697 = arith.constant 0 : index
    %c0_698 = arith.constant 0 : index
    %796 = vector.load %arg2[%c1_695, %c7_696, %c0_697, %c0_698] : memref<2x9x4x1xf32, #tpu.memory_space<vmem>>, vector<1x1x1x1xf32>
    %797 = vector.shape_cast %796 : vector<1x1x1x1xf32> to vector<1x1xf32>
    %798 = vector.shape_cast %797 : vector<1x1xf32> to vector<1x1x1xf32>
    %799 = vector.broadcast %798 : vector<1x1x1xf32> to vector<2x1x400xf32>
    %800 = arith.mulf %795, %799 : vector<2x1x400xf32>
    %801 = arith.addf %794, %800 : vector<2x1x400xf32>
    %c0_699 = arith.constant 0 : index
    %c1_700 = arith.constant 1 : index
    %c62_701 = arith.constant 62 : index
    %802 = vector.load %arg6[%c0_699, %c1_700, %c62_701] : memref<2x4x484xf32, #tpu.memory_space<vmem>>, vector<2x1x400xf32>
    %c1_702 = arith.constant 1 : index
    %c7_703 = arith.constant 7 : index
    %c1_704 = arith.constant 1 : index
    %c0_705 = arith.constant 0 : index
    %803 = vector.load %arg2[%c1_702, %c7_703, %c1_704, %c0_705] : memref<2x9x4x1xf32, #tpu.memory_space<vmem>>, vector<1x1x1x1xf32>
    %804 = vector.shape_cast %803 : vector<1x1x1x1xf32> to vector<1x1xf32>
    %805 = vector.shape_cast %804 : vector<1x1xf32> to vector<1x1x1xf32>
    %806 = vector.broadcast %805 : vector<1x1x1xf32> to vector<2x1x400xf32>
    %807 = arith.mulf %802, %806 : vector<2x1x400xf32>
    %808 = arith.addf %801, %807 : vector<2x1x400xf32>
    %c0_706 = arith.constant 0 : index
    %c2_707 = arith.constant 2 : index
    %c62_708 = arith.constant 62 : index
    %809 = vector.load %arg6[%c0_706, %c2_707, %c62_708] : memref<2x4x484xf32, #tpu.memory_space<vmem>>, vector<2x1x400xf32>
    %c1_709 = arith.constant 1 : index
    %c7_710 = arith.constant 7 : index
    %c2_711 = arith.constant 2 : index
    %c0_712 = arith.constant 0 : index
    %810 = vector.load %arg2[%c1_709, %c7_710, %c2_711, %c0_712] : memref<2x9x4x1xf32, #tpu.memory_space<vmem>>, vector<1x1x1x1xf32>
    %811 = vector.shape_cast %810 : vector<1x1x1x1xf32> to vector<1x1xf32>
    %812 = vector.shape_cast %811 : vector<1x1xf32> to vector<1x1x1xf32>
    %813 = vector.broadcast %812 : vector<1x1x1xf32> to vector<2x1x400xf32>
    %814 = arith.mulf %809, %813 : vector<2x1x400xf32>
    %815 = arith.addf %808, %814 : vector<2x1x400xf32>
    %c0_713 = arith.constant 0 : index
    %c3_714 = arith.constant 3 : index
    %c62_715 = arith.constant 62 : index
    %816 = vector.load %arg6[%c0_713, %c3_714, %c62_715] : memref<2x4x484xf32, #tpu.memory_space<vmem>>, vector<2x1x400xf32>
    %c1_716 = arith.constant 1 : index
    %c7_717 = arith.constant 7 : index
    %c3_718 = arith.constant 3 : index
    %c0_719 = arith.constant 0 : index
    %817 = vector.load %arg2[%c1_716, %c7_717, %c3_718, %c0_719] : memref<2x9x4x1xf32, #tpu.memory_space<vmem>>, vector<1x1x1x1xf32>
    %818 = vector.shape_cast %817 : vector<1x1x1x1xf32> to vector<1x1xf32>
    %819 = vector.shape_cast %818 : vector<1x1xf32> to vector<1x1x1xf32>
    %820 = vector.broadcast %819 : vector<1x1x1xf32> to vector<2x1x400xf32>
    %821 = arith.mulf %816, %820 : vector<2x1x400xf32>
    %822 = arith.addf %815, %821 : vector<2x1x400xf32>
    %c0_720 = arith.constant 0 : index
    %c0_721 = arith.constant 0 : index
    %c63_722 = arith.constant 63 : index
    %823 = vector.load %arg6[%c0_720, %c0_721, %c63_722] : memref<2x4x484xf32, #tpu.memory_space<vmem>>, vector<2x1x400xf32>
    %c1_723 = arith.constant 1 : index
    %c8_724 = arith.constant 8 : index
    %c0_725 = arith.constant 0 : index
    %c0_726 = arith.constant 0 : index
    %824 = vector.load %arg2[%c1_723, %c8_724, %c0_725, %c0_726] : memref<2x9x4x1xf32, #tpu.memory_space<vmem>>, vector<1x1x1x1xf32>
    %825 = vector.shape_cast %824 : vector<1x1x1x1xf32> to vector<1x1xf32>
    %826 = vector.shape_cast %825 : vector<1x1xf32> to vector<1x1x1xf32>
    %827 = vector.broadcast %826 : vector<1x1x1xf32> to vector<2x1x400xf32>
    %828 = arith.mulf %823, %827 : vector<2x1x400xf32>
    %829 = arith.addf %822, %828 : vector<2x1x400xf32>
    %c0_727 = arith.constant 0 : index
    %c1_728 = arith.constant 1 : index
    %c63_729 = arith.constant 63 : index
    %830 = vector.load %arg6[%c0_727, %c1_728, %c63_729] : memref<2x4x484xf32, #tpu.memory_space<vmem>>, vector<2x1x400xf32>
    %c1_730 = arith.constant 1 : index
    %c8_731 = arith.constant 8 : index
    %c1_732 = arith.constant 1 : index
    %c0_733 = arith.constant 0 : index
    %831 = vector.load %arg2[%c1_730, %c8_731, %c1_732, %c0_733] : memref<2x9x4x1xf32, #tpu.memory_space<vmem>>, vector<1x1x1x1xf32>
    %832 = vector.shape_cast %831 : vector<1x1x1x1xf32> to vector<1x1xf32>
    %833 = vector.shape_cast %832 : vector<1x1xf32> to vector<1x1x1xf32>
    %834 = vector.broadcast %833 : vector<1x1x1xf32> to vector<2x1x400xf32>
    %835 = arith.mulf %830, %834 : vector<2x1x400xf32>
    %836 = arith.addf %829, %835 : vector<2x1x400xf32>
    %c0_734 = arith.constant 0 : index
    %c2_735 = arith.constant 2 : index
    %c63_736 = arith.constant 63 : index
    %837 = vector.load %arg6[%c0_734, %c2_735, %c63_736] : memref<2x4x484xf32, #tpu.memory_space<vmem>>, vector<2x1x400xf32>
    %c1_737 = arith.constant 1 : index
    %c8_738 = arith.constant 8 : index
    %c2_739 = arith.constant 2 : index
    %c0_740 = arith.constant 0 : index
    %838 = vector.load %arg2[%c1_737, %c8_738, %c2_739, %c0_740] : memref<2x9x4x1xf32, #tpu.memory_space<vmem>>, vector<1x1x1x1xf32>
    %839 = vector.shape_cast %838 : vector<1x1x1x1xf32> to vector<1x1xf32>
    %840 = vector.shape_cast %839 : vector<1x1xf32> to vector<1x1x1xf32>
    %841 = vector.broadcast %840 : vector<1x1x1xf32> to vector<2x1x400xf32>
    %842 = arith.mulf %837, %841 : vector<2x1x400xf32>
    %843 = arith.addf %836, %842 : vector<2x1x400xf32>
    %c0_741 = arith.constant 0 : index
    %c3_742 = arith.constant 3 : index
    %c63_743 = arith.constant 63 : index
    %844 = vector.load %arg6[%c0_741, %c3_742, %c63_743] : memref<2x4x484xf32, #tpu.memory_space<vmem>>, vector<2x1x400xf32>
    %c1_744 = arith.constant 1 : index
    %c8_745 = arith.constant 8 : index
    %c3_746 = arith.constant 3 : index
    %c0_747 = arith.constant 0 : index
    %845 = vector.load %arg2[%c1_744, %c8_745, %c3_746, %c0_747] : memref<2x9x4x1xf32, #tpu.memory_space<vmem>>, vector<1x1x1x1xf32>
    %846 = vector.shape_cast %845 : vector<1x1x1x1xf32> to vector<1x1xf32>
    %847 = vector.shape_cast %846 : vector<1x1xf32> to vector<1x1x1xf32>
    %848 = vector.broadcast %847 : vector<1x1x1xf32> to vector<2x1x400xf32>
    %849 = arith.mulf %844, %848 : vector<2x1x400xf32>
    %850 = arith.addf %843, %849 : vector<2x1x400xf32>
    %c0_748 = arith.constant 0 : index
    %c0_749 = arith.constant 0 : index
    %c42_750 = arith.constant 42 : index
    %851 = vector.load %arg6[%c0_748, %c0_749, %c42_750] : memref<2x4x484xf32, #tpu.memory_space<vmem>>, vector<2x4x400xf32>
    %852 = vector.broadcast %850 : vector<2x1x400xf32> to vector<2x4x400xf32>
    %853 = arith.addf %851, %852 : vector<2x4x400xf32>
    %c2_751 = arith.constant 2 : index
    %c0_752 = arith.constant 0 : index
    %c0_753 = arith.constant 0 : index
    %854 = vector.load %arg4[%c2_751, %c0_752, %c0_753] : memref<8x4x1xf32, #tpu.memory_space<vmem>>, vector<1x4x1xf32>
    %855 = vector.shape_cast %854 : vector<1x4x1xf32> to vector<4x1xf32>
    %856 = vector.shape_cast %855 : vector<4x1xf32> to vector<1x4x1xf32>
    %857 = vector.broadcast %856 : vector<1x4x1xf32> to vector<2x4x400xf32>
    %858 = arith.addf %853, %857 : vector<2x4x400xf32>
    %859 = vector.broadcast %0 : vector<1x1x400xf32> to vector<2x4x400xf32>
    %860 = arith.mulf %858, %859 : vector<2x4x400xf32>
    %c0_754 = arith.constant 0 : index
    %c0_755 = arith.constant 0 : index
    %c42_756 = arith.constant 42 : index
    %861 = vector.load %arg6[%c0_754, %c0_755, %c42_756] : memref<2x4x484xf32, #tpu.memory_space<vmem>>, vector<2x4x400xf32>
    tpu.vector_store %arg6[%c0_754, %c0_755, %c42_756], %860 {strides = array<i32>} : memref<2x4x484xf32, #tpu.memory_space<vmem>>, vector<2x4x400xf32>,
    %cst_757 = arith.constant 0.000000e+00 : f32
    %862 = vector.broadcast %cst_757 : f32 to vector<2x4x400xf32>
    %c0_758 = arith.constant 0 : index
    %c0_759 = arith.constant 0 : index
    %c0_760 = arith.constant 0 : index
    %863 = vector.load %arg6[%c0_758, %c0_759, %c0_760] : memref<2x4x484xf32, #tpu.memory_space<vmem>>, vector<2x1x400xf32>
    %c1_761 = arith.constant 1 : index
    %c0_762 = arith.constant 0 : index
    %c0_763 = arith.constant 0 : index
    %c0_764 = arith.constant 0 : index
    %864 = vector.load %arg3[%c1_761, %c0_762, %c0_763, %c0_764] : memref<2x36x4x1xf32, #tpu.memory_space<vmem>>, vector<1x1x4x1xf32>
    %865 = vector.shape_cast %864 : vector<1x1x4x1xf32> to vector<4x1xf32>
    %866 = vector.shape_cast %865 : vector<4x1xf32> to vector<1x4x1xf32>
    %867 = vector.broadcast %863 : vector<2x1x400xf32> to vector<2x4x400xf32>
    %868 = vector.broadcast %866 : vector<1x4x1xf32> to vector<2x4x400xf32>
    %869 = arith.mulf %867, %868 : vector<2x4x400xf32>
    %870 = arith.addf %862, %869 : vector<2x4x400xf32>
    %c0_765 = arith.constant 0 : index
    %c1_766 = arith.constant 1 : index
    %c0_767 = arith.constant 0 : index
    %871 = vector.load %arg6[%c0_765, %c1_766, %c0_767] : memref<2x4x484xf32, #tpu.memory_space<vmem>>, vector<2x1x400xf32>
    %c1_768 = arith.constant 1 : index
    %c1_769 = arith.constant 1 : index
    %c0_770 = arith.constant 0 : index
    %c0_771 = arith.constant 0 : index
    %872 = vector.load %arg3[%c1_768, %c1_769, %c0_770, %c0_771] : memref<2x36x4x1xf32, #tpu.memory_space<vmem>>, vector<1x1x4x1xf32>
    %873 = vector.shape_cast %872 : vector<1x1x4x1xf32> to vector<4x1xf32>
    %874 = vector.shape_cast %873 : vector<4x1xf32> to vector<1x4x1xf32>
    %875 = vector.broadcast %871 : vector<2x1x400xf32> to vector<2x4x400xf32>
    %876 = vector.broadcast %874 : vector<1x4x1xf32> to vector<2x4x400xf32>
    %877 = arith.mulf %875, %876 : vector<2x4x400xf32>
    %878 = arith.addf %870, %877 : vector<2x4x400xf32>
    %c0_772 = arith.constant 0 : index
    %c2_773 = arith.constant 2 : index
    %c0_774 = arith.constant 0 : index
    %879 = vector.load %arg6[%c0_772, %c2_773, %c0_774] : memref<2x4x484xf32, #tpu.memory_space<vmem>>, vector<2x1x400xf32>
    %c1_775 = arith.constant 1 : index
    %c2_776 = arith.constant 2 : index
    %c0_777 = arith.constant 0 : index
    %c0_778 = arith.constant 0 : index
    %880 = vector.load %arg3[%c1_775, %c2_776, %c0_777, %c0_778] : memref<2x36x4x1xf32, #tpu.memory_space<vmem>>, vector<1x1x4x1xf32>
    %881 = vector.shape_cast %880 : vector<1x1x4x1xf32> to vector<4x1xf32>
    %882 = vector.shape_cast %881 : vector<4x1xf32> to vector<1x4x1xf32>
    %883 = vector.broadcast %879 : vector<2x1x400xf32> to vector<2x4x400xf32>
    %884 = vector.broadcast %882 : vector<1x4x1xf32> to vector<2x4x400xf32>
    %885 = arith.mulf %883, %884 : vector<2x4x400xf32>
    %886 = arith.addf %878, %885 : vector<2x4x400xf32>
    %c0_779 = arith.constant 0 : index
    %c3_780 = arith.constant 3 : index
    %c0_781 = arith.constant 0 : index
    %887 = vector.load %arg6[%c0_779, %c3_780, %c0_781] : memref<2x4x484xf32, #tpu.memory_space<vmem>>, vector<2x1x400xf32>
    %c1_782 = arith.constant 1 : index
    %c3_783 = arith.constant 3 : index
    %c0_784 = arith.constant 0 : index
    %c0_785 = arith.constant 0 : index
    %888 = vector.load %arg3[%c1_782, %c3_783, %c0_784, %c0_785] : memref<2x36x4x1xf32, #tpu.memory_space<vmem>>, vector<1x1x4x1xf32>
    %889 = vector.shape_cast %888 : vector<1x1x4x1xf32> to vector<4x1xf32>
    %890 = vector.shape_cast %889 : vector<4x1xf32> to vector<1x4x1xf32>
    %891 = vector.broadcast %887 : vector<2x1x400xf32> to vector<2x4x400xf32>
    %892 = vector.broadcast %890 : vector<1x4x1xf32> to vector<2x4x400xf32>
    %893 = arith.mulf %891, %892 : vector<2x4x400xf32>
    %894 = arith.addf %886, %893 : vector<2x4x400xf32>
    %c0_786 = arith.constant 0 : index
    %c0_787 = arith.constant 0 : index
    %c2_788 = arith.constant 2 : index
    %895 = vector.load %arg6[%c0_786, %c0_787, %c2_788] : memref<2x4x484xf32, #tpu.memory_space<vmem>>, vector<2x1x400xf32>
    %c1_789 = arith.constant 1 : index
    %c4_790 = arith.constant 4 : index
    %c0_791 = arith.constant 0 : index
    %c0_792 = arith.constant 0 : index
    %896 = vector.load %arg3[%c1_789, %c4_790, %c0_791, %c0_792] : memref<2x36x4x1xf32, #tpu.memory_space<vmem>>, vector<1x1x4x1xf32>
    %897 = vector.shape_cast %896 : vector<1x1x4x1xf32> to vector<4x1xf32>
    %898 = vector.shape_cast %897 : vector<4x1xf32> to vector<1x4x1xf32>
    %899 = vector.broadcast %895 : vector<2x1x400xf32> to vector<2x4x400xf32>
    %900 = vector.broadcast %898 : vector<1x4x1xf32> to vector<2x4x400xf32>
    %901 = arith.mulf %899, %900 : vector<2x4x400xf32>
    %902 = arith.addf %894, %901 : vector<2x4x400xf32>
    %c0_793 = arith.constant 0 : index
    %c1_794 = arith.constant 1 : index
    %c2_795 = arith.constant 2 : index
    %903 = vector.load %arg6[%c0_793, %c1_794, %c2_795] : memref<2x4x484xf32, #tpu.memory_space<vmem>>, vector<2x1x400xf32>
    %c1_796 = arith.constant 1 : index
    %c5_797 = arith.constant 5 : index
    %c0_798 = arith.constant 0 : index
    %c0_799 = arith.constant 0 : index
    %904 = vector.load %arg3[%c1_796, %c5_797, %c0_798, %c0_799] : memref<2x36x4x1xf32, #tpu.memory_space<vmem>>, vector<1x1x4x1xf32>
    %905 = vector.shape_cast %904 : vector<1x1x4x1xf32> to vector<4x1xf32>
    %906 = vector.shape_cast %905 : vector<4x1xf32> to vector<1x4x1xf32>
    %907 = vector.broadcast %903 : vector<2x1x400xf32> to vector<2x4x400xf32>
    %908 = vector.broadcast %906 : vector<1x4x1xf32> to vector<2x4x400xf32>
    %909 = arith.mulf %907, %908 : vector<2x4x400xf32>
    %910 = arith.addf %902, %909 : vector<2x4x400xf32>
    %c0_800 = arith.constant 0 : index
    %c2_801 = arith.constant 2 : index
    %c2_802 = arith.constant 2 : index
    %911 = vector.load %arg6[%c0_800, %c2_801, %c2_802] : memref<2x4x484xf32, #tpu.memory_space<vmem>>, vector<2x1x400xf32>
    %c1_803 = arith.constant 1 : index
    %c6_804 = arith.constant 6 : index
    %c0_805 = arith.constant 0 : index
    %c0_806 = arith.constant 0 : index
    %912 = vector.load %arg3[%c1_803, %c6_804, %c0_805, %c0_806] : memref<2x36x4x1xf32, #tpu.memory_space<vmem>>, vector<1x1x4x1xf32>
    %913 = vector.shape_cast %912 : vector<1x1x4x1xf32> to vector<4x1xf32>
    %914 = vector.shape_cast %913 : vector<4x1xf32> to vector<1x4x1xf32>
    %915 = vector.broadcast %911 : vector<2x1x400xf32> to vector<2x4x400xf32>
    %916 = vector.broadcast %914 : vector<1x4x1xf32> to vector<2x4x400xf32>
    %917 = arith.mulf %915, %916 : vector<2x4x400xf32>
    %918 = arith.addf %910, %917 : vector<2x4x400xf32>
    %c0_807 = arith.constant 0 : index
    %c3_808 = arith.constant 3 : index
    %c2_809 = arith.constant 2 : index
    %919 = vector.load %arg6[%c0_807, %c3_808, %c2_809] : memref<2x4x484xf32, #tpu.memory_space<vmem>>, vector<2x1x400xf32>
    %c1_810 = arith.constant 1 : index
    %c7_811 = arith.constant 7 : index
    %c0_812 = arith.constant 0 : index
    %c0_813 = arith.constant 0 : index
    %920 = vector.load %arg3[%c1_810, %c7_811, %c0_812, %c0_813] : memref<2x36x4x1xf32, #tpu.memory_space<vmem>>, vector<1x1x4x1xf32>
    %921 = vector.shape_cast %920 : vector<1x1x4x1xf32> to vector<4x1xf32>
    %922 = vector.shape_cast %921 : vector<4x1xf32> to vector<1x4x1xf32>
    %923 = vector.broadcast %919 : vector<2x1x400xf32> to vector<2x4x400xf32>
    %924 = vector.broadcast %922 : vector<1x4x1xf32> to vector<2x4x400xf32>
    %925 = arith.mulf %923, %924 : vector<2x4x400xf32>
    %926 = arith.addf %918, %925 : vector<2x4x400xf32>
    %c0_814 = arith.constant 0 : index
    %c0_815 = arith.constant 0 : index
    %c4_816 = arith.constant 4 : index
    %927 = vector.load %arg6[%c0_814, %c0_815, %c4_816] : memref<2x4x484xf32, #tpu.memory_space<vmem>>, vector<2x1x400xf32>
    %c1_817 = arith.constant 1 : index
    %c8_818 = arith.constant 8 : index
    %c0_819 = arith.constant 0 : index
    %c0_820 = arith.constant 0 : index
    %928 = vector.load %arg3[%c1_817, %c8_818, %c0_819, %c0_820] : memref<2x36x4x1xf32, #tpu.memory_space<vmem>>, vector<1x1x4x1xf32>
    %929 = vector.shape_cast %928 : vector<1x1x4x1xf32> to vector<4x1xf32>
    %930 = vector.shape_cast %929 : vector<4x1xf32> to vector<1x4x1xf32>
    %931 = vector.broadcast %927 : vector<2x1x400xf32> to vector<2x4x400xf32>
    %932 = vector.broadcast %930 : vector<1x4x1xf32> to vector<2x4x400xf32>
    %933 = arith.mulf %931, %932 : vector<2x4x400xf32>
    %934 = arith.addf %926, %933 : vector<2x4x400xf32>
    %c0_821 = arith.constant 0 : index
    %c1_822 = arith.constant 1 : index
    %c4_823 = arith.constant 4 : index
    %935 = vector.load %arg6[%c0_821, %c1_822, %c4_823] : memref<2x4x484xf32, #tpu.memory_space<vmem>>, vector<2x1x400xf32>
    %c1_824 = arith.constant 1 : index
    %c9_825 = arith.constant 9 : index
    %c0_826 = arith.constant 0 : index
    %c0_827 = arith.constant 0 : index
    %936 = vector.load %arg3[%c1_824, %c9_825, %c0_826, %c0_827] : memref<2x36x4x1xf32, #tpu.memory_space<vmem>>, vector<1x1x4x1xf32>
    %937 = vector.shape_cast %936 : vector<1x1x4x1xf32> to vector<4x1xf32>
    %938 = vector.shape_cast %937 : vector<4x1xf32> to vector<1x4x1xf32>
    %939 = vector.broadcast %935 : vector<2x1x400xf32> to vector<2x4x400xf32>
    %940 = vector.broadcast %938 : vector<1x4x1xf32> to vector<2x4x400xf32>
    %941 = arith.mulf %939, %940 : vector<2x4x400xf32>
    %942 = arith.addf %934, %941 : vector<2x4x400xf32>
    %c0_828 = arith.constant 0 : index
    %c2_829 = arith.constant 2 : index
    %c4_830 = arith.constant 4 : index
    %943 = vector.load %arg6[%c0_828, %c2_829, %c4_830] : memref<2x4x484xf32, #tpu.memory_space<vmem>>, vector<2x1x400xf32>
    %c1_831 = arith.constant 1 : index
    %c10_832 = arith.constant 10 : index
    %c0_833 = arith.constant 0 : index
    %c0_834 = arith.constant 0 : index
    %944 = vector.load %arg3[%c1_831, %c10_832, %c0_833, %c0_834] : memref<2x36x4x1xf32, #tpu.memory_space<vmem>>, vector<1x1x4x1xf32>
    %945 = vector.shape_cast %944 : vector<1x1x4x1xf32> to vector<4x1xf32>
    %946 = vector.shape_cast %945 : vector<4x1xf32> to vector<1x4x1xf32>
    %947 = vector.broadcast %943 : vector<2x1x400xf32> to vector<2x4x400xf32>
    %948 = vector.broadcast %946 : vector<1x4x1xf32> to vector<2x4x400xf32>
    %949 = arith.mulf %947, %948 : vector<2x4x400xf32>
    %950 = arith.addf %942, %949 : vector<2x4x400xf32>
    %c0_835 = arith.constant 0 : index
    %c3_836 = arith.constant 3 : index
    %c4_837 = arith.constant 4 : index
    %951 = vector.load %arg6[%c0_835, %c3_836, %c4_837] : memref<2x4x484xf32, #tpu.memory_space<vmem>>, vector<2x1x400xf32>
    %c1_838 = arith.constant 1 : index
    %c11_839 = arith.constant 11 : index
    %c0_840 = arith.constant 0 : index
    %c0_841 = arith.constant 0 : index
    %952 = vector.load %arg3[%c1_838, %c11_839, %c0_840, %c0_841] : memref<2x36x4x1xf32, #tpu.memory_space<vmem>>, vector<1x1x4x1xf32>
    %953 = vector.shape_cast %952 : vector<1x1x4x1xf32> to vector<4x1xf32>
    %954 = vector.shape_cast %953 : vector<4x1xf32> to vector<1x4x1xf32>
    %955 = vector.broadcast %951 : vector<2x1x400xf32> to vector<2x4x400xf32>
    %956 = vector.broadcast %954 : vector<1x4x1xf32> to vector<2x4x400xf32>
    %957 = arith.mulf %955, %956 : vector<2x4x400xf32>
    %958 = arith.addf %950, %957 : vector<2x4x400xf32>
    %c0_842 = arith.constant 0 : index
    %c0_843 = arith.constant 0 : index
    %c40_844 = arith.constant 40 : index
    %959 = vector.load %arg6[%c0_842, %c0_843, %c40_844] : memref<2x4x484xf32, #tpu.memory_space<vmem>>, vector<2x1x400xf32>
    %c1_845 = arith.constant 1 : index
    %c12_846 = arith.constant 12 : index
    %c0_847 = arith.constant 0 : index
    %c0_848 = arith.constant 0 : index
    %960 = vector.load %arg3[%c1_845, %c12_846, %c0_847, %c0_848] : memref<2x36x4x1xf32, #tpu.memory_space<vmem>>, vector<1x1x4x1xf32>
    %961 = vector.shape_cast %960 : vector<1x1x4x1xf32> to vector<4x1xf32>
    %962 = vector.shape_cast %961 : vector<4x1xf32> to vector<1x4x1xf32>
    %963 = vector.broadcast %959 : vector<2x1x400xf32> to vector<2x4x400xf32>
    %964 = vector.broadcast %962 : vector<1x4x1xf32> to vector<2x4x400xf32>
    %965 = arith.mulf %963, %964 : vector<2x4x400xf32>
    %966 = arith.addf %958, %965 : vector<2x4x400xf32>
    %c0_849 = arith.constant 0 : index
    %c1_850 = arith.constant 1 : index
    %c40_851 = arith.constant 40 : index
    %967 = vector.load %arg6[%c0_849, %c1_850, %c40_851] : memref<2x4x484xf32, #tpu.memory_space<vmem>>, vector<2x1x400xf32>
    %c1_852 = arith.constant 1 : index
    %c13_853 = arith.constant 13 : index
    %c0_854 = arith.constant 0 : index
    %c0_855 = arith.constant 0 : index
    %968 = vector.load %arg3[%c1_852, %c13_853, %c0_854, %c0_855] : memref<2x36x4x1xf32, #tpu.memory_space<vmem>>, vector<1x1x4x1xf32>
    %969 = vector.shape_cast %968 : vector<1x1x4x1xf32> to vector<4x1xf32>
    %970 = vector.shape_cast %969 : vector<4x1xf32> to vector<1x4x1xf32>
    %971 = vector.broadcast %967 : vector<2x1x400xf32> to vector<2x4x400xf32>
    %972 = vector.broadcast %970 : vector<1x4x1xf32> to vector<2x4x400xf32>
    %973 = arith.mulf %971, %972 : vector<2x4x400xf32>
    %974 = arith.addf %966, %973 : vector<2x4x400xf32>
    %c0_856 = arith.constant 0 : index
    %c2_857 = arith.constant 2 : index
    %c40_858 = arith.constant 40 : index
    %975 = vector.load %arg6[%c0_856, %c2_857, %c40_858] : memref<2x4x484xf32, #tpu.memory_space<vmem>>, vector<2x1x400xf32>
    %c1_859 = arith.constant 1 : index
    %c14_860 = arith.constant 14 : index
    %c0_861 = arith.constant 0 : index
    %c0_862 = arith.constant 0 : index
    %976 = vector.load %arg3[%c1_859, %c14_860, %c0_861, %c0_862] : memref<2x36x4x1xf32, #tpu.memory_space<vmem>>, vector<1x1x4x1xf32>
    %977 = vector.shape_cast %976 : vector<1x1x4x1xf32> to vector<4x1xf32>
    %978 = vector.shape_cast %977 : vector<4x1xf32> to vector<1x4x1xf32>
    %979 = vector.broadcast %975 : vector<2x1x400xf32> to vector<2x4x400xf32>
    %980 = vector.broadcast %978 : vector<1x4x1xf32> to vector<2x4x400xf32>
    %981 = arith.mulf %979, %980 : vector<2x4x400xf32>
    %982 = arith.addf %974, %981 : vector<2x4x400xf32>
    %c0_863 = arith.constant 0 : index
    %c3_864 = arith.constant 3 : index
    %c40_865 = arith.constant 40 : index
    %983 = vector.load %arg6[%c0_863, %c3_864, %c40_865] : memref<2x4x484xf32, #tpu.memory_space<vmem>>, vector<2x1x400xf32>
    %c1_866 = arith.constant 1 : index
    %c15_867 = arith.constant 15 : index
    %c0_868 = arith.constant 0 : index
    %c0_869 = arith.constant 0 : index
    %984 = vector.load %arg3[%c1_866, %c15_867, %c0_868, %c0_869] : memref<2x36x4x1xf32, #tpu.memory_space<vmem>>, vector<1x1x4x1xf32>
    %985 = vector.shape_cast %984 : vector<1x1x4x1xf32> to vector<4x1xf32>
    %986 = vector.shape_cast %985 : vector<4x1xf32> to vector<1x4x1xf32>
    %987 = vector.broadcast %983 : vector<2x1x400xf32> to vector<2x4x400xf32>
    %988 = vector.broadcast %986 : vector<1x4x1xf32> to vector<2x4x400xf32>
    %989 = arith.mulf %987, %988 : vector<2x4x400xf32>
    %990 = arith.addf %982, %989 : vector<2x4x400xf32>
    %c0_870 = arith.constant 0 : index
    %c0_871 = arith.constant 0 : index
    %c42_872 = arith.constant 42 : index
    %991 = vector.load %arg6[%c0_870, %c0_871, %c42_872] : memref<2x4x484xf32, #tpu.memory_space<vmem>>, vector<2x1x400xf32>
    %c1_873 = arith.constant 1 : index
    %c16_874 = arith.constant 16 : index
    %c0_875 = arith.constant 0 : index
    %c0_876 = arith.constant 0 : index
    %992 = vector.load %arg3[%c1_873, %c16_874, %c0_875, %c0_876] : memref<2x36x4x1xf32, #tpu.memory_space<vmem>>, vector<1x1x4x1xf32>
    %993 = vector.shape_cast %992 : vector<1x1x4x1xf32> to vector<4x1xf32>
    %994 = vector.shape_cast %993 : vector<4x1xf32> to vector<1x4x1xf32>
    %995 = vector.broadcast %991 : vector<2x1x400xf32> to vector<2x4x400xf32>
    %996 = vector.broadcast %994 : vector<1x4x1xf32> to vector<2x4x400xf32>
    %997 = arith.mulf %995, %996 : vector<2x4x400xf32>
    %998 = arith.addf %990, %997 : vector<2x4x400xf32>
    %c0_877 = arith.constant 0 : index
    %c1_878 = arith.constant 1 : index
    %c42_879 = arith.constant 42 : index
    %999 = vector.load %arg6[%c0_877, %c1_878, %c42_879] : memref<2x4x484xf32, #tpu.memory_space<vmem>>, vector<2x1x400xf32>
    %c1_880 = arith.constant 1 : index
    %c17_881 = arith.constant 17 : index
    %c0_882 = arith.constant 0 : index
    %c0_883 = arith.constant 0 : index
    %1000 = vector.load %arg3[%c1_880, %c17_881, %c0_882, %c0_883] : memref<2x36x4x1xf32, #tpu.memory_space<vmem>>, vector<1x1x4x1xf32>
    %1001 = vector.shape_cast %1000 : vector<1x1x4x1xf32> to vector<4x1xf32>
    %1002 = vector.shape_cast %1001 : vector<4x1xf32> to vector<1x4x1xf32>
    %1003 = vector.broadcast %999 : vector<2x1x400xf32> to vector<2x4x400xf32>
    %1004 = vector.broadcast %1002 : vector<1x4x1xf32> to vector<2x4x400xf32>
    %1005 = arith.mulf %1003, %1004 : vector<2x4x400xf32>
    %1006 = arith.addf %998, %1005 : vector<2x4x400xf32>
    %c0_884 = arith.constant 0 : index
    %c2_885 = arith.constant 2 : index
    %c42_886 = arith.constant 42 : index
    %1007 = vector.load %arg6[%c0_884, %c2_885, %c42_886] : memref<2x4x484xf32, #tpu.memory_space<vmem>>, vector<2x1x400xf32>
    %c1_887 = arith.constant 1 : index
    %c18_888 = arith.constant 18 : index
    %c0_889 = arith.constant 0 : index
    %c0_890 = arith.constant 0 : index
    %1008 = vector.load %arg3[%c1_887, %c18_888, %c0_889, %c0_890] : memref<2x36x4x1xf32, #tpu.memory_space<vmem>>, vector<1x1x4x1xf32>
    %1009 = vector.shape_cast %1008 : vector<1x1x4x1xf32> to vector<4x1xf32>
    %1010 = vector.shape_cast %1009 : vector<4x1xf32> to vector<1x4x1xf32>
    %1011 = vector.broadcast %1007 : vector<2x1x400xf32> to vector<2x4x400xf32>
    %1012 = vector.broadcast %1010 : vector<1x4x1xf32> to vector<2x4x400xf32>
    %1013 = arith.mulf %1011, %1012 : vector<2x4x400xf32>
    %1014 = arith.addf %1006, %1013 : vector<2x4x400xf32>
    %c0_891 = arith.constant 0 : index
    %c3_892 = arith.constant 3 : index
    %c42_893 = arith.constant 42 : index
    %1015 = vector.load %arg6[%c0_891, %c3_892, %c42_893] : memref<2x4x484xf32, #tpu.memory_space<vmem>>, vector<2x1x400xf32>
    %c1_894 = arith.constant 1 : index
    %c19_895 = arith.constant 19 : index
    %c0_896 = arith.constant 0 : index
    %c0_897 = arith.constant 0 : index
    %1016 = vector.load %arg3[%c1_894, %c19_895, %c0_896, %c0_897] : memref<2x36x4x1xf32, #tpu.memory_space<vmem>>, vector<1x1x4x1xf32>
    %1017 = vector.shape_cast %1016 : vector<1x1x4x1xf32> to vector<4x1xf32>
    %1018 = vector.shape_cast %1017 : vector<4x1xf32> to vector<1x4x1xf32>
    %1019 = vector.broadcast %1015 : vector<2x1x400xf32> to vector<2x4x400xf32>
    %1020 = vector.broadcast %1018 : vector<1x4x1xf32> to vector<2x4x400xf32>
    %1021 = arith.mulf %1019, %1020 : vector<2x4x400xf32>
    %1022 = arith.addf %1014, %1021 : vector<2x4x400xf32>
    %c0_898 = arith.constant 0 : index
    %c0_899 = arith.constant 0 : index
    %c44_900 = arith.constant 44 : index
    %1023 = vector.load %arg6[%c0_898, %c0_899, %c44_900] : memref<2x4x484xf32, #tpu.memory_space<vmem>>, vector<2x1x400xf32>
    %c1_901 = arith.constant 1 : index
    %c20_902 = arith.constant 20 : index
    %c0_903 = arith.constant 0 : index
    %c0_904 = arith.constant 0 : index
    %1024 = vector.load %arg3[%c1_901, %c20_902, %c0_903, %c0_904] : memref<2x36x4x1xf32, #tpu.memory_space<vmem>>, vector<1x1x4x1xf32>
    %1025 = vector.shape_cast %1024 : vector<1x1x4x1xf32> to vector<4x1xf32>
    %1026 = vector.shape_cast %1025 : vector<4x1xf32> to vector<1x4x1xf32>
    %1027 = vector.broadcast %1023 : vector<2x1x400xf32> to vector<2x4x400xf32>
    %1028 = vector.broadcast %1026 : vector<1x4x1xf32> to vector<2x4x400xf32>
    %1029 = arith.mulf %1027, %1028 : vector<2x4x400xf32>
    %1030 = arith.addf %1022, %1029 : vector<2x4x400xf32>
    %c0_905 = arith.constant 0 : index
    %c1_906 = arith.constant 1 : index
    %c44_907 = arith.constant 44 : index
    %1031 = vector.load %arg6[%c0_905, %c1_906, %c44_907] : memref<2x4x484xf32, #tpu.memory_space<vmem>>, vector<2x1x400xf32>
    %c1_908 = arith.constant 1 : index
    %c21_909 = arith.constant 21 : index
    %c0_910 = arith.constant 0 : index
    %c0_911 = arith.constant 0 : index
    %1032 = vector.load %arg3[%c1_908, %c21_909, %c0_910, %c0_911] : memref<2x36x4x1xf32, #tpu.memory_space<vmem>>, vector<1x1x4x1xf32>
    %1033 = vector.shape_cast %1032 : vector<1x1x4x1xf32> to vector<4x1xf32>
    %1034 = vector.shape_cast %1033 : vector<4x1xf32> to vector<1x4x1xf32>
    %1035 = vector.broadcast %1031 : vector<2x1x400xf32> to vector<2x4x400xf32>
    %1036 = vector.broadcast %1034 : vector<1x4x1xf32> to vector<2x4x400xf32>
    %1037 = arith.mulf %1035, %1036 : vector<2x4x400xf32>
    %1038 = arith.addf %1030, %1037 : vector<2x4x400xf32>
    %c0_912 = arith.constant 0 : index
    %c2_913 = arith.constant 2 : index
    %c44_914 = arith.constant 44 : index
    %1039 = vector.load %arg6[%c0_912, %c2_913, %c44_914] : memref<2x4x484xf32, #tpu.memory_space<vmem>>, vector<2x1x400xf32>
    %c1_915 = arith.constant 1 : index
    %c22_916 = arith.constant 22 : index
    %c0_917 = arith.constant 0 : index
    %c0_918 = arith.constant 0 : index
    %1040 = vector.load %arg3[%c1_915, %c22_916, %c0_917, %c0_918] : memref<2x36x4x1xf32, #tpu.memory_space<vmem>>, vector<1x1x4x1xf32>
    %1041 = vector.shape_cast %1040 : vector<1x1x4x1xf32> to vector<4x1xf32>
    %1042 = vector.shape_cast %1041 : vector<4x1xf32> to vector<1x4x1xf32>
    %1043 = vector.broadcast %1039 : vector<2x1x400xf32> to vector<2x4x400xf32>
    %1044 = vector.broadcast %1042 : vector<1x4x1xf32> to vector<2x4x400xf32>
    %1045 = arith.mulf %1043, %1044 : vector<2x4x400xf32>
    %1046 = arith.addf %1038, %1045 : vector<2x4x400xf32>
    %c0_919 = arith.constant 0 : index
    %c3_920 = arith.constant 3 : index
    %c44_921 = arith.constant 44 : index
    %1047 = vector.load %arg6[%c0_919, %c3_920, %c44_921] : memref<2x4x484xf32, #tpu.memory_space<vmem>>, vector<2x1x400xf32>
    %c1_922 = arith.constant 1 : index
    %c23_923 = arith.constant 23 : index
    %c0_924 = arith.constant 0 : index
    %c0_925 = arith.constant 0 : index
    %1048 = vector.load %arg3[%c1_922, %c23_923, %c0_924, %c0_925] : memref<2x36x4x1xf32, #tpu.memory_space<vmem>>, vector<1x1x4x1xf32>
    %1049 = vector.shape_cast %1048 : vector<1x1x4x1xf32> to vector<4x1xf32>
    %1050 = vector.shape_cast %1049 : vector<4x1xf32> to vector<1x4x1xf32>
    %1051 = vector.broadcast %1047 : vector<2x1x400xf32> to vector<2x4x400xf32>
    %1052 = vector.broadcast %1050 : vector<1x4x1xf32> to vector<2x4x400xf32>
    %1053 = arith.mulf %1051, %1052 : vector<2x4x400xf32>
    %1054 = arith.addf %1046, %1053 : vector<2x4x400xf32>
    %c0_926 = arith.constant 0 : index
    %c0_927 = arith.constant 0 : index
    %c80_928 = arith.constant 80 : index
    %1055 = vector.load %arg6[%c0_926, %c0_927, %c80_928] : memref<2x4x484xf32, #tpu.memory_space<vmem>>, vector<2x1x400xf32>
    %c1_929 = arith.constant 1 : index
    %c24_930 = arith.constant 24 : index
    %c0_931 = arith.constant 0 : index
    %c0_932 = arith.constant 0 : index
    %1056 = vector.load %arg3[%c1_929, %c24_930, %c0_931, %c0_932] : memref<2x36x4x1xf32, #tpu.memory_space<vmem>>, vector<1x1x4x1xf32>
    %1057 = vector.shape_cast %1056 : vector<1x1x4x1xf32> to vector<4x1xf32>
    %1058 = vector.shape_cast %1057 : vector<4x1xf32> to vector<1x4x1xf32>
    %1059 = vector.broadcast %1055 : vector<2x1x400xf32> to vector<2x4x400xf32>
    %1060 = vector.broadcast %1058 : vector<1x4x1xf32> to vector<2x4x400xf32>
    %1061 = arith.mulf %1059, %1060 : vector<2x4x400xf32>
    %1062 = arith.addf %1054, %1061 : vector<2x4x400xf32>
    %c0_933 = arith.constant 0 : index
    %c1_934 = arith.constant 1 : index
    %c80_935 = arith.constant 80 : index
    %1063 = vector.load %arg6[%c0_933, %c1_934, %c80_935] : memref<2x4x484xf32, #tpu.memory_space<vmem>>, vector<2x1x400xf32>
    %c1_936 = arith.constant 1 : index
    %c25_937 = arith.constant 25 : index
    %c0_938 = arith.constant 0 : index
    %c0_939 = arith.constant 0 : index
    %1064 = vector.load %arg3[%c1_936, %c25_937, %c0_938, %c0_939] : memref<2x36x4x1xf32, #tpu.memory_space<vmem>>, vector<1x1x4x1xf32>
    %1065 = vector.shape_cast %1064 : vector<1x1x4x1xf32> to vector<4x1xf32>
    %1066 = vector.shape_cast %1065 : vector<4x1xf32> to vector<1x4x1xf32>
    %1067 = vector.broadcast %1063 : vector<2x1x400xf32> to vector<2x4x400xf32>
    %1068 = vector.broadcast %1066 : vector<1x4x1xf32> to vector<2x4x400xf32>
    %1069 = arith.mulf %1067, %1068 : vector<2x4x400xf32>
    %1070 = arith.addf %1062, %1069 : vector<2x4x400xf32>
    %c0_940 = arith.constant 0 : index
    %c2_941 = arith.constant 2 : index
    %c80_942 = arith.constant 80 : index
    %1071 = vector.load %arg6[%c0_940, %c2_941, %c80_942] : memref<2x4x484xf32, #tpu.memory_space<vmem>>, vector<2x1x400xf32>
    %c1_943 = arith.constant 1 : index
    %c26_944 = arith.constant 26 : index
    %c0_945 = arith.constant 0 : index
    %c0_946 = arith.constant 0 : index
    %1072 = vector.load %arg3[%c1_943, %c26_944, %c0_945, %c0_946] : memref<2x36x4x1xf32, #tpu.memory_space<vmem>>, vector<1x1x4x1xf32>
    %1073 = vector.shape_cast %1072 : vector<1x1x4x1xf32> to vector<4x1xf32>
    %1074 = vector.shape_cast %1073 : vector<4x1xf32> to vector<1x4x1xf32>
    %1075 = vector.broadcast %1071 : vector<2x1x400xf32> to vector<2x4x400xf32>
    %1076 = vector.broadcast %1074 : vector<1x4x1xf32> to vector<2x4x400xf32>
    %1077 = arith.mulf %1075, %1076 : vector<2x4x400xf32>
    %1078 = arith.addf %1070, %1077 : vector<2x4x400xf32>
    %c0_947 = arith.constant 0 : index
    %c3_948 = arith.constant 3 : index
    %c80_949 = arith.constant 80 : index
    %1079 = vector.load %arg6[%c0_947, %c3_948, %c80_949] : memref<2x4x484xf32, #tpu.memory_space<vmem>>, vector<2x1x400xf32>
    %c1_950 = arith.constant 1 : index
    %c27_951 = arith.constant 27 : index
    %c0_952 = arith.constant 0 : index
    %c0_953 = arith.constant 0 : index
    %1080 = vector.load %arg3[%c1_950, %c27_951, %c0_952, %c0_953] : memref<2x36x4x1xf32, #tpu.memory_space<vmem>>, vector<1x1x4x1xf32>
    %1081 = vector.shape_cast %1080 : vector<1x1x4x1xf32> to vector<4x1xf32>
    %1082 = vector.shape_cast %1081 : vector<4x1xf32> to vector<1x4x1xf32>
    %1083 = vector.broadcast %1079 : vector<2x1x400xf32> to vector<2x4x400xf32>
    %1084 = vector.broadcast %1082 : vector<1x4x1xf32> to vector<2x4x400xf32>
    %1085 = arith.mulf %1083, %1084 : vector<2x4x400xf32>
    %1086 = arith.addf %1078, %1085 : vector<2x4x400xf32>
    %c0_954 = arith.constant 0 : index
    %c0_955 = arith.constant 0 : index
    %c82_956 = arith.constant 82 : index
    %1087 = vector.load %arg6[%c0_954, %c0_955, %c82_956] : memref<2x4x484xf32, #tpu.memory_space<vmem>>, vector<2x1x400xf32>
    %c1_957 = arith.constant 1 : index
    %c28_958 = arith.constant 28 : index
    %c0_959 = arith.constant 0 : index
    %c0_960 = arith.constant 0 : index
    %1088 = vector.load %arg3[%c1_957, %c28_958, %c0_959, %c0_960] : memref<2x36x4x1xf32, #tpu.memory_space<vmem>>, vector<1x1x4x1xf32>
    %1089 = vector.shape_cast %1088 : vector<1x1x4x1xf32> to vector<4x1xf32>
    %1090 = vector.shape_cast %1089 : vector<4x1xf32> to vector<1x4x1xf32>
    %1091 = vector.broadcast %1087 : vector<2x1x400xf32> to vector<2x4x400xf32>
    %1092 = vector.broadcast %1090 : vector<1x4x1xf32> to vector<2x4x400xf32>
    %1093 = arith.mulf %1091, %1092 : vector<2x4x400xf32>
    %1094 = arith.addf %1086, %1093 : vector<2x4x400xf32>
    %c0_961 = arith.constant 0 : index
    %c1_962 = arith.constant 1 : index
    %c82_963 = arith.constant 82 : index
    %1095 = vector.load %arg6[%c0_961, %c1_962, %c82_963] : memref<2x4x484xf32, #tpu.memory_space<vmem>>, vector<2x1x400xf32>
    %c1_964 = arith.constant 1 : index
    %c29_965 = arith.constant 29 : index
    %c0_966 = arith.constant 0 : index
    %c0_967 = arith.constant 0 : index
    %1096 = vector.load %arg3[%c1_964, %c29_965, %c0_966, %c0_967] : memref<2x36x4x1xf32, #tpu.memory_space<vmem>>, vector<1x1x4x1xf32>
    %1097 = vector.shape_cast %1096 : vector<1x1x4x1xf32> to vector<4x1xf32>
    %1098 = vector.shape_cast %1097 : vector<4x1xf32> to vector<1x4x1xf32>
    %1099 = vector.broadcast %1095 : vector<2x1x400xf32> to vector<2x4x400xf32>
    %1100 = vector.broadcast %1098 : vector<1x4x1xf32> to vector<2x4x400xf32>
    %1101 = arith.mulf %1099, %1100 : vector<2x4x400xf32>
    %1102 = arith.addf %1094, %1101 : vector<2x4x400xf32>
    %c0_968 = arith.constant 0 : index
    %c2_969 = arith.constant 2 : index
    %c82_970 = arith.constant 82 : index
    %1103 = vector.load %arg6[%c0_968, %c2_969, %c82_970] : memref<2x4x484xf32, #tpu.memory_space<vmem>>, vector<2x1x400xf32>
    %c1_971 = arith.constant 1 : index
    %c30_972 = arith.constant 30 : index
    %c0_973 = arith.constant 0 : index
    %c0_974 = arith.constant 0 : index
    %1104 = vector.load %arg3[%c1_971, %c30_972, %c0_973, %c0_974] : memref<2x36x4x1xf32, #tpu.memory_space<vmem>>, vector<1x1x4x1xf32>
    %1105 = vector.shape_cast %1104 : vector<1x1x4x1xf32> to vector<4x1xf32>
    %1106 = vector.shape_cast %1105 : vector<4x1xf32> to vector<1x4x1xf32>
    %1107 = vector.broadcast %1103 : vector<2x1x400xf32> to vector<2x4x400xf32>
    %1108 = vector.broadcast %1106 : vector<1x4x1xf32> to vector<2x4x400xf32>
    %1109 = arith.mulf %1107, %1108 : vector<2x4x400xf32>
    %1110 = arith.addf %1102, %1109 : vector<2x4x400xf32>
    %c0_975 = arith.constant 0 : index
    %c3_976 = arith.constant 3 : index
    %c82_977 = arith.constant 82 : index
    %1111 = vector.load %arg6[%c0_975, %c3_976, %c82_977] : memref<2x4x484xf32, #tpu.memory_space<vmem>>, vector<2x1x400xf32>
    %c1_978 = arith.constant 1 : index
    %c31_979 = arith.constant 31 : index
    %c0_980 = arith.constant 0 : index
    %c0_981 = arith.constant 0 : index
    %1112 = vector.load %arg3[%c1_978, %c31_979, %c0_980, %c0_981] : memref<2x36x4x1xf32, #tpu.memory_space<vmem>>, vector<1x1x4x1xf32>
    %1113 = vector.shape_cast %1112 : vector<1x1x4x1xf32> to vector<4x1xf32>
    %1114 = vector.shape_cast %1113 : vector<4x1xf32> to vector<1x4x1xf32>
    %1115 = vector.broadcast %1111 : vector<2x1x400xf32> to vector<2x4x400xf32>
    %1116 = vector.broadcast %1114 : vector<1x4x1xf32> to vector<2x4x400xf32>
    %1117 = arith.mulf %1115, %1116 : vector<2x4x400xf32>
    %1118 = arith.addf %1110, %1117 : vector<2x4x400xf32>
    %c0_982 = arith.constant 0 : index
    %c0_983 = arith.constant 0 : index
    %c84_984 = arith.constant 84 : index
    %1119 = vector.load %arg6[%c0_982, %c0_983, %c84_984] : memref<2x4x484xf32, #tpu.memory_space<vmem>>, vector<2x1x400xf32>
    %c1_985 = arith.constant 1 : index
    %c32_986 = arith.constant 32 : index
    %c0_987 = arith.constant 0 : index
    %c0_988 = arith.constant 0 : index
    %1120 = vector.load %arg3[%c1_985, %c32_986, %c0_987, %c0_988] : memref<2x36x4x1xf32, #tpu.memory_space<vmem>>, vector<1x1x4x1xf32>
    %1121 = vector.shape_cast %1120 : vector<1x1x4x1xf32> to vector<4x1xf32>
    %1122 = vector.shape_cast %1121 : vector<4x1xf32> to vector<1x4x1xf32>
    %1123 = vector.broadcast %1119 : vector<2x1x400xf32> to vector<2x4x400xf32>
    %1124 = vector.broadcast %1122 : vector<1x4x1xf32> to vector<2x4x400xf32>
    %1125 = arith.mulf %1123, %1124 : vector<2x4x400xf32>
    %1126 = arith.addf %1118, %1125 : vector<2x4x400xf32>
    %c0_989 = arith.constant 0 : index
    %c1_990 = arith.constant 1 : index
    %c84_991 = arith.constant 84 : index
    %1127 = vector.load %arg6[%c0_989, %c1_990, %c84_991] : memref<2x4x484xf32, #tpu.memory_space<vmem>>, vector<2x1x400xf32>
    %c1_992 = arith.constant 1 : index
    %c33_993 = arith.constant 33 : index
    %c0_994 = arith.constant 0 : index
    %c0_995 = arith.constant 0 : index
    %1128 = vector.load %arg3[%c1_992, %c33_993, %c0_994, %c0_995] : memref<2x36x4x1xf32, #tpu.memory_space<vmem>>, vector<1x1x4x1xf32>
    %1129 = vector.shape_cast %1128 : vector<1x1x4x1xf32> to vector<4x1xf32>
    %1130 = vector.shape_cast %1129 : vector<4x1xf32> to vector<1x4x1xf32>
    %1131 = vector.broadcast %1127 : vector<2x1x400xf32> to vector<2x4x400xf32>
    %1132 = vector.broadcast %1130 : vector<1x4x1xf32> to vector<2x4x400xf32>
    %1133 = arith.mulf %1131, %1132 : vector<2x4x400xf32>
    %1134 = arith.addf %1126, %1133 : vector<2x4x400xf32>
    %c0_996 = arith.constant 0 : index
    %c2_997 = arith.constant 2 : index
    %c84_998 = arith.constant 84 : index
    %1135 = vector.load %arg6[%c0_996, %c2_997, %c84_998] : memref<2x4x484xf32, #tpu.memory_space<vmem>>, vector<2x1x400xf32>
    %c1_999 = arith.constant 1 : index
    %c34_1000 = arith.constant 34 : index
    %c0_1001 = arith.constant 0 : index
    %c0_1002 = arith.constant 0 : index
    %1136 = vector.load %arg3[%c1_999, %c34_1000, %c0_1001, %c0_1002] : memref<2x36x4x1xf32, #tpu.memory_space<vmem>>, vector<1x1x4x1xf32>
    %1137 = vector.shape_cast %1136 : vector<1x1x4x1xf32> to vector<4x1xf32>
    %1138 = vector.shape_cast %1137 : vector<4x1xf32> to vector<1x4x1xf32>
    %1139 = vector.broadcast %1135 : vector<2x1x400xf32> to vector<2x4x400xf32>
    %1140 = vector.broadcast %1138 : vector<1x4x1xf32> to vector<2x4x400xf32>
    %1141 = arith.mulf %1139, %1140 : vector<2x4x400xf32>
    %1142 = arith.addf %1134, %1141 : vector<2x4x400xf32>
    %c0_1003 = arith.constant 0 : index
    %c3_1004 = arith.constant 3 : index
    %c84_1005 = arith.constant 84 : index
    %1143 = vector.load %arg6[%c0_1003, %c3_1004, %c84_1005] : memref<2x4x484xf32, #tpu.memory_space<vmem>>, vector<2x1x400xf32>
    %c1_1006 = arith.constant 1 : index
    %c35_1007 = arith.constant 35 : index
    %c0_1008 = arith.constant 0 : index
    %c0_1009 = arith.constant 0 : index
    %1144 = vector.load %arg3[%c1_1006, %c35_1007, %c0_1008, %c0_1009] : memref<2x36x4x1xf32, #tpu.memory_space<vmem>>, vector<1x1x4x1xf32>
    %1145 = vector.shape_cast %1144 : vector<1x1x4x1xf32> to vector<4x1xf32>
    %1146 = vector.shape_cast %1145 : vector<4x1xf32> to vector<1x4x1xf32>
    %1147 = vector.broadcast %1143 : vector<2x1x400xf32> to vector<2x4x400xf32>
    %1148 = vector.broadcast %1146 : vector<1x4x1xf32> to vector<2x4x400xf32>
    %1149 = arith.mulf %1147, %1148 : vector<2x4x400xf32>
    %1150 = arith.addf %1142, %1149 : vector<2x4x400xf32>
    %c3_1010 = arith.constant 3 : index
    %c0_1011 = arith.constant 0 : index
    %c0_1012 = arith.constant 0 : index
    %1151 = vector.load %arg4[%c3_1010, %c0_1011, %c0_1012] : memref<8x4x1xf32, #tpu.memory_space<vmem>>, vector<1x4x1xf32>
    %1152 = vector.shape_cast %1151 : vector<1x4x1xf32> to vector<4x1xf32>
    %1153 = vector.shape_cast %1152 : vector<4x1xf32> to vector<1x4x1xf32>
    %1154 = vector.broadcast %1153 : vector<1x4x1xf32> to vector<2x4x400xf32>
    %1155 = arith.addf %1150, %1154 : vector<2x4x400xf32>
    %c6_1013 = arith.constant 6 : index
    %c0_1014 = arith.constant 0 : index
    %c0_1015 = arith.constant 0 : index
    %1156 = vector.load %arg4[%c6_1013, %c0_1014, %c0_1015] : memref<8x4x1xf32, #tpu.memory_space<vmem>>, vector<1x4x1xf32>
    %1157 = vector.shape_cast %1156 : vector<1x4x1xf32> to vector<4x1xf32>
    %c7_1016 = arith.constant 7 : index
    %c0_1017 = arith.constant 0 : index
    %c0_1018 = arith.constant 0 : index
    %1158 = vector.load %arg4[%c7_1016, %c0_1017, %c0_1018] : memref<8x4x1xf32, #tpu.memory_space<vmem>>, vector<1x4x1xf32>
    %1159 = vector.shape_cast %1158 : vector<1x4x1xf32> to vector<4x1xf32>
    %1160 = vector.broadcast %0 : vector<1x1x400xf32> to vector<2x4x400xf32>
    %1161 = arith.mulf %1155, %1160 : vector<2x4x400xf32>
    %cst_1019 = arith.constant dense<0.000000e+00> : vector<4xf32>
    %1162 = vector.multi_reduction <add>, %1161, %cst_1019 [0, 2] : vector<2x4x400xf32> to vector<4xf32>
    %1163 = vector.shape_cast %1162 : vector<4xf32> to vector<1x4x1xf32>
    %1164 = arith.mulf %1161, %1161 : vector<2x4x400xf32>
    %cst_1020 = arith.constant dense<0.000000e+00> : vector<4xf32>
    %1165 = vector.multi_reduction <add>, %1164, %cst_1020 [0, 2] : vector<2x4x400xf32> to vector<4xf32>
    %1166 = vector.shape_cast %1165 : vector<4xf32> to vector<1x4x1xf32>
    %cst_1021 = arith.constant 0.001953125 : f32
    %1167 = vector.broadcast %cst_1021 : f32 to vector<1x4x1xf32>
    %1168 = arith.mulf %1163, %1167 : vector<1x4x1xf32>
    %cst_1022 = arith.constant 0.001953125 : f32
    %1169 = vector.broadcast %cst_1022 : f32 to vector<1x4x1xf32>
    %1170 = arith.mulf %1166, %1169 : vector<1x4x1xf32>
    %1171 = arith.mulf %1168, %1168 : vector<1x4x1xf32>
    %1172 = arith.subf %1170, %1171 : vector<1x4x1xf32>
    %1173 = vector.broadcast %1168 : vector<1x4x1xf32> to vector<2x4x400xf32>
    %1174 = arith.subf %1155, %1173 : vector<2x4x400xf32>
    %cst_1023 = arith.constant 9.99999974E-6 : f32
    %1175 = vector.broadcast %cst_1023 : f32 to vector<1x4x1xf32>
    %1176 = arith.addf %1172, %1175 : vector<1x4x1xf32>
    %1177 = math.rsqrt %1176 : vector<1x4x1xf32>
    %1178 = vector.broadcast %1177 : vector<1x4x1xf32> to vector<2x4x400xf32>
    %1179 = arith.mulf %1174, %1178 : vector<2x4x400xf32>
    %1180 = vector.shape_cast %1157 : vector<4x1xf32> to vector<1x4x1xf32>
    %1181 = vector.broadcast %1180 : vector<1x4x1xf32> to vector<2x4x400xf32>
    %1182 = arith.mulf %1179, %1181 : vector<2x4x400xf32>
    %1183 = vector.shape_cast %1159 : vector<4x1xf32> to vector<1x4x1xf32>
    %1184 = vector.broadcast %1183 : vector<1x4x1xf32> to vector<2x4x400xf32>
    %1185 = arith.addf %1182, %1184 : vector<2x4x400xf32>
    %1186 = arith.addf %1185, %5 : vector<2x4x400xf32>
    %cst_1024 = arith.constant 0.000000e+00 : f32
    %1187 = vector.broadcast %cst_1024 : f32 to vector<2x4x400xf32>
    %1188 = arith.maximumf %1186, %1187 : vector<2x4x400xf32>
    %c0_1025 = arith.constant 0 : index
    %c0_1026 = arith.constant 0 : index
    %c0_1027 = arith.constant 0 : index
    %1189 = vector.load %arg5[%c0_1025, %c0_1026, %c0_1027] : memref<2x4x400xf32, #tpu.memory_space<vmem>>, vector<2x4x400xf32>
    tpu.vector_store %arg5[%c0_1025, %c0_1026, %c0_1027], %1188 {strides = array<i32>} : memref<2x4x400xf32, #tpu.memory_space<vmem>>, vector<2x4x400xf32>,
    return
  }
}

</mosaic_0001>

<llo_original>
// kernel: sdrb_forward.1
$region0: #{sdrb_forward.1}
  #allocation0 [shape = 'u32[]', space=smem, size = 0x4, offset = 0x4, fixed_abs, tag = 'smem constant byte address 0x4 - core index']
  #allocation1 [shape = 'u32[144,128]{1,0:T(1,128)}', space=vmem, size = 0x12000, scoped, tag = 'internal scratch']
  #allocation2 [shape = 'f32[2,4,484]{2,1,0:T(4,128)}', space=vmem, size = 0x4000, scoped, tag = 'scratch operand']
  %s0 = inlined_call_operand.vmem [shape: f32[2,4,484], index: 0, kind: input, shape index: {}]
  %s1 = inlined_call_operand.vmem [shape: f32[1,1,400], index: 1, kind: input, shape index: {}]
  %s2 = inlined_call_operand.vmem [shape: f32[2,9,4,1], index: 2, kind: input, shape index: {}]
  %s3 = inlined_call_operand.vmem [shape: f32[2,36,4,1], index: 3, kind: input, shape index: {}]
  %s4 = inlined_call_operand.vmem [shape: f32[8,4,1], index: 4, kind: input, shape index: {}]
  %s5 = inlined_call_operand.vmem [shape: f32[2,4,400], index: 5, kind: output, shape index: {}]
  %s6 = sld [smem:[#allocation0]]
  $region30: #{sdrb_forward.1} parent=0
    _
  %s8 = ssub.s32 1, %s6
  %s9 = scalar_select 0, %s8, %s6
  // Predicated region
  $region2: #{sdrb_forward.1} parent=0 // pred_check
    _
  $region3: #{sdrb_forward.1} parent=0 // pred_check_branch
    %11 = sbr.rel (0) target = $region5
  $region4: #{sdrb_forward.1} parent=0 // pred_region
    _
  $region5: #{sdrb_forward.1} parent=0 // pred_fallthru
    _
  // Predicated region
  $region6: #{sdrb_forward.1} parent=0 // pred_check
    _
  $region7: #{sdrb_forward.1} parent=0 // pred_check_branch
    %13 = sbr.rel (0) target = $region9
  $region8: #{sdrb_forward.1} parent=0 // pred_region
    _
  $region9: #{sdrb_forward.1} parent=0 // pred_fallthru
    _
  // Predicated region
  $region10: #{sdrb_forward.1} parent=0 // pred_check
    _
  $region11: #{sdrb_forward.1} parent=0 // pred_check_branch
    %15 = sbr.rel (0) target = $region13
  $region12: #{sdrb_forward.1} parent=0 // pred_region
    _
  $region13: #{sdrb_forward.1} parent=0 // pred_fallthru
    _
  // Predicated region
  $region14: #{sdrb_forward.1} parent=0 // pred_check
    _
  $region15: #{sdrb_forward.1} parent=0 // pred_check_branch
    %17 = sbr.rel (0) target = $region17
  $region16: #{sdrb_forward.1} parent=0 // pred_region
    _
  $region17: #{sdrb_forward.1} parent=0 // pred_fallthru
    _
  // Predicated region
  $region18: #{sdrb_forward.1} parent=0 // pred_check
    _
  $region19: #{sdrb_forward.1} parent=0 // pred_check_branch
    %19 = sbr.rel (0) target = $region21
  $region20: #{sdrb_forward.1} parent=0 // pred_region
    _
  $region21: #{sdrb_forward.1} parent=0 // pred_fallthru
    _
  %v20 = vld [vmem:[%s1] sm:$0xf]
  %vm21 = vcmask 338944
  %22 = vst.msk [vmem:[#allocation2] sm:$0xf] %vm21, 0.0
  %23 = vst.msk [vmem:[#allocation2 + $0x10] sm:$0xf] %vm21, 0.0
  %vm24 = vcmask 814544
  %25 = vst.msk [vmem:[#allocation2 + $0xc] sm:$0xf] %vm24, 0.0
  %26 = vst.msk [vmem:[#allocation2 + $0x1c] sm:$0xf] %vm24, 0.0
  %v27 = vld [vmem:[%s0] sm:$0xff]
  %v28 = vld [vmem:[%s0 + $0x8] sm:$0xff]
  %v29 = vld [vmem:[%s0 + $0x10] sm:$0xff]
  %v30 = vld [vmem:[%s0 + $0x18] sm:$0xff]
  %v31 = vld [vmem:[%s0] ss:$4 sm:$0xf]
  %s32 = scalar_lea.vmem %s0, 16
  %v33 = vld [vmem:[%s32] ss:$4 sm:$0xf]
  %v34 = vld [vmem:[%s2] sm:$0x1]
  %36 = vset.pattern.permute.xlu0 0
  %37 = vperm.xlu0 %36, %v34
  %v38 = vpop.permute.xlu0 %37
  %v39 = vlaneseq
  %v40 = vshrl.u32 %v39, 7
  %v41 = vsub.s32 0, %v40
  %v42 = vrot.slane %v38, %v41
  %v44 = vmul.f32 %v31, %v42
  %v45 = vmul.f32 %v33, %v42
  %v46 = vadd.f32 %v44, 0.0
  %v47 = vadd.f32 %v45, 0.0
  %s48 = scalar_lea.vmem %s0, 1
  %v49 = vld [vmem:[%s48] ss:$4 sm:$0xf]
  %s50 = scalar_lea.vmem %s0, 17
  %v51 = vld [vmem:[%s50] ss:$4 sm:$0xf]
  %v52 = vld [vmem:[%s2 + $0x1] sm:$0x1]
  %54 = vset.pattern.permute.xlu0 0
  %55 = vperm.xlu0 %54, %v52
  %v56 = vpop.permute.xlu0 %55
  %v57 = vlaneseq
  %v58 = vshrl.u32 %v57, 7
  %v59 = vsub.s32 0, %v58
  %v60 = vrot.slane %v56, %v59
  %v62 = vmul.f32 %v49, %v60
  %v63 = vmul.f32 %v51, %v60
  %v64 = vadd.f32 %v46, %v62
  %v65 = vadd.f32 %v47, %v63
  %s66 = scalar_lea.vmem %s0, 2
  %v67 = vld [vmem:[%s66] ss:$4 sm:$0xf]
  %s68 = scalar_lea.vmem %s0, 18
  %v69 = vld [vmem:[%s68] ss:$4 sm:$0xf]
  %v70 = vld [vmem:[%s2 + $0x2] sm:$0x1]
  %72 = vset.pattern.permute.xlu0 0
  %73 = vperm.xlu0 %72, %v70
  %v74 = vpop.permute.xlu0 %73
  %v75 = vlaneseq
  %v76 = vshrl.u32 %v75, 7
  %v77 = vsub.s32 0, %v76
  %v78 = vrot.slane %v74, %v77
  %v80 = vmul.f32 %v67, %v78
  %v81 = vmul.f32 %v69, %v78
  %v82 = vadd.f32 %v64, %v80
  %v83 = vadd.f32 %v65, %v81
  %s84 = scalar_lea.vmem %s0, 3
  %v85 = vld [vmem:[%s84] ss:$4 sm:$0xf]
  %s86 = scalar_lea.vmem %s0, 19
  %v87 = vld [vmem:[%s86] ss:$4 sm:$0xf]
  %v88 = vld [vmem:[%s2 + $0x3] sm:$0x1]
  %90 = vset.pattern.permute.xlu0 0
  %91 = vperm.xlu0 %90, %v88
  %v92 = vpop.permute.xlu0 %91
  %v93 = vlaneseq
  %v94 = vshrl.u32 %v93, 7
  %v95 = vsub.s32 0, %v94
  %v96 = vrot.slane %v92, %v95
  %v98 = vmul.f32 %v85, %v96
  %v99 = vmul.f32 %v87, %v96
  %v100 = vadd.f32 %v82, %v98
  %v101 = vadd.f32 %v83, %v99
  %s102 = scalar_lea.vmem %s2, 4
  %v103 = vld [vmem:[%s102] sm:$0x1]
  %105 = vset.pattern.permute.xlu0 0
  %106 = vperm.xlu0 %105, %v103
  %v107 = vpop.permute.xlu0 %106
  %v108 = vlaneseq
  %v109 = vshrl.u32 %v108, 7
  %v110 = vsub.s32 0, %v109
  %v111 = vrot.slane %v107, %v110
  %v113 = vmul.f32 %v31, %v111
  %v114 = vmul.f32 %v33, %v111
  %117 = vrot.lane.b32.xlu0 %v113, 127
  %v118 = vpop.permute.xlu0 %117
  %119 = vrot.lane.b32.xlu0 %v114, 127
  %v120 = vpop.permute.xlu0 %119
  %v121 = vrot.slane %v118, 1
  %v122 = vrot.slane %v120, 1
  %vm123 = vcmask 1039360
  %v124 = vsel %vm123, %v118, %v121
  %v125 = vsel %vm123, %v120, %v122
  %v128 = vadd.f32 %v100, %v124
  %v129 = vadd.f32 %v101, %v125
  %v130 = vld [vmem:[%s102 + $0x1] sm:$0x1]
  %132 = vset.pattern.permute.xlu0 0
  %133 = vperm.xlu0 %132, %v130
  %v134 = vpop.permute.xlu0 %133
  %v135 = vlaneseq
  %v136 = vshrl.u32 %v135, 7
  %v137 = vsub.s32 0, %v136
  %v138 = vrot.slane %v134, %v137
  %v140 = vmul.f32 %v49, %v138
  %v141 = vmul.f32 %v51, %v138
  %144 = vrot.lane.b32.xlu0 %v140, 127
  %v145 = vpop.permute.xlu0 %144
  %146 = vrot.lane.b32.xlu0 %v141, 127
  %v147 = vpop.permute.xlu0 %146
  %v148 = vrot.slane %v145, 1
  %v149 = vrot.slane %v147, 1
  %v150 = vsel %vm123, %v145, %v148
  %v151 = vsel %vm123, %v147, %v149
  %v154 = vadd.f32 %v128, %v150
  %v155 = vadd.f32 %v129, %v151
  %v156 = vld [vmem:[%s102 + $0x2] sm:$0x1]
  %158 = vset.pattern.permute.xlu0 0
  %159 = vperm.xlu0 %158, %v156
  %v160 = vpop.permute.xlu0 %159
  %v161 = vlaneseq
  %v162 = vshrl.u32 %v161, 7
  %v163 = vsub.s32 0, %v162
  %v164 = vrot.slane %v160, %v163
  %v166 = vmul.f32 %v67, %v164
  %v167 = vmul.f32 %v69, %v164
  %170 = vrot.lane.b32.xlu0 %v166, 127
  %v171 = vpop.permute.xlu0 %170
  %172 = vrot.lane.b32.xlu0 %v167, 127
  %v173 = vpop.permute.xlu0 %172
  %v174 = vrot.slane %v171, 1
  %v175 = vrot.slane %v173, 1
  %v176 = vsel %vm123, %v171, %v174
  %v177 = vsel %vm123, %v173, %v175
  %v180 = vadd.f32 %v154, %v176
  %v181 = vadd.f32 %v155, %v177
  %v182 = vld [vmem:[%s102 + $0x3] sm:$0x1]
  %184 = vset.pattern.permute.xlu0 0
  %185 = vperm.xlu0 %184, %v182
  %v186 = vpop.permute.xlu0 %185
  %v187 = vlaneseq
  %v188 = vshrl.u32 %v187, 7
  %v189 = vsub.s32 0, %v188
  %v190 = vrot.slane %v186, %v189
  %v192 = vmul.f32 %v85, %v190
  %v193 = vmul.f32 %v87, %v190
  %196 = vrot.lane.b32.xlu0 %v192, 127
  %v197 = vpop.permute.xlu0 %196
  %198 = vrot.lane.b32.xlu0 %v193, 127
  %v199 = vpop.permute.xlu0 %198
  %v200 = vrot.slane %v197, 1
  %v201 = vrot.slane %v199, 1
  %v202 = vsel %vm123, %v197, %v200
  %v203 = vsel %vm123, %v199, %v201
  %v206 = vadd.f32 %v180, %v202
  %v207 = vadd.f32 %v181, %v203
  %s208 = scalar_lea.vmem %s2, 8
  %v209 = vld [vmem:[%s208] sm:$0x1]
  %211 = vset.pattern.permute.xlu0 0
  %212 = vperm.xlu0 %211, %v209
  %v213 = vpop.permute.xlu0 %212
  %v214 = vlaneseq
  %v215 = vshrl.u32 %v214, 7
  %v216 = vsub.s32 0, %v215
  %v217 = vrot.slane %v213, %v216
  %v219 = vmul.f32 %v31, %v217
  %v220 = vmul.f32 %v33, %v217
  %223 = vrot.lane.b32.xlu0 %v219, 126
  %v224 = vpop.permute.xlu0 %223
  %225 = vrot.lane.b32.xlu0 %v220, 126
  %v226 = vpop.permute.xlu0 %225
  %v227 = vrot.slane %v224, 1
  %v228 = vrot.slane %v226, 1
  %vm229 = vcmask 1031168
  %v230 = vsel %vm229, %v224, %v227
  %v231 = vsel %vm229, %v226, %v228
  %v234 = vadd.f32 %v206, %v230
  %v235 = vadd.f32 %v207, %v231
  %v236 = vld [vmem:[%s208 + $0x1] sm:$0x1]
  %238 = vset.pattern.permute.xlu0 0
  %239 = vperm.xlu0 %238, %v236
  %v240 = vpop.permute.xlu0 %239
  %v241 = vlaneseq
  %v242 = vshrl.u32 %v241, 7
  %v243 = vsub.s32 0, %v242
  %v244 = vrot.slane %v240, %v243
  %v246 = vmul.f32 %v49, %v244
  %v247 = vmul.f32 %v51, %v244
  %250 = vrot.lane.b32.xlu0 %v246, 126
  %v251 = vpop.permute.xlu0 %250
  %252 = vrot.lane.b32.xlu0 %v247, 126
  %v253 = vpop.permute.xlu0 %252
  %v254 = vrot.slane %v251, 1
  %v255 = vrot.slane %v253, 1
  %v256 = vsel %vm229, %v251, %v254
  %v257 = vsel %vm229, %v253, %v255
  %v260 = vadd.f32 %v234, %v256
  %v261 = vadd.f32 %v235, %v257
  %v262 = vld [vmem:[%s208 + $0x2] sm:$0x1]
  %264 = vset.pattern.permute.xlu0 0
  %265 = vperm.xlu0 %264, %v262
  %v266 = vpop.permute.xlu0 %265
  %v267 = vlaneseq
  %v268 = vshrl.u32 %v267, 7
  %v269 = vsub.s32 0, %v268
  %v270 = vrot.slane %v266, %v269
  %v272 = vmul.f32 %v67, %v270
  %v273 = vmul.f32 %v69, %v270
  %276 = vrot.lane.b32.xlu0 %v272, 126
  %v277 = vpop.permute.xlu0 %276
  %278 = vrot.lane.b32.xlu0 %v273, 126
  %v279 = vpop.permute.xlu0 %278
  %v280 = vrot.slane %v277, 1
  %v281 = vrot.slane %v279, 1
  %v282 = vsel %vm229, %v277, %v280
  %v283 = vsel %vm229, %v279, %v281
  %v286 = vadd.f32 %v260, %v282
  %v287 = vadd.f32 %v261, %v283
  %v288 = vld [vmem:[%s208 + $0x3] sm:$0x1]
  %290 = vset.pattern.permute.xlu0 0
  %291 = vperm.xlu0 %290, %v288
  %v292 = vpop.permute.xlu0 %291
  %v293 = vlaneseq
  %v294 = vshrl.u32 %v293, 7
  %v295 = vsub.s32 0, %v294
  %v296 = vrot.slane %v292, %v295
  %v298 = vmul.f32 %v85, %v296
  %v299 = vmul.f32 %v87, %v296
  %302 = vrot.lane.b32.xlu0 %v298, 126
  %v303 = vpop.permute.xlu0 %302
  %304 = vrot.lane.b32.xlu0 %v299, 126
  %v305 = vpop.permute.xlu0 %304
  %v306 = vrot.slane %v303, 1
  %v307 = vrot.slane %v305, 1
  %v308 = vsel %vm229, %v303, %v306
  %v309 = vsel %vm229, %v305, %v307
  %v312 = vadd.f32 %v286, %v308
  %v313 = vadd.f32 %v287, %v309
  %s314 = scalar_lea.vmem %s2, 12
  %v315 = vld [vmem:[%s314] sm:$0x1]
  %317 = vset.pattern.permute.xlu0 0
  %318 = vperm.xlu0 %317, %v315
  %v319 = vpop.permute.xlu0 %318
  %v320 = vlaneseq
  %v321 = vshrl.u32 %v320, 7
  %v322 = vsub.s32 0, %v321
  %v323 = vrot.slane %v319, %v322
  %v325 = vmul.f32 %v31, %v323
  %v326 = vmul.f32 %v33, %v323
  %329 = vrot.lane.b32.xlu0 %v325, 108
  %v330 = vpop.permute.xlu0 %329
  %331 = vrot.lane.b32.xlu0 %v326, 108
  %v332 = vpop.permute.xlu0 %331
  %v333 = vrot.slane %v330, 1
  %v334 = vrot.slane %v332, 1
  %vm335 = vcmask 883712
  %v336 = vsel %vm335, %v330, %v333
  %v337 = vsel %vm335, %v332, %v334
  %v340 = vadd.f32 %v312, %v336
  %v341 = vadd.f32 %v313, %v337
  %v342 = vld [vmem:[%s314 + $0x1] sm:$0x1]
  %344 = vset.pattern.permute.xlu0 0
  %345 = vperm.xlu0 %344, %v342
  %v346 = vpop.permute.xlu0 %345
  %v347 = vlaneseq
  %v348 = vshrl.u32 %v347, 7
  %v349 = vsub.s32 0, %v348
  %v350 = vrot.slane %v346, %v349
  %v352 = vmul.f32 %v49, %v350
  %v353 = vmul.f32 %v51, %v350
  %356 = vrot.lane.b32.xlu0 %v352, 108
  %v357 = vpop.permute.xlu0 %356
  %358 = vrot.lane.b32.xlu0 %v353, 108
  %v359 = vpop.permute.xlu0 %358
  %v360 = vrot.slane %v357, 1
  %v361 = vrot.slane %v359, 1
  %v362 = vsel %vm335, %v357, %v360
  %v363 = vsel %vm335, %v359, %v361
  %v366 = vadd.f32 %v340, %v362
  %v367 = vadd.f32 %v341, %v363
  %v368 = vld [vmem:[%s314 + $0x2] sm:$0x1]
  %370 = vset.pattern.permute.xlu0 0
  %371 = vperm.xlu0 %370, %v368
  %v372 = vpop.permute.xlu0 %371
  %v373 = vlaneseq
  %v374 = vshrl.u32 %v373, 7
  %v375 = vsub.s32 0, %v374
  %v376 = vrot.slane %v372, %v375
  %v378 = vmul.f32 %v67, %v376
  %v379 = vmul.f32 %v69, %v376
  %382 = vrot.lane.b32.xlu0 %v378, 108
  %v383 = vpop.permute.xlu0 %382
  %384 = vrot.lane.b32.xlu0 %v379, 108
  %v385 = vpop.permute.xlu0 %384
  %v386 = vrot.slane %v383, 1
  %v387 = vrot.slane %v385, 1
  %v388 = vsel %vm335, %v383, %v386
  %v389 = vsel %vm335, %v385, %v387
  %v392 = vadd.f32 %v366, %v388
  %v393 = vadd.f32 %v367, %v389
  %v394 = vld [vmem:[%s314 + $0x3] sm:$0x1]
  %396 = vset.pattern.permute.xlu0 0
  %397 = vperm.xlu0 %396, %v394
  %v398 = vpop.permute.xlu0 %397
  %v399 = vlaneseq
  %v400 = vshrl.u32 %v399, 7
  %v401 = vsub.s32 0, %v400
  %v402 = vrot.slane %v398, %v401
  %v404 = vmul.f32 %v85, %v402
  %v405 = vmul.f32 %v87, %v402
  %408 = vrot.lane.b32.xlu0 %v404, 108
  %v409 = vpop.permute.xlu0 %408
  %410 = vrot.lane.b32.xlu0 %v405, 108
  %v411 = vpop.permute.xlu0 %410
  %v412 = vrot.slane %v409, 1
  %v413 = vrot.slane %v411, 1
  %v414 = vsel %vm335, %v409, %v412
  %v415 = vsel %vm335, %v411, %v413
  %v418 = vadd.f32 %v392, %v414
  %v419 = vadd.f32 %v393, %v415
  %s420 = scalar_lea.vmem %s2, 16
  %v421 = vld [vmem:[%s420] sm:$0x1]
  %423 = vset.pattern.permute.xlu0 0
  %424 = vperm.xlu0 %423, %v421
  %v425 = vpop.permute.xlu0 %424
  %v426 = vlaneseq
  %v427 = vshrl.u32 %v426, 7
  %v428 = vsub.s32 0, %v427
  %v429 = vrot.slane %v425, %v428
  %v431 = vmul.f32 %v31, %v429
  %v432 = vmul.f32 %v33, %v429
  %435 = vrot.lane.b32.xlu0 %v431, 107
  %v436 = vpop.permute.xlu0 %435
  %437 = vrot.lane.b32.xlu0 %v432, 107
  %v438 = vpop.permute.xlu0 %437
  %v439 = vrot.slane %v436, 1
  %v440 = vrot.slane %v438, 1
  %vm441 = vcmask 875520
  %v442 = vsel %vm441, %v436, %v439
  %v443 = vsel %vm441, %v438, %v440
  %v446 = vadd.f32 %v418, %v442
  %v447 = vadd.f32 %v419, %v443
  %v448 = vld [vmem:[%s420 + $0x1] sm:$0x1]
  %450 = vset.pattern.permute.xlu0 0
  %451 = vperm.xlu0 %450, %v448
  %v452 = vpop.permute.xlu0 %451
  %v453 = vlaneseq
  %v454 = vshrl.u32 %v453, 7
  %v455 = vsub.s32 0, %v454
  %v456 = vrot.slane %v452, %v455
  %v458 = vmul.f32 %v49, %v456
  %v459 = vmul.f32 %v51, %v456
  %462 = vrot.lane.b32.xlu0 %v458, 107
  %v463 = vpop.permute.xlu0 %462
  %464 = vrot.lane.b32.xlu0 %v459, 107
  %v465 = vpop.permute.xlu0 %464
  %v466 = vrot.slane %v463, 1
  %v467 = vrot.slane %v465, 1
  %v468 = vsel %vm441, %v463, %v466
  %v469 = vsel %vm441, %v465, %v467
  %v472 = vadd.f32 %v446, %v468
  %v473 = vadd.f32 %v447, %v469
  %v474 = vld [vmem:[%s420 + $0x2] sm:$0x1]
  %476 = vset.pattern.permute.xlu0 0
  %477 = vperm.xlu0 %476, %v474
  %v478 = vpop.permute.xlu0 %477
  %v479 = vlaneseq
  %v480 = vshrl.u32 %v479, 7
  %v481 = vsub.s32 0, %v480
  %v482 = vrot.slane %v478, %v481
  %v484 = vmul.f32 %v67, %v482
  %v485 = vmul.f32 %v69, %v482
  %488 = vrot.lane.b32.xlu0 %v484, 107
  %v489 = vpop.permute.xlu0 %488
  %490 = vrot.lane.b32.xlu0 %v485, 107
  %v491 = vpop.permute.xlu0 %490
  %v492 = vrot.slane %v489, 1
  %v493 = vrot.slane %v491, 1
  %v494 = vsel %vm441, %v489, %v492
  %v495 = vsel %vm441, %v491, %v493
  %v498 = vadd.f32 %v472, %v494
  %v499 = vadd.f32 %v473, %v495
  %v500 = vld [vmem:[%s420 + $0x3] sm:$0x1]
  %502 = vset.pattern.permute.xlu0 0
  %503 = vperm.xlu0 %502, %v500
  %v504 = vpop.permute.xlu0 %503
  %v505 = vlaneseq
  %v506 = vshrl.u32 %v505, 7
  %v507 = vsub.s32 0, %v506
  %v508 = vrot.slane %v504, %v507
  %v510 = vmul.f32 %v85, %v508
  %v511 = vmul.f32 %v87, %v508
  %514 = vrot.lane.b32.xlu0 %v510, 107
  %v515 = vpop.permute.xlu0 %514
  %516 = vrot.lane.b32.xlu0 %v511, 107
  %v517 = vpop.permute.xlu0 %516
  %v518 = vrot.slane %v515, 1
  %v519 = vrot.slane %v517, 1
  %v520 = vsel %vm441, %v515, %v518
  %v521 = vsel %vm441, %v517, %v519
  %v524 = vadd.f32 %v498, %v520
  %v525 = vadd.f32 %v499, %v521
  %s526 = scalar_lea.vmem %s2, 20
  %v527 = vld [vmem:[%s526] sm:$0x1]
  %529 = vset.pattern.permute.xlu0 0
  %530 = vperm.xlu0 %529, %v527
  %v531 = vpop.permute.xlu0 %530
  %v532 = vlaneseq
  %v533 = vshrl.u32 %v532, 7
  %v534 = vsub.s32 0, %v533
  %v535 = vrot.slane %v531, %v534
  %v537 = vmul.f32 %v31, %v535
  %v538 = vmul.f32 %v33, %v535
  %541 = vrot.lane.b32.xlu0 %v537, 106
  %v542 = vpop.permute.xlu0 %541
  %543 = vrot.lane.b32.xlu0 %v538, 106
  %v544 = vpop.permute.xlu0 %543
  %v545 = vrot.slane %v542, 1
  %v546 = vrot.slane %v544, 1
  %vm547 = vcmask 867328
  %v548 = vsel %vm547, %v542, %v545
  %v549 = vsel %vm547, %v544, %v546
  %v552 = vadd.f32 %v524, %v548
  %v553 = vadd.f32 %v525, %v549
  %v554 = vld [vmem:[%s526 + $0x1] sm:$0x1]
  %556 = vset.pattern.permute.xlu0 0
  %557 = vperm.xlu0 %556, %v554
  %v558 = vpop.permute.xlu0 %557
  %v559 = vlaneseq
  %v560 = vshrl.u32 %v559, 7
  %v561 = vsub.s32 0, %v560
  %v562 = vrot.slane %v558, %v561
  %v564 = vmul.f32 %v49, %v562
  %v565 = vmul.f32 %v51, %v562
  %568 = vrot.lane.b32.xlu0 %v564, 106
  %v569 = vpop.permute.xlu0 %568
  %570 = vrot.lane.b32.xlu0 %v565, 106
  %v571 = vpop.permute.xlu0 %570
  %v572 = vrot.slane %v569, 1
  %v573 = vrot.slane %v571, 1
  %v574 = vsel %vm547, %v569, %v572
  %v575 = vsel %vm547, %v571, %v573
  %v578 = vadd.f32 %v552, %v574
  %v579 = vadd.f32 %v553, %v575
  %v580 = vld [vmem:[%s526 + $0x2] sm:$0x1]
  %582 = vset.pattern.permute.xlu0 0
  %583 = vperm.xlu0 %582, %v580
  %v584 = vpop.permute.xlu0 %583
  %v585 = vlaneseq
  %v586 = vshrl.u32 %v585, 7
  %v587 = vsub.s32 0, %v586
  %v588 = vrot.slane %v584, %v587
  %v590 = vmul.f32 %v67, %v588
  %v591 = vmul.f32 %v69, %v588
  %594 = vrot.lane.b32.xlu0 %v590, 106
  %v595 = vpop.permute.xlu0 %594
  %596 = vrot.lane.b32.xlu0 %v591, 106
  %v597 = vpop.permute.xlu0 %596
  %v598 = vrot.slane %v595, 1
  %v599 = vrot.slane %v597, 1
  %v600 = vsel %vm547, %v595, %v598
  %v601 = vsel %vm547, %v597, %v599
  %v604 = vadd.f32 %v578, %v600
  %v605 = vadd.f32 %v579, %v601
  %v606 = vld [vmem:[%s526 + $0x3] sm:$0x1]
  %608 = vset.pattern.permute.xlu0 0
  %609 = vperm.xlu0 %608, %v606
  %v610 = vpop.permute.xlu0 %609
  %v611 = vlaneseq
  %v612 = vshrl.u32 %v611, 7
  %v613 = vsub.s32 0, %v612
  %v614 = vrot.slane %v610, %v613
  %v616 = vmul.f32 %v85, %v614
  %v617 = vmul.f32 %v87, %v614
  %620 = vrot.lane.b32.xlu0 %v616, 106
  %v621 = vpop.permute.xlu0 %620
  %622 = vrot.lane.b32.xlu0 %v617, 106
  %v623 = vpop.permute.xlu0 %622
  %v624 = vrot.slane %v621, 1
  %v625 = vrot.slane %v623, 1
  %v626 = vsel %vm547, %v621, %v624
  %v627 = vsel %vm547, %v623, %v625
  %v630 = vadd.f32 %v604, %v626
  %v631 = vadd.f32 %v605, %v627
  %s632 = scalar_lea.vmem %s2, 24
  %v633 = vld [vmem:[%s632] sm:$0x1]
  %635 = vset.pattern.permute.xlu0 0
  %636 = vperm.xlu0 %635, %v633
  %v637 = vpop.permute.xlu0 %636
  %v638 = vlaneseq
  %v639 = vshrl.u32 %v638, 7
  %v640 = vsub.s32 0, %v639
  %v641 = vrot.slane %v637, %v640
  %v643 = vmul.f32 %v31, %v641
  %v644 = vmul.f32 %v33, %v641
  %647 = vrot.lane.b32.xlu0 %v643, 88
  %v648 = vpop.permute.xlu0 %647
  %649 = vrot.lane.b32.xlu0 %v644, 88
  %v650 = vpop.permute.xlu0 %649
  %v651 = vrot.slane %v648, 1
  %v652 = vrot.slane %v650, 1
  %vm653 = vcmask 719872
  %v654 = vsel %vm653, %v648, %v651
  %v655 = vsel %vm653, %v650, %v652
  %v658 = vadd.f32 %v630, %v654
  %v659 = vadd.f32 %v631, %v655
  %v660 = vld [vmem:[%s632 + $0x1] sm:$0x1]
  %662 = vset.pattern.permute.xlu0 0
  %663 = vperm.xlu0 %662, %v660
  %v664 = vpop.permute.xlu0 %663
  %v665 = vlaneseq
  %v666 = vshrl.u32 %v665, 7
  %v667 = vsub.s32 0, %v666
  %v668 = vrot.slane %v664, %v667
  %v670 = vmul.f32 %v49, %v668
  %v671 = vmul.f32 %v51, %v668
  %674 = vrot.lane.b32.xlu0 %v670, 88
  %v675 = vpop.permute.xlu0 %674
  %676 = vrot.lane.b32.xlu0 %v671, 88
  %v677 = vpop.permute.xlu0 %676
  %v678 = vrot.slane %v675, 1
  %v679 = vrot.slane %v677, 1
  %v680 = vsel %vm653, %v675, %v678
  %v681 = vsel %vm653, %v677, %v679
  %v684 = vadd.f32 %v658, %v680
  %v685 = vadd.f32 %v659, %v681
  %v686 = vld [vmem:[%s632 + $0x2] sm:$0x1]
  %688 = vset.pattern.permute.xlu0 0
  %689 = vperm.xlu0 %688, %v686
  %v690 = vpop.permute.xlu0 %689
  %v691 = vlaneseq
  %v692 = vshrl.u32 %v691, 7
  %v693 = vsub.s32 0, %v692
  %v694 = vrot.slane %v690, %v693
  %v696 = vmul.f32 %v67, %v694
  %v697 = vmul.f32 %v69, %v694
  %700 = vrot.lane.b32.xlu0 %v696, 88
  %v701 = vpop.permute.xlu0 %700
  %702 = vrot.lane.b32.xlu0 %v697, 88
  %v703 = vpop.permute.xlu0 %702
  %v704 = vrot.slane %v701, 1
  %v705 = vrot.slane %v703, 1
  %v706 = vsel %vm653, %v701, %v704
  %v707 = vsel %vm653, %v703, %v705
  %v710 = vadd.f32 %v684, %v706
  %v711 = vadd.f32 %v685, %v707
  %v712 = vld [vmem:[%s632 + $0x3] sm:$0x1]
  %714 = vset.pattern.permute.xlu0 0
  %715 = vperm.xlu0 %714, %v712
  %v716 = vpop.permute.xlu0 %715
  %v717 = vlaneseq
  %v718 = vshrl.u32 %v717, 7
  %v719 = vsub.s32 0, %v718
  %v720 = vrot.slane %v716, %v719
  %v722 = vmul.f32 %v85, %v720
  %v723 = vmul.f32 %v87, %v720
  %726 = vrot.lane.b32.xlu0 %v722, 88
  %v727 = vpop.permute.xlu0 %726
  %728 = vrot.lane.b32.xlu0 %v723, 88
  %v729 = vpop.permute.xlu0 %728
  %v730 = vrot.slane %v727, 1
  %v731 = vrot.slane %v729, 1
  %v732 = vsel %vm653, %v727, %v730
  %v733 = vsel %vm653, %v729, %v731
  %v736 = vadd.f32 %v710, %v732
  %v737 = vadd.f32 %v711, %v733
  %s738 = scalar_lea.vmem %s2, 28
  %v739 = vld [vmem:[%s738] sm:$0x1]
  %741 = vset.pattern.permute.xlu0 0
  %742 = vperm.xlu0 %741, %v739
  %v743 = vpop.permute.xlu0 %742
  %v744 = vlaneseq
  %v745 = vshrl.u32 %v744, 7
  %v746 = vsub.s32 0, %v745
  %v747 = vrot.slane %v743, %v746
  %v749 = vmul.f32 %v31, %v747
  %v750 = vmul.f32 %v33, %v747
  %753 = vrot.lane.b32.xlu0 %v749, 87
  %v754 = vpop.permute.xlu0 %753
  %755 = vrot.lane.b32.xlu0 %v750, 87
  %v756 = vpop.permute.xlu0 %755
  %v757 = vrot.slane %v754, 1
  %v758 = vrot.slane %v756, 1
  %vm759 = vcmask 711680
  %v760 = vsel %vm759, %v754, %v757
  %v761 = vsel %vm759, %v756, %v758
  %v764 = vadd.f32 %v736, %v760
  %v765 = vadd.f32 %v737, %v761
  %v766 = vld [vmem:[%s738 + $0x1] sm:$0x1]
  %768 = vset.pattern.permute.xlu0 0
  %769 = vperm.xlu0 %768, %v766
  %v770 = vpop.permute.xlu0 %769
  %v771 = vlaneseq
  %v772 = vshrl.u32 %v771, 7
  %v773 = vsub.s32 0, %v772
  %v774 = vrot.slane %v770, %v773
  %v776 = vmul.f32 %v49, %v774
  %v777 = vmul.f32 %v51, %v774
  %780 = vrot.lane.b32.xlu0 %v776, 87
  %v781 = vpop.permute.xlu0 %780
  %782 = vrot.lane.b32.xlu0 %v777, 87
  %v783 = vpop.permute.xlu0 %782
  %v784 = vrot.slane %v781, 1
  %v785 = vrot.slane %v783, 1
  %v786 = vsel %vm759, %v781, %v784
  %v787 = vsel %vm759, %v783, %v785
  %v790 = vadd.f32 %v764, %v786
  %v791 = vadd.f32 %v765, %v787
  %v792 = vld [vmem:[%s738 + $0x2] sm:$0x1]
  %794 = vset.pattern.permute.xlu0 0
  %795 = vperm.xlu0 %794, %v792
  %v796 = vpop.permute.xlu0 %795
  %v797 = vlaneseq
  %v798 = vshrl.u32 %v797, 7
  %v799 = vsub.s32 0, %v798
  %v800 = vrot.slane %v796, %v799
  %v802 = vmul.f32 %v67, %v800
  %v803 = vmul.f32 %v69, %v800
  %806 = vrot.lane.b32.xlu0 %v802, 87
  %v807 = vpop.permute.xlu0 %806
  %808 = vrot.lane.b32.xlu0 %v803, 87
  %v809 = vpop.permute.xlu0 %808
  %v810 = vrot.slane %v807, 1
  %v811 = vrot.slane %v809, 1
  %v812 = vsel %vm759, %v807, %v810
  %v813 = vsel %vm759, %v809, %v811
  %v816 = vadd.f32 %v790, %v812
  %v817 = vadd.f32 %v791, %v813
  %v818 = vld [vmem:[%s738 + $0x3] sm:$0x1]
  %820 = vset.pattern.permute.xlu0 0
  %821 = vperm.xlu0 %820, %v818
  %v822 = vpop.permute.xlu0 %821
  %v823 = vlaneseq
  %v824 = vshrl.u32 %v823, 7
  %v825 = vsub.s32 0, %v824
  %v826 = vrot.slane %v822, %v825
  %v828 = vmul.f32 %v85, %v826
  %v829 = vmul.f32 %v87, %v826
  %832 = vrot.lane.b32.xlu0 %v828, 87
  %v833 = vpop.permute.xlu0 %832
  %834 = vrot.lane.b32.xlu0 %v829, 87
  %v835 = vpop.permute.xlu0 %834
  %v836 = vrot.slane %v833, 1
  %v837 = vrot.slane %v835, 1
  %v838 = vsel %vm759, %v833, %v836
  %v839 = vsel %vm759, %v835, %v837
  %v842 = vadd.f32 %v816, %v838
  %v843 = vadd.f32 %v817, %v839
  %s844 = scalar_lea.vmem %s2, 32
  %v845 = vld [vmem:[%s844] sm:$0x1]
  %847 = vset.pattern.permute.xlu0 0
  %848 = vperm.xlu0 %847, %v845
  %v849 = vpop.permute.xlu0 %848
  %v850 = vlaneseq
  %v851 = vshrl.u32 %v850, 7
  %v852 = vsub.s32 0, %v851
  %v853 = vrot.slane %v849, %v852
  %v855 = vmul.f32 %v31, %v853
  %v856 = vmul.f32 %v33, %v853
  %859 = vrot.lane.b32.xlu0 %v855, 86
  %v860 = vpop.permute.xlu0 %859
  %861 = vrot.lane.b32.xlu0 %v856, 86
  %v862 = vpop.permute.xlu0 %861
  %v863 = vrot.slane %v860, 1
  %v864 = vrot.slane %v862, 1
  %vm865 = vcmask 703488
  %v866 = vsel %vm865, %v860, %v863
  %v867 = vsel %vm865, %v862, %v864
  %v870 = vadd.f32 %v842, %v866
  %v871 = vadd.f32 %v843, %v867
  %v872 = vld [vmem:[%s844 + $0x1] sm:$0x1]
  %874 = vset.pattern.permute.xlu0 0
  %875 = vperm.xlu0 %874, %v872
  %v876 = vpop.permute.xlu0 %875
  %v877 = vlaneseq
  %v878 = vshrl.u32 %v877, 7
  %v879 = vsub.s32 0, %v878
  %v880 = vrot.slane %v876, %v879
  %v882 = vmul.f32 %v49, %v880
  %v883 = vmul.f32 %v51, %v880
  %886 = vrot.lane.b32.xlu0 %v882, 86
  %v887 = vpop.permute.xlu0 %886
  %888 = vrot.lane.b32.xlu0 %v883, 86
  %v889 = vpop.permute.xlu0 %888
  %v890 = vrot.slane %v887, 1
  %v891 = vrot.slane %v889, 1
  %v892 = vsel %vm865, %v887, %v890
  %v893 = vsel %vm865, %v889, %v891
  %v896 = vadd.f32 %v870, %v892
  %v897 = vadd.f32 %v871, %v893
  %v898 = vld [vmem:[%s844 + $0x2] sm:$0x1]
  %900 = vset.pattern.permute.xlu0 0
  %901 = vperm.xlu0 %900, %v898
  %v902 = vpop.permute.xlu0 %901
  %v903 = vlaneseq
  %v904 = vshrl.u32 %v903, 7
  %v905 = vsub.s32 0, %v904
  %v906 = vrot.slane %v902, %v905
  %v908 = vmul.f32 %v67, %v906
  %v909 = vmul.f32 %v69, %v906
  %912 = vrot.lane.b32.xlu0 %v908, 86
  %v913 = vpop.permute.xlu0 %912
  %914 = vrot.lane.b32.xlu0 %v909, 86
  %v915 = vpop.permute.xlu0 %914
  %v916 = vrot.slane %v913, 1
  %v917 = vrot.slane %v915, 1
  %v918 = vsel %vm865, %v913, %v916
  %v919 = vsel %vm865, %v915, %v917
  %v922 = vadd.f32 %v896, %v918
  %v923 = vadd.f32 %v897, %v919
  %v924 = vld [vmem:[%s844 + $0x3] sm:$0x1]
  %926 = vset.pattern.permute.xlu0 0
  %927 = vperm.xlu0 %926, %v924
  %v928 = vpop.permute.xlu0 %927
  %v929 = vlaneseq
  %v930 = vshrl.u32 %v929, 7
  %v931 = vsub.s32 0, %v930
  %v932 = vrot.slane %v928, %v931
  %v934 = vmul.f32 %v85, %v932
  %v935 = vmul.f32 %v87, %v932
  %938 = vrot.lane.b32.xlu0 %v934, 86
  %v939 = vpop.permute.xlu0 %938
  %940 = vrot.lane.b32.xlu0 %v935, 86
  %v941 = vpop.permute.xlu0 %940
  %v942 = vrot.slane %v939, 1
  %v943 = vrot.slane %v941, 1
  %v944 = vsel %vm865, %v939, %v942
  %v945 = vsel %vm865, %v941, %v943
  %v948 = vadd.f32 %v922, %v944
  %v949 = vadd.f32 %v923, %v945
  %v952 = vlaneseq
  %v953 = vshrl.u32 %v952, 7
  %v954 = vsub.s32 0, %v953
  %v955 = vrot.slane %v948, %v954
  %v956 = vlaneseq
  %v957 = vshrl.u32 %v956, 7
  %v958 = vsub.s32 1, %v957
  %v959 = vrot.slane %v948, %v958
  %v960 = vlaneseq
  %v961 = vshrl.u32 %v960, 7
  %v962 = vsub.s32 2, %v961
  %v963 = vrot.slane %v948, %v962
  %v964 = vlaneseq
  %v965 = vshrl.u32 %v964, 7
  %v966 = vsub.s32 3, %v965
  %v967 = vrot.slane %v948, %v966
  %v968 = vlaneseq
  %v969 = vshrl.u32 %v968, 7
  %v970 = vsub.s32 0, %v969
  %v971 = vrot.slane %v949, %v970
  %v972 = vlaneseq
  %v973 = vshrl.u32 %v972, 7
  %v974 = vsub.s32 1, %v973
  %v975 = vrot.slane %v949, %v974
  %v976 = vlaneseq
  %v977 = vshrl.u32 %v976, 7
  %v978 = vsub.s32 2, %v977
  %v979 = vrot.slane %v949, %v978
  %v980 = vlaneseq
  %v981 = vshrl.u32 %v980, 7
  %v982 = vsub.s32 3, %v981
  %v983 = vrot.slane %v949, %v982
  %v984 = vcombine.low %v955, %v959
  %v985 = vcombine.low %v963, %v967
  %v986 = vcombine.low %v971, %v975
  %v987 = vcombine.low %v979, %v983
  %988 = vrot.lane.b32.xlu0 %v984, 21
  %v989 = vpop.permute.xlu0 %988
  %990 = vrot.lane.b32.xlu0 %v985, 21
  %v991 = vpop.permute.xlu0 %990
  %992 = vrot.lane.b32.xlu0 %v986, 21
  %v993 = vpop.permute.xlu0 %992
  %994 = vrot.lane.b32.xlu0 %v987, 21
  %v995 = vpop.permute.xlu0 %994
  %v996 = vrot.slane %v989, 4
  %v997 = vrot.slane %v991, 4
  %v998 = vrot.slane %v993, 4
  %v999 = vrot.slane %v995, 4
  %vm1000 = vcmask 171008
  %v1001 = vsel %vm1000, %v996, %v989
  %vm1002 = vcmask 1043456
  %v1003 = vsel %vm1002, %v996, %v997
  %v1004 = vsel %vm1000, %v1003, %v991
  %v1005 = vsel %vm1000, %v998, %v993
  %v1006 = vsel %vm1002, %v998, %v999
  %v1007 = vsel %vm1000, %v1006, %v995
  %v1012 = vadd.f32 %v27, %v1001
  %v1013 = vadd.f32 %v28, %v1004
  %v1014 = vadd.f32 %v29, %v1005
  %v1015 = vadd.f32 %v30, %v1007
  %v1016 = vld [vmem:[%s4] sm:$0xf]
  %1018 = vset.pattern.permute.xlu0 0
  %1019 = vperm.xlu0 %1018, %v1016
  %v1020 = vpop.permute.xlu0 %1019
  %v1022 = vunpack.c.l.s4 839922192
  %v1023 = vunpack.c.0.s8 %v1022
  %v1024 = vlaneseq
  %v1025 = vshrl.u32 %v1024, 7
  %v1026 = vsub.s32 %v1023, %v1025
  %v1027 = vrot.slane %v1020, %v1026
  %v1029 = vadd.f32 %v1012, %v1027
  %v1030 = vadd.f32 %v1013, %v1027
  %v1031 = vadd.f32 %v1014, %v1027
  %v1032 = vadd.f32 %v1015, %v1027
  %v1034 = vlaneseq
  %v1035 = vshrl.u32 %v1034, 7
  %v1036 = vsub.s32 0, %v1035
  %v1037 = vrot.slane %v20, %v1036
  %v1038 = vlaneseq
  %v1039 = vshrl.u32 %v1038, 7
  %v1040 = vsub.s32 1, %v1039
  %v1041 = vrot.slane %v20, %v1040
  %v1042 = vlaneseq
  %v1043 = vshrl.u32 %v1042, 7
  %v1044 = vsub.s32 2, %v1043
  %v1045 = vrot.slane %v20, %v1044
  %v1046 = vlaneseq
  %v1047 = vshrl.u32 %v1046, 7
  %v1048 = vsub.s32 3, %v1047
  %v1049 = vrot.slane %v20, %v1048
  %v1054 = vcombine.low %v1037, %v1041
  %v1055 = vcombine.low %v1045, %v1049
  %1056 = vrot.lane.b32.xlu0 %v1054, 42
  %v1057 = vpop.permute.xlu0 %1056
  %1058 = vrot.lane.b32.xlu0 %v1055, 42
  %v1059 = vpop.permute.xlu0 %1058
  %v1060 = vrot.slane %v1057, 4
  %v1061 = vrot.slane %v1059, 4
  %vm1062 = vcmask 343040
  %v1063 = vsel %vm1062, %v1060, %v1057
  %v1064 = vsel %vm1002, %v1060, %v1061
  %v1065 = vsel %vm1062, %v1064, %v1059
  %v1068 = vmul.f32 %v1029, %v1063
  %v1069 = vmul.f32 %v1030, %v1065
  %v1070 = vmul.f32 %v1031, %v1063
  %v1071 = vmul.f32 %v1032, %v1065
  %vm1072 = vcmask 1043792
  %vm1073 = vcmask 1047556
  %vm1074 = vmor %vm1073, %vm1072
  %1075 = vst.msk [vmem:[#allocation2] sm:$0xff] %vm1074, %v1068
  %vm1076 = vcmask 474116
  %vm1077 = vmor %vm1076, %vm1002
  %1078 = vst.msk [vmem:[#allocation2 + $0x8] sm:$0xff] %vm1077, %v1069
  %1079 = vst.msk [vmem:[#allocation2 + $0x10] sm:$0xff] %vm1074, %v1070
  %1080 = vst.msk [vmem:[#allocation2 + $0x18] sm:$0xff] %vm1077, %v1071
  %v1081 = vld [vmem:[#allocation2] ss:$4 sm:$0xf]
  %s1082 = scalar_lea.vmem [#allocation2], 16
  %v1083 = vld [vmem:[%s1082] ss:$4 sm:$0xf]
  %v1084 = vld [vmem:[%s3] sm:$0xf]
  %v1087 = vlaneseq
  %v1088 = vshrl.u32 %v1087, 7
  %v1089 = vsub.s32 0, %v1088
  %v1090 = vrot.slane %v1081, %v1089
  %v1091 = vlaneseq
  %v1092 = vshrl.u32 %v1091, 7
  %v1093 = vsub.s32 1, %v1092
  %v1094 = vrot.slane %v1081, %v1093
  %v1095 = vlaneseq
  %v1096 = vshrl.u32 %v1095, 7
  %v1097 = vsub.s32 2, %v1096
  %v1098 = vrot.slane %v1081, %v1097
  %v1099 = vlaneseq
  %v1100 = vshrl.u32 %v1099, 7
  %v1101 = vsub.s32 3, %v1100
  %v1102 = vrot.slane %v1081, %v1101
  %v1103 = vlaneseq
  %v1104 = vshrl.u32 %v1103, 7
  %v1105 = vsub.s32 0, %v1104
  %v1106 = vrot.slane %v1083, %v1105
  %v1107 = vlaneseq
  %v1108 = vshrl.u32 %v1107, 7
  %v1109 = vsub.s32 1, %v1108
  %v1110 = vrot.slane %v1083, %v1109
  %v1111 = vlaneseq
  %v1112 = vshrl.u32 %v1111, 7
  %v1113 = vsub.s32 2, %v1112
  %v1114 = vrot.slane %v1083, %v1113
  %v1115 = vlaneseq
  %v1116 = vshrl.u32 %v1115, 7
  %v1117 = vsub.s32 3, %v1116
  %v1118 = vrot.slane %v1083, %v1117
  %1128 = vset.pattern.permute.xlu0 0
  %1129 = vperm.xlu0 %1128, %v1084
  %v1130 = vpop.permute.xlu0 %1129
  %v1132 = vmul.f32 %v1090, %v1130
  %v1133 = vmul.f32 %v1094, %v1130
  %v1134 = vmul.f32 %v1098, %v1130
  %v1135 = vmul.f32 %v1102, %v1130
  %v1136 = vmul.f32 %v1106, %v1130
  %v1137 = vmul.f32 %v1110, %v1130
  %v1138 = vmul.f32 %v1114, %v1130
  %v1139 = vmul.f32 %v1118, %v1130
  %v1140 = vadd.f32 %v1132, 0.0
  %v1141 = vadd.f32 %v1133, 0.0
  %v1142 = vadd.f32 %v1134, 0.0
  %v1143 = vadd.f32 %v1135, 0.0
  %v1144 = vadd.f32 %v1136, 0.0
  %v1145 = vadd.f32 %v1137, 0.0
  %v1146 = vadd.f32 %v1138, 0.0
  %v1147 = vadd.f32 %v1139, 0.0
  %s1148 = scalar_lea.vmem [#allocation2], 1
  %v1149 = vld [vmem:[%s1148] ss:$4 sm:$0xf]
  %s1150 = scalar_lea.vmem [#allocation2], 17
  %v1151 = vld [vmem:[%s1150] ss:$4 sm:$0xf]
  %s1152 = scalar_lea.vmem %s3, 4
  %v1153 = vld [vmem:[%s1152] sm:$0xf]
  %v1156 = vlaneseq
  %v1157 = vshrl.u32 %v1156, 7
  %v1158 = vsub.s32 0, %v1157
  %v1159 = vrot.slane %v1149, %v1158
  %v1160 = vlaneseq
  %v1161 = vshrl.u32 %v1160, 7
  %v1162 = vsub.s32 1, %v1161
  %v1163 = vrot.slane %v1149, %v1162
  %v1164 = vlaneseq
  %v1165 = vshrl.u32 %v1164, 7
  %v1166 = vsub.s32 2, %v1165
  %v1167 = vrot.slane %v1149, %v1166
  %v1168 = vlaneseq
  %v1169 = vshrl.u32 %v1168, 7
  %v1170 = vsub.s32 3, %v1169
  %v1171 = vrot.slane %v1149, %v1170
  %v1172 = vlaneseq
  %v1173 = vshrl.u32 %v1172, 7
  %v1174 = vsub.s32 0, %v1173
  %v1175 = vrot.slane %v1151, %v1174
  %v1176 = vlaneseq
  %v1177 = vshrl.u32 %v1176, 7
  %v1178 = vsub.s32 1, %v1177
  %v1179 = vrot.slane %v1151, %v1178
  %v1180 = vlaneseq
  %v1181 = vshrl.u32 %v1180, 7
  %v1182 = vsub.s32 2, %v1181
  %v1183 = vrot.slane %v1151, %v1182
  %v1184 = vlaneseq
  %v1185 = vshrl.u32 %v1184, 7
  %v1186 = vsub.s32 3, %v1185
  %v1187 = vrot.slane %v1151, %v1186
  %1197 = vset.pattern.permute.xlu0 0
  %1198 = vperm.xlu0 %1197, %v1153
  %v1199 = vpop.permute.xlu0 %1198
  %v1201 = vmul.f32 %v1159, %v1199
  %v1202 = vmul.f32 %v1163, %v1199
  %v1203 = vmul.f32 %v1167, %v1199
  %v1204 = vmul.f32 %v1171, %v1199
  %v1205 = vmul.f32 %v1175, %v1199
  %v1206 = vmul.f32 %v1179, %v1199
  %v1207 = vmul.f32 %v1183, %v1199
  %v1208 = vmul.f32 %v1187, %v1199
  %v1209 = vadd.f32 %v1140, %v1201
  %v1210 = vadd.f32 %v1141, %v1202
  %v1211 = vadd.f32 %v1142, %v1203
  %v1212 = vadd.f32 %v1143, %v1204
  %v1213 = vadd.f32 %v1144, %v1205
  %v1214 = vadd.f32 %v1145, %v1206
  %v1215 = vadd.f32 %v1146, %v1207
  %v1216 = vadd.f32 %v1147, %v1208
  %s1217 = scalar_lea.vmem [#allocation2], 2
  %v1218 = vld [vmem:[%s1217] ss:$4 sm:$0xf]
  %s1219 = scalar_lea.vmem [#allocation2], 18
  %v1220 = vld [vmem:[%s1219] ss:$4 sm:$0xf]
  %s1221 = scalar_lea.vmem %s3, 8
  %v1222 = vld [vmem:[%s1221] sm:$0xf]
  %v1225 = vlaneseq
  %v1226 = vshrl.u32 %v1225, 7
  %v1227 = vsub.s32 0, %v1226
  %v1228 = vrot.slane %v1218, %v1227
  %v1229 = vlaneseq
  %v1230 = vshrl.u32 %v1229, 7
  %v1231 = vsub.s32 1, %v1230
  %v1232 = vrot.slane %v1218, %v1231
  %v1233 = vlaneseq
  %v1234 = vshrl.u32 %v1233, 7
  %v1235 = vsub.s32 2, %v1234
  %v1236 = vrot.slane %v1218, %v1235
  %v1237 = vlaneseq
  %v1238 = vshrl.u32 %v1237, 7
  %v1239 = vsub.s32 3, %v1238
  %v1240 = vrot.slane %v1218, %v1239
  %v1241 = vlaneseq
  %v1242 = vshrl.u32 %v1241, 7
  %v1243 = vsub.s32 0, %v1242
  %v1244 = vrot.slane %v1220, %v1243
  %v1245 = vlaneseq
  %v1246 = vshrl.u32 %v1245, 7
  %v1247 = vsub.s32 1, %v1246
  %v1248 = vrot.slane %v1220, %v1247
  %v1249 = vlaneseq
  %v1250 = vshrl.u32 %v1249, 7
  %v1251 = vsub.s32 2, %v1250
  %v1252 = vrot.slane %v1220, %v1251
  %v1253 = vlaneseq
  %v1254 = vshrl.u32 %v1253, 7
  %v1255 = vsub.s32 3, %v1254
  %v1256 = vrot.slane %v1220, %v1255
  %1266 = vset.pattern.permute.xlu0 0
  %1267 = vperm.xlu0 %1266, %v1222
  %v1268 = vpop.permute.xlu0 %1267
  %v1270 = vmul.f32 %v1228, %v1268
  %v1271 = vmul.f32 %v1232, %v1268
  %v1272 = vmul.f32 %v1236, %v1268
  %v1273 = vmul.f32 %v1240, %v1268
  %v1274 = vmul.f32 %v1244, %v1268
  %v1275 = vmul.f32 %v1248, %v1268
  %v1276 = vmul.f32 %v1252, %v1268
  %v1277 = vmul.f32 %v1256, %v1268
  %v1278 = vadd.f32 %v1209, %v1270
  %v1279 = vadd.f32 %v1210, %v1271
  %v1280 = vadd.f32 %v1211, %v1272
  %v1281 = vadd.f32 %v1212, %v1273
  %v1282 = vadd.f32 %v1213, %v1274
  %v1283 = vadd.f32 %v1214, %v1275
  %v1284 = vadd.f32 %v1215, %v1276
  %v1285 = vadd.f32 %v1216, %v1277
  %s1286 = scalar_lea.vmem [#allocation2], 3
  %v1287 = vld [vmem:[%s1286] ss:$4 sm:$0xf]
  %s1288 = scalar_lea.vmem [#allocation2], 19
  %v1289 = vld [vmem:[%s1288] ss:$4 sm:$0xf]
  %s1290 = scalar_lea.vmem %s3, 12
  %v1291 = vld [vmem:[%s1290] sm:$0xf]
  %v1294 = vlaneseq
  %v1295 = vshrl.u32 %v1294, 7
  %v1296 = vsub.s32 0, %v1295
  %v1297 = vrot.slane %v1287, %v1296
  %v1298 = vlaneseq
  %v1299 = vshrl.u32 %v1298, 7
  %v1300 = vsub.s32 1, %v1299
  %v1301 = vrot.slane %v1287, %v1300
  %v1302 = vlaneseq
  %v1303 = vshrl.u32 %v1302, 7
  %v1304 = vsub.s32 2, %v1303
  %v1305 = vrot.slane %v1287, %v1304
  %v1306 = vlaneseq
  %v1307 = vshrl.u32 %v1306, 7
  %v1308 = vsub.s32 3, %v1307
  %v1309 = vrot.slane %v1287, %v1308
  %v1310 = vlaneseq
  %v1311 = vshrl.u32 %v1310, 7
  %v1312 = vsub.s32 0, %v1311
  %v1313 = vrot.slane %v1289, %v1312
  %v1314 = vlaneseq
  %v1315 = vshrl.u32 %v1314, 7
  %v1316 = vsub.s32 1, %v1315
  %v1317 = vrot.slane %v1289, %v1316
  %v1318 = vlaneseq
  %v1319 = vshrl.u32 %v1318, 7
  %v1320 = vsub.s32 2, %v1319
  %v1321 = vrot.slane %v1289, %v1320
  %v1322 = vlaneseq
  %v1323 = vshrl.u32 %v1322, 7
  %v1324 = vsub.s32 3, %v1323
  %v1325 = vrot.slane %v1289, %v1324
  %1335 = vset.pattern.permute.xlu0 0
  %1336 = vperm.xlu0 %1335, %v1291
  %v1337 = vpop.permute.xlu0 %1336
  %v1339 = vmul.f32 %v1297, %v1337
  %v1340 = vmul.f32 %v1301, %v1337
  %v1341 = vmul.f32 %v1305, %v1337
  %v1342 = vmul.f32 %v1309, %v1337
  %v1343 = vmul.f32 %v1313, %v1337
  %v1344 = vmul.f32 %v1317, %v1337
  %v1345 = vmul.f32 %v1321, %v1337
  %v1346 = vmul.f32 %v1325, %v1337
  %v1347 = vadd.f32 %v1278, %v1339
  %v1348 = vadd.f32 %v1279, %v1340
  %v1349 = vadd.f32 %v1280, %v1341
  %v1350 = vadd.f32 %v1281, %v1342
  %v1351 = vadd.f32 %v1282, %v1343
  %v1352 = vadd.f32 %v1283, %v1344
  %v1353 = vadd.f32 %v1284, %v1345
  %v1354 = vadd.f32 %v1285, %v1346
  %s1355 = scalar_lea.vmem %s3, 16
  %v1356 = vld [vmem:[%s1355] sm:$0xf]
  %1358 = vset.pattern.permute.xlu0 0
  %1359 = vperm.xlu0 %1358, %v1356
  %v1360 = vpop.permute.xlu0 %1359
  %v1362 = vmul.f32 %v1090, %v1360
  %v1363 = vmul.f32 %v1094, %v1360
  %v1364 = vmul.f32 %v1098, %v1360
  %v1365 = vmul.f32 %v1102, %v1360
  %v1366 = vmul.f32 %v1106, %v1360
  %v1367 = vmul.f32 %v1110, %v1360
  %v1368 = vmul.f32 %v1114, %v1360
  %v1369 = vmul.f32 %v1118, %v1360
  %1378 = vrot.lane.b32.xlu0 %v1362, 126
  %v1379 = vpop.permute.xlu0 %1378
  %1380 = vrot.lane.b32.xlu0 %v1363, 126
  %v1381 = vpop.permute.xlu0 %1380
  %1382 = vrot.lane.b32.xlu0 %v1364, 126
  %v1383 = vpop.permute.xlu0 %1382
  %1384 = vrot.lane.b32.xlu0 %v1365, 126
  %v1385 = vpop.permute.xlu0 %1384
  %1386 = vrot.lane.b32.xlu0 %v1366, 126
  %v1387 = vpop.permute.xlu0 %1386
  %1388 = vrot.lane.b32.xlu0 %v1367, 126
  %v1389 = vpop.permute.xlu0 %1388
  %1390 = vrot.lane.b32.xlu0 %v1368, 126
  %v1391 = vpop.permute.xlu0 %1390
  %1392 = vrot.lane.b32.xlu0 %v1369, 126
  %v1393 = vpop.permute.xlu0 %1392
  %v1394 = vsel %vm229, %v1379, %v1381
  %v1395 = vsel %vm229, %v1381, %v1383
  %v1396 = vsel %vm229, %v1383, %v1385
  %v1397 = vsel %vm229, %v1387, %v1389
  %v1398 = vsel %vm229, %v1389, %v1391
  %v1399 = vsel %vm229, %v1391, %v1393
  %v1408 = vadd.f32 %v1347, %v1394
  %v1409 = vadd.f32 %v1348, %v1395
  %v1410 = vadd.f32 %v1349, %v1396
  %v1411 = vadd.f32 %v1350, %v1385
  %v1412 = vadd.f32 %v1351, %v1397
  %v1413 = vadd.f32 %v1352, %v1398
  %v1414 = vadd.f32 %v1353, %v1399
  %v1415 = vadd.f32 %v1354, %v1393
  %s1416 = scalar_lea.vmem %s3, 20
  %v1417 = vld [vmem:[%s1416] sm:$0xf]
  %1419 = vset.pattern.permute.xlu0 0
  %1420 = vperm.xlu0 %1419, %v1417
  %v1421 = vpop.permute.xlu0 %1420
  %v1423 = vmul.f32 %v1159, %v1421
  %v1424 = vmul.f32 %v1163, %v1421
  %v1425 = vmul.f32 %v1167, %v1421
  %v1426 = vmul.f32 %v1171, %v1421
  %v1427 = vmul.f32 %v1175, %v1421
  %v1428 = vmul.f32 %v1179, %v1421
  %v1429 = vmul.f32 %v1183, %v1421
  %v1430 = vmul.f32 %v1187, %v1421
  %1439 = vrot.lane.b32.xlu0 %v1423, 126
  %v1440 = vpop.permute.xlu0 %1439
  %1441 = vrot.lane.b32.xlu0 %v1424, 126
  %v1442 = vpop.permute.xlu0 %1441
  %1443 = vrot.lane.b32.xlu0 %v1425, 126
  %v1444 = vpop.permute.xlu0 %1443
  %1445 = vrot.lane.b32.xlu0 %v1426, 126
  %v1446 = vpop.permute.xlu0 %1445
  %1447 = vrot.lane.b32.xlu0 %v1427, 126
  %v1448 = vpop.permute.xlu0 %1447
  %1449 = vrot.lane.b32.xlu0 %v1428, 126
  %v1450 = vpop.permute.xlu0 %1449
  %1451 = vrot.lane.b32.xlu0 %v1429, 126
  %v1452 = vpop.permute.xlu0 %1451
  %1453 = vrot.lane.b32.xlu0 %v1430, 126
  %v1454 = vpop.permute.xlu0 %1453
  %v1455 = vsel %vm229, %v1440, %v1442
  %v1456 = vsel %vm229, %v1442, %v1444
  %v1457 = vsel %vm229, %v1444, %v1446
  %v1458 = vsel %vm229, %v1448, %v1450
  %v1459 = vsel %vm229, %v1450, %v1452
  %v1460 = vsel %vm229, %v1452, %v1454
  %v1469 = vadd.f32 %v1408, %v1455
  %v1470 = vadd.f32 %v1409, %v1456
  %v1471 = vadd.f32 %v1410, %v1457
  %v1472 = vadd.f32 %v1411, %v1446
  %v1473 = vadd.f32 %v1412, %v1458
  %v1474 = vadd.f32 %v1413, %v1459
  %v1475 = vadd.f32 %v1414, %v1460
  %v1476 = vadd.f32 %v1415, %v1454
  %s1477 = scalar_lea.vmem %s3, 24
  %v1478 = vld [vmem:[%s1477] sm:$0xf]
  %1480 = vset.pattern.permute.xlu0 0
  %1481 = vperm.xlu0 %1480, %v1478
  %v1482 = vpop.permute.xlu0 %1481
  %v1484 = vmul.f32 %v1228, %v1482
  %v1485 = vmul.f32 %v1232, %v1482
  %v1486 = vmul.f32 %v1236, %v1482
  %v1487 = vmul.f32 %v1240, %v1482
  %v1488 = vmul.f32 %v1244, %v1482
  %v1489 = vmul.f32 %v1248, %v1482
  %v1490 = vmul.f32 %v1252, %v1482
  %v1491 = vmul.f32 %v1256, %v1482
  %1500 = vrot.lane.b32.xlu0 %v1484, 126
  %v1501 = vpop.permute.xlu0 %1500
  %1502 = vrot.lane.b32.xlu0 %v1485, 126
  %v1503 = vpop.permute.xlu0 %1502
  %1504 = vrot.lane.b32.xlu0 %v1486, 126
  %v1505 = vpop.permute.xlu0 %1504
  %1506 = vrot.lane.b32.xlu0 %v1487, 126
  %v1507 = vpop.permute.xlu0 %1506
  %1508 = vrot.lane.b32.xlu0 %v1488, 126
  %v1509 = vpop.permute.xlu0 %1508
  %1510 = vrot.lane.b32.xlu0 %v1489, 126
  %v1511 = vpop.permute.xlu0 %1510
  %1512 = vrot.lane.b32.xlu0 %v1490, 126
  %v1513 = vpop.permute.xlu0 %1512
  %1514 = vrot.lane.b32.xlu0 %v1491, 126
  %v1515 = vpop.permute.xlu0 %1514
  %v1516 = vsel %vm229, %v1501, %v1503
  %v1517 = vsel %vm229, %v1503, %v1505
  %v1518 = vsel %vm229, %v1505, %v1507
  %v1519 = vsel %vm229, %v1509, %v1511
  %v1520 = vsel %vm229, %v1511, %v1513
  %v1521 = vsel %vm229, %v1513, %v1515
  %v1530 = vadd.f32 %v1469, %v1516
  %v1531 = vadd.f32 %v1470, %v1517
  %v1532 = vadd.f32 %v1471, %v1518
  %v1533 = vadd.f32 %v1472, %v1507
  %v1534 = vadd.f32 %v1473, %v1519
  %v1535 = vadd.f32 %v1474, %v1520
  %v1536 = vadd.f32 %v1475, %v1521
  %v1537 = vadd.f32 %v1476, %v1515
  %s1538 = scalar_lea.vmem %s3, 28
  %v1539 = vld [vmem:[%s1538] sm:$0xf]
  %1541 = vset.pattern.permute.xlu0 0
  %1542 = vperm.xlu0 %1541, %v1539
  %v1543 = vpop.permute.xlu0 %1542
  %v1545 = vmul.f32 %v1297, %v1543
  %v1546 = vmul.f32 %v1301, %v1543
  %v1547 = vmul.f32 %v1305, %v1543
  %v1548 = vmul.f32 %v1309, %v1543
  %v1549 = vmul.f32 %v1313, %v1543
  %v1550 = vmul.f32 %v1317, %v1543
  %v1551 = vmul.f32 %v1321, %v1543
  %v1552 = vmul.f32 %v1325, %v1543
  %1561 = vrot.lane.b32.xlu0 %v1545, 126
  %v1562 = vpop.permute.xlu0 %1561
  %1563 = vrot.lane.b32.xlu0 %v1546, 126
  %v1564 = vpop.permute.xlu0 %1563
  %1565 = vrot.lane.b32.xlu0 %v1547, 126
  %v1566 = vpop.permute.xlu0 %1565
  %1567 = vrot.lane.b32.xlu0 %v1548, 126
  %v1568 = vpop.permute.xlu0 %1567
  %1569 = vrot.lane.b32.xlu0 %v1549, 126
  %v1570 = vpop.permute.xlu0 %1569
  %1571 = vrot.lane.b32.xlu0 %v1550, 126
  %v1572 = vpop.permute.xlu0 %1571
  %1573 = vrot.lane.b32.xlu0 %v1551, 126
  %v1574 = vpop.permute.xlu0 %1573
  %1575 = vrot.lane.b32.xlu0 %v1552, 126
  %v1576 = vpop.permute.xlu0 %1575
  %v1577 = vsel %vm229, %v1562, %v1564
  %v1578 = vsel %vm229, %v1564, %v1566
  %v1579 = vsel %vm229, %v1566, %v1568
  %v1580 = vsel %vm229, %v1570, %v1572
  %v1581 = vsel %vm229, %v1572, %v1574
  %v1582 = vsel %vm229, %v1574, %v1576
  %v1591 = vadd.f32 %v1530, %v1577
  %v1592 = vadd.f32 %v1531, %v1578
  %v1593 = vadd.f32 %v1532, %v1579
  %v1594 = vadd.f32 %v1533, %v1568
  %v1595 = vadd.f32 %v1534, %v1580
  %v1596 = vadd.f32 %v1535, %v1581
  %v1597 = vadd.f32 %v1536, %v1582
  %v1598 = vadd.f32 %v1537, %v1576
  %s1599 = scalar_lea.vmem %s3, 32
  %v1600 = vld [vmem:[%s1599] sm:$0xf]
  %1602 = vset.pattern.permute.xlu0 0
  %1603 = vperm.xlu0 %1602, %v1600
  %v1604 = vpop.permute.xlu0 %1603
  %v1606 = vmul.f32 %v1090, %v1604
  %v1607 = vmul.f32 %v1094, %v1604
  %v1608 = vmul.f32 %v1098, %v1604
  %v1609 = vmul.f32 %v1102, %v1604
  %v1610 = vmul.f32 %v1106, %v1604
  %v1611 = vmul.f32 %v1110, %v1604
  %v1612 = vmul.f32 %v1114, %v1604
  %v1613 = vmul.f32 %v1118, %v1604
  %1622 = vrot.lane.b32.xlu0 %v1606, 124
  %v1623 = vpop.permute.xlu0 %1622
  %1624 = vrot.lane.b32.xlu0 %v1607, 124
  %v1625 = vpop.permute.xlu0 %1624
  %1626 = vrot.lane.b32.xlu0 %v1608, 124
  %v1627 = vpop.permute.xlu0 %1626
  %1628 = vrot.lane.b32.xlu0 %v1609, 124
  %v1629 = vpop.permute.xlu0 %1628
  %1630 = vrot.lane.b32.xlu0 %v1610, 124
  %v1631 = vpop.permute.xlu0 %1630
  %1632 = vrot.lane.b32.xlu0 %v1611, 124
  %v1633 = vpop.permute.xlu0 %1632
  %1634 = vrot.lane.b32.xlu0 %v1612, 124
  %v1635 = vpop.permute.xlu0 %1634
  %1636 = vrot.lane.b32.xlu0 %v1613, 124
  %v1637 = vpop.permute.xlu0 %1636
  %vm1638 = vcmask 1014784
  %v1639 = vsel %vm1638, %v1623, %v1625
  %v1640 = vsel %vm1638, %v1625, %v1627
  %v1641 = vsel %vm1638, %v1627, %v1629
  %v1642 = vsel %vm1638, %v1631, %v1633
  %v1643 = vsel %vm1638, %v1633, %v1635
  %v1644 = vsel %vm1638, %v1635, %v1637
  %v1653 = vadd.f32 %v1591, %v1639
  %v1654 = vadd.f32 %v1592, %v1640
  %v1655 = vadd.f32 %v1593, %v1641
  %v1656 = vadd.f32 %v1594, %v1629
  %v1657 = vadd.f32 %v1595, %v1642
  %v1658 = vadd.f32 %v1596, %v1643
  %v1659 = vadd.f32 %v1597, %v1644
  %v1660 = vadd.f32 %v1598, %v1637
  %s1661 = scalar_lea.vmem %s3, 36
  %v1662 = vld [vmem:[%s1661] sm:$0xf]
  %1664 = vset.pattern.permute.xlu0 0
  %1665 = vperm.xlu0 %1664, %v1662
  %v1666 = vpop.permute.xlu0 %1665
  %v1668 = vmul.f32 %v1159, %v1666
  %v1669 = vmul.f32 %v1163, %v1666
  %v1670 = vmul.f32 %v1167, %v1666
  %v1671 = vmul.f32 %v1171, %v1666
  %v1672 = vmul.f32 %v1175, %v1666
  %v1673 = vmul.f32 %v1179, %v1666
  %v1674 = vmul.f32 %v1183, %v1666
  %v1675 = vmul.f32 %v1187, %v1666
  %1684 = vrot.lane.b32.xlu0 %v1668, 124
  %v1685 = vpop.permute.xlu0 %1684
  %1686 = vrot.lane.b32.xlu0 %v1669, 124
  %v1687 = vpop.permute.xlu0 %1686
  %1688 = vrot.lane.b32.xlu0 %v1670, 124
  %v1689 = vpop.permute.xlu0 %1688
  %1690 = vrot.lane.b32.xlu0 %v1671, 124
  %v1691 = vpop.permute.xlu0 %1690
  %1692 = vrot.lane.b32.xlu0 %v1672, 124
  %v1693 = vpop.permute.xlu0 %1692
  %1694 = vrot.lane.b32.xlu0 %v1673, 124
  %v1695 = vpop.permute.xlu0 %1694
  %1696 = vrot.lane.b32.xlu0 %v1674, 124
  %v1697 = vpop.permute.xlu0 %1696
  %1698 = vrot.lane.b32.xlu0 %v1675, 124
  %v1699 = vpop.permute.xlu0 %1698
  %v1700 = vsel %vm1638, %v1685, %v1687
  %v1701 = vsel %vm1638, %v1687, %v1689
  %v1702 = vsel %vm1638, %v1689, %v1691
  %v1703 = vsel %vm1638, %v1693, %v1695
  %v1704 = vsel %vm1638, %v1695, %v1697
  %v1705 = vsel %vm1638, %v1697, %v1699
  %v1714 = vadd.f32 %v1653, %v1700
  %v1715 = vadd.f32 %v1654, %v1701
  %v1716 = vadd.f32 %v1655, %v1702
  %v1717 = vadd.f32 %v1656, %v1691
  %v1718 = vadd.f32 %v1657, %v1703
  %v1719 = vadd.f32 %v1658, %v1704
  %v1720 = vadd.f32 %v1659, %v1705
  %v1721 = vadd.f32 %v1660, %v1699
  %s1722 = scalar_lea.vmem %s3, 40
  %v1723 = vld [vmem:[%s1722] sm:$0xf]
  %1725 = vset.pattern.permute.xlu0 0
  %1726 = vperm.xlu0 %1725, %v1723
  %v1727 = vpop.permute.xlu0 %1726
  %v1729 = vmul.f32 %v1228, %v1727
  %v1730 = vmul.f32 %v1232, %v1727
  %v1731 = vmul.f32 %v1236, %v1727
  %v1732 = vmul.f32 %v1240, %v1727
  %v1733 = vmul.f32 %v1244, %v1727
  %v1734 = vmul.f32 %v1248, %v1727
  %v1735 = vmul.f32 %v1252, %v1727
  %v1736 = vmul.f32 %v1256, %v1727
  %1745 = vrot.lane.b32.xlu0 %v1729, 124
  %v1746 = vpop.permute.xlu0 %1745
  %1747 = vrot.lane.b32.xlu0 %v1730, 124
  %v1748 = vpop.permute.xlu0 %1747
  %1749 = vrot.lane.b32.xlu0 %v1731, 124
  %v1750 = vpop.permute.xlu0 %1749
  %1751 = vrot.lane.b32.xlu0 %v1732, 124
  %v1752 = vpop.permute.xlu0 %1751
  %1753 = vrot.lane.b32.xlu0 %v1733, 124
  %v1754 = vpop.permute.xlu0 %1753
  %1755 = vrot.lane.b32.xlu0 %v1734, 124
  %v1756 = vpop.permute.xlu0 %1755
  %1757 = vrot.lane.b32.xlu0 %v1735, 124
  %v1758 = vpop.permute.xlu0 %1757
  %1759 = vrot.lane.b32.xlu0 %v1736, 124
  %v1760 = vpop.permute.xlu0 %1759
  %v1761 = vsel %vm1638, %v1746, %v1748
  %v1762 = vsel %vm1638, %v1748, %v1750
  %v1763 = vsel %vm1638, %v1750, %v1752
  %v1764 = vsel %vm1638, %v1754, %v1756
  %v1765 = vsel %vm1638, %v1756, %v1758
  %v1766 = vsel %vm1638, %v1758, %v1760
  %v1775 = vadd.f32 %v1714, %v1761
  %v1776 = vadd.f32 %v1715, %v1762
  %v1777 = vadd.f32 %v1716, %v1763
  %v1778 = vadd.f32 %v1717, %v1752
  %v1779 = vadd.f32 %v1718, %v1764
  %v1780 = vadd.f32 %v1719, %v1765
  %v1781 = vadd.f32 %v1720, %v1766
  %v1782 = vadd.f32 %v1721, %v1760
  %s1783 = scalar_lea.vmem %s3, 44
  %v1784 = vld [vmem:[%s1783] sm:$0xf]
  %1786 = vset.pattern.permute.xlu0 0
  %1787 = vperm.xlu0 %1786, %v1784
  %v1788 = vpop.permute.xlu0 %1787
  %v1790 = vmul.f32 %v1297, %v1788
  %v1791 = vmul.f32 %v1301, %v1788
  %v1792 = vmul.f32 %v1305, %v1788
  %v1793 = vmul.f32 %v1309, %v1788
  %v1794 = vmul.f32 %v1313, %v1788
  %v1795 = vmul.f32 %v1317, %v1788
  %v1796 = vmul.f32 %v1321, %v1788
  %v1797 = vmul.f32 %v1325, %v1788
  %1806 = vrot.lane.b32.xlu0 %v1790, 124
  %v1807 = vpop.permute.xlu0 %1806
  %1808 = vrot.lane.b32.xlu0 %v1791, 124
  %v1809 = vpop.permute.xlu0 %1808
  %1810 = vrot.lane.b32.xlu0 %v1792, 124
  %v1811 = vpop.permute.xlu0 %1810
  %1812 = vrot.lane.b32.xlu0 %v1793, 124
  %v1813 = vpop.permute.xlu0 %1812
  %1814 = vrot.lane.b32.xlu0 %v1794, 124
  %v1815 = vpop.permute.xlu0 %1814
  %1816 = vrot.lane.b32.xlu0 %v1795, 124
  %v1817 = vpop.permute.xlu0 %1816
  %1818 = vrot.lane.b32.xlu0 %v1796, 124
  %v1819 = vpop.permute.xlu0 %1818
  %1820 = vrot.lane.b32.xlu0 %v1797, 124
  %v1821 = vpop.permute.xlu0 %1820
  %v1822 = vsel %vm1638, %v1807, %v1809
  %v1823 = vsel %vm1638, %v1809, %v1811
  %v1824 = vsel %vm1638, %v1811, %v1813
  %v1825 = vsel %vm1638, %v1815, %v1817
  %v1826 = vsel %vm1638, %v1817, %v1819
  %v1827 = vsel %vm1638, %v1819, %v1821
  %v1836 = vadd.f32 %v1775, %v1822
  %v1837 = vadd.f32 %v1776, %v1823
  %v1838 = vadd.f32 %v1777, %v1824
  %v1839 = vadd.f32 %v1778, %v1813
  %v1840 = vadd.f32 %v1779, %v1825
  %v1841 = vadd.f32 %v1780, %v1826
  %v1842 = vadd.f32 %v1781, %v1827
  %v1843 = vadd.f32 %v1782, %v1821
  %s1844 = scalar_lea.vmem %s3, 48
  %v1845 = vld [vmem:[%s1844] sm:$0xf]
  %1847 = vset.pattern.permute.xlu0 0
  %1848 = vperm.xlu0 %1847, %v1845
  %v1849 = vpop.permute.xlu0 %1848
  %v1851 = vmul.f32 %v1090, %v1849
  %v1852 = vmul.f32 %v1094, %v1849
  %v1853 = vmul.f32 %v1098, %v1849
  %v1854 = vmul.f32 %v1102, %v1849
  %v1855 = vmul.f32 %v1106, %v1849
  %v1856 = vmul.f32 %v1110, %v1849
  %v1857 = vmul.f32 %v1114, %v1849
  %v1858 = vmul.f32 %v1118, %v1849
  %1867 = vrot.lane.b32.xlu0 %v1851, 88
  %v1868 = vpop.permute.xlu0 %1867
  %1869 = vrot.lane.b32.xlu0 %v1852, 88
  %v1870 = vpop.permute.xlu0 %1869
  %1871 = vrot.lane.b32.xlu0 %v1853, 88
  %v1872 = vpop.permute.xlu0 %1871
  %1873 = vrot.lane.b32.xlu0 %v1854, 88
  %v1874 = vpop.permute.xlu0 %1873
  %1875 = vrot.lane.b32.xlu0 %v1855, 88
  %v1876 = vpop.permute.xlu0 %1875
  %1877 = vrot.lane.b32.xlu0 %v1856, 88
  %v1878 = vpop.permute.xlu0 %1877
  %1879 = vrot.lane.b32.xlu0 %v1857, 88
  %v1880 = vpop.permute.xlu0 %1879
  %1881 = vrot.lane.b32.xlu0 %v1858, 88
  %v1882 = vpop.permute.xlu0 %1881
  %v1883 = vsel %vm653, %v1868, %v1870
  %v1884 = vsel %vm653, %v1870, %v1872
  %v1885 = vsel %vm653, %v1872, %v1874
  %v1886 = vsel %vm653, %v1876, %v1878
  %v1887 = vsel %vm653, %v1878, %v1880
  %v1888 = vsel %vm653, %v1880, %v1882
  %v1897 = vadd.f32 %v1836, %v1883
  %v1898 = vadd.f32 %v1837, %v1884
  %v1899 = vadd.f32 %v1838, %v1885
  %v1900 = vadd.f32 %v1839, %v1874
  %v1901 = vadd.f32 %v1840, %v1886
  %v1902 = vadd.f32 %v1841, %v1887
  %v1903 = vadd.f32 %v1842, %v1888
  %v1904 = vadd.f32 %v1843, %v1882
  %s1905 = scalar_lea.vmem %s3, 52
  %v1906 = vld [vmem:[%s1905] sm:$0xf]
  %1908 = vset.pattern.permute.xlu0 0
  %1909 = vperm.xlu0 %1908, %v1906
  %v1910 = vpop.permute.xlu0 %1909
  %v1912 = vmul.f32 %v1159, %v1910
  %v1913 = vmul.f32 %v1163, %v1910
  %v1914 = vmul.f32 %v1167, %v1910
  %v1915 = vmul.f32 %v1171, %v1910
  %v1916 = vmul.f32 %v1175, %v1910
  %v1917 = vmul.f32 %v1179, %v1910
  %v1918 = vmul.f32 %v1183, %v1910
  %v1919 = vmul.f32 %v1187, %v1910
  %1928 = vrot.lane.b32.xlu0 %v1912, 88
  %v1929 = vpop.permute.xlu0 %1928
  %1930 = vrot.lane.b32.xlu0 %v1913, 88
  %v1931 = vpop.permute.xlu0 %1930
  %1932 = vrot.lane.b32.xlu0 %v1914, 88
  %v1933 = vpop.permute.xlu0 %1932
  %1934 = vrot.lane.b32.xlu0 %v1915, 88
  %v1935 = vpop.permute.xlu0 %1934
  %1936 = vrot.lane.b32.xlu0 %v1916, 88
  %v1937 = vpop.permute.xlu0 %1936
  %1938 = vrot.lane.b32.xlu0 %v1917, 88
  %v1939 = vpop.permute.xlu0 %1938
  %1940 = vrot.lane.b32.xlu0 %v1918, 88
  %v1941 = vpop.permute.xlu0 %1940
  %1942 = vrot.lane.b32.xlu0 %v1919, 88
  %v1943 = vpop.permute.xlu0 %1942
  %v1944 = vsel %vm653, %v1929, %v1931
  %v1945 = vsel %vm653, %v1931, %v1933
  %v1946 = vsel %vm653, %v1933, %v1935
  %v1947 = vsel %vm653, %v1937, %v1939
  %v1948 = vsel %vm653, %v1939, %v1941
  %v1949 = vsel %vm653, %v1941, %v1943
  %v1958 = vadd.f32 %v1897, %v1944
  %v1959 = vadd.f32 %v1898, %v1945
  %v1960 = vadd.f32 %v1899, %v1946
  %v1961 = vadd.f32 %v1900, %v1935
  %v1962 = vadd.f32 %v1901, %v1947
  %v1963 = vadd.f32 %v1902, %v1948
  %v1964 = vadd.f32 %v1903, %v1949
  %v1965 = vadd.f32 %v1904, %v1943
  %s1966 = scalar_lea.vmem %s3, 56
  %v1967 = vld [vmem:[%s1966] sm:$0xf]
  %1969 = vset.pattern.permute.xlu0 0
  %1970 = vperm.xlu0 %1969, %v1967
  %v1971 = vpop.permute.xlu0 %1970
  %v1973 = vmul.f32 %v1228, %v1971
  %v1974 = vmul.f32 %v1232, %v1971
  %v1975 = vmul.f32 %v1236, %v1971
  %v1976 = vmul.f32 %v1240, %v1971
  %v1977 = vmul.f32 %v1244, %v1971
  %v1978 = vmul.f32 %v1248, %v1971
  %v1979 = vmul.f32 %v1252, %v1971
  %v1980 = vmul.f32 %v1256, %v1971
  %1989 = vrot.lane.b32.xlu0 %v1973, 88
  %v1990 = vpop.permute.xlu0 %1989
  %1991 = vrot.lane.b32.xlu0 %v1974, 88
  %v1992 = vpop.permute.xlu0 %1991
  %1993 = vrot.lane.b32.xlu0 %v1975, 88
  %v1994 = vpop.permute.xlu0 %1993
  %1995 = vrot.lane.b32.xlu0 %v1976, 88
  %v1996 = vpop.permute.xlu0 %1995
  %1997 = vrot.lane.b32.xlu0 %v1977, 88
  %v1998 = vpop.permute.xlu0 %1997
  %1999 = vrot.lane.b32.xlu0 %v1978, 88
  %v2000 = vpop.permute.xlu0 %1999
  %2001 = vrot.lane.b32.xlu0 %v1979, 88
  %v2002 = vpop.permute.xlu0 %2001
  %2003 = vrot.lane.b32.xlu0 %v1980, 88
  %v2004 = vpop.permute.xlu0 %2003
  %v2005 = vsel %vm653, %v1990, %v1992
  %v2006 = vsel %vm653, %v1992, %v1994
  %v2007 = vsel %vm653, %v1994, %v1996
  %v2008 = vsel %vm653, %v1998, %v2000
  %v2009 = vsel %vm653, %v2000, %v2002
  %v2010 = vsel %vm653, %v2002, %v2004
  %v2019 = vadd.f32 %v1958, %v2005
  %v2020 = vadd.f32 %v1959, %v2006
  %v2021 = vadd.f32 %v1960, %v2007
  %v2022 = vadd.f32 %v1961, %v1996
  %v2023 = vadd.f32 %v1962, %v2008
  %v2024 = vadd.f32 %v1963, %v2009
  %v2025 = vadd.f32 %v1964, %v2010
  %v2026 = vadd.f32 %v1965, %v2004
  %s2027 = scalar_lea.vmem %s3, 60
  %v2028 = vld [vmem:[%s2027] sm:$0xf]
  %2030 = vset.pattern.permute.xlu0 0
  %2031 = vperm.xlu0 %2030, %v2028
  %v2032 = vpop.permute.xlu0 %2031
  %v2034 = vmul.f32 %v1297, %v2032
  %v2035 = vmul.f32 %v1301, %v2032
  %v2036 = vmul.f32 %v1305, %v2032
  %v2037 = vmul.f32 %v1309, %v2032
  %v2038 = vmul.f32 %v1313, %v2032
  %v2039 = vmul.f32 %v1317, %v2032
  %v2040 = vmul.f32 %v1321, %v2032
  %v2041 = vmul.f32 %v1325, %v2032
  %2050 = vrot.lane.b32.xlu0 %v2034, 88
  %v2051 = vpop.permute.xlu0 %2050
  %2052 = vrot.lane.b32.xlu0 %v2035, 88
  %v2053 = vpop.permute.xlu0 %2052
  %2054 = vrot.lane.b32.xlu0 %v2036, 88
  %v2055 = vpop.permute.xlu0 %2054
  %2056 = vrot.lane.b32.xlu0 %v2037, 88
  %v2057 = vpop.permute.xlu0 %2056
  %2058 = vrot.lane.b32.xlu0 %v2038, 88
  %v2059 = vpop.permute.xlu0 %2058
  %2060 = vrot.lane.b32.xlu0 %v2039, 88
  %v2061 = vpop.permute.xlu0 %2060
  %2062 = vrot.lane.b32.xlu0 %v2040, 88
  %v2063 = vpop.permute.xlu0 %2062
  %2064 = vrot.lane.b32.xlu0 %v2041, 88
  %v2065 = vpop.permute.xlu0 %2064
  %v2066 = vsel %vm653, %v2051, %v2053
  %v2067 = vsel %vm653, %v2053, %v2055
  %v2068 = vsel %vm653, %v2055, %v2057
  %v2069 = vsel %vm653, %v2059, %v2061
  %v2070 = vsel %vm653, %v2061, %v2063
  %v2071 = vsel %vm653, %v2063, %v2065
  %v2080 = vadd.f32 %v2019, %v2066
  %v2081 = vadd.f32 %v2020, %v2067
  %v2082 = vadd.f32 %v2021, %v2068
  %v2083 = vadd.f32 %v2022, %v2057
  %v2084 = vadd.f32 %v2023, %v2069
  %v2085 = vadd.f32 %v2024, %v2070
  %v2086 = vadd.f32 %v2025, %v2071
  %v2087 = vadd.f32 %v2026, %v2065
  %s2088 = scalar_lea.vmem %s3, 64
  %v2089 = vld [vmem:[%s2088] sm:$0xf]
  %2091 = vset.pattern.permute.xlu0 0
  %2092 = vperm.xlu0 %2091, %v2089
  %v2093 = vpop.permute.xlu0 %2092
  %v2095 = vmul.f32 %v1090, %v2093
  %v2096 = vmul.f32 %v1094, %v2093
  %v2097 = vmul.f32 %v1098, %v2093
  %v2098 = vmul.f32 %v1102, %v2093
  %v2099 = vmul.f32 %v1106, %v2093
  %v2100 = vmul.f32 %v1110, %v2093
  %v2101 = vmul.f32 %v1114, %v2093
  %v2102 = vmul.f32 %v1118, %v2093
  %2111 = vrot.lane.b32.xlu0 %v2095, 86
  %v2112 = vpop.permute.xlu0 %2111
  %2113 = vrot.lane.b32.xlu0 %v2096, 86
  %v2114 = vpop.permute.xlu0 %2113
  %2115 = vrot.lane.b32.xlu0 %v2097, 86
  %v2116 = vpop.permute.xlu0 %2115
  %2117 = vrot.lane.b32.xlu0 %v2098, 86
  %v2118 = vpop.permute.xlu0 %2117
  %2119 = vrot.lane.b32.xlu0 %v2099, 86
  %v2120 = vpop.permute.xlu0 %2119
  %2121 = vrot.lane.b32.xlu0 %v2100, 86
  %v2122 = vpop.permute.xlu0 %2121
  %2123 = vrot.lane.b32.xlu0 %v2101, 86
  %v2124 = vpop.permute.xlu0 %2123
  %2125 = vrot.lane.b32.xlu0 %v2102, 86
  %v2126 = vpop.permute.xlu0 %2125
  %v2127 = vsel %vm865, %v2112, %v2114
  %v2128 = vsel %vm865, %v2114, %v2116
  %v2129 = vsel %vm865, %v2116, %v2118
  %v2130 = vsel %vm865, %v2120, %v2122
  %v2131 = vsel %vm865, %v2122, %v2124
  %v2132 = vsel %vm865, %v2124, %v2126
  %v2141 = vadd.f32 %v2080, %v2127
  %v2142 = vadd.f32 %v2081, %v2128
  %v2143 = vadd.f32 %v2082, %v2129
  %v2144 = vadd.f32 %v2083, %v2118
  %v2145 = vadd.f32 %v2084, %v2130
  %v2146 = vadd.f32 %v2085, %v2131
  %v2147 = vadd.f32 %v2086, %v2132
  %v2148 = vadd.f32 %v2087, %v2126
  %s2149 = scalar_lea.vmem %s3, 68
  %v2150 = vld [vmem:[%s2149] sm:$0xf]
  %2152 = vset.pattern.permute.xlu0 0
  %2153 = vperm.xlu0 %2152, %v2150
  %v2154 = vpop.permute.xlu0 %2153
  %v2156 = vmul.f32 %v1159, %v2154
  %v2157 = vmul.f32 %v1163, %v2154
  %v2158 = vmul.f32 %v1167, %v2154
  %v2159 = vmul.f32 %v1171, %v2154
  %v2160 = vmul.f32 %v1175, %v2154
  %v2161 = vmul.f32 %v1179, %v2154
  %v2162 = vmul.f32 %v1183, %v2154
  %v2163 = vmul.f32 %v1187, %v2154
  %2172 = vrot.lane.b32.xlu0 %v2156, 86
  %v2173 = vpop.permute.xlu0 %2172
  %2174 = vrot.lane.b32.xlu0 %v2157, 86
  %v2175 = vpop.permute.xlu0 %2174
  %2176 = vrot.lane.b32.xlu0 %v2158, 86
  %v2177 = vpop.permute.xlu0 %2176
  %2178 = vrot.lane.b32.xlu0 %v2159, 86
  %v2179 = vpop.permute.xlu0 %2178
  %2180 = vrot.lane.b32.xlu0 %v2160, 86
  %v2181 = vpop.permute.xlu0 %2180
  %2182 = vrot.lane.b32.xlu0 %v2161, 86
  %v2183 = vpop.permute.xlu0 %2182
  %2184 = vrot.lane.b32.xlu0 %v2162, 86
  %v2185 = vpop.permute.xlu0 %2184
  %2186 = vrot.lane.b32.xlu0 %v2163, 86
  %v2187 = vpop.permute.xlu0 %2186
  %v2188 = vsel %vm865, %v2173, %v2175
  %v2189 = vsel %vm865, %v2175, %v2177
  %v2190 = vsel %vm865, %v2177, %v2179
  %v2191 = vsel %vm865, %v2181, %v2183
  %v2192 = vsel %vm865, %v2183, %v2185
  %v2193 = vsel %vm865, %v2185, %v2187
  %v2202 = vadd.f32 %v2141, %v2188
  %v2203 = vadd.f32 %v2142, %v2189
  %v2204 = vadd.f32 %v2143, %v2190
  %v2205 = vadd.f32 %v2144, %v2179
  %v2206 = vadd.f32 %v2145, %v2191
  %v2207 = vadd.f32 %v2146, %v2192
  %v2208 = vadd.f32 %v2147, %v2193
  %v2209 = vadd.f32 %v2148, %v2187
  %s2210 = scalar_lea.vmem %s3, 72
  %v2211 = vld [vmem:[%s2210] sm:$0xf]
  %2213 = vset.pattern.permute.xlu0 0
  %2214 = vperm.xlu0 %2213, %v2211
  %v2215 = vpop.permute.xlu0 %2214
  %v2217 = vmul.f32 %v1228, %v2215
  %v2218 = vmul.f32 %v1232, %v2215
  %v2219 = vmul.f32 %v1236, %v2215
  %v2220 = vmul.f32 %v1240, %v2215
  %v2221 = vmul.f32 %v1244, %v2215
  %v2222 = vmul.f32 %v1248, %v2215
  %v2223 = vmul.f32 %v1252, %v2215
  %v2224 = vmul.f32 %v1256, %v2215
  %2233 = vrot.lane.b32.xlu0 %v2217, 86
  %v2234 = vpop.permute.xlu0 %2233
  %2235 = vrot.lane.b32.xlu0 %v2218, 86
  %v2236 = vpop.permute.xlu0 %2235
  %2237 = vrot.lane.b32.xlu0 %v2219, 86
  %v2238 = vpop.permute.xlu0 %2237
  %2239 = vrot.lane.b32.xlu0 %v2220, 86
  %v2240 = vpop.permute.xlu0 %2239
  %2241 = vrot.lane.b32.xlu0 %v2221, 86
  %v2242 = vpop.permute.xlu0 %2241
  %2243 = vrot.lane.b32.xlu0 %v2222, 86
  %v2244 = vpop.permute.xlu0 %2243
  %2245 = vrot.lane.b32.xlu0 %v2223, 86
  %v2246 = vpop.permute.xlu0 %2245
  %2247 = vrot.lane.b32.xlu0 %v2224, 86
  %v2248 = vpop.permute.xlu0 %2247
  %v2249 = vsel %vm865, %v2234, %v2236
  %v2250 = vsel %vm865, %v2236, %v2238
  %v2251 = vsel %vm865, %v2238, %v2240
  %v2252 = vsel %vm865, %v2242, %v2244
  %v2253 = vsel %vm865, %v2244, %v2246
  %v2254 = vsel %vm865, %v2246, %v2248
  %v2263 = vadd.f32 %v2202, %v2249
  %v2264 = vadd.f32 %v2203, %v2250
  %v2265 = vadd.f32 %v2204, %v2251
  %v2266 = vadd.f32 %v2205, %v2240
  %v2267 = vadd.f32 %v2206, %v2252
  %v2268 = vadd.f32 %v2207, %v2253
  %v2269 = vadd.f32 %v2208, %v2254
  %v2270 = vadd.f32 %v2209, %v2248
  %s2271 = scalar_lea.vmem %s3, 76
  %v2272 = vld [vmem:[%s2271] sm:$0xf]
  %2274 = vset.pattern.permute.xlu0 0
  %2275 = vperm.xlu0 %2274, %v2272
  %v2276 = vpop.permute.xlu0 %2275
  %v2278 = vmul.f32 %v1297, %v2276
  %v2279 = vmul.f32 %v1301, %v2276
  %v2280 = vmul.f32 %v1305, %v2276
  %v2281 = vmul.f32 %v1309, %v2276
  %v2282 = vmul.f32 %v1313, %v2276
  %v2283 = vmul.f32 %v1317, %v2276
  %v2284 = vmul.f32 %v1321, %v2276
  %v2285 = vmul.f32 %v1325, %v2276
  %2294 = vrot.lane.b32.xlu0 %v2278, 86
  %v2295 = vpop.permute.xlu0 %2294
  %2296 = vrot.lane.b32.xlu0 %v2279, 86
  %v2297 = vpop.permute.xlu0 %2296
  %2298 = vrot.lane.b32.xlu0 %v2280, 86
  %v2299 = vpop.permute.xlu0 %2298
  %2300 = vrot.lane.b32.xlu0 %v2281, 86
  %v2301 = vpop.permute.xlu0 %2300
  %2302 = vrot.lane.b32.xlu0 %v2282, 86
  %v2303 = vpop.permute.xlu0 %2302
  %2304 = vrot.lane.b32.xlu0 %v2283, 86
  %v2305 = vpop.permute.xlu0 %2304
  %2306 = vrot.lane.b32.xlu0 %v2284, 86
  %v2307 = vpop.permute.xlu0 %2306
  %2308 = vrot.lane.b32.xlu0 %v2285, 86
  %v2309 = vpop.permute.xlu0 %2308
  %v2310 = vsel %vm865, %v2295, %v2297
  %v2311 = vsel %vm865, %v2297, %v2299
  %v2312 = vsel %vm865, %v2299, %v2301
  %v2313 = vsel %vm865, %v2303, %v2305
  %v2314 = vsel %vm865, %v2305, %v2307
  %v2315 = vsel %vm865, %v2307, %v2309
  %v2324 = vadd.f32 %v2263, %v2310
  %v2325 = vadd.f32 %v2264, %v2311
  %v2326 = vadd.f32 %v2265, %v2312
  %v2327 = vadd.f32 %v2266, %v2301
  %v2328 = vadd.f32 %v2267, %v2313
  %v2329 = vadd.f32 %v2268, %v2314
  %v2330 = vadd.f32 %v2269, %v2315
  %v2331 = vadd.f32 %v2270, %v2309
  %s2332 = scalar_lea.vmem %s3, 80
  %v2333 = vld [vmem:[%s2332] sm:$0xf]
  %2335 = vset.pattern.permute.xlu0 0
  %2336 = vperm.xlu0 %2335, %v2333
  %v2337 = vpop.permute.xlu0 %2336
  %v2339 = vmul.f32 %v1090, %v2337
  %v2340 = vmul.f32 %v1094, %v2337
  %v2341 = vmul.f32 %v1098, %v2337
  %v2342 = vmul.f32 %v1102, %v2337
  %v2343 = vmul.f32 %v1106, %v2337
  %v2344 = vmul.f32 %v1110, %v2337
  %v2345 = vmul.f32 %v1114, %v2337
  %v2346 = vmul.f32 %v1118, %v2337
  %2355 = vrot.lane.b32.xlu0 %v2339, 84
  %v2356 = vpop.permute.xlu0 %2355
  %2357 = vrot.lane.b32.xlu0 %v2340, 84
  %v2358 = vpop.permute.xlu0 %2357
  %2359 = vrot.lane.b32.xlu0 %v2341, 84
  %v2360 = vpop.permute.xlu0 %2359
  %2361 = vrot.lane.b32.xlu0 %v2342, 84
  %v2362 = vpop.permute.xlu0 %2361
  %2363 = vrot.lane.b32.xlu0 %v2343, 84
  %v2364 = vpop.permute.xlu0 %2363
  %2365 = vrot.lane.b32.xlu0 %v2344, 84
  %v2366 = vpop.permute.xlu0 %2365
  %2367 = vrot.lane.b32.xlu0 %v2345, 84
  %v2368 = vpop.permute.xlu0 %2367
  %2369 = vrot.lane.b32.xlu0 %v2346, 84
  %v2370 = vpop.permute.xlu0 %2369
  %vm2371 = vcmask 687104
  %v2372 = vsel %vm2371, %v2356, %v2358
  %v2373 = vsel %vm2371, %v2358, %v2360
  %v2374 = vsel %vm2371, %v2360, %v2362
  %v2375 = vsel %vm2371, %v2364, %v2366
  %v2376 = vsel %vm2371, %v2366, %v2368
  %v2377 = vsel %vm2371, %v2368, %v2370
  %v2386 = vadd.f32 %v2324, %v2372
  %v2387 = vadd.f32 %v2325, %v2373
  %v2388 = vadd.f32 %v2326, %v2374
  %v2389 = vadd.f32 %v2327, %v2362
  %v2390 = vadd.f32 %v2328, %v2375
  %v2391 = vadd.f32 %v2329, %v2376
  %v2392 = vadd.f32 %v2330, %v2377
  %v2393 = vadd.f32 %v2331, %v2370
  %s2394 = scalar_lea.vmem %s3, 84
  %v2395 = vld [vmem:[%s2394] sm:$0xf]
  %2397 = vset.pattern.permute.xlu0 0
  %2398 = vperm.xlu0 %2397, %v2395
  %v2399 = vpop.permute.xlu0 %2398
  %v2401 = vmul.f32 %v1159, %v2399
  %v2402 = vmul.f32 %v1163, %v2399
  %v2403 = vmul.f32 %v1167, %v2399
  %v2404 = vmul.f32 %v1171, %v2399
  %v2405 = vmul.f32 %v1175, %v2399
  %v2406 = vmul.f32 %v1179, %v2399
  %v2407 = vmul.f32 %v1183, %v2399
  %v2408 = vmul.f32 %v1187, %v2399
  %2417 = vrot.lane.b32.xlu0 %v2401, 84
  %v2418 = vpop.permute.xlu0 %2417
  %2419 = vrot.lane.b32.xlu0 %v2402, 84
  %v2420 = vpop.permute.xlu0 %2419
  %2421 = vrot.lane.b32.xlu0 %v2403, 84
  %v2422 = vpop.permute.xlu0 %2421
  %2423 = vrot.lane.b32.xlu0 %v2404, 84
  %v2424 = vpop.permute.xlu0 %2423
  %2425 = vrot.lane.b32.xlu0 %v2405, 84
  %v2426 = vpop.permute.xlu0 %2425
  %2427 = vrot.lane.b32.xlu0 %v2406, 84
  %v2428 = vpop.permute.xlu0 %2427
  %2429 = vrot.lane.b32.xlu0 %v2407, 84
  %v2430 = vpop.permute.xlu0 %2429
  %2431 = vrot.lane.b32.xlu0 %v2408, 84
  %v2432 = vpop.permute.xlu0 %2431
  %v2433 = vsel %vm2371, %v2418, %v2420
  %v2434 = vsel %vm2371, %v2420, %v2422
  %v2435 = vsel %vm2371, %v2422, %v2424
  %v2436 = vsel %vm2371, %v2426, %v2428
  %v2437 = vsel %vm2371, %v2428, %v2430
  %v2438 = vsel %vm2371, %v2430, %v2432
  %v2447 = vadd.f32 %v2386, %v2433
  %v2448 = vadd.f32 %v2387, %v2434
  %v2449 = vadd.f32 %v2388, %v2435
  %v2450 = vadd.f32 %v2389, %v2424
  %v2451 = vadd.f32 %v2390, %v2436
  %v2452 = vadd.f32 %v2391, %v2437
  %v2453 = vadd.f32 %v2392, %v2438
  %v2454 = vadd.f32 %v2393, %v2432
  %s2455 = scalar_lea.vmem %s3, 88
  %v2456 = vld [vmem:[%s2455] sm:$0xf]
  %2458 = vset.pattern.permute.xlu0 0
  %2459 = vperm.xlu0 %2458, %v2456
  %v2460 = vpop.permute.xlu0 %2459
  %v2462 = vmul.f32 %v1228, %v2460
  %v2463 = vmul.f32 %v1232, %v2460
  %v2464 = vmul.f32 %v1236, %v2460
  %v2465 = vmul.f32 %v1240, %v2460
  %v2466 = vmul.f32 %v1244, %v2460
  %v2467 = vmul.f32 %v1248, %v2460
  %v2468 = vmul.f32 %v1252, %v2460
  %v2469 = vmul.f32 %v1256, %v2460
  %2478 = vrot.lane.b32.xlu0 %v2462, 84
  %v2479 = vpop.permute.xlu0 %2478
  %2480 = vrot.lane.b32.xlu0 %v2463, 84
  %v2481 = vpop.permute.xlu0 %2480
  %2482 = vrot.lane.b32.xlu0 %v2464, 84
  %v2483 = vpop.permute.xlu0 %2482
  %2484 = vrot.lane.b32.xlu0 %v2465, 84
  %v2485 = vpop.permute.xlu0 %2484
  %2486 = vrot.lane.b32.xlu0 %v2466, 84
  %v2487 = vpop.permute.xlu0 %2486
  %2488 = vrot.lane.b32.xlu0 %v2467, 84
  %v2489 = vpop.permute.xlu0 %2488
  %2490 = vrot.lane.b32.xlu0 %v2468, 84
  %v2491 = vpop.permute.xlu0 %2490
  %2492 = vrot.lane.b32.xlu0 %v2469, 84
  %v2493 = vpop.permute.xlu0 %2492
  %v2494 = vsel %vm2371, %v2479, %v2481
  %v2495 = vsel %vm2371, %v2481, %v2483
  %v2496 = vsel %vm2371, %v2483, %v2485
  %v2497 = vsel %vm2371, %v2487, %v2489
  %v2498 = vsel %vm2371, %v2489, %v2491
  %v2499 = vsel %vm2371, %v2491, %v2493
  %v2508 = vadd.f32 %v2447, %v2494
  %v2509 = vadd.f32 %v2448, %v2495
  %v2510 = vadd.f32 %v2449, %v2496
  %v2511 = vadd.f32 %v2450, %v2485
  %v2512 = vadd.f32 %v2451, %v2497
  %v2513 = vadd.f32 %v2452, %v2498
  %v2514 = vadd.f32 %v2453, %v2499
  %v2515 = vadd.f32 %v2454, %v2493
  %s2516 = scalar_lea.vmem %s3, 92
  %v2517 = vld [vmem:[%s2516] sm:$0xf]
  %2519 = vset.pattern.permute.xlu0 0
  %2520 = vperm.xlu0 %2519, %v2517
  %v2521 = vpop.permute.xlu0 %2520
  %v2523 = vmul.f32 %v1297, %v2521
  %v2524 = vmul.f32 %v1301, %v2521
  %v2525 = vmul.f32 %v1305, %v2521
  %v2526 = vmul.f32 %v1309, %v2521
  %v2527 = vmul.f32 %v1313, %v2521
  %v2528 = vmul.f32 %v1317, %v2521
  %v2529 = vmul.f32 %v1321, %v2521
  %v2530 = vmul.f32 %v1325, %v2521
  %2539 = vrot.lane.b32.xlu0 %v2523, 84
  %v2540 = vpop.permute.xlu0 %2539
  %2541 = vrot.lane.b32.xlu0 %v2524, 84
  %v2542 = vpop.permute.xlu0 %2541
  %2543 = vrot.lane.b32.xlu0 %v2525, 84
  %v2544 = vpop.permute.xlu0 %2543
  %2545 = vrot.lane.b32.xlu0 %v2526, 84
  %v2546 = vpop.permute.xlu0 %2545
  %2547 = vrot.lane.b32.xlu0 %v2527, 84
  %v2548 = vpop.permute.xlu0 %2547
  %2549 = vrot.lane.b32.xlu0 %v2528, 84
  %v2550 = vpop.permute.xlu0 %2549
  %2551 = vrot.lane.b32.xlu0 %v2529, 84
  %v2552 = vpop.permute.xlu0 %2551
  %2553 = vrot.lane.b32.xlu0 %v2530, 84
  %v2554 = vpop.permute.xlu0 %2553
  %v2555 = vsel %vm2371, %v2540, %v2542
  %v2556 = vsel %vm2371, %v2542, %v2544
  %v2557 = vsel %vm2371, %v2544, %v2546
  %v2558 = vsel %vm2371, %v2548, %v2550
  %v2559 = vsel %vm2371, %v2550, %v2552
  %v2560 = vsel %vm2371, %v2552, %v2554
  %v2569 = vadd.f32 %v2508, %v2555
  %v2570 = vadd.f32 %v2509, %v2556
  %v2571 = vadd.f32 %v2510, %v2557
  %v2572 = vadd.f32 %v2511, %v2546
  %v2573 = vadd.f32 %v2512, %v2558
  %v2574 = vadd.f32 %v2513, %v2559
  %v2575 = vadd.f32 %v2514, %v2560
  %v2576 = vadd.f32 %v2515, %v2554
  %s2577 = scalar_lea.vmem %s3, 96
  %v2578 = vld [vmem:[%s2577] sm:$0xf]
  %2580 = vset.pattern.permute.xlu0 0
  %2581 = vperm.xlu0 %2580, %v2578
  %v2582 = vpop.permute.xlu0 %2581
  %v2584 = vmul.f32 %v1090, %v2582
  %v2585 = vmul.f32 %v1094, %v2582
  %v2586 = vmul.f32 %v1098, %v2582
  %v2587 = vmul.f32 %v1102, %v2582
  %v2588 = vmul.f32 %v1106, %v2582
  %v2589 = vmul.f32 %v1110, %v2582
  %v2590 = vmul.f32 %v1114, %v2582
  %v2591 = vmul.f32 %v1118, %v2582
  %2600 = vrot.lane.b32.xlu0 %v2584, 48
  %v2601 = vpop.permute.xlu0 %2600
  %2602 = vrot.lane.b32.xlu0 %v2585, 48
  %v2603 = vpop.permute.xlu0 %2602
  %2604 = vrot.lane.b32.xlu0 %v2586, 48
  %v2605 = vpop.permute.xlu0 %2604
  %2606 = vrot.lane.b32.xlu0 %v2587, 48
  %v2607 = vpop.permute.xlu0 %2606
  %2608 = vrot.lane.b32.xlu0 %v2588, 48
  %v2609 = vpop.permute.xlu0 %2608
  %2610 = vrot.lane.b32.xlu0 %v2589, 48
  %v2611 = vpop.permute.xlu0 %2610
  %2612 = vrot.lane.b32.xlu0 %v2590, 48
  %v2613 = vpop.permute.xlu0 %2612
  %2614 = vrot.lane.b32.xlu0 %v2591, 48
  %v2615 = vpop.permute.xlu0 %2614
  %vm2616 = vcmask 392192
  %v2617 = vsel %vm2616, %v2601, %v2603
  %v2618 = vsel %vm2616, %v2603, %v2605
  %v2619 = vsel %vm2616, %v2605, %v2607
  %v2620 = vsel %vm2616, %v2609, %v2611
  %v2621 = vsel %vm2616, %v2611, %v2613
  %v2622 = vsel %vm2616, %v2613, %v2615
  %v2631 = vadd.f32 %v2569, %v2617
  %v2632 = vadd.f32 %v2570, %v2618
  %v2633 = vadd.f32 %v2571, %v2619
  %v2634 = vadd.f32 %v2572, %v2607
  %v2635 = vadd.f32 %v2573, %v2620
  %v2636 = vadd.f32 %v2574, %v2621
  %v2637 = vadd.f32 %v2575, %v2622
  %v2638 = vadd.f32 %v2576, %v2615
  %s2639 = scalar_lea.vmem %s3, 100
  %v2640 = vld [vmem:[%s2639] sm:$0xf]
  %2642 = vset.pattern.permute.xlu0 0
  %2643 = vperm.xlu0 %2642, %v2640
  %v2644 = vpop.permute.xlu0 %2643
  %v2646 = vmul.f32 %v1159, %v2644
  %v2647 = vmul.f32 %v1163, %v2644
  %v2648 = vmul.f32 %v1167, %v2644
  %v2649 = vmul.f32 %v1171, %v2644
  %v2650 = vmul.f32 %v1175, %v2644
  %v2651 = vmul.f32 %v1179, %v2644
  %v2652 = vmul.f32 %v1183, %v2644
  %v2653 = vmul.f32 %v1187, %v2644
  %2662 = vrot.lane.b32.xlu0 %v2646, 48
  %v2663 = vpop.permute.xlu0 %2662
  %2664 = vrot.lane.b32.xlu0 %v2647, 48
  %v2665 = vpop.permute.xlu0 %2664
  %2666 = vrot.lane.b32.xlu0 %v2648, 48
  %v2667 = vpop.permute.xlu0 %2666
  %2668 = vrot.lane.b32.xlu0 %v2649, 48
  %v2669 = vpop.permute.xlu0 %2668
  %2670 = vrot.lane.b32.xlu0 %v2650, 48
  %v2671 = vpop.permute.xlu0 %2670
  %2672 = vrot.lane.b32.xlu0 %v2651, 48
  %v2673 = vpop.permute.xlu0 %2672
  %2674 = vrot.lane.b32.xlu0 %v2652, 48
  %v2675 = vpop.permute.xlu0 %2674
  %2676 = vrot.lane.b32.xlu0 %v2653, 48
  %v2677 = vpop.permute.xlu0 %2676
  %v2678 = vsel %vm2616, %v2663, %v2665
  %v2679 = vsel %vm2616, %v2665, %v2667
  %v2680 = vsel %vm2616, %v2667, %v2669
  %v2681 = vsel %vm2616, %v2671, %v2673
  %v2682 = vsel %vm2616, %v2673, %v2675
  %v2683 = vsel %vm2616, %v2675, %v2677
  %v2692 = vadd.f32 %v2631, %v2678
  %v2693 = vadd.f32 %v2632, %v2679
  %v2694 = vadd.f32 %v2633, %v2680
  %v2695 = vadd.f32 %v2634, %v2669
  %v2696 = vadd.f32 %v2635, %v2681
  %v2697 = vadd.f32 %v2636, %v2682
  %v2698 = vadd.f32 %v2637, %v2683
  %v2699 = vadd.f32 %v2638, %v2677
  %s2700 = scalar_lea.vmem %s3, 104
  %v2701 = vld [vmem:[%s2700] sm:$0xf]
  %2703 = vset.pattern.permute.xlu0 0
  %2704 = vperm.xlu0 %2703, %v2701
  %v2705 = vpop.permute.xlu0 %2704
  %v2707 = vmul.f32 %v1228, %v2705
  %v2708 = vmul.f32 %v1232, %v2705
  %v2709 = vmul.f32 %v1236, %v2705
  %v2710 = vmul.f32 %v1240, %v2705
  %v2711 = vmul.f32 %v1244, %v2705
  %v2712 = vmul.f32 %v1248, %v2705
  %v2713 = vmul.f32 %v1252, %v2705
  %v2714 = vmul.f32 %v1256, %v2705
  %2723 = vrot.lane.b32.xlu0 %v2707, 48
  %v2724 = vpop.permute.xlu0 %2723
  %2725 = vrot.lane.b32.xlu0 %v2708, 48
  %v2726 = vpop.permute.xlu0 %2725
  %2727 = vrot.lane.b32.xlu0 %v2709, 48
  %v2728 = vpop.permute.xlu0 %2727
  %2729 = vrot.lane.b32.xlu0 %v2710, 48
  %v2730 = vpop.permute.xlu0 %2729
  %2731 = vrot.lane.b32.xlu0 %v2711, 48
  %v2732 = vpop.permute.xlu0 %2731
  %2733 = vrot.lane.b32.xlu0 %v2712, 48
  %v2734 = vpop.permute.xlu0 %2733
  %2735 = vrot.lane.b32.xlu0 %v2713, 48
  %v2736 = vpop.permute.xlu0 %2735
  %2737 = vrot.lane.b32.xlu0 %v2714, 48
  %v2738 = vpop.permute.xlu0 %2737
  %v2739 = vsel %vm2616, %v2724, %v2726
  %v2740 = vsel %vm2616, %v2726, %v2728
  %v2741 = vsel %vm2616, %v2728, %v2730
  %v2742 = vsel %vm2616, %v2732, %v2734
  %v2743 = vsel %vm2616, %v2734, %v2736
  %v2744 = vsel %vm2616, %v2736, %v2738
  %v2753 = vadd.f32 %v2692, %v2739
  %v2754 = vadd.f32 %v2693, %v2740
  %v2755 = vadd.f32 %v2694, %v2741
  %v2756 = vadd.f32 %v2695, %v2730
  %v2757 = vadd.f32 %v2696, %v2742
  %v2758 = vadd.f32 %v2697, %v2743
  %v2759 = vadd.f32 %v2698, %v2744
  %v2760 = vadd.f32 %v2699, %v2738
  %s2761 = scalar_lea.vmem %s3, 108
  %v2762 = vld [vmem:[%s2761] sm:$0xf]
  %2764 = vset.pattern.permute.xlu0 0
  %2765 = vperm.xlu0 %2764, %v2762
  %v2766 = vpop.permute.xlu0 %2765
  %v2768 = vmul.f32 %v1297, %v2766
  %v2769 = vmul.f32 %v1301, %v2766
  %v2770 = vmul.f32 %v1305, %v2766
  %v2771 = vmul.f32 %v1309, %v2766
  %v2772 = vmul.f32 %v1313, %v2766
  %v2773 = vmul.f32 %v1317, %v2766
  %v2774 = vmul.f32 %v1321, %v2766
  %v2775 = vmul.f32 %v1325, %v2766
  %2784 = vrot.lane.b32.xlu0 %v2768, 48
  %v2785 = vpop.permute.xlu0 %2784
  %2786 = vrot.lane.b32.xlu0 %v2769, 48
  %v2787 = vpop.permute.xlu0 %2786
  %2788 = vrot.lane.b32.xlu0 %v2770, 48
  %v2789 = vpop.permute.xlu0 %2788
  %2790 = vrot.lane.b32.xlu0 %v2771, 48
  %v2791 = vpop.permute.xlu0 %2790
  %2792 = vrot.lane.b32.xlu0 %v2772, 48
  %v2793 = vpop.permute.xlu0 %2792
  %2794 = vrot.lane.b32.xlu0 %v2773, 48
  %v2795 = vpop.permute.xlu0 %2794
  %2796 = vrot.lane.b32.xlu0 %v2774, 48
  %v2797 = vpop.permute.xlu0 %2796
  %2798 = vrot.lane.b32.xlu0 %v2775, 48
  %v2799 = vpop.permute.xlu0 %2798
  %v2800 = vsel %vm2616, %v2785, %v2787
  %v2801 = vsel %vm2616, %v2787, %v2789
  %v2802 = vsel %vm2616, %v2789, %v2791
  %v2803 = vsel %vm2616, %v2793, %v2795
  %v2804 = vsel %vm2616, %v2795, %v2797
  %v2805 = vsel %vm2616, %v2797, %v2799
  %v2814 = vadd.f32 %v2753, %v2800
  %v2815 = vadd.f32 %v2754, %v2801
  %v2816 = vadd.f32 %v2755, %v2802
  %v2817 = vadd.f32 %v2756, %v2791
  %v2818 = vadd.f32 %v2757, %v2803
  %v2819 = vadd.f32 %v2758, %v2804
  %v2820 = vadd.f32 %v2759, %v2805
  %v2821 = vadd.f32 %v2760, %v2799
  %s2822 = scalar_lea.vmem %s3, 112
  %v2823 = vld [vmem:[%s2822] sm:$0xf]
  %2825 = vset.pattern.permute.xlu0 0
  %2826 = vperm.xlu0 %2825, %v2823
  %v2827 = vpop.permute.xlu0 %2826
  %v2829 = vmul.f32 %v1090, %v2827
  %v2830 = vmul.f32 %v1094, %v2827
  %v2831 = vmul.f32 %v1098, %v2827
  %v2832 = vmul.f32 %v1102, %v2827
  %v2833 = vmul.f32 %v1106, %v2827
  %v2834 = vmul.f32 %v1110, %v2827
  %v2835 = vmul.f32 %v1114, %v2827
  %v2836 = vmul.f32 %v1118, %v2827
  %2845 = vrot.lane.b32.xlu0 %v2829, 46
  %v2846 = vpop.permute.xlu0 %2845
  %2847 = vrot.lane.b32.xlu0 %v2830, 46
  %v2848 = vpop.permute.xlu0 %2847
  %2849 = vrot.lane.b32.xlu0 %v2831, 46
  %v2850 = vpop.permute.xlu0 %2849
  %2851 = vrot.lane.b32.xlu0 %v2832, 46
  %v2852 = vpop.permute.xlu0 %2851
  %2853 = vrot.lane.b32.xlu0 %v2833, 46
  %v2854 = vpop.permute.xlu0 %2853
  %2855 = vrot.lane.b32.xlu0 %v2834, 46
  %v2856 = vpop.permute.xlu0 %2855
  %2857 = vrot.lane.b32.xlu0 %v2835, 46
  %v2858 = vpop.permute.xlu0 %2857
  %2859 = vrot.lane.b32.xlu0 %v2836, 46
  %v2860 = vpop.permute.xlu0 %2859
  %vm2861 = vcmask 375808
  %v2862 = vsel %vm2861, %v2846, %v2848
  %v2863 = vsel %vm2861, %v2848, %v2850
  %v2864 = vsel %vm2861, %v2850, %v2852
  %v2865 = vsel %vm2861, %v2854, %v2856
  %v2866 = vsel %vm2861, %v2856, %v2858
  %v2867 = vsel %vm2861, %v2858, %v2860
  %v2876 = vadd.f32 %v2814, %v2862
  %v2877 = vadd.f32 %v2815, %v2863
  %v2878 = vadd.f32 %v2816, %v2864
  %v2879 = vadd.f32 %v2817, %v2852
  %v2880 = vadd.f32 %v2818, %v2865
  %v2881 = vadd.f32 %v2819, %v2866
  %v2882 = vadd.f32 %v2820, %v2867
  %v2883 = vadd.f32 %v2821, %v2860
  %s2884 = scalar_lea.vmem %s3, 116
  %v2885 = vld [vmem:[%s2884] sm:$0xf]
  %2887 = vset.pattern.permute.xlu0 0
  %2888 = vperm.xlu0 %2887, %v2885
  %v2889 = vpop.permute.xlu0 %2888
  %v2891 = vmul.f32 %v1159, %v2889
  %v2892 = vmul.f32 %v1163, %v2889
  %v2893 = vmul.f32 %v1167, %v2889
  %v2894 = vmul.f32 %v1171, %v2889
  %v2895 = vmul.f32 %v1175, %v2889
  %v2896 = vmul.f32 %v1179, %v2889
  %v2897 = vmul.f32 %v1183, %v2889
  %v2898 = vmul.f32 %v1187, %v2889
  %2907 = vrot.lane.b32.xlu0 %v2891, 46
  %v2908 = vpop.permute.xlu0 %2907
  %2909 = vrot.lane.b32.xlu0 %v2892, 46
  %v2910 = vpop.permute.xlu0 %2909
  %2911 = vrot.lane.b32.xlu0 %v2893, 46
  %v2912 = vpop.permute.xlu0 %2911
  %2913 = vrot.lane.b32.xlu0 %v2894, 46
  %v2914 = vpop.permute.xlu0 %2913
  %2915 = vrot.lane.b32.xlu0 %v2895, 46
  %v2916 = vpop.permute.xlu0 %2915
  %2917 = vrot.lane.b32.xlu0 %v2896, 46
  %v2918 = vpop.permute.xlu0 %2917
  %2919 = vrot.lane.b32.xlu0 %v2897, 46
  %v2920 = vpop.permute.xlu0 %2919
  %2921 = vrot.lane.b32.xlu0 %v2898, 46
  %v2922 = vpop.permute.xlu0 %2921
  %v2923 = vsel %vm2861, %v2908, %v2910
  %v2924 = vsel %vm2861, %v2910, %v2912
  %v2925 = vsel %vm2861, %v2912, %v2914
  %v2926 = vsel %vm2861, %v2916, %v2918
  %v2927 = vsel %vm2861, %v2918, %v2920
  %v2928 = vsel %vm2861, %v2920, %v2922
  %v2937 = vadd.f32 %v2876, %v2923
  %v2938 = vadd.f32 %v2877, %v2924
  %v2939 = vadd.f32 %v2878, %v2925
  %v2940 = vadd.f32 %v2879, %v2914
  %v2941 = vadd.f32 %v2880, %v2926
  %v2942 = vadd.f32 %v2881, %v2927
  %v2943 = vadd.f32 %v2882, %v2928
  %v2944 = vadd.f32 %v2883, %v2922
  %s2945 = scalar_lea.vmem %s3, 120
  %v2946 = vld [vmem:[%s2945] sm:$0xf]
  %2948 = vset.pattern.permute.xlu0 0
  %2949 = vperm.xlu0 %2948, %v2946
  %v2950 = vpop.permute.xlu0 %2949
  %v2952 = vmul.f32 %v1228, %v2950
  %v2953 = vmul.f32 %v1232, %v2950
  %v2954 = vmul.f32 %v1236, %v2950
  %v2955 = vmul.f32 %v1240, %v2950
  %v2956 = vmul.f32 %v1244, %v2950
  %v2957 = vmul.f32 %v1248, %v2950
  %v2958 = vmul.f32 %v1252, %v2950
  %v2959 = vmul.f32 %v1256, %v2950
  %2968 = vrot.lane.b32.xlu0 %v2952, 46
  %v2969 = vpop.permute.xlu0 %2968
  %2970 = vrot.lane.b32.xlu0 %v2953, 46
  %v2971 = vpop.permute.xlu0 %2970
  %2972 = vrot.lane.b32.xlu0 %v2954, 46
  %v2973 = vpop.permute.xlu0 %2972
  %2974 = vrot.lane.b32.xlu0 %v2955, 46
  %v2975 = vpop.permute.xlu0 %2974
  %2976 = vrot.lane.b32.xlu0 %v2956, 46
  %v2977 = vpop.permute.xlu0 %2976
  %2978 = vrot.lane.b32.xlu0 %v2957, 46
  %v2979 = vpop.permute.xlu0 %2978
  %2980 = vrot.lane.b32.xlu0 %v2958, 46
  %v2981 = vpop.permute.xlu0 %2980
  %2982 = vrot.lane.b32.xlu0 %v2959, 46
  %v2983 = vpop.permute.xlu0 %2982
  %v2984 = vsel %vm2861, %v2969, %v2971
  %v2985 = vsel %vm2861, %v2971, %v2973
  %v2986 = vsel %vm2861, %v2973, %v2975
  %v2987 = vsel %vm2861, %v2977, %v2979
  %v2988 = vsel %vm2861, %v2979, %v2981
  %v2989 = vsel %vm2861, %v2981, %v2983
  %v2998 = vadd.f32 %v2937, %v2984
  %v2999 = vadd.f32 %v2938, %v2985
  %v3000 = vadd.f32 %v2939, %v2986
  %v3001 = vadd.f32 %v2940, %v2975
  %v3002 = vadd.f32 %v2941, %v2987
  %v3003 = vadd.f32 %v2942, %v2988
  %v3004 = vadd.f32 %v2943, %v2989
  %v3005 = vadd.f32 %v2944, %v2983
  %s3006 = scalar_lea.vmem %s3, 124
  %v3007 = vld [vmem:[%s3006] sm:$0xf]
  %3009 = vset.pattern.permute.xlu0 0
  %3010 = vperm.xlu0 %3009, %v3007
  %v3011 = vpop.permute.xlu0 %3010
  %v3013 = vmul.f32 %v1297, %v3011
  %v3014 = vmul.f32 %v1301, %v3011
  %v3015 = vmul.f32 %v1305, %v3011
  %v3016 = vmul.f32 %v1309, %v3011
  %v3017 = vmul.f32 %v1313, %v3011
  %v3018 = vmul.f32 %v1317, %v3011
  %v3019 = vmul.f32 %v1321, %v3011
  %v3020 = vmul.f32 %v1325, %v3011
  %3029 = vrot.lane.b32.xlu0 %v3013, 46
  %v3030 = vpop.permute.xlu0 %3029
  %3031 = vrot.lane.b32.xlu0 %v3014, 46
  %v3032 = vpop.permute.xlu0 %3031
  %3033 = vrot.lane.b32.xlu0 %v3015, 46
  %v3034 = vpop.permute.xlu0 %3033
  %3035 = vrot.lane.b32.xlu0 %v3016, 46
  %v3036 = vpop.permute.xlu0 %3035
  %3037 = vrot.lane.b32.xlu0 %v3017, 46
  %v3038 = vpop.permute.xlu0 %3037
  %3039 = vrot.lane.b32.xlu0 %v3018, 46
  %v3040 = vpop.permute.xlu0 %3039
  %3041 = vrot.lane.b32.xlu0 %v3019, 46
  %v3042 = vpop.permute.xlu0 %3041
  %3043 = vrot.lane.b32.xlu0 %v3020, 46
  %v3044 = vpop.permute.xlu0 %3043
  %v3045 = vsel %vm2861, %v3030, %v3032
  %v3046 = vsel %vm2861, %v3032, %v3034
  %v3047 = vsel %vm2861, %v3034, %v3036
  %v3048 = vsel %vm2861, %v3038, %v3040
  %v3049 = vsel %vm2861, %v3040, %v3042
  %v3050 = vsel %vm2861, %v3042, %v3044
  %v3059 = vadd.f32 %v2998, %v3045
  %v3060 = vadd.f32 %v2999, %v3046
  %v3061 = vadd.f32 %v3000, %v3047
  %v3062 = vadd.f32 %v3001, %v3036
  %v3063 = vadd.f32 %v3002, %v3048
  %v3064 = vadd.f32 %v3003, %v3049
  %v3065 = vadd.f32 %v3004, %v3050
  %v3066 = vadd.f32 %v3005, %v3044
  %s3067 = scalar_lea.vmem %s3, 128
  %v3068 = vld [vmem:[%s3067] sm:$0xf]
  %3070 = vset.pattern.permute.xlu0 0
  %3071 = vperm.xlu0 %3070, %v3068
  %v3072 = vpop.permute.xlu0 %3071
  %v3074 = vmul.f32 %v1090, %v3072
  %v3075 = vmul.f32 %v1094, %v3072
  %v3076 = vmul.f32 %v1098, %v3072
  %v3077 = vmul.f32 %v1102, %v3072
  %v3078 = vmul.f32 %v1106, %v3072
  %v3079 = vmul.f32 %v1110, %v3072
  %v3080 = vmul.f32 %v1114, %v3072
  %v3081 = vmul.f32 %v1118, %v3072
  %3090 = vrot.lane.b32.xlu0 %v3074, 44
  %v3091 = vpop.permute.xlu0 %3090
  %3092 = vrot.lane.b32.xlu0 %v3075, 44
  %v3093 = vpop.permute.xlu0 %3092
  %3094 = vrot.lane.b32.xlu0 %v3076, 44
  %v3095 = vpop.permute.xlu0 %3094
  %3096 = vrot.lane.b32.xlu0 %v3077, 44
  %v3097 = vpop.permute.xlu0 %3096
  %3098 = vrot.lane.b32.xlu0 %v3078, 44
  %v3099 = vpop.permute.xlu0 %3098
  %3100 = vrot.lane.b32.xlu0 %v3079, 44
  %v3101 = vpop.permute.xlu0 %3100
  %3102 = vrot.lane.b32.xlu0 %v3080, 44
  %v3103 = vpop.permute.xlu0 %3102
  %3104 = vrot.lane.b32.xlu0 %v3081, 44
  %v3105 = vpop.permute.xlu0 %3104
  %vm3106 = vcmask 359424
  %v3107 = vsel %vm3106, %v3091, %v3093
  %v3108 = vsel %vm3106, %v3093, %v3095
  %v3109 = vsel %vm3106, %v3095, %v3097
  %v3110 = vsel %vm3106, %v3099, %v3101
  %v3111 = vsel %vm3106, %v3101, %v3103
  %v3112 = vsel %vm3106, %v3103, %v3105
  %v3121 = vadd.f32 %v3059, %v3107
  %v3122 = vadd.f32 %v3060, %v3108
  %v3123 = vadd.f32 %v3061, %v3109
  %v3124 = vadd.f32 %v3062, %v3097
  %v3125 = vadd.f32 %v3063, %v3110
  %v3126 = vadd.f32 %v3064, %v3111
  %v3127 = vadd.f32 %v3065, %v3112
  %v3128 = vadd.f32 %v3066, %v3105
  %s3129 = scalar_lea.vmem %s3, 132
  %v3130 = vld [vmem:[%s3129] sm:$0xf]
  %3132 = vset.pattern.permute.xlu0 0
  %3133 = vperm.xlu0 %3132, %v3130
  %v3134 = vpop.permute.xlu0 %3133
  %v3136 = vmul.f32 %v1159, %v3134
  %v3137 = vmul.f32 %v1163, %v3134
  %v3138 = vmul.f32 %v1167, %v3134
  %v3139 = vmul.f32 %v1171, %v3134
  %v3140 = vmul.f32 %v1175, %v3134
  %v3141 = vmul.f32 %v1179, %v3134
  %v3142 = vmul.f32 %v1183, %v3134
  %v3143 = vmul.f32 %v1187, %v3134
  %3152 = vrot.lane.b32.xlu0 %v3136, 44
  %v3153 = vpop.permute.xlu0 %3152
  %3154 = vrot.lane.b32.xlu0 %v3137, 44
  %v3155 = vpop.permute.xlu0 %3154
  %3156 = vrot.lane.b32.xlu0 %v3138, 44
  %v3157 = vpop.permute.xlu0 %3156
  %3158 = vrot.lane.b32.xlu0 %v3139, 44
  %v3159 = vpop.permute.xlu0 %3158
  %3160 = vrot.lane.b32.xlu0 %v3140, 44
  %v3161 = vpop.permute.xlu0 %3160
  %3162 = vrot.lane.b32.xlu0 %v3141, 44
  %v3163 = vpop.permute.xlu0 %3162
  %3164 = vrot.lane.b32.xlu0 %v3142, 44
  %v3165 = vpop.permute.xlu0 %3164
  %3166 = vrot.lane.b32.xlu0 %v3143, 44
  %v3167 = vpop.permute.xlu0 %3166
  %v3168 = vsel %vm3106, %v3153, %v3155
  %v3169 = vsel %vm3106, %v3155, %v3157
  %v3170 = vsel %vm3106, %v3157, %v3159
  %v3171 = vsel %vm3106, %v3161, %v3163
  %v3172 = vsel %vm3106, %v3163, %v3165
  %v3173 = vsel %vm3106, %v3165, %v3167
  %v3182 = vadd.f32 %v3121, %v3168
  %v3183 = vadd.f32 %v3122, %v3169
  %v3184 = vadd.f32 %v3123, %v3170
  %v3185 = vadd.f32 %v3124, %v3159
  %v3186 = vadd.f32 %v3125, %v3171
  %v3187 = vadd.f32 %v3126, %v3172
  %v3188 = vadd.f32 %v3127, %v3173
  %v3189 = vadd.f32 %v3128, %v3167
  %s3190 = scalar_lea.vmem %s3, 136
  %v3191 = vld [vmem:[%s3190] sm:$0xf]
  %3193 = vset.pattern.permute.xlu0 0
  %3194 = vperm.xlu0 %3193, %v3191
  %v3195 = vpop.permute.xlu0 %3194
  %v3197 = vmul.f32 %v1228, %v3195
  %v3198 = vmul.f32 %v1232, %v3195
  %v3199 = vmul.f32 %v1236, %v3195
  %v3200 = vmul.f32 %v1240, %v3195
  %v3201 = vmul.f32 %v1244, %v3195
  %v3202 = vmul.f32 %v1248, %v3195
  %v3203 = vmul.f32 %v1252, %v3195
  %v3204 = vmul.f32 %v1256, %v3195
  %3213 = vrot.lane.b32.xlu0 %v3197, 44
  %v3214 = vpop.permute.xlu0 %3213
  %3215 = vrot.lane.b32.xlu0 %v3198, 44
  %v3216 = vpop.permute.xlu0 %3215
  %3217 = vrot.lane.b32.xlu0 %v3199, 44
  %v3218 = vpop.permute.xlu0 %3217
  %3219 = vrot.lane.b32.xlu0 %v3200, 44
  %v3220 = vpop.permute.xlu0 %3219
  %3221 = vrot.lane.b32.xlu0 %v3201, 44
  %v3222 = vpop.permute.xlu0 %3221
  %3223 = vrot.lane.b32.xlu0 %v3202, 44
  %v3224 = vpop.permute.xlu0 %3223
  %3225 = vrot.lane.b32.xlu0 %v3203, 44
  %v3226 = vpop.permute.xlu0 %3225
  %3227 = vrot.lane.b32.xlu0 %v3204, 44
  %v3228 = vpop.permute.xlu0 %3227
  %v3229 = vsel %vm3106, %v3214, %v3216
  %v3230 = vsel %vm3106, %v3216, %v3218
  %v3231 = vsel %vm3106, %v3218, %v3220
  %v3232 = vsel %vm3106, %v3222, %v3224
  %v3233 = vsel %vm3106, %v3224, %v3226
  %v3234 = vsel %vm3106, %v3226, %v3228
  %v3243 = vadd.f32 %v3182, %v3229
  %v3244 = vadd.f32 %v3183, %v3230
  %v3245 = vadd.f32 %v3184, %v3231
  %v3246 = vadd.f32 %v3185, %v3220
  %v3247 = vadd.f32 %v3186, %v3232
  %v3248 = vadd.f32 %v3187, %v3233
  %v3249 = vadd.f32 %v3188, %v3234
  %v3250 = vadd.f32 %v3189, %v3228
  %s3251 = scalar_lea.vmem %s3, 140
  %v3252 = vld [vmem:[%s3251] sm:$0xf]
  %3254 = vset.pattern.permute.xlu0 0
  %3255 = vperm.xlu0 %3254, %v3252
  %v3256 = vpop.permute.xlu0 %3255
  %v3258 = vmul.f32 %v1297, %v3256
  %v3259 = vmul.f32 %v1301, %v3256
  %v3260 = vmul.f32 %v1305, %v3256
  %v3261 = vmul.f32 %v1309, %v3256
  %v3262 = vmul.f32 %v1313, %v3256
  %v3263 = vmul.f32 %v1317, %v3256
  %v3264 = vmul.f32 %v1321, %v3256
  %v3265 = vmul.f32 %v1325, %v3256
  %3274 = vrot.lane.b32.xlu0 %v3258, 44
  %v3275 = vpop.permute.xlu0 %3274
  %3276 = vrot.lane.b32.xlu0 %v3259, 44
  %v3277 = vpop.permute.xlu0 %3276
  %3278 = vrot.lane.b32.xlu0 %v3260, 44
  %v3279 = vpop.permute.xlu0 %3278
  %3280 = vrot.lane.b32.xlu0 %v3261, 44
  %v3281 = vpop.permute.xlu0 %3280
  %3282 = vrot.lane.b32.xlu0 %v3262, 44
  %v3283 = vpop.permute.xlu0 %3282
  %3284 = vrot.lane.b32.xlu0 %v3263, 44
  %v3285 = vpop.permute.xlu0 %3284
  %3286 = vrot.lane.b32.xlu0 %v3264, 44
  %v3287 = vpop.permute.xlu0 %3286
  %3288 = vrot.lane.b32.xlu0 %v3265, 44
  %v3289 = vpop.permute.xlu0 %3288
  %v3290 = vsel %vm3106, %v3275, %v3277
  %v3291 = vsel %vm3106, %v3277, %v3279
  %v3292 = vsel %vm3106, %v3279, %v3281
  %v3293 = vsel %vm3106, %v3283, %v3285
  %v3294 = vsel %vm3106, %v3285, %v3287
  %v3295 = vsel %vm3106, %v3287, %v3289
  %v3304 = vadd.f32 %v3243, %v3290
  %v3305 = vadd.f32 %v3244, %v3291
  %v3306 = vadd.f32 %v3245, %v3292
  %v3307 = vadd.f32 %v3246, %v3281
  %v3308 = vadd.f32 %v3247, %v3293
  %v3309 = vadd.f32 %v3248, %v3294
  %v3310 = vadd.f32 %v3249, %v3295
  %v3311 = vadd.f32 %v3250, %v3289
  %s3312 = scalar_lea.vmem %s4, 4
  %v3313 = vld [vmem:[%s3312] sm:$0xf]
  %3315 = vset.pattern.permute.xlu0 0
  %3316 = vperm.xlu0 %3315, %v3313
  %v3317 = vpop.permute.xlu0 %3316
  %v3319 = vadd.f32 %v3304, %v3317
  %v3320 = vadd.f32 %v3305, %v3317
  %v3321 = vadd.f32 %v3306, %v3317
  %v3322 = vadd.f32 %v3307, %v3317
  %v3323 = vadd.f32 %v3308, %v3317
  %v3324 = vadd.f32 %v3309, %v3317
  %v3325 = vadd.f32 %v3310, %v3317
  %v3326 = vadd.f32 %v3311, %v3317
  %s3327 = scalar_lea.vmem %s4, 16
  %v3328 = vld [vmem:[%s3327] sm:$0xf]
  %s3329 = scalar_lea.vmem %s4, 20
  %v3330 = vld [vmem:[%s3329] sm:$0xf]
  %v3331 = vmul.f32 %v3319, %v1037
  %v3332 = vmul.f32 %v3320, %v1041
  %v3333 = vmul.f32 %v3321, %v1045
  %v3334 = vmul.f32 %v3322, %v1049
  %v3335 = vmul.f32 %v3323, %v1037
  %v3336 = vmul.f32 %v3324, %v1041
  %v3337 = vmul.f32 %v3325, %v1045
  %v3338 = vmul.f32 %v3326, %v1049
  %v3339 = vsel %vm1002, %v3331, 0.0
  %v3340 = vsel %vm1002, %v3332, 0.0
  %v3341 = vadd.f32 %v3339, %v3340
  %v3342 = vsel %vm1002, %v3333, 0.0
  %v3343 = vadd.f32 %v3341, %v3342
  %vm3344 = vcmask 125952
  %v3345 = vsel %vm3344, %v3334, 0.0
  %v3346 = vadd.f32 %v3343, %v3345
  %v3347 = vsel %vm1002, %v3335, 0.0
  %v3348 = vadd.f32 %v3346, %v3347
  %v3349 = vsel %vm1002, %v3336, 0.0
  %v3350 = vadd.f32 %v3348, %v3349
  %v3351 = vsel %vm1002, %v3337, 0.0
  %v3352 = vadd.f32 %v3350, %v3351
  %v3353 = vsel %vm3344, %v3338, 0.0
  %v3354 = vadd.f32 %v3352, %v3353
  %3355 = vadd.xlane.f32.xlu0 %v3354
  %v3356 = vpop.xlane.xlu0 %3355
  %v3357 = vmul.f32 %v3331, %v3331
  %v3358 = vmul.f32 %v3332, %v3332
  %v3359 = vmul.f32 %v3333, %v3333
  %v3360 = vmul.f32 %v3334, %v3334
  %v3361 = vmul.f32 %v3335, %v3335
  %v3362 = vmul.f32 %v3336, %v3336
  %v3363 = vmul.f32 %v3337, %v3337
  %v3364 = vmul.f32 %v3338, %v3338
  %v3365 = vsel %vm1002, %v3357, 0.0
  %v3366 = vsel %vm1002, %v3358, 0.0
  %v3367 = vadd.f32 %v3365, %v3366
  %v3368 = vsel %vm1002, %v3359, 0.0
  %v3369 = vadd.f32 %v3367, %v3368
  %v3370 = vsel %vm3344, %v3360, 0.0
  %v3371 = vadd.f32 %v3369, %v3370
  %v3372 = vsel %vm1002, %v3361, 0.0
  %v3373 = vadd.f32 %v3371, %v3372
  %v3374 = vsel %vm1002, %v3362, 0.0
  %v3375 = vadd.f32 %v3373, %v3374
  %v3376 = vsel %vm1002, %v3363, 0.0
  %v3377 = vadd.f32 %v3375, %v3376
  %v3378 = vsel %vm3344, %v3364, 0.0
  %v3379 = vadd.f32 %v3377, %v3378
  %3380 = vadd.xlane.f32.xlu0 %v3379
  %v3381 = vpop.xlane.xlu0 %3380
  %v3382 = vmul.f32 %v3356, 0.001953125
  %v3383 = vmul.f32 %v3381, 0.001953125
  %v3384 = vmul.f32 %v3382, %v3382
  %v3385 = vsub.f32 %v3383, %v3384
  %v3386 = vsub.f32 %v3319, %v3382
  %v3387 = vsub.f32 %v3320, %v3382
  %v3388 = vsub.f32 %v3321, %v3382
  %v3389 = vsub.f32 %v3322, %v3382
  %v3390 = vsub.f32 %v3323, %v3382
  %v3391 = vsub.f32 %v3324, %v3382
  %v3392 = vsub.f32 %v3325, %v3382
  %v3393 = vsub.f32 %v3326, %v3382
  %v3394 = vadd.f32 %v3385, 1e-05
  %v3395 = vrsqrt.pop %v3394
  %v3396 = vmul.f32 %v3386, %v3395
  %v3397 = vmul.f32 %v3387, %v3395
  %v3398 = vmul.f32 %v3388, %v3395
  %v3399 = vmul.f32 %v3389, %v3395
  %v3400 = vmul.f32 %v3390, %v3395
  %v3401 = vmul.f32 %v3391, %v3395
  %v3402 = vmul.f32 %v3392, %v3395
  %v3403 = vmul.f32 %v3393, %v3395
  %3405 = vset.pattern.permute.xlu0 0
  %3406 = vperm.xlu0 %3405, %v3328
  %v3407 = vpop.permute.xlu0 %3406
  %v3409 = vmul.f32 %v3396, %v3407
  %v3410 = vmul.f32 %v3397, %v3407
  %v3411 = vmul.f32 %v3398, %v3407
  %v3412 = vmul.f32 %v3399, %v3407
  %v3413 = vmul.f32 %v3400, %v3407
  %v3414 = vmul.f32 %v3401, %v3407
  %v3415 = vmul.f32 %v3402, %v3407
  %v3416 = vmul.f32 %v3403, %v3407
  %3418 = vset.pattern.permute.xlu0 0
  %3419 = vperm.xlu0 %3418, %v3330
  %v3420 = vpop.permute.xlu0 %3419
  %v3422 = vadd.f32 %v3409, %v3420
  %v3423 = vadd.f32 %v3410, %v3420
  %v3424 = vadd.f32 %v3411, %v3420
  %v3425 = vadd.f32 %v3412, %v3420
  %v3426 = vadd.f32 %v3413, %v3420
  %v3427 = vadd.f32 %v3414, %v3420
  %v3428 = vadd.f32 %v3415, %v3420
  %v3429 = vadd.f32 %v3416, %v3420
  %v3430 = vmax.f32 %v3422, 0.0
  %v3431 = vmax.f32 %v3423, 0.0
  %v3432 = vmax.f32 %v3424, 0.0
  %v3433 = vmax.f32 %v3425, 0.0
  %v3434 = vmax.f32 %v3426, 0.0
  %v3435 = vmax.f32 %v3427, 0.0
  %v3436 = vmax.f32 %v3428, 0.0
  %v3437 = vmax.f32 %v3429, 0.0
  %v3438 = vmul.f32 %v3430, %v1037
  %v3439 = vmul.f32 %v3431, %v1041
  %v3440 = vmul.f32 %v3432, %v1045
  %v3441 = vmul.f32 %v3433, %v1049
  %v3442 = vmul.f32 %v3434, %v1037
  %v3443 = vmul.f32 %v3435, %v1041
  %v3444 = vmul.f32 %v3436, %v1045
  %v3445 = vmul.f32 %v3437, %v1049
  %v3454 = vcombine.low %v3438, %v3439
  %v3455 = vcombine.low %v3440, %v3441
  %v3456 = vcombine.low %v3442, %v3443
  %v3457 = vcombine.low %v3444, %v3445
  %3458 = vrot.lane.b32.xlu0 %v3454, 42
  %v3459 = vpop.permute.xlu0 %3458
  %3460 = vrot.lane.b32.xlu0 %v3455, 42
  %v3461 = vpop.permute.xlu0 %3460
  %3462 = vrot.lane.b32.xlu0 %v3456, 42
  %v3463 = vpop.permute.xlu0 %3462
  %3464 = vrot.lane.b32.xlu0 %v3457, 42
  %v3465 = vpop.permute.xlu0 %3464
  %v3466 = vrot.slane %v3459, 4
  %v3467 = vrot.slane %v3461, 4
  %v3468 = vrot.slane %v3463, 4
  %v3469 = vrot.slane %v3465, 4
  %v3470 = vsel %vm1062, %v3466, %v3459
  %v3471 = vsel %vm1002, %v3466, %v3467
  %v3472 = vsel %vm1062, %v3471, %v3461
  %v3473 = vsel %vm1062, %v3468, %v3463
  %v3474 = vsel %vm1002, %v3468, %v3469
  %v3475 = vsel %vm1062, %v3474, %v3465
  %3480 = vst.msk [vmem:[#allocation2] sm:$0xff] %vm1074, %v3470
  %3481 = vst.msk [vmem:[#allocation2 + $0x8] sm:$0xff] %vm1077, %v3472
  %3482 = vst.msk [vmem:[#allocation2 + $0x10] sm:$0xff] %vm1074, %v3473
  %3483 = vst.msk [vmem:[#allocation2 + $0x18] sm:$0xff] %vm1077, %v3475
  %v3484 = vld [vmem:[#allocation2] ss:$4 sm:$0xf]
  %v3485 = vld [vmem:[%s1082] ss:$4 sm:$0xf]
  %s3486 = scalar_lea.vmem %s2, 36
  %v3487 = vld [vmem:[%s3486] sm:$0x1]
  %3489 = vset.pattern.permute.xlu0 0
  %3490 = vperm.xlu0 %3489, %v3487
  %v3491 = vpop.permute.xlu0 %3490
  %v3492 = vlaneseq
  %v3493 = vshrl.u32 %v3492, 7
  %v3494 = vsub.s32 0, %v3493
  %v3495 = vrot.slane %v3491, %v3494
  %v3497 = vmul.f32 %v3484, %v3495
  %v3498 = vmul.f32 %v3485, %v3495
  %v3499 = vadd.f32 %v3497, 0.0
  %v3500 = vadd.f32 %v3498, 0.0
  %v3501 = vld [vmem:[%s1148] ss:$4 sm:$0xf]
  %v3502 = vld [vmem:[%s1150] ss:$4 sm:$0xf]
  %v3503 = vld [vmem:[%s3486 + $0x1] sm:$0x1]
  %3505 = vset.pattern.permute.xlu0 0
  %3506 = vperm.xlu0 %3505, %v3503
  %v3507 = vpop.permute.xlu0 %3506
  %v3508 = vlaneseq
  %v3509 = vshrl.u32 %v3508, 7
  %v3510 = vsub.s32 0, %v3509
  %v3511 = vrot.slane %v3507, %v3510
  %v3513 = vmul.f32 %v3501, %v3511
  %v3514 = vmul.f32 %v3502, %v3511
  %v3515 = vadd.f32 %v3499, %v3513
  %v3516 = vadd.f32 %v3500, %v3514
  %v3517 = vld [vmem:[%s1217] ss:$4 sm:$0xf]
  %v3518 = vld [vmem:[%s1219] ss:$4 sm:$0xf]
  %v3519 = vld [vmem:[%s3486 + $0x2] sm:$0x1]
  %3521 = vset.pattern.permute.xlu0 0
  %3522 = vperm.xlu0 %3521, %v3519
  %v3523 = vpop.permute.xlu0 %3522
  %v3524 = vlaneseq
  %v3525 = vshrl.u32 %v3524, 7
  %v3526 = vsub.s32 0, %v3525
  %v3527 = vrot.slane %v3523, %v3526
  %v3529 = vmul.f32 %v3517, %v3527
  %v3530 = vmul.f32 %v3518, %v3527
  %v3531 = vadd.f32 %v3515, %v3529
  %v3532 = vadd.f32 %v3516, %v3530
  %v3533 = vld [vmem:[%s1286] ss:$4 sm:$0xf]
  %v3534 = vld [vmem:[%s1288] ss:$4 sm:$0xf]
  %v3535 = vld [vmem:[%s3486 + $0x3] sm:$0x1]
  %3537 = vset.pattern.permute.xlu0 0
  %3538 = vperm.xlu0 %3537, %v3535
  %v3539 = vpop.permute.xlu0 %3538
  %v3540 = vlaneseq
  %v3541 = vshrl.u32 %v3540, 7
  %v3542 = vsub.s32 0, %v3541
  %v3543 = vrot.slane %v3539, %v3542
  %v3545 = vmul.f32 %v3533, %v3543
  %v3546 = vmul.f32 %v3534, %v3543
  %v3547 = vadd.f32 %v3531, %v3545
  %v3548 = vadd.f32 %v3532, %v3546
  %s3549 = scalar_lea.vmem %s2, 40
  %v3550 = vld [vmem:[%s3549] sm:$0x1]
  %3552 = vset.pattern.permute.xlu0 0
  %3553 = vperm.xlu0 %3552, %v3550
  %v3554 = vpop.permute.xlu0 %3553
  %v3555 = vlaneseq
  %v3556 = vshrl.u32 %v3555, 7
  %v3557 = vsub.s32 0, %v3556
  %v3558 = vrot.slane %v3554, %v3557
  %v3560 = vmul.f32 %v3484, %v3558
  %v3561 = vmul.f32 %v3485, %v3558
  %3564 = vrot.lane.b32.xlu0 %v3560, 127
  %v3565 = vpop.permute.xlu0 %3564
  %3566 = vrot.lane.b32.xlu0 %v3561, 127
  %v3567 = vpop.permute.xlu0 %3566
  %v3568 = vrot.slane %v3565, 1
  %v3569 = vrot.slane %v3567, 1
  %v3570 = vsel %vm123, %v3565, %v3568
  %v3571 = vsel %vm123, %v3567, %v3569
  %v3574 = vadd.f32 %v3547, %v3570
  %v3575 = vadd.f32 %v3548, %v3571
  %v3576 = vld [vmem:[%s3549 + $0x1] sm:$0x1]
  %3578 = vset.pattern.permute.xlu0 0
  %3579 = vperm.xlu0 %3578, %v3576
  %v3580 = vpop.permute.xlu0 %3579
  %v3581 = vlaneseq
  %v3582 = vshrl.u32 %v3581, 7
  %v3583 = vsub.s32 0, %v3582
  %v3584 = vrot.slane %v3580, %v3583
  %v3586 = vmul.f32 %v3501, %v3584
  %v3587 = vmul.f32 %v3502, %v3584
  %3590 = vrot.lane.b32.xlu0 %v3586, 127
  %v3591 = vpop.permute.xlu0 %3590
  %3592 = vrot.lane.b32.xlu0 %v3587, 127
  %v3593 = vpop.permute.xlu0 %3592
  %v3594 = vrot.slane %v3591, 1
  %v3595 = vrot.slane %v3593, 1
  %v3596 = vsel %vm123, %v3591, %v3594
  %v3597 = vsel %vm123, %v3593, %v3595
  %v3600 = vadd.f32 %v3574, %v3596
  %v3601 = vadd.f32 %v3575, %v3597
  %v3602 = vld [vmem:[%s3549 + $0x2] sm:$0x1]
  %3604 = vset.pattern.permute.xlu0 0
  %3605 = vperm.xlu0 %3604, %v3602
  %v3606 = vpop.permute.xlu0 %3605
  %v3607 = vlaneseq
  %v3608 = vshrl.u32 %v3607, 7
  %v3609 = vsub.s32 0, %v3608
  %v3610 = vrot.slane %v3606, %v3609
  %v3612 = vmul.f32 %v3517, %v3610
  %v3613 = vmul.f32 %v3518, %v3610
  %3616 = vrot.lane.b32.xlu0 %v3612, 127
  %v3617 = vpop.permute.xlu0 %3616
  %3618 = vrot.lane.b32.xlu0 %v3613, 127
  %v3619 = vpop.permute.xlu0 %3618
  %v3620 = vrot.slane %v3617, 1
  %v3621 = vrot.slane %v3619, 1
  %v3622 = vsel %vm123, %v3617, %v3620
  %v3623 = vsel %vm123, %v3619, %v3621
  %v3626 = vadd.f32 %v3600, %v3622
  %v3627 = vadd.f32 %v3601, %v3623
  %v3628 = vld [vmem:[%s3549 + $0x3] sm:$0x1]
  %3630 = vset.pattern.permute.xlu0 0
  %3631 = vperm.xlu0 %3630, %v3628
  %v3632 = vpop.permute.xlu0 %3631
  %v3633 = vlaneseq
  %v3634 = vshrl.u32 %v3633, 7
  %v3635 = vsub.s32 0, %v3634
  %v3636 = vrot.slane %v3632, %v3635
  %v3638 = vmul.f32 %v3533, %v3636
  %v3639 = vmul.f32 %v3534, %v3636
  %3642 = vrot.lane.b32.xlu0 %v3638, 127
  %v3643 = vpop.permute.xlu0 %3642
  %3644 = vrot.lane.b32.xlu0 %v3639, 127
  %v3645 = vpop.permute.xlu0 %3644
  %v3646 = vrot.slane %v3643, 1
  %v3647 = vrot.slane %v3645, 1
  %v3648 = vsel %vm123, %v3643, %v3646
  %v3649 = vsel %vm123, %v3645, %v3647
  %v3652 = vadd.f32 %v3626, %v3648
  %v3653 = vadd.f32 %v3627, %v3649
  %s3654 = scalar_lea.vmem %s2, 44
  %v3655 = vld [vmem:[%s3654] sm:$0x1]
  %3657 = vset.pattern.permute.xlu0 0
  %3658 = vperm.xlu0 %3657, %v3655
  %v3659 = vpop.permute.xlu0 %3658
  %v3660 = vlaneseq
  %v3661 = vshrl.u32 %v3660, 7
  %v3662 = vsub.s32 0, %v3661
  %v3663 = vrot.slane %v3659, %v3662
  %v3665 = vmul.f32 %v3484, %v3663
  %v3666 = vmul.f32 %v3485, %v3663
  %3669 = vrot.lane.b32.xlu0 %v3665, 126
  %v3670 = vpop.permute.xlu0 %3669
  %3671 = vrot.lane.b32.xlu0 %v3666, 126
  %v3672 = vpop.permute.xlu0 %3671
  %v3673 = vrot.slane %v3670, 1
  %v3674 = vrot.slane %v3672, 1
  %v3675 = vsel %vm229, %v3670, %v3673
  %v3676 = vsel %vm229, %v3672, %v3674
  %v3679 = vadd.f32 %v3652, %v3675
  %v3680 = vadd.f32 %v3653, %v3676
  %v3681 = vld [vmem:[%s3654 + $0x1] sm:$0x1]
  %3683 = vset.pattern.permute.xlu0 0
  %3684 = vperm.xlu0 %3683, %v3681
  %v3685 = vpop.permute.xlu0 %3684
  %v3686 = vlaneseq
  %v3687 = vshrl.u32 %v3686, 7
  %v3688 = vsub.s32 0, %v3687
  %v3689 = vrot.slane %v3685, %v3688
  %v3691 = vmul.f32 %v3501, %v3689
  %v3692 = vmul.f32 %v3502, %v3689
  %3695 = vrot.lane.b32.xlu0 %v3691, 126
  %v3696 = vpop.permute.xlu0 %3695
  %3697 = vrot.lane.b32.xlu0 %v3692, 126
  %v3698 = vpop.permute.xlu0 %3697
  %v3699 = vrot.slane %v3696, 1
  %v3700 = vrot.slane %v3698, 1
  %v3701 = vsel %vm229, %v3696, %v3699
  %v3702 = vsel %vm229, %v3698, %v3700
  %v3705 = vadd.f32 %v3679, %v3701
  %v3706 = vadd.f32 %v3680, %v3702
  %v3707 = vld [vmem:[%s3654 + $0x2] sm:$0x1]
  %3709 = vset.pattern.permute.xlu0 0
  %3710 = vperm.xlu0 %3709, %v3707
  %v3711 = vpop.permute.xlu0 %3710
  %v3712 = vlaneseq
  %v3713 = vshrl.u32 %v3712, 7
  %v3714 = vsub.s32 0, %v3713
  %v3715 = vrot.slane %v3711, %v3714
  %v3717 = vmul.f32 %v3517, %v3715
  %v3718 = vmul.f32 %v3518, %v3715
  %3721 = vrot.lane.b32.xlu0 %v3717, 126
  %v3722 = vpop.permute.xlu0 %3721
  %3723 = vrot.lane.b32.xlu0 %v3718, 126
  %v3724 = vpop.permute.xlu0 %3723
  %v3725 = vrot.slane %v3722, 1
  %v3726 = vrot.slane %v3724, 1
  %v3727 = vsel %vm229, %v3722, %v3725
  %v3728 = vsel %vm229, %v3724, %v3726
  %v3731 = vadd.f32 %v3705, %v3727
  %v3732 = vadd.f32 %v3706, %v3728
  %v3733 = vld [vmem:[%s3654 + $0x3] sm:$0x1]
  %3735 = vset.pattern.permute.xlu0 0
  %3736 = vperm.xlu0 %3735, %v3733
  %v3737 = vpop.permute.xlu0 %3736
  %v3738 = vlaneseq
  %v3739 = vshrl.u32 %v3738, 7
  %v3740 = vsub.s32 0, %v3739
  %v3741 = vrot.slane %v3737, %v3740
  %v3743 = vmul.f32 %v3533, %v3741
  %v3744 = vmul.f32 %v3534, %v3741
  %3747 = vrot.lane.b32.xlu0 %v3743, 126
  %v3748 = vpop.permute.xlu0 %3747
  %3749 = vrot.lane.b32.xlu0 %v3744, 126
  %v3750 = vpop.permute.xlu0 %3749
  %v3751 = vrot.slane %v3748, 1
  %v3752 = vrot.slane %v3750, 1
  %v3753 = vsel %vm229, %v3748, %v3751
  %v3754 = vsel %vm229, %v3750, %v3752
  %v3757 = vadd.f32 %v3731, %v3753
  %v3758 = vadd.f32 %v3732, %v3754
  %s3759 = scalar_lea.vmem %s2, 48
  %v3760 = vld [vmem:[%s3759] sm:$0x1]
  %3762 = vset.pattern.permute.xlu0 0
  %3763 = vperm.xlu0 %3762, %v3760
  %v3764 = vpop.permute.xlu0 %3763
  %v3765 = vlaneseq
  %v3766 = vshrl.u32 %v3765, 7
  %v3767 = vsub.s32 0, %v3766
  %v3768 = vrot.slane %v3764, %v3767
  %v3770 = vmul.f32 %v3484, %v3768
  %v3771 = vmul.f32 %v3485, %v3768
  %3774 = vrot.lane.b32.xlu0 %v3770, 108
  %v3775 = vpop.permute.xlu0 %3774
  %3776 = vrot.lane.b32.xlu0 %v3771, 108
  %v3777 = vpop.permute.xlu0 %3776
  %v3778 = vrot.slane %v3775, 1
  %v3779 = vrot.slane %v3777, 1
  %v3780 = vsel %vm335, %v3775, %v3778
  %v3781 = vsel %vm335, %v3777, %v3779
  %v3784 = vadd.f32 %v3757, %v3780
  %v3785 = vadd.f32 %v3758, %v3781
  %v3786 = vld [vmem:[%s3759 + $0x1] sm:$0x1]
  %3788 = vset.pattern.permute.xlu0 0
  %3789 = vperm.xlu0 %3788, %v3786
  %v3790 = vpop.permute.xlu0 %3789
  %v3791 = vlaneseq
  %v3792 = vshrl.u32 %v3791, 7
  %v3793 = vsub.s32 0, %v3792
  %v3794 = vrot.slane %v3790, %v3793
  %v3796 = vmul.f32 %v3501, %v3794
  %v3797 = vmul.f32 %v3502, %v3794
  %3800 = vrot.lane.b32.xlu0 %v3796, 108
  %v3801 = vpop.permute.xlu0 %3800
  %3802 = vrot.lane.b32.xlu0 %v3797, 108
  %v3803 = vpop.permute.xlu0 %3802
  %v3804 = vrot.slane %v3801, 1
  %v3805 = vrot.slane %v3803, 1
  %v3806 = vsel %vm335, %v3801, %v3804
  %v3807 = vsel %vm335, %v3803, %v3805
  %v3810 = vadd.f32 %v3784, %v3806
  %v3811 = vadd.f32 %v3785, %v3807
  %v3812 = vld [vmem:[%s3759 + $0x2] sm:$0x1]
  %3814 = vset.pattern.permute.xlu0 0
  %3815 = vperm.xlu0 %3814, %v3812
  %v3816 = vpop.permute.xlu0 %3815
  %v3817 = vlaneseq
  %v3818 = vshrl.u32 %v3817, 7
  %v3819 = vsub.s32 0, %v3818
  %v3820 = vrot.slane %v3816, %v3819
  %v3822 = vmul.f32 %v3517, %v3820
  %v3823 = vmul.f32 %v3518, %v3820
  %3826 = vrot.lane.b32.xlu0 %v3822, 108
  %v3827 = vpop.permute.xlu0 %3826
  %3828 = vrot.lane.b32.xlu0 %v3823, 108
  %v3829 = vpop.permute.xlu0 %3828
  %v3830 = vrot.slane %v3827, 1
  %v3831 = vrot.slane %v3829, 1
  %v3832 = vsel %vm335, %v3827, %v3830
  %v3833 = vsel %vm335, %v3829, %v3831
  %v3836 = vadd.f32 %v3810, %v3832
  %v3837 = vadd.f32 %v3811, %v3833
  %v3838 = vld [vmem:[%s3759 + $0x3] sm:$0x1]
  %3840 = vset.pattern.permute.xlu0 0
  %3841 = vperm.xlu0 %3840, %v3838
  %v3842 = vpop.permute.xlu0 %3841
  %v3843 = vlaneseq
  %v3844 = vshrl.u32 %v3843, 7
  %v3845 = vsub.s32 0, %v3844
  %v3846 = vrot.slane %v3842, %v3845
  %v3848 = vmul.f32 %v3533, %v3846
  %v3849 = vmul.f32 %v3534, %v3846
  %3852 = vrot.lane.b32.xlu0 %v3848, 108
  %v3853 = vpop.permute.xlu0 %3852
  %3854 = vrot.lane.b32.xlu0 %v3849, 108
  %v3855 = vpop.permute.xlu0 %3854
  %v3856 = vrot.slane %v3853, 1
  %v3857 = vrot.slane %v3855, 1
  %v3858 = vsel %vm335, %v3853, %v3856
  %v3859 = vsel %vm335, %v3855, %v3857
  %v3862 = vadd.f32 %v3836, %v3858
  %v3863 = vadd.f32 %v3837, %v3859
  %s3864 = scalar_lea.vmem %s2, 52
  %v3865 = vld [vmem:[%s3864] sm:$0x1]
  %3867 = vset.pattern.permute.xlu0 0
  %3868 = vperm.xlu0 %3867, %v3865
  %v3869 = vpop.permute.xlu0 %3868
  %v3870 = vlaneseq
  %v3871 = vshrl.u32 %v3870, 7
  %v3872 = vsub.s32 0, %v3871
  %v3873 = vrot.slane %v3869, %v3872
  %v3875 = vmul.f32 %v3484, %v3873
  %v3876 = vmul.f32 %v3485, %v3873
  %3879 = vrot.lane.b32.xlu0 %v3875, 107
  %v3880 = vpop.permute.xlu0 %3879
  %3881 = vrot.lane.b32.xlu0 %v3876, 107
  %v3882 = vpop.permute.xlu0 %3881
  %v3883 = vrot.slane %v3880, 1
  %v3884 = vrot.slane %v3882, 1
  %v3885 = vsel %vm441, %v3880, %v3883
  %v3886 = vsel %vm441, %v3882, %v3884
  %v3889 = vadd.f32 %v3862, %v3885
  %v3890 = vadd.f32 %v3863, %v3886
  %v3891 = vld [vmem:[%s3864 + $0x1] sm:$0x1]
  %3893 = vset.pattern.permute.xlu0 0
  %3894 = vperm.xlu0 %3893, %v3891
  %v3895 = vpop.permute.xlu0 %3894
  %v3896 = vlaneseq
  %v3897 = vshrl.u32 %v3896, 7
  %v3898 = vsub.s32 0, %v3897
  %v3899 = vrot.slane %v3895, %v3898
  %v3901 = vmul.f32 %v3501, %v3899
  %v3902 = vmul.f32 %v3502, %v3899
  %3905 = vrot.lane.b32.xlu0 %v3901, 107
  %v3906 = vpop.permute.xlu0 %3905
  %3907 = vrot.lane.b32.xlu0 %v3902, 107
  %v3908 = vpop.permute.xlu0 %3907
  %v3909 = vrot.slane %v3906, 1
  %v3910 = vrot.slane %v3908, 1
  %v3911 = vsel %vm441, %v3906, %v3909
  %v3912 = vsel %vm441, %v3908, %v3910
  %v3915 = vadd.f32 %v3889, %v3911
  %v3916 = vadd.f32 %v3890, %v3912
  %v3917 = vld [vmem:[%s3864 + $0x2] sm:$0x1]
  %3919 = vset.pattern.permute.xlu0 0
  %3920 = vperm.xlu0 %3919, %v3917
  %v3921 = vpop.permute.xlu0 %3920
  %v3922 = vlaneseq
  %v3923 = vshrl.u32 %v3922, 7
  %v3924 = vsub.s32 0, %v3923
  %v3925 = vrot.slane %v3921, %v3924
  %v3927 = vmul.f32 %v3517, %v3925
  %v3928 = vmul.f32 %v3518, %v3925
  %3931 = vrot.lane.b32.xlu0 %v3927, 107
  %v3932 = vpop.permute.xlu0 %3931
  %3933 = vrot.lane.b32.xlu0 %v3928, 107
  %v3934 = vpop.permute.xlu0 %3933
  %v3935 = vrot.slane %v3932, 1
  %v3936 = vrot.slane %v3934, 1
  %v3937 = vsel %vm441, %v3932, %v3935
  %v3938 = vsel %vm441, %v3934, %v3936
  %v3941 = vadd.f32 %v3915, %v3937
  %v3942 = vadd.f32 %v3916, %v3938
  %v3943 = vld [vmem:[%s3864 + $0x3] sm:$0x1]
  %3945 = vset.pattern.permute.xlu0 0
  %3946 = vperm.xlu0 %3945, %v3943
  %v3947 = vpop.permute.xlu0 %3946
  %v3948 = vlaneseq
  %v3949 = vshrl.u32 %v3948, 7
  %v3950 = vsub.s32 0, %v3949
  %v3951 = vrot.slane %v3947, %v3950
  %v3953 = vmul.f32 %v3533, %v3951
  %v3954 = vmul.f32 %v3534, %v3951
  %3957 = vrot.lane.b32.xlu0 %v3953, 107
  %v3958 = vpop.permute.xlu0 %3957
  %3959 = vrot.lane.b32.xlu0 %v3954, 107
  %v3960 = vpop.permute.xlu0 %3959
  %v3961 = vrot.slane %v3958, 1
  %v3962 = vrot.slane %v3960, 1
  %v3963 = vsel %vm441, %v3958, %v3961
  %v3964 = vsel %vm441, %v3960, %v3962
  %v3967 = vadd.f32 %v3941, %v3963
  %v3968 = vadd.f32 %v3942, %v3964
  %s3969 = scalar_lea.vmem %s2, 56
  %v3970 = vld [vmem:[%s3969] sm:$0x1]
  %3972 = vset.pattern.permute.xlu0 0
  %3973 = vperm.xlu0 %3972, %v3970
  %v3974 = vpop.permute.xlu0 %3973
  %v3975 = vlaneseq
  %v3976 = vshrl.u32 %v3975, 7
  %v3977 = vsub.s32 0, %v3976
  %v3978 = vrot.slane %v3974, %v3977
  %v3980 = vmul.f32 %v3484, %v3978
  %v3981 = vmul.f32 %v3485, %v3978
  %3984 = vrot.lane.b32.xlu0 %v3980, 106
  %v3985 = vpop.permute.xlu0 %3984
  %3986 = vrot.lane.b32.xlu0 %v3981, 106
  %v3987 = vpop.permute.xlu0 %3986
  %v3988 = vrot.slane %v3985, 1
  %v3989 = vrot.slane %v3987, 1
  %v3990 = vsel %vm547, %v3985, %v3988
  %v3991 = vsel %vm547, %v3987, %v3989
  %v3994 = vadd.f32 %v3967, %v3990
  %v3995 = vadd.f32 %v3968, %v3991
  %v3996 = vld [vmem:[%s3969 + $0x1] sm:$0x1]
  %3998 = vset.pattern.permute.xlu0 0
  %3999 = vperm.xlu0 %3998, %v3996
  %v4000 = vpop.permute.xlu0 %3999
  %v4001 = vlaneseq
  %v4002 = vshrl.u32 %v4001, 7
  %v4003 = vsub.s32 0, %v4002
  %v4004 = vrot.slane %v4000, %v4003
  %v4006 = vmul.f32 %v3501, %v4004
  %v4007 = vmul.f32 %v3502, %v4004
  %4010 = vrot.lane.b32.xlu0 %v4006, 106
  %v4011 = vpop.permute.xlu0 %4010
  %4012 = vrot.lane.b32.xlu0 %v4007, 106
  %v4013 = vpop.permute.xlu0 %4012
  %v4014 = vrot.slane %v4011, 1
  %v4015 = vrot.slane %v4013, 1
  %v4016 = vsel %vm547, %v4011, %v4014
  %v4017 = vsel %vm547, %v4013, %v4015
  %v4020 = vadd.f32 %v3994, %v4016
  %v4021 = vadd.f32 %v3995, %v4017
  %v4022 = vld [vmem:[%s3969 + $0x2] sm:$0x1]
  %4024 = vset.pattern.permute.xlu0 0
  %4025 = vperm.xlu0 %4024, %v4022
  %v4026 = vpop.permute.xlu0 %4025
  %v4027 = vlaneseq
  %v4028 = vshrl.u32 %v4027, 7
  %v4029 = vsub.s32 0, %v4028
  %v4030 = vrot.slane %v4026, %v4029
  %v4032 = vmul.f32 %v3517, %v4030
  %v4033 = vmul.f32 %v3518, %v4030
  %4036 = vrot.lane.b32.xlu0 %v4032, 106
  %v4037 = vpop.permute.xlu0 %4036
  %4038 = vrot.lane.b32.xlu0 %v4033, 106
  %v4039 = vpop.permute.xlu0 %4038
  %v4040 = vrot.slane %v4037, 1
  %v4041 = vrot.slane %v4039, 1
  %v4042 = vsel %vm547, %v4037, %v4040
  %v4043 = vsel %vm547, %v4039, %v4041
  %v4046 = vadd.f32 %v4020, %v4042
  %v4047 = vadd.f32 %v4021, %v4043
  %v4048 = vld [vmem:[%s3969 + $0x3] sm:$0x1]
  %4050 = vset.pattern.permute.xlu0 0
  %4051 = vperm.xlu0 %4050, %v4048
  %v4052 = vpop.permute.xlu0 %4051
  %v4053 = vlaneseq
  %v4054 = vshrl.u32 %v4053, 7
  %v4055 = vsub.s32 0, %v4054
  %v4056 = vrot.slane %v4052, %v4055
  %v4058 = vmul.f32 %v3533, %v4056
  %v4059 = vmul.f32 %v3534, %v4056
  %4062 = vrot.lane.b32.xlu0 %v4058, 106
  %v4063 = vpop.permute.xlu0 %4062
  %4064 = vrot.lane.b32.xlu0 %v4059, 106
  %v4065 = vpop.permute.xlu0 %4064
  %v4066 = vrot.slane %v4063, 1
  %v4067 = vrot.slane %v4065, 1
  %v4068 = vsel %vm547, %v4063, %v4066
  %v4069 = vsel %vm547, %v4065, %v4067
  %v4072 = vadd.f32 %v4046, %v4068
  %v4073 = vadd.f32 %v4047, %v4069
  %s4074 = scalar_lea.vmem %s2, 60
  %v4075 = vld [vmem:[%s4074] sm:$0x1]
  %4077 = vset.pattern.permute.xlu0 0
  %4078 = vperm.xlu0 %4077, %v4075
  %v4079 = vpop.permute.xlu0 %4078
  %v4080 = vlaneseq
  %v4081 = vshrl.u32 %v4080, 7
  %v4082 = vsub.s32 0, %v4081
  %v4083 = vrot.slane %v4079, %v4082
  %v4085 = vmul.f32 %v3484, %v4083
  %v4086 = vmul.f32 %v3485, %v4083
  %4089 = vrot.lane.b32.xlu0 %v4085, 88
  %v4090 = vpop.permute.xlu0 %4089
  %4091 = vrot.lane.b32.xlu0 %v4086, 88
  %v4092 = vpop.permute.xlu0 %4091
  %v4093 = vrot.slane %v4090, 1
  %v4094 = vrot.slane %v4092, 1
  %v4095 = vsel %vm653, %v4090, %v4093
  %v4096 = vsel %vm653, %v4092, %v4094
  %v4099 = vadd.f32 %v4072, %v4095
  %v4100 = vadd.f32 %v4073, %v4096
  %v4101 = vld [vmem:[%s4074 + $0x1] sm:$0x1]
  %4103 = vset.pattern.permute.xlu0 0
  %4104 = vperm.xlu0 %4103, %v4101
  %v4105 = vpop.permute.xlu0 %4104
  %v4106 = vlaneseq
  %v4107 = vshrl.u32 %v4106, 7
  %v4108 = vsub.s32 0, %v4107
  %v4109 = vrot.slane %v4105, %v4108
  %v4111 = vmul.f32 %v3501, %v4109
  %v4112 = vmul.f32 %v3502, %v4109
  %4115 = vrot.lane.b32.xlu0 %v4111, 88
  %v4116 = vpop.permute.xlu0 %4115
  %4117 = vrot.lane.b32.xlu0 %v4112, 88
  %v4118 = vpop.permute.xlu0 %4117
  %v4119 = vrot.slane %v4116, 1
  %v4120 = vrot.slane %v4118, 1
  %v4121 = vsel %vm653, %v4116, %v4119
  %v4122 = vsel %vm653, %v4118, %v4120
  %v4125 = vadd.f32 %v4099, %v4121
  %v4126 = vadd.f32 %v4100, %v4122
  %v4127 = vld [vmem:[%s4074 + $0x2] sm:$0x1]
  %4129 = vset.pattern.permute.xlu0 0
  %4130 = vperm.xlu0 %4129, %v4127
  %v4131 = vpop.permute.xlu0 %4130
  %v4132 = vlaneseq
  %v4133 = vshrl.u32 %v4132, 7
  %v4134 = vsub.s32 0, %v4133
  %v4135 = vrot.slane %v4131, %v4134
  %v4137 = vmul.f32 %v3517, %v4135
  %v4138 = vmul.f32 %v3518, %v4135
  %4141 = vrot.lane.b32.xlu0 %v4137, 88
  %v4142 = vpop.permute.xlu0 %4141
  %4143 = vrot.lane.b32.xlu0 %v4138, 88
  %v4144 = vpop.permute.xlu0 %4143
  %v4145 = vrot.slane %v4142, 1
  %v4146 = vrot.slane %v4144, 1
  %v4147 = vsel %vm653, %v4142, %v4145
  %v4148 = vsel %vm653, %v4144, %v4146
  %v4151 = vadd.f32 %v4125, %v4147
  %v4152 = vadd.f32 %v4126, %v4148
  %v4153 = vld [vmem:[%s4074 + $0x3] sm:$0x1]
  %4155 = vset.pattern.permute.xlu0 0
  %4156 = vperm.xlu0 %4155, %v4153
  %v4157 = vpop.permute.xlu0 %4156
  %v4158 = vlaneseq
  %v4159 = vshrl.u32 %v4158, 7
  %v4160 = vsub.s32 0, %v4159
  %v4161 = vrot.slane %v4157, %v4160
  %v4163 = vmul.f32 %v3533, %v4161
  %v4164 = vmul.f32 %v3534, %v4161
  %4167 = vrot.lane.b32.xlu0 %v4163, 88
  %v4168 = vpop.permute.xlu0 %4167
  %4169 = vrot.lane.b32.xlu0 %v4164, 88
  %v4170 = vpop.permute.xlu0 %4169
  %v4171 = vrot.slane %v4168, 1
  %v4172 = vrot.slane %v4170, 1
  %v4173 = vsel %vm653, %v4168, %v4171
  %v4174 = vsel %vm653, %v4170, %v4172
  %v4177 = vadd.f32 %v4151, %v4173
  %v4178 = vadd.f32 %v4152, %v4174
  %s4179 = scalar_lea.vmem %s2, 64
  %v4180 = vld [vmem:[%s4179] sm:$0x1]
  %4182 = vset.pattern.permute.xlu0 0
  %4183 = vperm.xlu0 %4182, %v4180
  %v4184 = vpop.permute.xlu0 %4183
  %v4185 = vlaneseq
  %v4186 = vshrl.u32 %v4185, 7
  %v4187 = vsub.s32 0, %v4186
  %v4188 = vrot.slane %v4184, %v4187
  %v4190 = vmul.f32 %v3484, %v4188
  %v4191 = vmul.f32 %v3485, %v4188
  %4194 = vrot.lane.b32.xlu0 %v4190, 87
  %v4195 = vpop.permute.xlu0 %4194
  %4196 = vrot.lane.b32.xlu0 %v4191, 87
  %v4197 = vpop.permute.xlu0 %4196
  %v4198 = vrot.slane %v4195, 1
  %v4199 = vrot.slane %v4197, 1
  %v4200 = vsel %vm759, %v4195, %v4198
  %v4201 = vsel %vm759, %v4197, %v4199
  %v4204 = vadd.f32 %v4177, %v4200
  %v4205 = vadd.f32 %v4178, %v4201
  %v4206 = vld [vmem:[%s4179 + $0x1] sm:$0x1]
  %4208 = vset.pattern.permute.xlu0 0
  %4209 = vperm.xlu0 %4208, %v4206
  %v4210 = vpop.permute.xlu0 %4209
  %v4211 = vlaneseq
  %v4212 = vshrl.u32 %v4211, 7
  %v4213 = vsub.s32 0, %v4212
  %v4214 = vrot.slane %v4210, %v4213
  %v4216 = vmul.f32 %v3501, %v4214
  %v4217 = vmul.f32 %v3502, %v4214
  %4220 = vrot.lane.b32.xlu0 %v4216, 87
  %v4221 = vpop.permute.xlu0 %4220
  %4222 = vrot.lane.b32.xlu0 %v4217, 87
  %v4223 = vpop.permute.xlu0 %4222
  %v4224 = vrot.slane %v4221, 1
  %v4225 = vrot.slane %v4223, 1
  %v4226 = vsel %vm759, %v4221, %v4224
  %v4227 = vsel %vm759, %v4223, %v4225
  %v4230 = vadd.f32 %v4204, %v4226
  %v4231 = vadd.f32 %v4205, %v4227
  %v4232 = vld [vmem:[%s4179 + $0x2] sm:$0x1]
  %4234 = vset.pattern.permute.xlu0 0
  %4235 = vperm.xlu0 %4234, %v4232
  %v4236 = vpop.permute.xlu0 %4235
  %v4237 = vlaneseq
  %v4238 = vshrl.u32 %v4237, 7
  %v4239 = vsub.s32 0, %v4238
  %v4240 = vrot.slane %v4236, %v4239
  %v4242 = vmul.f32 %v3517, %v4240
  %v4243 = vmul.f32 %v3518, %v4240
  %4246 = vrot.lane.b32.xlu0 %v4242, 87
  %v4247 = vpop.permute.xlu0 %4246
  %4248 = vrot.lane.b32.xlu0 %v4243, 87
  %v4249 = vpop.permute.xlu0 %4248
  %v4250 = vrot.slane %v4247, 1
  %v4251 = vrot.slane %v4249, 1
  %v4252 = vsel %vm759, %v4247, %v4250
  %v4253 = vsel %vm759, %v4249, %v4251
  %v4256 = vadd.f32 %v4230, %v4252
  %v4257 = vadd.f32 %v4231, %v4253
  %v4258 = vld [vmem:[%s4179 + $0x3] sm:$0x1]
  %4260 = vset.pattern.permute.xlu0 0
  %4261 = vperm.xlu0 %4260, %v4258
  %v4262 = vpop.permute.xlu0 %4261
  %v4263 = vlaneseq
  %v4264 = vshrl.u32 %v4263, 7
  %v4265 = vsub.s32 0, %v4264
  %v4266 = vrot.slane %v4262, %v4265
  %v4268 = vmul.f32 %v3533, %v4266
  %v4269 = vmul.f32 %v3534, %v4266
  %4272 = vrot.lane.b32.xlu0 %v4268, 87
  %v4273 = vpop.permute.xlu0 %4272
  %4274 = vrot.lane.b32.xlu0 %v4269, 87
  %v4275 = vpop.permute.xlu0 %4274
  %v4276 = vrot.slane %v4273, 1
  %v4277 = vrot.slane %v4275, 1
  %v4278 = vsel %vm759, %v4273, %v4276
  %v4279 = vsel %vm759, %v4275, %v4277
  %v4282 = vadd.f32 %v4256, %v4278
  %v4283 = vadd.f32 %v4257, %v4279
  %s4284 = scalar_lea.vmem %s2, 68
  %v4285 = vld [vmem:[%s4284] sm:$0x1]
  %4287 = vset.pattern.permute.xlu0 0
  %4288 = vperm.xlu0 %4287, %v4285
  %v4289 = vpop.permute.xlu0 %4288
  %v4290 = vlaneseq
  %v4291 = vshrl.u32 %v4290, 7
  %v4292 = vsub.s32 0, %v4291
  %v4293 = vrot.slane %v4289, %v4292
  %v4295 = vmul.f32 %v3484, %v4293
  %v4296 = vmul.f32 %v3485, %v4293
  %4299 = vrot.lane.b32.xlu0 %v4295, 86
  %v4300 = vpop.permute.xlu0 %4299
  %4301 = vrot.lane.b32.xlu0 %v4296, 86
  %v4302 = vpop.permute.xlu0 %4301
  %v4303 = vrot.slane %v4300, 1
  %v4304 = vrot.slane %v4302, 1
  %v4305 = vsel %vm865, %v4300, %v4303
  %v4306 = vsel %vm865, %v4302, %v4304
  %v4309 = vadd.f32 %v4282, %v4305
  %v4310 = vadd.f32 %v4283, %v4306
  %v4311 = vld [vmem:[%s4284 + $0x1] sm:$0x1]
  %4313 = vset.pattern.permute.xlu0 0
  %4314 = vperm.xlu0 %4313, %v4311
  %v4315 = vpop.permute.xlu0 %4314
  %v4316 = vlaneseq
  %v4317 = vshrl.u32 %v4316, 7
  %v4318 = vsub.s32 0, %v4317
  %v4319 = vrot.slane %v4315, %v4318
  %v4321 = vmul.f32 %v3501, %v4319
  %v4322 = vmul.f32 %v3502, %v4319
  %4325 = vrot.lane.b32.xlu0 %v4321, 86
  %v4326 = vpop.permute.xlu0 %4325
  %4327 = vrot.lane.b32.xlu0 %v4322, 86
  %v4328 = vpop.permute.xlu0 %4327
  %v4329 = vrot.slane %v4326, 1
  %v4330 = vrot.slane %v4328, 1
  %v4331 = vsel %vm865, %v4326, %v4329
  %v4332 = vsel %vm865, %v4328, %v4330
  %v4335 = vadd.f32 %v4309, %v4331
  %v4336 = vadd.f32 %v4310, %v4332
  %v4337 = vld [vmem:[%s4284 + $0x2] sm:$0x1]
  %4339 = vset.pattern.permute.xlu0 0
  %4340 = vperm.xlu0 %4339, %v4337
  %v4341 = vpop.permute.xlu0 %4340
  %v4342 = vlaneseq
  %v4343 = vshrl.u32 %v4342, 7
  %v4344 = vsub.s32 0, %v4343
  %v4345 = vrot.slane %v4341, %v4344
  %v4347 = vmul.f32 %v3517, %v4345
  %v4348 = vmul.f32 %v3518, %v4345
  %4351 = vrot.lane.b32.xlu0 %v4347, 86
  %v4352 = vpop.permute.xlu0 %4351
  %4353 = vrot.lane.b32.xlu0 %v4348, 86
  %v4354 = vpop.permute.xlu0 %4353
  %v4355 = vrot.slane %v4352, 1
  %v4356 = vrot.slane %v4354, 1
  %v4357 = vsel %vm865, %v4352, %v4355
  %v4358 = vsel %vm865, %v4354, %v4356
  %v4361 = vadd.f32 %v4335, %v4357
  %v4362 = vadd.f32 %v4336, %v4358
  %v4363 = vld [vmem:[%s4284 + $0x3] sm:$0x1]
  %4365 = vset.pattern.permute.xlu0 0
  %4366 = vperm.xlu0 %4365, %v4363
  %v4367 = vpop.permute.xlu0 %4366
  %v4368 = vlaneseq
  %v4369 = vshrl.u32 %v4368, 7
  %v4370 = vsub.s32 0, %v4369
  %v4371 = vrot.slane %v4367, %v4370
  %v4373 = vmul.f32 %v3533, %v4371
  %v4374 = vmul.f32 %v3534, %v4371
  %4377 = vrot.lane.b32.xlu0 %v4373, 86
  %v4378 = vpop.permute.xlu0 %4377
  %4379 = vrot.lane.b32.xlu0 %v4374, 86
  %v4380 = vpop.permute.xlu0 %4379
  %v4381 = vrot.slane %v4378, 1
  %v4382 = vrot.slane %v4380, 1
  %v4383 = vsel %vm865, %v4378, %v4381
  %v4384 = vsel %vm865, %v4380, %v4382
  %v4387 = vadd.f32 %v4361, %v4383
  %v4388 = vadd.f32 %v4362, %v4384
  %v4389 = vld [vmem:[#allocation2] sm:$0xff]
  %v4390 = vld [vmem:[#allocation2 + $0x8] sm:$0xff]
  %v4391 = vld [vmem:[#allocation2 + $0x10] sm:$0xff]
  %v4392 = vld [vmem:[#allocation2 + $0x18] sm:$0xff]
  %v4395 = vlaneseq
  %v4396 = vshrl.u32 %v4395, 7
  %v4397 = vsub.s32 0, %v4396
  %v4398 = vrot.slane %v4387, %v4397
  %v4399 = vlaneseq
  %v4400 = vshrl.u32 %v4399, 7
  %v4401 = vsub.s32 1, %v4400
  %v4402 = vrot.slane %v4387, %v4401
  %v4403 = vlaneseq
  %v4404 = vshrl.u32 %v4403, 7
  %v4405 = vsub.s32 2, %v4404
  %v4406 = vrot.slane %v4387, %v4405
  %v4407 = vlaneseq
  %v4408 = vshrl.u32 %v4407, 7
  %v4409 = vsub.s32 3, %v4408
  %v4410 = vrot.slane %v4387, %v4409
  %v4411 = vlaneseq
  %v4412 = vshrl.u32 %v4411, 7
  %v4413 = vsub.s32 0, %v4412
  %v4414 = vrot.slane %v4388, %v4413
  %v4415 = vlaneseq
  %v4416 = vshrl.u32 %v4415, 7
  %v4417 = vsub.s32 1, %v4416
  %v4418 = vrot.slane %v4388, %v4417
  %v4419 = vlaneseq
  %v4420 = vshrl.u32 %v4419, 7
  %v4421 = vsub.s32 2, %v4420
  %v4422 = vrot.slane %v4388, %v4421
  %v4423 = vlaneseq
  %v4424 = vshrl.u32 %v4423, 7
  %v4425 = vsub.s32 3, %v4424
  %v4426 = vrot.slane %v4388, %v4425
  %v4427 = vcombine.low %v4398, %v4402
  %v4428 = vcombine.low %v4406, %v4410
  %v4429 = vcombine.low %v4414, %v4418
  %v4430 = vcombine.low %v4422, %v4426
  %4431 = vrot.lane.b32.xlu0 %v4427, 21
  %v4432 = vpop.permute.xlu0 %4431
  %4433 = vrot.lane.b32.xlu0 %v4428, 21
  %v4434 = vpop.permute.xlu0 %4433
  %4435 = vrot.lane.b32.xlu0 %v4429, 21
  %v4436 = vpop.permute.xlu0 %4435
  %4437 = vrot.lane.b32.xlu0 %v4430, 21
  %v4438 = vpop.permute.xlu0 %4437
  %v4439 = vrot.slane %v4432, 4
  %v4440 = vrot.slane %v4434, 4
  %v4441 = vrot.slane %v4436, 4
  %v4442 = vrot.slane %v4438, 4
  %v4443 = vsel %vm1000, %v4439, %v4432
  %v4444 = vsel %vm1002, %v4439, %v4440
  %v4445 = vsel %vm1000, %v4444, %v4434
  %v4446 = vsel %vm1000, %v4441, %v4436
  %v4447 = vsel %vm1002, %v4441, %v4442
  %v4448 = vsel %vm1000, %v4447, %v4438
  %v4453 = vadd.f32 %v4389, %v4443
  %v4454 = vadd.f32 %v4390, %v4445
  %v4455 = vadd.f32 %v4391, %v4446
  %v4456 = vadd.f32 %v4392, %v4448
  %s4457 = scalar_lea.vmem %s4, 8
  %v4458 = vld [vmem:[%s4457] sm:$0xf]
  %4460 = vset.pattern.permute.xlu0 0
  %4461 = vperm.xlu0 %4460, %v4458
  %v4462 = vpop.permute.xlu0 %4461
  %v4464 = vunpack.c.l.s4 839922192
  %v4465 = vunpack.c.0.s8 %v4464
  %v4466 = vlaneseq
  %v4467 = vshrl.u32 %v4466, 7
  %v4468 = vsub.s32 %v4465, %v4467
  %v4469 = vrot.slane %v4462, %v4468
  %v4471 = vadd.f32 %v4453, %v4469
  %v4472 = vadd.f32 %v4454, %v4469
  %v4473 = vadd.f32 %v4455, %v4469
  %v4474 = vadd.f32 %v4456, %v4469
  %v4475 = vmul.f32 %v4471, %v1063
  %v4476 = vmul.f32 %v4472, %v1065
  %v4477 = vmul.f32 %v4473, %v1063
  %v4478 = vmul.f32 %v4474, %v1065
  %4479 = vst.msk [vmem:[#allocation2] sm:$0xff] %vm1074, %v4475
  %4480 = vst.msk [vmem:[#allocation2 + $0x8] sm:$0xff] %vm1077, %v4476
  %4481 = vst.msk [vmem:[#allocation2 + $0x10] sm:$0xff] %vm1074, %v4477
  %4482 = vst.msk [vmem:[#allocation2 + $0x18] sm:$0xff] %vm1077, %v4478
  %v4483 = vld [vmem:[#allocation2] ss:$4 sm:$0xf]
  %v4484 = vld [vmem:[%s1082] ss:$4 sm:$0xf]
  %s4485 = scalar_lea.vmem %s3, 144
  %v4486 = vld [vmem:[%s4485] sm:$0xf]
  %v4489 = vlaneseq
  %v4490 = vshrl.u32 %v4489, 7
  %v4491 = vsub.s32 0, %v4490
  %v4492 = vrot.slane %v4483, %v4491
  %v4493 = vlaneseq
  %v4494 = vshrl.u32 %v4493, 7
  %v4495 = vsub.s32 1, %v4494
  %v4496 = vrot.slane %v4483, %v4495
  %v4497 = vlaneseq
  %v4498 = vshrl.u32 %v4497, 7
  %v4499 = vsub.s32 2, %v4498
  %v4500 = vrot.slane %v4483, %v4499
  %v4501 = vlaneseq
  %v4502 = vshrl.u32 %v4501, 7
  %v4503 = vsub.s32 3, %v4502
  %v4504 = vrot.slane %v4483, %v4503
  %v4505 = vlaneseq
  %v4506 = vshrl.u32 %v4505, 7
  %v4507 = vsub.s32 0, %v4506
  %v4508 = vrot.slane %v4484, %v4507
  %v4509 = vlaneseq
  %v4510 = vshrl.u32 %v4509, 7
  %v4511 = vsub.s32 1, %v4510
  %v4512 = vrot.slane %v4484, %v4511
  %v4513 = vlaneseq
  %v4514 = vshrl.u32 %v4513, 7
  %v4515 = vsub.s32 2, %v4514
  %v4516 = vrot.slane %v4484, %v4515
  %v4517 = vlaneseq
  %v4518 = vshrl.u32 %v4517, 7
  %v4519 = vsub.s32 3, %v4518
  %v4520 = vrot.slane %v4484, %v4519
  %4530 = vset.pattern.permute.xlu0 0
  %4531 = vperm.xlu0 %4530, %v4486
  %v4532 = vpop.permute.xlu0 %4531
  %v4534 = vmul.f32 %v4492, %v4532
  %v4535 = vmul.f32 %v4496, %v4532
  %v4536 = vmul.f32 %v4500, %v4532
  %v4537 = vmul.f32 %v4504, %v4532
  %v4538 = vmul.f32 %v4508, %v4532
  %v4539 = vmul.f32 %v4512, %v4532
  %v4540 = vmul.f32 %v4516, %v4532
  %v4541 = vmul.f32 %v4520, %v4532
  %v4542 = vadd.f32 %v4534, 0.0
  %v4543 = vadd.f32 %v4535, 0.0
  %v4544 = vadd.f32 %v4536, 0.0
  %v4545 = vadd.f32 %v4537, 0.0
  %v4546 = vadd.f32 %v4538, 0.0
  %v4547 = vadd.f32 %v4539, 0.0
  %v4548 = vadd.f32 %v4540, 0.0
  %v4549 = vadd.f32 %v4541, 0.0
  %v4550 = vld [vmem:[%s1148] ss:$4 sm:$0xf]
  %v4551 = vld [vmem:[%s1150] ss:$4 sm:$0xf]
  %s4552 = scalar_lea.vmem %s3, 148
  %v4553 = vld [vmem:[%s4552] sm:$0xf]
  %v4556 = vlaneseq
  %v4557 = vshrl.u32 %v4556, 7
  %v4558 = vsub.s32 0, %v4557
  %v4559 = vrot.slane %v4550, %v4558
  %v4560 = vlaneseq
  %v4561 = vshrl.u32 %v4560, 7
  %v4562 = vsub.s32 1, %v4561
  %v4563 = vrot.slane %v4550, %v4562
  %v4564 = vlaneseq
  %v4565 = vshrl.u32 %v4564, 7
  %v4566 = vsub.s32 2, %v4565
  %v4567 = vrot.slane %v4550, %v4566
  %v4568 = vlaneseq
  %v4569 = vshrl.u32 %v4568, 7
  %v4570 = vsub.s32 3, %v4569
  %v4571 = vrot.slane %v4550, %v4570
  %v4572 = vlaneseq
  %v4573 = vshrl.u32 %v4572, 7
  %v4574 = vsub.s32 0, %v4573
  %v4575 = vrot.slane %v4551, %v4574
  %v4576 = vlaneseq
  %v4577 = vshrl.u32 %v4576, 7
  %v4578 = vsub.s32 1, %v4577
  %v4579 = vrot.slane %v4551, %v4578
  %v4580 = vlaneseq
  %v4581 = vshrl.u32 %v4580, 7
  %v4582 = vsub.s32 2, %v4581
  %v4583 = vrot.slane %v4551, %v4582
  %v4584 = vlaneseq
  %v4585 = vshrl.u32 %v4584, 7
  %v4586 = vsub.s32 3, %v4585
  %v4587 = vrot.slane %v4551, %v4586
  %4597 = vset.pattern.permute.xlu0 0
  %4598 = vperm.xlu0 %4597, %v4553
  %v4599 = vpop.permute.xlu0 %4598
  %v4601 = vmul.f32 %v4559, %v4599
  %v4602 = vmul.f32 %v4563, %v4599
  %v4603 = vmul.f32 %v4567, %v4599
  %v4604 = vmul.f32 %v4571, %v4599
  %v4605 = vmul.f32 %v4575, %v4599
  %v4606 = vmul.f32 %v4579, %v4599
  %v4607 = vmul.f32 %v4583, %v4599
  %v4608 = vmul.f32 %v4587, %v4599
  %v4609 = vadd.f32 %v4542, %v4601
  %v4610 = vadd.f32 %v4543, %v4602
  %v4611 = vadd.f32 %v4544, %v4603
  %v4612 = vadd.f32 %v4545, %v4604
  %v4613 = vadd.f32 %v4546, %v4605
  %v4614 = vadd.f32 %v4547, %v4606
  %v4615 = vadd.f32 %v4548, %v4607
  %v4616 = vadd.f32 %v4549, %v4608
  %v4617 = vld [vmem:[%s1217] ss:$4 sm:$0xf]
  %v4618 = vld [vmem:[%s1219] ss:$4 sm:$0xf]
  %s4619 = scalar_lea.vmem %s3, 152
  %v4620 = vld [vmem:[%s4619] sm:$0xf]
  %v4623 = vlaneseq
  %v4624 = vshrl.u32 %v4623, 7
  %v4625 = vsub.s32 0, %v4624
  %v4626 = vrot.slane %v4617, %v4625
  %v4627 = vlaneseq
  %v4628 = vshrl.u32 %v4627, 7
  %v4629 = vsub.s32 1, %v4628
  %v4630 = vrot.slane %v4617, %v4629
  %v4631 = vlaneseq
  %v4632 = vshrl.u32 %v4631, 7
  %v4633 = vsub.s32 2, %v4632
  %v4634 = vrot.slane %v4617, %v4633
  %v4635 = vlaneseq
  %v4636 = vshrl.u32 %v4635, 7
  %v4637 = vsub.s32 3, %v4636
  %v4638 = vrot.slane %v4617, %v4637
  %v4639 = vlaneseq
  %v4640 = vshrl.u32 %v4639, 7
  %v4641 = vsub.s32 0, %v4640
  %v4642 = vrot.slane %v4618, %v4641
  %v4643 = vlaneseq
  %v4644 = vshrl.u32 %v4643, 7
  %v4645 = vsub.s32 1, %v4644
  %v4646 = vrot.slane %v4618, %v4645
  %v4647 = vlaneseq
  %v4648 = vshrl.u32 %v4647, 7
  %v4649 = vsub.s32 2, %v4648
  %v4650 = vrot.slane %v4618, %v4649
  %v4651 = vlaneseq
  %v4652 = vshrl.u32 %v4651, 7
  %v4653 = vsub.s32 3, %v4652
  %v4654 = vrot.slane %v4618, %v4653
  %4664 = vset.pattern.permute.xlu0 0
  %4665 = vperm.xlu0 %4664, %v4620
  %v4666 = vpop.permute.xlu0 %4665
  %v4668 = vmul.f32 %v4626, %v4666
  %v4669 = vmul.f32 %v4630, %v4666
  %v4670 = vmul.f32 %v4634, %v4666
  %v4671 = vmul.f32 %v4638, %v4666
  %v4672 = vmul.f32 %v4642, %v4666
  %v4673 = vmul.f32 %v4646, %v4666
  %v4674 = vmul.f32 %v4650, %v4666
  %v4675 = vmul.f32 %v4654, %v4666
  %v4676 = vadd.f32 %v4609, %v4668
  %v4677 = vadd.f32 %v4610, %v4669
  %v4678 = vadd.f32 %v4611, %v4670
  %v4679 = vadd.f32 %v4612, %v4671
  %v4680 = vadd.f32 %v4613, %v4672
  %v4681 = vadd.f32 %v4614, %v4673
  %v4682 = vadd.f32 %v4615, %v4674
  %v4683 = vadd.f32 %v4616, %v4675
  %v4684 = vld [vmem:[%s1286] ss:$4 sm:$0xf]
  %v4685 = vld [vmem:[%s1288] ss:$4 sm:$0xf]
  %s4686 = scalar_lea.vmem %s3, 156
  %v4687 = vld [vmem:[%s4686] sm:$0xf]
  %v4690 = vlaneseq
  %v4691 = vshrl.u32 %v4690, 7
  %v4692 = vsub.s32 0, %v4691
  %v4693 = vrot.slane %v4684, %v4692
  %v4694 = vlaneseq
  %v4695 = vshrl.u32 %v4694, 7
  %v4696 = vsub.s32 1, %v4695
  %v4697 = vrot.slane %v4684, %v4696
  %v4698 = vlaneseq
  %v4699 = vshrl.u32 %v4698, 7
  %v4700 = vsub.s32 2, %v4699
  %v4701 = vrot.slane %v4684, %v4700
  %v4702 = vlaneseq
  %v4703 = vshrl.u32 %v4702, 7
  %v4704 = vsub.s32 3, %v4703
  %v4705 = vrot.slane %v4684, %v4704
  %v4706 = vlaneseq
  %v4707 = vshrl.u32 %v4706, 7
  %v4708 = vsub.s32 0, %v4707
  %v4709 = vrot.slane %v4685, %v4708
  %v4710 = vlaneseq
  %v4711 = vshrl.u32 %v4710, 7
  %v4712 = vsub.s32 1, %v4711
  %v4713 = vrot.slane %v4685, %v4712
  %v4714 = vlaneseq
  %v4715 = vshrl.u32 %v4714, 7
  %v4716 = vsub.s32 2, %v4715
  %v4717 = vrot.slane %v4685, %v4716
  %v4718 = vlaneseq
  %v4719 = vshrl.u32 %v4718, 7
  %v4720 = vsub.s32 3, %v4719
  %v4721 = vrot.slane %v4685, %v4720
  %4731 = vset.pattern.permute.xlu0 0
  %4732 = vperm.xlu0 %4731, %v4687
  %v4733 = vpop.permute.xlu0 %4732
  %v4735 = vmul.f32 %v4693, %v4733
  %v4736 = vmul.f32 %v4697, %v4733
  %v4737 = vmul.f32 %v4701, %v4733
  %v4738 = vmul.f32 %v4705, %v4733
  %v4739 = vmul.f32 %v4709, %v4733
  %v4740 = vmul.f32 %v4713, %v4733
  %v4741 = vmul.f32 %v4717, %v4733
  %v4742 = vmul.f32 %v4721, %v4733
  %v4743 = vadd.f32 %v4676, %v4735
  %v4744 = vadd.f32 %v4677, %v4736
  %v4745 = vadd.f32 %v4678, %v4737
  %v4746 = vadd.f32 %v4679, %v4738
  %v4747 = vadd.f32 %v4680, %v4739
  %v4748 = vadd.f32 %v4681, %v4740
  %v4749 = vadd.f32 %v4682, %v4741
  %v4750 = vadd.f32 %v4683, %v4742
  %s4751 = scalar_lea.vmem %s3, 160
  %v4752 = vld [vmem:[%s4751] sm:$0xf]
  %4754 = vset.pattern.permute.xlu0 0
  %4755 = vperm.xlu0 %4754, %v4752
  %v4756 = vpop.permute.xlu0 %4755
  %v4758 = vmul.f32 %v4492, %v4756
  %v4759 = vmul.f32 %v4496, %v4756
  %v4760 = vmul.f32 %v4500, %v4756
  %v4761 = vmul.f32 %v4504, %v4756
  %v4762 = vmul.f32 %v4508, %v4756
  %v4763 = vmul.f32 %v4512, %v4756
  %v4764 = vmul.f32 %v4516, %v4756
  %v4765 = vmul.f32 %v4520, %v4756
  %4774 = vrot.lane.b32.xlu0 %v4758, 126
  %v4775 = vpop.permute.xlu0 %4774
  %4776 = vrot.lane.b32.xlu0 %v4759, 126
  %v4777 = vpop.permute.xlu0 %4776
  %4778 = vrot.lane.b32.xlu0 %v4760, 126
  %v4779 = vpop.permute.xlu0 %4778
  %4780 = vrot.lane.b32.xlu0 %v4761, 126
  %v4781 = vpop.permute.xlu0 %4780
  %4782 = vrot.lane.b32.xlu0 %v4762, 126
  %v4783 = vpop.permute.xlu0 %4782
  %4784 = vrot.lane.b32.xlu0 %v4763, 126
  %v4785 = vpop.permute.xlu0 %4784
  %4786 = vrot.lane.b32.xlu0 %v4764, 126
  %v4787 = vpop.permute.xlu0 %4786
  %4788 = vrot.lane.b32.xlu0 %v4765, 126
  %v4789 = vpop.permute.xlu0 %4788
  %v4790 = vsel %vm229, %v4775, %v4777
  %v4791 = vsel %vm229, %v4777, %v4779
  %v4792 = vsel %vm229, %v4779, %v4781
  %v4793 = vsel %vm229, %v4783, %v4785
  %v4794 = vsel %vm229, %v4785, %v4787
  %v4795 = vsel %vm229, %v4787, %v4789
  %v4804 = vadd.f32 %v4743, %v4790
  %v4805 = vadd.f32 %v4744, %v4791
  %v4806 = vadd.f32 %v4745, %v4792
  %v4807 = vadd.f32 %v4746, %v4781
  %v4808 = vadd.f32 %v4747, %v4793
  %v4809 = vadd.f32 %v4748, %v4794
  %v4810 = vadd.f32 %v4749, %v4795
  %v4811 = vadd.f32 %v4750, %v4789
  %s4812 = scalar_lea.vmem %s3, 164
  %v4813 = vld [vmem:[%s4812] sm:$0xf]
  %4815 = vset.pattern.permute.xlu0 0
  %4816 = vperm.xlu0 %4815, %v4813
  %v4817 = vpop.permute.xlu0 %4816
  %v4819 = vmul.f32 %v4559, %v4817
  %v4820 = vmul.f32 %v4563, %v4817
  %v4821 = vmul.f32 %v4567, %v4817
  %v4822 = vmul.f32 %v4571, %v4817
  %v4823 = vmul.f32 %v4575, %v4817
  %v4824 = vmul.f32 %v4579, %v4817
  %v4825 = vmul.f32 %v4583, %v4817
  %v4826 = vmul.f32 %v4587, %v4817
  %4835 = vrot.lane.b32.xlu0 %v4819, 126
  %v4836 = vpop.permute.xlu0 %4835
  %4837 = vrot.lane.b32.xlu0 %v4820, 126
  %v4838 = vpop.permute.xlu0 %4837
  %4839 = vrot.lane.b32.xlu0 %v4821, 126
  %v4840 = vpop.permute.xlu0 %4839
  %4841 = vrot.lane.b32.xlu0 %v4822, 126
  %v4842 = vpop.permute.xlu0 %4841
  %4843 = vrot.lane.b32.xlu0 %v4823, 126
  %v4844 = vpop.permute.xlu0 %4843
  %4845 = vrot.lane.b32.xlu0 %v4824, 126
  %v4846 = vpop.permute.xlu0 %4845
  %4847 = vrot.lane.b32.xlu0 %v4825, 126
  %v4848 = vpop.permute.xlu0 %4847
  %4849 = vrot.lane.b32.xlu0 %v4826, 126
  %v4850 = vpop.permute.xlu0 %4849
  %v4851 = vsel %vm229, %v4836, %v4838
  %v4852 = vsel %vm229, %v4838, %v4840
  %v4853 = vsel %vm229, %v4840, %v4842
  %v4854 = vsel %vm229, %v4844, %v4846
  %v4855 = vsel %vm229, %v4846, %v4848
  %v4856 = vsel %vm229, %v4848, %v4850
  %v4865 = vadd.f32 %v4804, %v4851
  %v4866 = vadd.f32 %v4805, %v4852
  %v4867 = vadd.f32 %v4806, %v4853
  %v4868 = vadd.f32 %v4807, %v4842
  %v4869 = vadd.f32 %v4808, %v4854
  %v4870 = vadd.f32 %v4809, %v4855
  %v4871 = vadd.f32 %v4810, %v4856
  %v4872 = vadd.f32 %v4811, %v4850
  %s4873 = scalar_lea.vmem %s3, 168
  %v4874 = vld [vmem:[%s4873] sm:$0xf]
  %4876 = vset.pattern.permute.xlu0 0
  %4877 = vperm.xlu0 %4876, %v4874
  %v4878 = vpop.permute.xlu0 %4877
  %v4880 = vmul.f32 %v4626, %v4878
  %v4881 = vmul.f32 %v4630, %v4878
  %v4882 = vmul.f32 %v4634, %v4878
  %v4883 = vmul.f32 %v4638, %v4878
  %v4884 = vmul.f32 %v4642, %v4878
  %v4885 = vmul.f32 %v4646, %v4878
  %v4886 = vmul.f32 %v4650, %v4878
  %v4887 = vmul.f32 %v4654, %v4878
  %4896 = vrot.lane.b32.xlu0 %v4880, 126
  %v4897 = vpop.permute.xlu0 %4896
  %4898 = vrot.lane.b32.xlu0 %v4881, 126
  %v4899 = vpop.permute.xlu0 %4898
  %4900 = vrot.lane.b32.xlu0 %v4882, 126
  %v4901 = vpop.permute.xlu0 %4900
  %4902 = vrot.lane.b32.xlu0 %v4883, 126
  %v4903 = vpop.permute.xlu0 %4902
  %4904 = vrot.lane.b32.xlu0 %v4884, 126
  %v4905 = vpop.permute.xlu0 %4904
  %4906 = vrot.lane.b32.xlu0 %v4885, 126
  %v4907 = vpop.permute.xlu0 %4906
  %4908 = vrot.lane.b32.xlu0 %v4886, 126
  %v4909 = vpop.permute.xlu0 %4908
  %4910 = vrot.lane.b32.xlu0 %v4887, 126
  %v4911 = vpop.permute.xlu0 %4910
  %v4912 = vsel %vm229, %v4897, %v4899
  %v4913 = vsel %vm229, %v4899, %v4901
  %v4914 = vsel %vm229, %v4901, %v4903
  %v4915 = vsel %vm229, %v4905, %v4907
  %v4916 = vsel %vm229, %v4907, %v4909
  %v4917 = vsel %vm229, %v4909, %v4911
  %v4926 = vadd.f32 %v4865, %v4912
  %v4927 = vadd.f32 %v4866, %v4913
  %v4928 = vadd.f32 %v4867, %v4914
  %v4929 = vadd.f32 %v4868, %v4903
  %v4930 = vadd.f32 %v4869, %v4915
  %v4931 = vadd.f32 %v4870, %v4916
  %v4932 = vadd.f32 %v4871, %v4917
  %v4933 = vadd.f32 %v4872, %v4911
  %s4934 = scalar_lea.vmem %s3, 172
  %v4935 = vld [vmem:[%s4934] sm:$0xf]
  %4937 = vset.pattern.permute.xlu0 0
  %4938 = vperm.xlu0 %4937, %v4935
  %v4939 = vpop.permute.xlu0 %4938
  %v4941 = vmul.f32 %v4693, %v4939
  %v4942 = vmul.f32 %v4697, %v4939
  %v4943 = vmul.f32 %v4701, %v4939
  %v4944 = vmul.f32 %v4705, %v4939
  %v4945 = vmul.f32 %v4709, %v4939
  %v4946 = vmul.f32 %v4713, %v4939
  %v4947 = vmul.f32 %v4717, %v4939
  %v4948 = vmul.f32 %v4721, %v4939
  %4957 = vrot.lane.b32.xlu0 %v4941, 126
  %v4958 = vpop.permute.xlu0 %4957
  %4959 = vrot.lane.b32.xlu0 %v4942, 126
  %v4960 = vpop.permute.xlu0 %4959
  %4961 = vrot.lane.b32.xlu0 %v4943, 126
  %v4962 = vpop.permute.xlu0 %4961
  %4963 = vrot.lane.b32.xlu0 %v4944, 126
  %v4964 = vpop.permute.xlu0 %4963
  %4965 = vrot.lane.b32.xlu0 %v4945, 126
  %v4966 = vpop.permute.xlu0 %4965
  %4967 = vrot.lane.b32.xlu0 %v4946, 126
  %v4968 = vpop.permute.xlu0 %4967
  %4969 = vrot.lane.b32.xlu0 %v4947, 126
  %v4970 = vpop.permute.xlu0 %4969
  %4971 = vrot.lane.b32.xlu0 %v4948, 126
  %v4972 = vpop.permute.xlu0 %4971
  %v4973 = vsel %vm229, %v4958, %v4960
  %v4974 = vsel %vm229, %v4960, %v4962
  %v4975 = vsel %vm229, %v4962, %v4964
  %v4976 = vsel %vm229, %v4966, %v4968
  %v4977 = vsel %vm229, %v4968, %v4970
  %v4978 = vsel %vm229, %v4970, %v4972
  %v4987 = vadd.f32 %v4926, %v4973
  %v4988 = vadd.f32 %v4927, %v4974
  %v4989 = vadd.f32 %v4928, %v4975
  %v4990 = vadd.f32 %v4929, %v4964
  %v4991 = vadd.f32 %v4930, %v4976
  %v4992 = vadd.f32 %v4931, %v4977
  %v4993 = vadd.f32 %v4932, %v4978
  %v4994 = vadd.f32 %v4933, %v4972
  %s4995 = scalar_lea.vmem %s3, 176
  %v4996 = vld [vmem:[%s4995] sm:$0xf]
  %4998 = vset.pattern.permute.xlu0 0
  %4999 = vperm.xlu0 %4998, %v4996
  %v5000 = vpop.permute.xlu0 %4999
  %v5002 = vmul.f32 %v4492, %v5000
  %v5003 = vmul.f32 %v4496, %v5000
  %v5004 = vmul.f32 %v4500, %v5000
  %v5005 = vmul.f32 %v4504, %v5000
  %v5006 = vmul.f32 %v4508, %v5000
  %v5007 = vmul.f32 %v4512, %v5000
  %v5008 = vmul.f32 %v4516, %v5000
  %v5009 = vmul.f32 %v4520, %v5000
  %5018 = vrot.lane.b32.xlu0 %v5002, 124
  %v5019 = vpop.permute.xlu0 %5018
  %5020 = vrot.lane.b32.xlu0 %v5003, 124
  %v5021 = vpop.permute.xlu0 %5020
  %5022 = vrot.lane.b32.xlu0 %v5004, 124
  %v5023 = vpop.permute.xlu0 %5022
  %5024 = vrot.lane.b32.xlu0 %v5005, 124
  %v5025 = vpop.permute.xlu0 %5024
  %5026 = vrot.lane.b32.xlu0 %v5006, 124
  %v5027 = vpop.permute.xlu0 %5026
  %5028 = vrot.lane.b32.xlu0 %v5007, 124
  %v5029 = vpop.permute.xlu0 %5028
  %5030 = vrot.lane.b32.xlu0 %v5008, 124
  %v5031 = vpop.permute.xlu0 %5030
  %5032 = vrot.lane.b32.xlu0 %v5009, 124
  %v5033 = vpop.permute.xlu0 %5032
  %v5034 = vsel %vm1638, %v5019, %v5021
  %v5035 = vsel %vm1638, %v5021, %v5023
  %v5036 = vsel %vm1638, %v5023, %v5025
  %v5037 = vsel %vm1638, %v5027, %v5029
  %v5038 = vsel %vm1638, %v5029, %v5031
  %v5039 = vsel %vm1638, %v5031, %v5033
  %v5048 = vadd.f32 %v4987, %v5034
  %v5049 = vadd.f32 %v4988, %v5035
  %v5050 = vadd.f32 %v4989, %v5036
  %v5051 = vadd.f32 %v4990, %v5025
  %v5052 = vadd.f32 %v4991, %v5037
  %v5053 = vadd.f32 %v4992, %v5038
  %v5054 = vadd.f32 %v4993, %v5039
  %v5055 = vadd.f32 %v4994, %v5033
  %s5056 = scalar_lea.vmem %s3, 180
  %v5057 = vld [vmem:[%s5056] sm:$0xf]
  %5059 = vset.pattern.permute.xlu0 0
  %5060 = vperm.xlu0 %5059, %v5057
  %v5061 = vpop.permute.xlu0 %5060
  %v5063 = vmul.f32 %v4559, %v5061
  %v5064 = vmul.f32 %v4563, %v5061
  %v5065 = vmul.f32 %v4567, %v5061
  %v5066 = vmul.f32 %v4571, %v5061
  %v5067 = vmul.f32 %v4575, %v5061
  %v5068 = vmul.f32 %v4579, %v5061
  %v5069 = vmul.f32 %v4583, %v5061
  %v5070 = vmul.f32 %v4587, %v5061
  %5079 = vrot.lane.b32.xlu0 %v5063, 124
  %v5080 = vpop.permute.xlu0 %5079
  %5081 = vrot.lane.b32.xlu0 %v5064, 124
  %v5082 = vpop.permute.xlu0 %5081
  %5083 = vrot.lane.b32.xlu0 %v5065, 124
  %v5084 = vpop.permute.xlu0 %5083
  %5085 = vrot.lane.b32.xlu0 %v5066, 124
  %v5086 = vpop.permute.xlu0 %5085
  %5087 = vrot.lane.b32.xlu0 %v5067, 124
  %v5088 = vpop.permute.xlu0 %5087
  %5089 = vrot.lane.b32.xlu0 %v5068, 124
  %v5090 = vpop.permute.xlu0 %5089
  %5091 = vrot.lane.b32.xlu0 %v5069, 124
  %v5092 = vpop.permute.xlu0 %5091
  %5093 = vrot.lane.b32.xlu0 %v5070, 124
  %v5094 = vpop.permute.xlu0 %5093
  %v5095 = vsel %vm1638, %v5080, %v5082
  %v5096 = vsel %vm1638, %v5082, %v5084
  %v5097 = vsel %vm1638, %v5084, %v5086
  %v5098 = vsel %vm1638, %v5088, %v5090
  %v5099 = vsel %vm1638, %v5090, %v5092
  %v5100 = vsel %vm1638, %v5092, %v5094
  %v5109 = vadd.f32 %v5048, %v5095
  %v5110 = vadd.f32 %v5049, %v5096
  %v5111 = vadd.f32 %v5050, %v5097
  %v5112 = vadd.f32 %v5051, %v5086
  %v5113 = vadd.f32 %v5052, %v5098
  %v5114 = vadd.f32 %v5053, %v5099
  %v5115 = vadd.f32 %v5054, %v5100
  %v5116 = vadd.f32 %v5055, %v5094
  %s5117 = scalar_lea.vmem %s3, 184
  %v5118 = vld [vmem:[%s5117] sm:$0xf]
  %5120 = vset.pattern.permute.xlu0 0
  %5121 = vperm.xlu0 %5120, %v5118
  %v5122 = vpop.permute.xlu0 %5121
  %v5124 = vmul.f32 %v4626, %v5122
  %v5125 = vmul.f32 %v4630, %v5122
  %v5126 = vmul.f32 %v4634, %v5122
  %v5127 = vmul.f32 %v4638, %v5122
  %v5128 = vmul.f32 %v4642, %v5122
  %v5129 = vmul.f32 %v4646, %v5122
  %v5130 = vmul.f32 %v4650, %v5122
  %v5131 = vmul.f32 %v4654, %v5122
  %5140 = vrot.lane.b32.xlu0 %v5124, 124
  %v5141 = vpop.permute.xlu0 %5140
  %5142 = vrot.lane.b32.xlu0 %v5125, 124
  %v5143 = vpop.permute.xlu0 %5142
  %5144 = vrot.lane.b32.xlu0 %v5126, 124
  %v5145 = vpop.permute.xlu0 %5144
  %5146 = vrot.lane.b32.xlu0 %v5127, 124
  %v5147 = vpop.permute.xlu0 %5146
  %5148 = vrot.lane.b32.xlu0 %v5128, 124
  %v5149 = vpop.permute.xlu0 %5148
  %5150 = vrot.lane.b32.xlu0 %v5129, 124
  %v5151 = vpop.permute.xlu0 %5150
  %5152 = vrot.lane.b32.xlu0 %v5130, 124
  %v5153 = vpop.permute.xlu0 %5152
  %5154 = vrot.lane.b32.xlu0 %v5131, 124
  %v5155 = vpop.permute.xlu0 %5154
  %v5156 = vsel %vm1638, %v5141, %v5143
  %v5157 = vsel %vm1638, %v5143, %v5145
  %v5158 = vsel %vm1638, %v5145, %v5147
  %v5159 = vsel %vm1638, %v5149, %v5151
  %v5160 = vsel %vm1638, %v5151, %v5153
  %v5161 = vsel %vm1638, %v5153, %v5155
  %v5170 = vadd.f32 %v5109, %v5156
  %v5171 = vadd.f32 %v5110, %v5157
  %v5172 = vadd.f32 %v5111, %v5158
  %v5173 = vadd.f32 %v5112, %v5147
  %v5174 = vadd.f32 %v5113, %v5159
  %v5175 = vadd.f32 %v5114, %v5160
  %v5176 = vadd.f32 %v5115, %v5161
  %v5177 = vadd.f32 %v5116, %v5155
  %s5178 = scalar_lea.vmem %s3, 188
  %v5179 = vld [vmem:[%s5178] sm:$0xf]
  %5181 = vset.pattern.permute.xlu0 0
  %5182 = vperm.xlu0 %5181, %v5179
  %v5183 = vpop.permute.xlu0 %5182
  %v5185 = vmul.f32 %v4693, %v5183
  %v5186 = vmul.f32 %v4697, %v5183
  %v5187 = vmul.f32 %v4701, %v5183
  %v5188 = vmul.f32 %v4705, %v5183
  %v5189 = vmul.f32 %v4709, %v5183
  %v5190 = vmul.f32 %v4713, %v5183
  %v5191 = vmul.f32 %v4717, %v5183
  %v5192 = vmul.f32 %v4721, %v5183
  %5201 = vrot.lane.b32.xlu0 %v5185, 124
  %v5202 = vpop.permute.xlu0 %5201
  %5203 = vrot.lane.b32.xlu0 %v5186, 124
  %v5204 = vpop.permute.xlu0 %5203
  %5205 = vrot.lane.b32.xlu0 %v5187, 124
  %v5206 = vpop.permute.xlu0 %5205
  %5207 = vrot.lane.b32.xlu0 %v5188, 124
  %v5208 = vpop.permute.xlu0 %5207
  %5209 = vrot.lane.b32.xlu0 %v5189, 124
  %v5210 = vpop.permute.xlu0 %5209
  %5211 = vrot.lane.b32.xlu0 %v5190, 124
  %v5212 = vpop.permute.xlu0 %5211
  %5213 = vrot.lane.b32.xlu0 %v5191, 124
  %v5214 = vpop.permute.xlu0 %5213
  %5215 = vrot.lane.b32.xlu0 %v5192, 124
  %v5216 = vpop.permute.xlu0 %5215
  %v5217 = vsel %vm1638, %v5202, %v5204
  %v5218 = vsel %vm1638, %v5204, %v5206
  %v5219 = vsel %vm1638, %v5206, %v5208
  %v5220 = vsel %vm1638, %v5210, %v5212
  %v5221 = vsel %vm1638, %v5212, %v5214
  %v5222 = vsel %vm1638, %v5214, %v5216
  %v5231 = vadd.f32 %v5170, %v5217
  %v5232 = vadd.f32 %v5171, %v5218
  %v5233 = vadd.f32 %v5172, %v5219
  %v5234 = vadd.f32 %v5173, %v5208
  %v5235 = vadd.f32 %v5174, %v5220
  %v5236 = vadd.f32 %v5175, %v5221
  %v5237 = vadd.f32 %v5176, %v5222
  %v5238 = vadd.f32 %v5177, %v5216
  %s5239 = scalar_lea.vmem %s3, 192
  %v5240 = vld [vmem:[%s5239] sm:$0xf]
  %5242 = vset.pattern.permute.xlu0 0
  %5243 = vperm.xlu0 %5242, %v5240
  %v5244 = vpop.permute.xlu0 %5243
  %v5246 = vmul.f32 %v4492, %v5244
  %v5247 = vmul.f32 %v4496, %v5244
  %v5248 = vmul.f32 %v4500, %v5244
  %v5249 = vmul.f32 %v4504, %v5244
  %v5250 = vmul.f32 %v4508, %v5244
  %v5251 = vmul.f32 %v4512, %v5244
  %v5252 = vmul.f32 %v4516, %v5244
  %v5253 = vmul.f32 %v4520, %v5244
  %5262 = vrot.lane.b32.xlu0 %v5246, 88
  %v5263 = vpop.permute.xlu0 %5262
  %5264 = vrot.lane.b32.xlu0 %v5247, 88
  %v5265 = vpop.permute.xlu0 %5264
  %5266 = vrot.lane.b32.xlu0 %v5248, 88
  %v5267 = vpop.permute.xlu0 %5266
  %5268 = vrot.lane.b32.xlu0 %v5249, 88
  %v5269 = vpop.permute.xlu0 %5268
  %5270 = vrot.lane.b32.xlu0 %v5250, 88
  %v5271 = vpop.permute.xlu0 %5270
  %5272 = vrot.lane.b32.xlu0 %v5251, 88
  %v5273 = vpop.permute.xlu0 %5272
  %5274 = vrot.lane.b32.xlu0 %v5252, 88
  %v5275 = vpop.permute.xlu0 %5274
  %5276 = vrot.lane.b32.xlu0 %v5253, 88
  %v5277 = vpop.permute.xlu0 %5276
  %v5278 = vsel %vm653, %v5263, %v5265
  %v5279 = vsel %vm653, %v5265, %v5267
  %v5280 = vsel %vm653, %v5267, %v5269
  %v5281 = vsel %vm653, %v5271, %v5273
  %v5282 = vsel %vm653, %v5273, %v5275
  %v5283 = vsel %vm653, %v5275, %v5277
  %v5292 = vadd.f32 %v5231, %v5278
  %v5293 = vadd.f32 %v5232, %v5279
  %v5294 = vadd.f32 %v5233, %v5280
  %v5295 = vadd.f32 %v5234, %v5269
  %v5296 = vadd.f32 %v5235, %v5281
  %v5297 = vadd.f32 %v5236, %v5282
  %v5298 = vadd.f32 %v5237, %v5283
  %v5299 = vadd.f32 %v5238, %v5277
  %s5300 = scalar_lea.vmem %s3, 196
  %v5301 = vld [vmem:[%s5300] sm:$0xf]
  %5303 = vset.pattern.permute.xlu0 0
  %5304 = vperm.xlu0 %5303, %v5301
  %v5305 = vpop.permute.xlu0 %5304
  %v5307 = vmul.f32 %v4559, %v5305
  %v5308 = vmul.f32 %v4563, %v5305
  %v5309 = vmul.f32 %v4567, %v5305
  %v5310 = vmul.f32 %v4571, %v5305
  %v5311 = vmul.f32 %v4575, %v5305
  %v5312 = vmul.f32 %v4579, %v5305
  %v5313 = vmul.f32 %v4583, %v5305
  %v5314 = vmul.f32 %v4587, %v5305
  %5323 = vrot.lane.b32.xlu0 %v5307, 88
  %v5324 = vpop.permute.xlu0 %5323
  %5325 = vrot.lane.b32.xlu0 %v5308, 88
  %v5326 = vpop.permute.xlu0 %5325
  %5327 = vrot.lane.b32.xlu0 %v5309, 88
  %v5328 = vpop.permute.xlu0 %5327
  %5329 = vrot.lane.b32.xlu0 %v5310, 88
  %v5330 = vpop.permute.xlu0 %5329
  %5331 = vrot.lane.b32.xlu0 %v5311, 88
  %v5332 = vpop.permute.xlu0 %5331
  %5333 = vrot.lane.b32.xlu0 %v5312, 88
  %v5334 = vpop.permute.xlu0 %5333
  %5335 = vrot.lane.b32.xlu0 %v5313, 88
  %v5336 = vpop.permute.xlu0 %5335
  %5337 = vrot.lane.b32.xlu0 %v5314, 88
  %v5338 = vpop.permute.xlu0 %5337
  %v5339 = vsel %vm653, %v5324, %v5326
  %v5340 = vsel %vm653, %v5326, %v5328
  %v5341 = vsel %vm653, %v5328, %v5330
  %v5342 = vsel %vm653, %v5332, %v5334
  %v5343 = vsel %vm653, %v5334, %v5336
  %v5344 = vsel %vm653, %v5336, %v5338
  %v5353 = vadd.f32 %v5292, %v5339
  %v5354 = vadd.f32 %v5293, %v5340
  %v5355 = vadd.f32 %v5294, %v5341
  %v5356 = vadd.f32 %v5295, %v5330
  %v5357 = vadd.f32 %v5296, %v5342
  %v5358 = vadd.f32 %v5297, %v5343
  %v5359 = vadd.f32 %v5298, %v5344
  %v5360 = vadd.f32 %v5299, %v5338
  %s5361 = scalar_lea.vmem %s3, 200
  %v5362 = vld [vmem:[%s5361] sm:$0xf]
  %5364 = vset.pattern.permute.xlu0 0
  %5365 = vperm.xlu0 %5364, %v5362
  %v5366 = vpop.permute.xlu0 %5365
  %v5368 = vmul.f32 %v4626, %v5366
  %v5369 = vmul.f32 %v4630, %v5366
  %v5370 = vmul.f32 %v4634, %v5366
  %v5371 = vmul.f32 %v4638, %v5366
  %v5372 = vmul.f32 %v4642, %v5366
  %v5373 = vmul.f32 %v4646, %v5366
  %v5374 = vmul.f32 %v4650, %v5366
  %v5375 = vmul.f32 %v4654, %v5366
  %5384 = vrot.lane.b32.xlu0 %v5368, 88
  %v5385 = vpop.permute.xlu0 %5384
  %5386 = vrot.lane.b32.xlu0 %v5369, 88
  %v5387 = vpop.permute.xlu0 %5386
  %5388 = vrot.lane.b32.xlu0 %v5370, 88
  %v5389 = vpop.permute.xlu0 %5388
  %5390 = vrot.lane.b32.xlu0 %v5371, 88
  %v5391 = vpop.permute.xlu0 %5390
  %5392 = vrot.lane.b32.xlu0 %v5372, 88
  %v5393 = vpop.permute.xlu0 %5392
  %5394 = vrot.lane.b32.xlu0 %v5373, 88
  %v5395 = vpop.permute.xlu0 %5394
  %5396 = vrot.lane.b32.xlu0 %v5374, 88
  %v5397 = vpop.permute.xlu0 %5396
  %5398 = vrot.lane.b32.xlu0 %v5375, 88
  %v5399 = vpop.permute.xlu0 %5398
  %v5400 = vsel %vm653, %v5385, %v5387
  %v5401 = vsel %vm653, %v5387, %v5389
  %v5402 = vsel %vm653, %v5389, %v5391
  %v5403 = vsel %vm653, %v5393, %v5395
  %v5404 = vsel %vm653, %v5395, %v5397
  %v5405 = vsel %vm653, %v5397, %v5399
  %v5414 = vadd.f32 %v5353, %v5400
  %v5415 = vadd.f32 %v5354, %v5401
  %v5416 = vadd.f32 %v5355, %v5402
  %v5417 = vadd.f32 %v5356, %v5391
  %v5418 = vadd.f32 %v5357, %v5403
  %v5419 = vadd.f32 %v5358, %v5404
  %v5420 = vadd.f32 %v5359, %v5405
  %v5421 = vadd.f32 %v5360, %v5399
  %s5422 = scalar_lea.vmem %s3, 204
  %v5423 = vld [vmem:[%s5422] sm:$0xf]
  %5425 = vset.pattern.permute.xlu0 0
  %5426 = vperm.xlu0 %5425, %v5423
  %v5427 = vpop.permute.xlu0 %5426
  %v5429 = vmul.f32 %v4693, %v5427
  %v5430 = vmul.f32 %v4697, %v5427
  %v5431 = vmul.f32 %v4701, %v5427
  %v5432 = vmul.f32 %v4705, %v5427
  %v5433 = vmul.f32 %v4709, %v5427
  %v5434 = vmul.f32 %v4713, %v5427
  %v5435 = vmul.f32 %v4717, %v5427
  %v5436 = vmul.f32 %v4721, %v5427
  %5445 = vrot.lane.b32.xlu0 %v5429, 88
  %v5446 = vpop.permute.xlu0 %5445
  %5447 = vrot.lane.b32.xlu0 %v5430, 88
  %v5448 = vpop.permute.xlu0 %5447
  %5449 = vrot.lane.b32.xlu0 %v5431, 88
  %v5450 = vpop.permute.xlu0 %5449
  %5451 = vrot.lane.b32.xlu0 %v5432, 88
  %v5452 = vpop.permute.xlu0 %5451
  %5453 = vrot.lane.b32.xlu0 %v5433, 88
  %v5454 = vpop.permute.xlu0 %5453
  %5455 = vrot.lane.b32.xlu0 %v5434, 88
  %v5456 = vpop.permute.xlu0 %5455
  %5457 = vrot.lane.b32.xlu0 %v5435, 88
  %v5458 = vpop.permute.xlu0 %5457
  %5459 = vrot.lane.b32.xlu0 %v5436, 88
  %v5460 = vpop.permute.xlu0 %5459
  %v5461 = vsel %vm653, %v5446, %v5448
  %v5462 = vsel %vm653, %v5448, %v5450
  %v5463 = vsel %vm653, %v5450, %v5452
  %v5464 = vsel %vm653, %v5454, %v5456
  %v5465 = vsel %vm653, %v5456, %v5458
  %v5466 = vsel %vm653, %v5458, %v5460
  %v5475 = vadd.f32 %v5414, %v5461
  %v5476 = vadd.f32 %v5415, %v5462
  %v5477 = vadd.f32 %v5416, %v5463
  %v5478 = vadd.f32 %v5417, %v5452
  %v5479 = vadd.f32 %v5418, %v5464
  %v5480 = vadd.f32 %v5419, %v5465
  %v5481 = vadd.f32 %v5420, %v5466
  %v5482 = vadd.f32 %v5421, %v5460
  %s5483 = scalar_lea.vmem %s3, 208
  %v5484 = vld [vmem:[%s5483] sm:$0xf]
  %5486 = vset.pattern.permute.xlu0 0
  %5487 = vperm.xlu0 %5486, %v5484
  %v5488 = vpop.permute.xlu0 %5487
  %v5490 = vmul.f32 %v4492, %v5488
  %v5491 = vmul.f32 %v4496, %v5488
  %v5492 = vmul.f32 %v4500, %v5488
  %v5493 = vmul.f32 %v4504, %v5488
  %v5494 = vmul.f32 %v4508, %v5488
  %v5495 = vmul.f32 %v4512, %v5488
  %v5496 = vmul.f32 %v4516, %v5488
  %v5497 = vmul.f32 %v4520, %v5488
  %5506 = vrot.lane.b32.xlu0 %v5490, 86
  %v5507 = vpop.permute.xlu0 %5506
  %5508 = vrot.lane.b32.xlu0 %v5491, 86
  %v5509 = vpop.permute.xlu0 %5508
  %5510 = vrot.lane.b32.xlu0 %v5492, 86
  %v5511 = vpop.permute.xlu0 %5510
  %5512 = vrot.lane.b32.xlu0 %v5493, 86
  %v5513 = vpop.permute.xlu0 %5512
  %5514 = vrot.lane.b32.xlu0 %v5494, 86
  %v5515 = vpop.permute.xlu0 %5514
  %5516 = vrot.lane.b32.xlu0 %v5495, 86
  %v5517 = vpop.permute.xlu0 %5516
  %5518 = vrot.lane.b32.xlu0 %v5496, 86
  %v5519 = vpop.permute.xlu0 %5518
  %5520 = vrot.lane.b32.xlu0 %v5497, 86
  %v5521 = vpop.permute.xlu0 %5520
  %v5522 = vsel %vm865, %v5507, %v5509
  %v5523 = vsel %vm865, %v5509, %v5511
  %v5524 = vsel %vm865, %v5511, %v5513
  %v5525 = vsel %vm865, %v5515, %v5517
  %v5526 = vsel %vm865, %v5517, %v5519
  %v5527 = vsel %vm865, %v5519, %v5521
  %v5536 = vadd.f32 %v5475, %v5522
  %v5537 = vadd.f32 %v5476, %v5523
  %v5538 = vadd.f32 %v5477, %v5524
  %v5539 = vadd.f32 %v5478, %v5513
  %v5540 = vadd.f32 %v5479, %v5525
  %v5541 = vadd.f32 %v5480, %v5526
  %v5542 = vadd.f32 %v5481, %v5527
  %v5543 = vadd.f32 %v5482, %v5521
  %s5544 = scalar_lea.vmem %s3, 212
  %v5545 = vld [vmem:[%s5544] sm:$0xf]
  %5547 = vset.pattern.permute.xlu0 0
  %5548 = vperm.xlu0 %5547, %v5545
  %v5549 = vpop.permute.xlu0 %5548
  %v5551 = vmul.f32 %v4559, %v5549
  %v5552 = vmul.f32 %v4563, %v5549
  %v5553 = vmul.f32 %v4567, %v5549
  %v5554 = vmul.f32 %v4571, %v5549
  %v5555 = vmul.f32 %v4575, %v5549
  %v5556 = vmul.f32 %v4579, %v5549
  %v5557 = vmul.f32 %v4583, %v5549
  %v5558 = vmul.f32 %v4587, %v5549
  %5567 = vrot.lane.b32.xlu0 %v5551, 86
  %v5568 = vpop.permute.xlu0 %5567
  %5569 = vrot.lane.b32.xlu0 %v5552, 86
  %v5570 = vpop.permute.xlu0 %5569
  %5571 = vrot.lane.b32.xlu0 %v5553, 86
  %v5572 = vpop.permute.xlu0 %5571
  %5573 = vrot.lane.b32.xlu0 %v5554, 86
  %v5574 = vpop.permute.xlu0 %5573
  %5575 = vrot.lane.b32.xlu0 %v5555, 86
  %v5576 = vpop.permute.xlu0 %5575
  %5577 = vrot.lane.b32.xlu0 %v5556, 86
  %v5578 = vpop.permute.xlu0 %5577
  %5579 = vrot.lane.b32.xlu0 %v5557, 86
  %v5580 = vpop.permute.xlu0 %5579
  %5581 = vrot.lane.b32.xlu0 %v5558, 86
  %v5582 = vpop.permute.xlu0 %5581
  %v5583 = vsel %vm865, %v5568, %v5570
  %v5584 = vsel %vm865, %v5570, %v5572
  %v5585 = vsel %vm865, %v5572, %v5574
  %v5586 = vsel %vm865, %v5576, %v5578
  %v5587 = vsel %vm865, %v5578, %v5580
  %v5588 = vsel %vm865, %v5580, %v5582
  %v5597 = vadd.f32 %v5536, %v5583
  %v5598 = vadd.f32 %v5537, %v5584
  %v5599 = vadd.f32 %v5538, %v5585
  %v5600 = vadd.f32 %v5539, %v5574
  %v5601 = vadd.f32 %v5540, %v5586
  %v5602 = vadd.f32 %v5541, %v5587
  %v5603 = vadd.f32 %v5542, %v5588
  %v5604 = vadd.f32 %v5543, %v5582
  %s5605 = scalar_lea.vmem %s3, 216
  %v5606 = vld [vmem:[%s5605] sm:$0xf]
  %5608 = vset.pattern.permute.xlu0 0
  %5609 = vperm.xlu0 %5608, %v5606
  %v5610 = vpop.permute.xlu0 %5609
  %v5612 = vmul.f32 %v4626, %v5610
  %v5613 = vmul.f32 %v4630, %v5610
  %v5614 = vmul.f32 %v4634, %v5610
  %v5615 = vmul.f32 %v4638, %v5610
  %v5616 = vmul.f32 %v4642, %v5610
  %v5617 = vmul.f32 %v4646, %v5610
  %v5618 = vmul.f32 %v4650, %v5610
  %v5619 = vmul.f32 %v4654, %v5610
  %5628 = vrot.lane.b32.xlu0 %v5612, 86
  %v5629 = vpop.permute.xlu0 %5628
  %5630 = vrot.lane.b32.xlu0 %v5613, 86
  %v5631 = vpop.permute.xlu0 %5630
  %5632 = vrot.lane.b32.xlu0 %v5614, 86
  %v5633 = vpop.permute.xlu0 %5632
  %5634 = vrot.lane.b32.xlu0 %v5615, 86
  %v5635 = vpop.permute.xlu0 %5634
  %5636 = vrot.lane.b32.xlu0 %v5616, 86
  %v5637 = vpop.permute.xlu0 %5636
  %5638 = vrot.lane.b32.xlu0 %v5617, 86
  %v5639 = vpop.permute.xlu0 %5638
  %5640 = vrot.lane.b32.xlu0 %v5618, 86
  %v5641 = vpop.permute.xlu0 %5640
  %5642 = vrot.lane.b32.xlu0 %v5619, 86
  %v5643 = vpop.permute.xlu0 %5642
  %v5644 = vsel %vm865, %v5629, %v5631
  %v5645 = vsel %vm865, %v5631, %v5633
  %v5646 = vsel %vm865, %v5633, %v5635
  %v5647 = vsel %vm865, %v5637, %v5639
  %v5648 = vsel %vm865, %v5639, %v5641
  %v5649 = vsel %vm865, %v5641, %v5643
  %v5658 = vadd.f32 %v5597, %v5644
  %v5659 = vadd.f32 %v5598, %v5645
  %v5660 = vadd.f32 %v5599, %v5646
  %v5661 = vadd.f32 %v5600, %v5635
  %v5662 = vadd.f32 %v5601, %v5647
  %v5663 = vadd.f32 %v5602, %v5648
  %v5664 = vadd.f32 %v5603, %v5649
  %v5665 = vadd.f32 %v5604, %v5643
  %s5666 = scalar_lea.vmem %s3, 220
  %v5667 = vld [vmem:[%s5666] sm:$0xf]
  %5669 = vset.pattern.permute.xlu0 0
  %5670 = vperm.xlu0 %5669, %v5667
  %v5671 = vpop.permute.xlu0 %5670
  %v5673 = vmul.f32 %v4693, %v5671
  %v5674 = vmul.f32 %v4697, %v5671
  %v5675 = vmul.f32 %v4701, %v5671
  %v5676 = vmul.f32 %v4705, %v5671
  %v5677 = vmul.f32 %v4709, %v5671
  %v5678 = vmul.f32 %v4713, %v5671
  %v5679 = vmul.f32 %v4717, %v5671
  %v5680 = vmul.f32 %v4721, %v5671
  %5689 = vrot.lane.b32.xlu0 %v5673, 86
  %v5690 = vpop.permute.xlu0 %5689
  %5691 = vrot.lane.b32.xlu0 %v5674, 86
  %v5692 = vpop.permute.xlu0 %5691
  %5693 = vrot.lane.b32.xlu0 %v5675, 86
  %v5694 = vpop.permute.xlu0 %5693
  %5695 = vrot.lane.b32.xlu0 %v5676, 86
  %v5696 = vpop.permute.xlu0 %5695
  %5697 = vrot.lane.b32.xlu0 %v5677, 86
  %v5698 = vpop.permute.xlu0 %5697
  %5699 = vrot.lane.b32.xlu0 %v5678, 86
  %v5700 = vpop.permute.xlu0 %5699
  %5701 = vrot.lane.b32.xlu0 %v5679, 86
  %v5702 = vpop.permute.xlu0 %5701
  %5703 = vrot.lane.b32.xlu0 %v5680, 86
  %v5704 = vpop.permute.xlu0 %5703
  %v5705 = vsel %vm865, %v5690, %v5692
  %v5706 = vsel %vm865, %v5692, %v5694
  %v5707 = vsel %vm865, %v5694, %v5696
  %v5708 = vsel %vm865, %v5698, %v5700
  %v5709 = vsel %vm865, %v5700, %v5702
  %v5710 = vsel %vm865, %v5702, %v5704
  %v5719 = vadd.f32 %v5658, %v5705
  %v5720 = vadd.f32 %v5659, %v5706
  %v5721 = vadd.f32 %v5660, %v5707
  %v5722 = vadd.f32 %v5661, %v5696
  %v5723 = vadd.f32 %v5662, %v5708
  %v5724 = vadd.f32 %v5663, %v5709
  %v5725 = vadd.f32 %v5664, %v5710
  %v5726 = vadd.f32 %v5665, %v5704
  %s5727 = scalar_lea.vmem %s3, 224
  %v5728 = vld [vmem:[%s5727] sm:$0xf]
  %5730 = vset.pattern.permute.xlu0 0
  %5731 = vperm.xlu0 %5730, %v5728
  %v5732 = vpop.permute.xlu0 %5731
  %v5734 = vmul.f32 %v4492, %v5732
  %v5735 = vmul.f32 %v4496, %v5732
  %v5736 = vmul.f32 %v4500, %v5732
  %v5737 = vmul.f32 %v4504, %v5732
  %v5738 = vmul.f32 %v4508, %v5732
  %v5739 = vmul.f32 %v4512, %v5732
  %v5740 = vmul.f32 %v4516, %v5732
  %v5741 = vmul.f32 %v4520, %v5732
  %5750 = vrot.lane.b32.xlu0 %v5734, 84
  %v5751 = vpop.permute.xlu0 %5750
  %5752 = vrot.lane.b32.xlu0 %v5735, 84
  %v5753 = vpop.permute.xlu0 %5752
  %5754 = vrot.lane.b32.xlu0 %v5736, 84
  %v5755 = vpop.permute.xlu0 %5754
  %5756 = vrot.lane.b32.xlu0 %v5737, 84
  %v5757 = vpop.permute.xlu0 %5756
  %5758 = vrot.lane.b32.xlu0 %v5738, 84
  %v5759 = vpop.permute.xlu0 %5758
  %5760 = vrot.lane.b32.xlu0 %v5739, 84
  %v5761 = vpop.permute.xlu0 %5760
  %5762 = vrot.lane.b32.xlu0 %v5740, 84
  %v5763 = vpop.permute.xlu0 %5762
  %5764 = vrot.lane.b32.xlu0 %v5741, 84
  %v5765 = vpop.permute.xlu0 %5764
  %v5766 = vsel %vm2371, %v5751, %v5753
  %v5767 = vsel %vm2371, %v5753, %v5755
  %v5768 = vsel %vm2371, %v5755, %v5757
  %v5769 = vsel %vm2371, %v5759, %v5761
  %v5770 = vsel %vm2371, %v5761, %v5763
  %v5771 = vsel %vm2371, %v5763, %v5765
  %v5780 = vadd.f32 %v5719, %v5766
  %v5781 = vadd.f32 %v5720, %v5767
  %v5782 = vadd.f32 %v5721, %v5768
  %v5783 = vadd.f32 %v5722, %v5757
  %v5784 = vadd.f32 %v5723, %v5769
  %v5785 = vadd.f32 %v5724, %v5770
  %v5786 = vadd.f32 %v5725, %v5771
  %v5787 = vadd.f32 %v5726, %v5765
  %s5788 = scalar_lea.vmem %s3, 228
  %v5789 = vld [vmem:[%s5788] sm:$0xf]
  %5791 = vset.pattern.permute.xlu0 0
  %5792 = vperm.xlu0 %5791, %v5789
  %v5793 = vpop.permute.xlu0 %5792
  %v5795 = vmul.f32 %v4559, %v5793
  %v5796 = vmul.f32 %v4563, %v5793
  %v5797 = vmul.f32 %v4567, %v5793
  %v5798 = vmul.f32 %v4571, %v5793
  %v5799 = vmul.f32 %v4575, %v5793
  %v5800 = vmul.f32 %v4579, %v5793
  %v5801 = vmul.f32 %v4583, %v5793
  %v5802 = vmul.f32 %v4587, %v5793
  %5811 = vrot.lane.b32.xlu0 %v5795, 84
  %v5812 = vpop.permute.xlu0 %5811
  %5813 = vrot.lane.b32.xlu0 %v5796, 84
  %v5814 = vpop.permute.xlu0 %5813
  %5815 = vrot.lane.b32.xlu0 %v5797, 84
  %v5816 = vpop.permute.xlu0 %5815
  %5817 = vrot.lane.b32.xlu0 %v5798, 84
  %v5818 = vpop.permute.xlu0 %5817
  %5819 = vrot.lane.b32.xlu0 %v5799, 84
  %v5820 = vpop.permute.xlu0 %5819
  %5821 = vrot.lane.b32.xlu0 %v5800, 84
  %v5822 = vpop.permute.xlu0 %5821
  %5823 = vrot.lane.b32.xlu0 %v5801, 84
  %v5824 = vpop.permute.xlu0 %5823
  %5825 = vrot.lane.b32.xlu0 %v5802, 84
  %v5826 = vpop.permute.xlu0 %5825
  %v5827 = vsel %vm2371, %v5812, %v5814
  %v5828 = vsel %vm2371, %v5814, %v5816
  %v5829 = vsel %vm2371, %v5816, %v5818
  %v5830 = vsel %vm2371, %v5820, %v5822
  %v5831 = vsel %vm2371, %v5822, %v5824
  %v5832 = vsel %vm2371, %v5824, %v5826
  %v5841 = vadd.f32 %v5780, %v5827
  %v5842 = vadd.f32 %v5781, %v5828
  %v5843 = vadd.f32 %v5782, %v5829
  %v5844 = vadd.f32 %v5783, %v5818
  %v5845 = vadd.f32 %v5784, %v5830
  %v5846 = vadd.f32 %v5785, %v5831
  %v5847 = vadd.f32 %v5786, %v5832
  %v5848 = vadd.f32 %v5787, %v5826
  %s5849 = scalar_lea.vmem %s3, 232
  %v5850 = vld [vmem:[%s5849] sm:$0xf]
  %5852 = vset.pattern.permute.xlu0 0
  %5853 = vperm.xlu0 %5852, %v5850
  %v5854 = vpop.permute.xlu0 %5853
  %v5856 = vmul.f32 %v4626, %v5854
  %v5857 = vmul.f32 %v4630, %v5854
  %v5858 = vmul.f32 %v4634, %v5854
  %v5859 = vmul.f32 %v4638, %v5854
  %v5860 = vmul.f32 %v4642, %v5854
  %v5861 = vmul.f32 %v4646, %v5854
  %v5862 = vmul.f32 %v4650, %v5854
  %v5863 = vmul.f32 %v4654, %v5854
  %5872 = vrot.lane.b32.xlu0 %v5856, 84
  %v5873 = vpop.permute.xlu0 %5872
  %5874 = vrot.lane.b32.xlu0 %v5857, 84
  %v5875 = vpop.permute.xlu0 %5874
  %5876 = vrot.lane.b32.xlu0 %v5858, 84
  %v5877 = vpop.permute.xlu0 %5876
  %5878 = vrot.lane.b32.xlu0 %v5859, 84
  %v5879 = vpop.permute.xlu0 %5878
  %5880 = vrot.lane.b32.xlu0 %v5860, 84
  %v5881 = vpop.permute.xlu0 %5880
  %5882 = vrot.lane.b32.xlu0 %v5861, 84
  %v5883 = vpop.permute.xlu0 %5882
  %5884 = vrot.lane.b32.xlu0 %v5862, 84
  %v5885 = vpop.permute.xlu0 %5884
  %5886 = vrot.lane.b32.xlu0 %v5863, 84
  %v5887 = vpop.permute.xlu0 %5886
  %v5888 = vsel %vm2371, %v5873, %v5875
  %v5889 = vsel %vm2371, %v5875, %v5877
  %v5890 = vsel %vm2371, %v5877, %v5879
  %v5891 = vsel %vm2371, %v5881, %v5883
  %v5892 = vsel %vm2371, %v5883, %v5885
  %v5893 = vsel %vm2371, %v5885, %v5887
  %v5902 = vadd.f32 %v5841, %v5888
  %v5903 = vadd.f32 %v5842, %v5889
  %v5904 = vadd.f32 %v5843, %v5890
  %v5905 = vadd.f32 %v5844, %v5879
  %v5906 = vadd.f32 %v5845, %v5891
  %v5907 = vadd.f32 %v5846, %v5892
  %v5908 = vadd.f32 %v5847, %v5893
  %v5909 = vadd.f32 %v5848, %v5887
  %s5910 = scalar_lea.vmem %s3, 236
  %v5911 = vld [vmem:[%s5910] sm:$0xf]
  %5913 = vset.pattern.permute.xlu0 0
  %5914 = vperm.xlu0 %5913, %v5911
  %v5915 = vpop.permute.xlu0 %5914
  %v5917 = vmul.f32 %v4693, %v5915
  %v5918 = vmul.f32 %v4697, %v5915
  %v5919 = vmul.f32 %v4701, %v5915
  %v5920 = vmul.f32 %v4705, %v5915
  %v5921 = vmul.f32 %v4709, %v5915
  %v5922 = vmul.f32 %v4713, %v5915
  %v5923 = vmul.f32 %v4717, %v5915
  %v5924 = vmul.f32 %v4721, %v5915
  %5933 = vrot.lane.b32.xlu0 %v5917, 84
  %v5934 = vpop.permute.xlu0 %5933
  %5935 = vrot.lane.b32.xlu0 %v5918, 84
  %v5936 = vpop.permute.xlu0 %5935
  %5937 = vrot.lane.b32.xlu0 %v5919, 84
  %v5938 = vpop.permute.xlu0 %5937
  %5939 = vrot.lane.b32.xlu0 %v5920, 84
  %v5940 = vpop.permute.xlu0 %5939
  %5941 = vrot.lane.b32.xlu0 %v5921, 84
  %v5942 = vpop.permute.xlu0 %5941
  %5943 = vrot.lane.b32.xlu0 %v5922, 84
  %v5944 = vpop.permute.xlu0 %5943
  %5945 = vrot.lane.b32.xlu0 %v5923, 84
  %v5946 = vpop.permute.xlu0 %5945
  %5947 = vrot.lane.b32.xlu0 %v5924, 84
  %v5948 = vpop.permute.xlu0 %5947
  %v5949 = vsel %vm2371, %v5934, %v5936
  %v5950 = vsel %vm2371, %v5936, %v5938
  %v5951 = vsel %vm2371, %v5938, %v5940
  %v5952 = vsel %vm2371, %v5942, %v5944
  %v5953 = vsel %vm2371, %v5944, %v5946
  %v5954 = vsel %vm2371, %v5946, %v5948
  %v5963 = vadd.f32 %v5902, %v5949
  %v5964 = vadd.f32 %v5903, %v5950
  %v5965 = vadd.f32 %v5904, %v5951
  %v5966 = vadd.f32 %v5905, %v5940
  %v5967 = vadd.f32 %v5906, %v5952
  %v5968 = vadd.f32 %v5907, %v5953
  %v5969 = vadd.f32 %v5908, %v5954
  %v5970 = vadd.f32 %v5909, %v5948
  %s5971 = scalar_lea.vmem %s3, 240
  %v5972 = vld [vmem:[%s5971] sm:$0xf]
  %5974 = vset.pattern.permute.xlu0 0
  %5975 = vperm.xlu0 %5974, %v5972
  %v5976 = vpop.permute.xlu0 %5975
  %v5978 = vmul.f32 %v4492, %v5976
  %v5979 = vmul.f32 %v4496, %v5976
  %v5980 = vmul.f32 %v4500, %v5976
  %v5981 = vmul.f32 %v4504, %v5976
  %v5982 = vmul.f32 %v4508, %v5976
  %v5983 = vmul.f32 %v4512, %v5976
  %v5984 = vmul.f32 %v4516, %v5976
  %v5985 = vmul.f32 %v4520, %v5976
  %5994 = vrot.lane.b32.xlu0 %v5978, 48
  %v5995 = vpop.permute.xlu0 %5994
  %5996 = vrot.lane.b32.xlu0 %v5979, 48
  %v5997 = vpop.permute.xlu0 %5996
  %5998 = vrot.lane.b32.xlu0 %v5980, 48
  %v5999 = vpop.permute.xlu0 %5998
  %6000 = vrot.lane.b32.xlu0 %v5981, 48
  %v6001 = vpop.permute.xlu0 %6000
  %6002 = vrot.lane.b32.xlu0 %v5982, 48
  %v6003 = vpop.permute.xlu0 %6002
  %6004 = vrot.lane.b32.xlu0 %v5983, 48
  %v6005 = vpop.permute.xlu0 %6004
  %6006 = vrot.lane.b32.xlu0 %v5984, 48
  %v6007 = vpop.permute.xlu0 %6006
  %6008 = vrot.lane.b32.xlu0 %v5985, 48
  %v6009 = vpop.permute.xlu0 %6008
  %v6010 = vsel %vm2616, %v5995, %v5997
  %v6011 = vsel %vm2616, %v5997, %v5999
  %v6012 = vsel %vm2616, %v5999, %v6001
  %v6013 = vsel %vm2616, %v6003, %v6005
  %v6014 = vsel %vm2616, %v6005, %v6007
  %v6015 = vsel %vm2616, %v6007, %v6009
  %v6024 = vadd.f32 %v5963, %v6010
  %v6025 = vadd.f32 %v5964, %v6011
  %v6026 = vadd.f32 %v5965, %v6012
  %v6027 = vadd.f32 %v5966, %v6001
  %v6028 = vadd.f32 %v5967, %v6013
  %v6029 = vadd.f32 %v5968, %v6014
  %v6030 = vadd.f32 %v5969, %v6015
  %v6031 = vadd.f32 %v5970, %v6009
  %s6032 = scalar_lea.vmem %s3, 244
  %v6033 = vld [vmem:[%s6032] sm:$0xf]
  %6035 = vset.pattern.permute.xlu0 0
  %6036 = vperm.xlu0 %6035, %v6033
  %v6037 = vpop.permute.xlu0 %6036
  %v6039 = vmul.f32 %v4559, %v6037
  %v6040 = vmul.f32 %v4563, %v6037
  %v6041 = vmul.f32 %v4567, %v6037
  %v6042 = vmul.f32 %v4571, %v6037
  %v6043 = vmul.f32 %v4575, %v6037
  %v6044 = vmul.f32 %v4579, %v6037
  %v6045 = vmul.f32 %v4583, %v6037
  %v6046 = vmul.f32 %v4587, %v6037
  %6055 = vrot.lane.b32.xlu0 %v6039, 48
  %v6056 = vpop.permute.xlu0 %6055
  %6057 = vrot.lane.b32.xlu0 %v6040, 48
  %v6058 = vpop.permute.xlu0 %6057
  %6059 = vrot.lane.b32.xlu0 %v6041, 48
  %v6060 = vpop.permute.xlu0 %6059
  %6061 = vrot.lane.b32.xlu0 %v6042, 48
  %v6062 = vpop.permute.xlu0 %6061
  %6063 = vrot.lane.b32.xlu0 %v6043, 48
  %v6064 = vpop.permute.xlu0 %6063
  %6065 = vrot.lane.b32.xlu0 %v6044, 48
  %v6066 = vpop.permute.xlu0 %6065
  %6067 = vrot.lane.b32.xlu0 %v6045, 48
  %v6068 = vpop.permute.xlu0 %6067
  %6069 = vrot.lane.b32.xlu0 %v6046, 48
  %v6070 = vpop.permute.xlu0 %6069
  %v6071 = vsel %vm2616, %v6056, %v6058
  %v6072 = vsel %vm2616, %v6058, %v6060
  %v6073 = vsel %vm2616, %v6060, %v6062
  %v6074 = vsel %vm2616, %v6064, %v6066
  %v6075 = vsel %vm2616, %v6066, %v6068
  %v6076 = vsel %vm2616, %v6068, %v6070
  %v6085 = vadd.f32 %v6024, %v6071
  %v6086 = vadd.f32 %v6025, %v6072
  %v6087 = vadd.f32 %v6026, %v6073
  %v6088 = vadd.f32 %v6027, %v6062
  %v6089 = vadd.f32 %v6028, %v6074
  %v6090 = vadd.f32 %v6029, %v6075
  %v6091 = vadd.f32 %v6030, %v6076
  %v6092 = vadd.f32 %v6031, %v6070
  %s6093 = scalar_lea.vmem %s3, 248
  %v6094 = vld [vmem:[%s6093] sm:$0xf]
  %6096 = vset.pattern.permute.xlu0 0
  %6097 = vperm.xlu0 %6096, %v6094
  %v6098 = vpop.permute.xlu0 %6097
  %v6100 = vmul.f32 %v4626, %v6098
  %v6101 = vmul.f32 %v4630, %v6098
  %v6102 = vmul.f32 %v4634, %v6098
  %v6103 = vmul.f32 %v4638, %v6098
  %v6104 = vmul.f32 %v4642, %v6098
  %v6105 = vmul.f32 %v4646, %v6098
  %v6106 = vmul.f32 %v4650, %v6098
  %v6107 = vmul.f32 %v4654, %v6098
  %6116 = vrot.lane.b32.xlu0 %v6100, 48
  %v6117 = vpop.permute.xlu0 %6116
  %6118 = vrot.lane.b32.xlu0 %v6101, 48
  %v6119 = vpop.permute.xlu0 %6118
  %6120 = vrot.lane.b32.xlu0 %v6102, 48
  %v6121 = vpop.permute.xlu0 %6120
  %6122 = vrot.lane.b32.xlu0 %v6103, 48
  %v6123 = vpop.permute.xlu0 %6122
  %6124 = vrot.lane.b32.xlu0 %v6104, 48
  %v6125 = vpop.permute.xlu0 %6124
  %6126 = vrot.lane.b32.xlu0 %v6105, 48
  %v6127 = vpop.permute.xlu0 %6126
  %6128 = vrot.lane.b32.xlu0 %v6106, 48
  %v6129 = vpop.permute.xlu0 %6128
  %6130 = vrot.lane.b32.xlu0 %v6107, 48
  %v6131 = vpop.permute.xlu0 %6130
  %v6132 = vsel %vm2616, %v6117, %v6119
  %v6133 = vsel %vm2616, %v6119, %v6121
  %v6134 = vsel %vm2616, %v6121, %v6123
  %v6135 = vsel %vm2616, %v6125, %v6127
  %v6136 = vsel %vm2616, %v6127, %v6129
  %v6137 = vsel %vm2616, %v6129, %v6131
  %v6146 = vadd.f32 %v6085, %v6132
  %v6147 = vadd.f32 %v6086, %v6133
  %v6148 = vadd.f32 %v6087, %v6134
  %v6149 = vadd.f32 %v6088, %v6123
  %v6150 = vadd.f32 %v6089, %v6135
  %v6151 = vadd.f32 %v6090, %v6136
  %v6152 = vadd.f32 %v6091, %v6137
  %v6153 = vadd.f32 %v6092, %v6131
  %s6154 = scalar_lea.vmem %s3, 252
  %v6155 = vld [vmem:[%s6154] sm:$0xf]
  %6157 = vset.pattern.permute.xlu0 0
  %6158 = vperm.xlu0 %6157, %v6155
  %v6159 = vpop.permute.xlu0 %6158
  %v6161 = vmul.f32 %v4693, %v6159
  %v6162 = vmul.f32 %v4697, %v6159
  %v6163 = vmul.f32 %v4701, %v6159
  %v6164 = vmul.f32 %v4705, %v6159
  %v6165 = vmul.f32 %v4709, %v6159
  %v6166 = vmul.f32 %v4713, %v6159
  %v6167 = vmul.f32 %v4717, %v6159
  %v6168 = vmul.f32 %v4721, %v6159
  %6177 = vrot.lane.b32.xlu0 %v6161, 48
  %v6178 = vpop.permute.xlu0 %6177
  %6179 = vrot.lane.b32.xlu0 %v6162, 48
  %v6180 = vpop.permute.xlu0 %6179
  %6181 = vrot.lane.b32.xlu0 %v6163, 48
  %v6182 = vpop.permute.xlu0 %6181
  %6183 = vrot.lane.b32.xlu0 %v6164, 48
  %v6184 = vpop.permute.xlu0 %6183
  %6185 = vrot.lane.b32.xlu0 %v6165, 48
  %v6186 = vpop.permute.xlu0 %6185
  %6187 = vrot.lane.b32.xlu0 %v6166, 48
  %v6188 = vpop.permute.xlu0 %6187
  %6189 = vrot.lane.b32.xlu0 %v6167, 48
  %v6190 = vpop.permute.xlu0 %6189
  %6191 = vrot.lane.b32.xlu0 %v6168, 48
  %v6192 = vpop.permute.xlu0 %6191
  %v6193 = vsel %vm2616, %v6178, %v6180
  %v6194 = vsel %vm2616, %v6180, %v6182
  %v6195 = vsel %vm2616, %v6182, %v6184
  %v6196 = vsel %vm2616, %v6186, %v6188
  %v6197 = vsel %vm2616, %v6188, %v6190
  %v6198 = vsel %vm2616, %v6190, %v6192
  %v6207 = vadd.f32 %v6146, %v6193
  %v6208 = vadd.f32 %v6147, %v6194
  %v6209 = vadd.f32 %v6148, %v6195
  %v6210 = vadd.f32 %v6149, %v6184
  %v6211 = vadd.f32 %v6150, %v6196
  %v6212 = vadd.f32 %v6151, %v6197
  %v6213 = vadd.f32 %v6152, %v6198
  %v6214 = vadd.f32 %v6153, %v6192
  %s6215 = scalar_lea.vmem %s3, 256
  %v6216 = vld [vmem:[%s6215] sm:$0xf]
  %6218 = vset.pattern.permute.xlu0 0
  %6219 = vperm.xlu0 %6218, %v6216
  %v6220 = vpop.permute.xlu0 %6219
  %v6222 = vmul.f32 %v4492, %v6220
  %v6223 = vmul.f32 %v4496, %v6220
  %v6224 = vmul.f32 %v4500, %v6220
  %v6225 = vmul.f32 %v4504, %v6220
  %v6226 = vmul.f32 %v4508, %v6220
  %v6227 = vmul.f32 %v4512, %v6220
  %v6228 = vmul.f32 %v4516, %v6220
  %v6229 = vmul.f32 %v4520, %v6220
  %6238 = vrot.lane.b32.xlu0 %v6222, 46
  %v6239 = vpop.permute.xlu0 %6238
  %6240 = vrot.lane.b32.xlu0 %v6223, 46
  %v6241 = vpop.permute.xlu0 %6240
  %6242 = vrot.lane.b32.xlu0 %v6224, 46
  %v6243 = vpop.permute.xlu0 %6242
  %6244 = vrot.lane.b32.xlu0 %v6225, 46
  %v6245 = vpop.permute.xlu0 %6244
  %6246 = vrot.lane.b32.xlu0 %v6226, 46
  %v6247 = vpop.permute.xlu0 %6246
  %6248 = vrot.lane.b32.xlu0 %v6227, 46
  %v6249 = vpop.permute.xlu0 %6248
  %6250 = vrot.lane.b32.xlu0 %v6228, 46
  %v6251 = vpop.permute.xlu0 %6250
  %6252 = vrot.lane.b32.xlu0 %v6229, 46
  %v6253 = vpop.permute.xlu0 %6252
  %v6254 = vsel %vm2861, %v6239, %v6241
  %v6255 = vsel %vm2861, %v6241, %v6243
  %v6256 = vsel %vm2861, %v6243, %v6245
  %v6257 = vsel %vm2861, %v6247, %v6249
  %v6258 = vsel %vm2861, %v6249, %v6251
  %v6259 = vsel %vm2861, %v6251, %v6253
  %v6268 = vadd.f32 %v6207, %v6254
  %v6269 = vadd.f32 %v6208, %v6255
  %v6270 = vadd.f32 %v6209, %v6256
  %v6271 = vadd.f32 %v6210, %v6245
  %v6272 = vadd.f32 %v6211, %v6257
  %v6273 = vadd.f32 %v6212, %v6258
  %v6274 = vadd.f32 %v6213, %v6259
  %v6275 = vadd.f32 %v6214, %v6253
  %s6276 = scalar_lea.vmem %s3, 260
  %v6277 = vld [vmem:[%s6276] sm:$0xf]
  %6279 = vset.pattern.permute.xlu0 0
  %6280 = vperm.xlu0 %6279, %v6277
  %v6281 = vpop.permute.xlu0 %6280
  %v6283 = vmul.f32 %v4559, %v6281
  %v6284 = vmul.f32 %v4563, %v6281
  %v6285 = vmul.f32 %v4567, %v6281
  %v6286 = vmul.f32 %v4571, %v6281
  %v6287 = vmul.f32 %v4575, %v6281
  %v6288 = vmul.f32 %v4579, %v6281
  %v6289 = vmul.f32 %v4583, %v6281
  %v6290 = vmul.f32 %v4587, %v6281
  %6299 = vrot.lane.b32.xlu0 %v6283, 46
  %v6300 = vpop.permute.xlu0 %6299
  %6301 = vrot.lane.b32.xlu0 %v6284, 46
  %v6302 = vpop.permute.xlu0 %6301
  %6303 = vrot.lane.b32.xlu0 %v6285, 46
  %v6304 = vpop.permute.xlu0 %6303
  %6305 = vrot.lane.b32.xlu0 %v6286, 46
  %v6306 = vpop.permute.xlu0 %6305
  %6307 = vrot.lane.b32.xlu0 %v6287, 46
  %v6308 = vpop.permute.xlu0 %6307
  %6309 = vrot.lane.b32.xlu0 %v6288, 46
  %v6310 = vpop.permute.xlu0 %6309
  %6311 = vrot.lane.b32.xlu0 %v6289, 46
  %v6312 = vpop.permute.xlu0 %6311
  %6313 = vrot.lane.b32.xlu0 %v6290, 46
  %v6314 = vpop.permute.xlu0 %6313
  %v6315 = vsel %vm2861, %v6300, %v6302
  %v6316 = vsel %vm2861, %v6302, %v6304
  %v6317 = vsel %vm2861, %v6304, %v6306
  %v6318 = vsel %vm2861, %v6308, %v6310
  %v6319 = vsel %vm2861, %v6310, %v6312
  %v6320 = vsel %vm2861, %v6312, %v6314
  %v6329 = vadd.f32 %v6268, %v6315
  %v6330 = vadd.f32 %v6269, %v6316
  %v6331 = vadd.f32 %v6270, %v6317
  %v6332 = vadd.f32 %v6271, %v6306
  %v6333 = vadd.f32 %v6272, %v6318
  %v6334 = vadd.f32 %v6273, %v6319
  %v6335 = vadd.f32 %v6274, %v6320
  %v6336 = vadd.f32 %v6275, %v6314
  %s6337 = scalar_lea.vmem %s3, 264
  %v6338 = vld [vmem:[%s6337] sm:$0xf]
  %6340 = vset.pattern.permute.xlu0 0
  %6341 = vperm.xlu0 %6340, %v6338
  %v6342 = vpop.permute.xlu0 %6341
  %v6344 = vmul.f32 %v4626, %v6342
  %v6345 = vmul.f32 %v4630, %v6342
  %v6346 = vmul.f32 %v4634, %v6342
  %v6347 = vmul.f32 %v4638, %v6342
  %v6348 = vmul.f32 %v4642, %v6342
  %v6349 = vmul.f32 %v4646, %v6342
  %v6350 = vmul.f32 %v4650, %v6342
  %v6351 = vmul.f32 %v4654, %v6342
  %6360 = vrot.lane.b32.xlu0 %v6344, 46
  %v6361 = vpop.permute.xlu0 %6360
  %6362 = vrot.lane.b32.xlu0 %v6345, 46
  %v6363 = vpop.permute.xlu0 %6362
  %6364 = vrot.lane.b32.xlu0 %v6346, 46
  %v6365 = vpop.permute.xlu0 %6364
  %6366 = vrot.lane.b32.xlu0 %v6347, 46
  %v6367 = vpop.permute.xlu0 %6366
  %6368 = vrot.lane.b32.xlu0 %v6348, 46
  %v6369 = vpop.permute.xlu0 %6368
  %6370 = vrot.lane.b32.xlu0 %v6349, 46
  %v6371 = vpop.permute.xlu0 %6370
  %6372 = vrot.lane.b32.xlu0 %v6350, 46
  %v6373 = vpop.permute.xlu0 %6372
  %6374 = vrot.lane.b32.xlu0 %v6351, 46
  %v6375 = vpop.permute.xlu0 %6374
  %v6376 = vsel %vm2861, %v6361, %v6363
  %v6377 = vsel %vm2861, %v6363, %v6365
  %v6378 = vsel %vm2861, %v6365, %v6367
  %v6379 = vsel %vm2861, %v6369, %v6371
  %v6380 = vsel %vm2861, %v6371, %v6373
  %v6381 = vsel %vm2861, %v6373, %v6375
  %v6390 = vadd.f32 %v6329, %v6376
  %v6391 = vadd.f32 %v6330, %v6377
  %v6392 = vadd.f32 %v6331, %v6378
  %v6393 = vadd.f32 %v6332, %v6367
  %v6394 = vadd.f32 %v6333, %v6379
  %v6395 = vadd.f32 %v6334, %v6380
  %v6396 = vadd.f32 %v6335, %v6381
  %v6397 = vadd.f32 %v6336, %v6375
  %s6398 = scalar_lea.vmem %s3, 268
  %v6399 = vld [vmem:[%s6398] sm:$0xf]
  %6401 = vset.pattern.permute.xlu0 0
  %6402 = vperm.xlu0 %6401, %v6399
  %v6403 = vpop.permute.xlu0 %6402
  %v6405 = vmul.f32 %v4693, %v6403
  %v6406 = vmul.f32 %v4697, %v6403
  %v6407 = vmul.f32 %v4701, %v6403
  %v6408 = vmul.f32 %v4705, %v6403
  %v6409 = vmul.f32 %v4709, %v6403
  %v6410 = vmul.f32 %v4713, %v6403
  %v6411 = vmul.f32 %v4717, %v6403
  %v6412 = vmul.f32 %v4721, %v6403
  %6421 = vrot.lane.b32.xlu0 %v6405, 46
  %v6422 = vpop.permute.xlu0 %6421
  %6423 = vrot.lane.b32.xlu0 %v6406, 46
  %v6424 = vpop.permute.xlu0 %6423
  %6425 = vrot.lane.b32.xlu0 %v6407, 46
  %v6426 = vpop.permute.xlu0 %6425
  %6427 = vrot.lane.b32.xlu0 %v6408, 46
  %v6428 = vpop.permute.xlu0 %6427
  %6429 = vrot.lane.b32.xlu0 %v6409, 46
  %v6430 = vpop.permute.xlu0 %6429
  %6431 = vrot.lane.b32.xlu0 %v6410, 46
  %v6432 = vpop.permute.xlu0 %6431
  %6433 = vrot.lane.b32.xlu0 %v6411, 46
  %v6434 = vpop.permute.xlu0 %6433
  %6435 = vrot.lane.b32.xlu0 %v6412, 46
  %v6436 = vpop.permute.xlu0 %6435
  %v6437 = vsel %vm2861, %v6422, %v6424
  %v6438 = vsel %vm2861, %v6424, %v6426
  %v6439 = vsel %vm2861, %v6426, %v6428
  %v6440 = vsel %vm2861, %v6430, %v6432
  %v6441 = vsel %vm2861, %v6432, %v6434
  %v6442 = vsel %vm2861, %v6434, %v6436
  %v6451 = vadd.f32 %v6390, %v6437
  %v6452 = vadd.f32 %v6391, %v6438
  %v6453 = vadd.f32 %v6392, %v6439
  %v6454 = vadd.f32 %v6393, %v6428
  %v6455 = vadd.f32 %v6394, %v6440
  %v6456 = vadd.f32 %v6395, %v6441
  %v6457 = vadd.f32 %v6396, %v6442
  %v6458 = vadd.f32 %v6397, %v6436
  %s6459 = scalar_lea.vmem %s3, 272
  %v6460 = vld [vmem:[%s6459] sm:$0xf]
  %6462 = vset.pattern.permute.xlu0 0
  %6463 = vperm.xlu0 %6462, %v6460
  %v6464 = vpop.permute.xlu0 %6463
  %v6466 = vmul.f32 %v4492, %v6464
  %v6467 = vmul.f32 %v4496, %v6464
  %v6468 = vmul.f32 %v4500, %v6464
  %v6469 = vmul.f32 %v4504, %v6464
  %v6470 = vmul.f32 %v4508, %v6464
  %v6471 = vmul.f32 %v4512, %v6464
  %v6472 = vmul.f32 %v4516, %v6464
  %v6473 = vmul.f32 %v4520, %v6464
  %6482 = vrot.lane.b32.xlu0 %v6466, 44
  %v6483 = vpop.permute.xlu0 %6482
  %6484 = vrot.lane.b32.xlu0 %v6467, 44
  %v6485 = vpop.permute.xlu0 %6484
  %6486 = vrot.lane.b32.xlu0 %v6468, 44
  %v6487 = vpop.permute.xlu0 %6486
  %6488 = vrot.lane.b32.xlu0 %v6469, 44
  %v6489 = vpop.permute.xlu0 %6488
  %6490 = vrot.lane.b32.xlu0 %v6470, 44
  %v6491 = vpop.permute.xlu0 %6490
  %6492 = vrot.lane.b32.xlu0 %v6471, 44
  %v6493 = vpop.permute.xlu0 %6492
  %6494 = vrot.lane.b32.xlu0 %v6472, 44
  %v6495 = vpop.permute.xlu0 %6494
  %6496 = vrot.lane.b32.xlu0 %v6473, 44
  %v6497 = vpop.permute.xlu0 %6496
  %v6498 = vsel %vm3106, %v6483, %v6485
  %v6499 = vsel %vm3106, %v6485, %v6487
  %v6500 = vsel %vm3106, %v6487, %v6489
  %v6501 = vsel %vm3106, %v6491, %v6493
  %v6502 = vsel %vm3106, %v6493, %v6495
  %v6503 = vsel %vm3106, %v6495, %v6497
  %v6512 = vadd.f32 %v6451, %v6498
  %v6513 = vadd.f32 %v6452, %v6499
  %v6514 = vadd.f32 %v6453, %v6500
  %v6515 = vadd.f32 %v6454, %v6489
  %v6516 = vadd.f32 %v6455, %v6501
  %v6517 = vadd.f32 %v6456, %v6502
  %v6518 = vadd.f32 %v6457, %v6503
  %v6519 = vadd.f32 %v6458, %v6497
  %s6520 = scalar_lea.vmem %s3, 276
  %v6521 = vld [vmem:[%s6520] sm:$0xf]
  %6523 = vset.pattern.permute.xlu0 0
  %6524 = vperm.xlu0 %6523, %v6521
  %v6525 = vpop.permute.xlu0 %6524
  %v6527 = vmul.f32 %v4559, %v6525
  %v6528 = vmul.f32 %v4563, %v6525
  %v6529 = vmul.f32 %v4567, %v6525
  %v6530 = vmul.f32 %v4571, %v6525
  %v6531 = vmul.f32 %v4575, %v6525
  %v6532 = vmul.f32 %v4579, %v6525
  %v6533 = vmul.f32 %v4583, %v6525
  %v6534 = vmul.f32 %v4587, %v6525
  %6543 = vrot.lane.b32.xlu0 %v6527, 44
  %v6544 = vpop.permute.xlu0 %6543
  %6545 = vrot.lane.b32.xlu0 %v6528, 44
  %v6546 = vpop.permute.xlu0 %6545
  %6547 = vrot.lane.b32.xlu0 %v6529, 44
  %v6548 = vpop.permute.xlu0 %6547
  %6549 = vrot.lane.b32.xlu0 %v6530, 44
  %v6550 = vpop.permute.xlu0 %6549
  %6551 = vrot.lane.b32.xlu0 %v6531, 44
  %v6552 = vpop.permute.xlu0 %6551
  %6553 = vrot.lane.b32.xlu0 %v6532, 44
  %v6554 = vpop.permute.xlu0 %6553
  %6555 = vrot.lane.b32.xlu0 %v6533, 44
  %v6556 = vpop.permute.xlu0 %6555
  %6557 = vrot.lane.b32.xlu0 %v6534, 44
  %v6558 = vpop.permute.xlu0 %6557
  %v6559 = vsel %vm3106, %v6544, %v6546
  %v6560 = vsel %vm3106, %v6546, %v6548
  %v6561 = vsel %vm3106, %v6548, %v6550
  %v6562 = vsel %vm3106, %v6552, %v6554
  %v6563 = vsel %vm3106, %v6554, %v6556
  %v6564 = vsel %vm3106, %v6556, %v6558
  %v6573 = vadd.f32 %v6512, %v6559
  %v6574 = vadd.f32 %v6513, %v6560
  %v6575 = vadd.f32 %v6514, %v6561
  %v6576 = vadd.f32 %v6515, %v6550
  %v6577 = vadd.f32 %v6516, %v6562
  %v6578 = vadd.f32 %v6517, %v6563
  %v6579 = vadd.f32 %v6518, %v6564
  %v6580 = vadd.f32 %v6519, %v6558
  %s6581 = scalar_lea.vmem %s3, 280
  %v6582 = vld [vmem:[%s6581] sm:$0xf]
  %6584 = vset.pattern.permute.xlu0 0
  %6585 = vperm.xlu0 %6584, %v6582
  %v6586 = vpop.permute.xlu0 %6585
  %v6588 = vmul.f32 %v4626, %v6586
  %v6589 = vmul.f32 %v4630, %v6586
  %v6590 = vmul.f32 %v4634, %v6586
  %v6591 = vmul.f32 %v4638, %v6586
  %v6592 = vmul.f32 %v4642, %v6586
  %v6593 = vmul.f32 %v4646, %v6586
  %v6594 = vmul.f32 %v4650, %v6586
  %v6595 = vmul.f32 %v4654, %v6586
  %6604 = vrot.lane.b32.xlu0 %v6588, 44
  %v6605 = vpop.permute.xlu0 %6604
  %6606 = vrot.lane.b32.xlu0 %v6589, 44
  %v6607 = vpop.permute.xlu0 %6606
  %6608 = vrot.lane.b32.xlu0 %v6590, 44
  %v6609 = vpop.permute.xlu0 %6608
  %6610 = vrot.lane.b32.xlu0 %v6591, 44
  %v6611 = vpop.permute.xlu0 %6610
  %6612 = vrot.lane.b32.xlu0 %v6592, 44
  %v6613 = vpop.permute.xlu0 %6612
  %6614 = vrot.lane.b32.xlu0 %v6593, 44
  %v6615 = vpop.permute.xlu0 %6614
  %6616 = vrot.lane.b32.xlu0 %v6594, 44
  %v6617 = vpop.permute.xlu0 %6616
  %6618 = vrot.lane.b32.xlu0 %v6595, 44
  %v6619 = vpop.permute.xlu0 %6618
  %v6620 = vsel %vm3106, %v6605, %v6607
  %v6621 = vsel %vm3106, %v6607, %v6609
  %v6622 = vsel %vm3106, %v6609, %v6611
  %v6623 = vsel %vm3106, %v6613, %v6615
  %v6624 = vsel %vm3106, %v6615, %v6617
  %v6625 = vsel %vm3106, %v6617, %v6619
  %v6634 = vadd.f32 %v6573, %v6620
  %v6635 = vadd.f32 %v6574, %v6621
  %v6636 = vadd.f32 %v6575, %v6622
  %v6637 = vadd.f32 %v6576, %v6611
  %v6638 = vadd.f32 %v6577, %v6623
  %v6639 = vadd.f32 %v6578, %v6624
  %v6640 = vadd.f32 %v6579, %v6625
  %v6641 = vadd.f32 %v6580, %v6619
  %s6642 = scalar_lea.vmem %s3, 284
  %v6643 = vld [vmem:[%s6642] sm:$0xf]
  %6645 = vset.pattern.permute.xlu0 0
  %6646 = vperm.xlu0 %6645, %v6643
  %v6647 = vpop.permute.xlu0 %6646
  %v6649 = vmul.f32 %v4693, %v6647
  %v6650 = vmul.f32 %v4697, %v6647
  %v6651 = vmul.f32 %v4701, %v6647
  %v6652 = vmul.f32 %v4705, %v6647
  %v6653 = vmul.f32 %v4709, %v6647
  %v6654 = vmul.f32 %v4713, %v6647
  %v6655 = vmul.f32 %v4717, %v6647
  %v6656 = vmul.f32 %v4721, %v6647
  %6665 = vrot.lane.b32.xlu0 %v6649, 44
  %v6666 = vpop.permute.xlu0 %6665
  %6667 = vrot.lane.b32.xlu0 %v6650, 44
  %v6668 = vpop.permute.xlu0 %6667
  %6669 = vrot.lane.b32.xlu0 %v6651, 44
  %v6670 = vpop.permute.xlu0 %6669
  %6671 = vrot.lane.b32.xlu0 %v6652, 44
  %v6672 = vpop.permute.xlu0 %6671
  %6673 = vrot.lane.b32.xlu0 %v6653, 44
  %v6674 = vpop.permute.xlu0 %6673
  %6675 = vrot.lane.b32.xlu0 %v6654, 44
  %v6676 = vpop.permute.xlu0 %6675
  %6677 = vrot.lane.b32.xlu0 %v6655, 44
  %v6678 = vpop.permute.xlu0 %6677
  %6679 = vrot.lane.b32.xlu0 %v6656, 44
  %v6680 = vpop.permute.xlu0 %6679
  %v6681 = vsel %vm3106, %v6666, %v6668
  %v6682 = vsel %vm3106, %v6668, %v6670
  %v6683 = vsel %vm3106, %v6670, %v6672
  %v6684 = vsel %vm3106, %v6674, %v6676
  %v6685 = vsel %vm3106, %v6676, %v6678
  %v6686 = vsel %vm3106, %v6678, %v6680
  %v6695 = vadd.f32 %v6634, %v6681
  %v6696 = vadd.f32 %v6635, %v6682
  %v6697 = vadd.f32 %v6636, %v6683
  %v6698 = vadd.f32 %v6637, %v6672
  %v6699 = vadd.f32 %v6638, %v6684
  %v6700 = vadd.f32 %v6639, %v6685
  %v6701 = vadd.f32 %v6640, %v6686
  %v6702 = vadd.f32 %v6641, %v6680
  %s6703 = scalar_lea.vmem %s4, 12
  %v6704 = vld [vmem:[%s6703] sm:$0xf]
  %6706 = vset.pattern.permute.xlu0 0
  %6707 = vperm.xlu0 %6706, %v6704
  %v6708 = vpop.permute.xlu0 %6707
  %v6710 = vadd.f32 %v6695, %v6708
  %v6711 = vadd.f32 %v6696, %v6708
  %v6712 = vadd.f32 %v6697, %v6708
  %v6713 = vadd.f32 %v6698, %v6708
  %v6714 = vadd.f32 %v6699, %v6708
  %v6715 = vadd.f32 %v6700, %v6708
  %v6716 = vadd.f32 %v6701, %v6708
  %v6717 = vadd.f32 %v6702, %v6708
  %s6718 = scalar_lea.vmem %s4, 24
  %v6719 = vld [vmem:[%s6718] sm:$0xf]
  %s6720 = scalar_lea.vmem %s4, 28
  %v6721 = vld [vmem:[%s6720] sm:$0xf]
  %v6722 = vmul.f32 %v6710, %v1037
  %v6723 = vmul.f32 %v6711, %v1041
  %v6724 = vmul.f32 %v6712, %v1045
  %v6725 = vmul.f32 %v6713, %v1049
  %v6726 = vmul.f32 %v6714, %v1037
  %v6727 = vmul.f32 %v6715, %v1041
  %v6728 = vmul.f32 %v6716, %v1045
  %v6729 = vmul.f32 %v6717, %v1049
  %v6730 = vsel %vm1002, %v6722, 0.0
  %v6731 = vsel %vm1002, %v6723, 0.0
  %v6732 = vadd.f32 %v6730, %v6731
  %v6733 = vsel %vm1002, %v6724, 0.0
  %v6734 = vadd.f32 %v6732, %v6733
  %v6735 = vsel %vm3344, %v6725, 0.0
  %v6736 = vadd.f32 %v6734, %v6735
  %v6737 = vsel %vm1002, %v6726, 0.0
  %v6738 = vadd.f32 %v6736, %v6737
  %v6739 = vsel %vm1002, %v6727, 0.0
  %v6740 = vadd.f32 %v6738, %v6739
  %v6741 = vsel %vm1002, %v6728, 0.0
  %v6742 = vadd.f32 %v6740, %v6741
  %v6743 = vsel %vm3344, %v6729, 0.0
  %v6744 = vadd.f32 %v6742, %v6743
  %6745 = vadd.xlane.f32.xlu0 %v6744
  %v6746 = vpop.xlane.xlu0 %6745
  %v6747 = vmul.f32 %v6722, %v6722
  %v6748 = vmul.f32 %v6723, %v6723
  %v6749 = vmul.f32 %v6724, %v6724
  %v6750 = vmul.f32 %v6725, %v6725
  %v6751 = vmul.f32 %v6726, %v6726
  %v6752 = vmul.f32 %v6727, %v6727
  %v6753 = vmul.f32 %v6728, %v6728
  %v6754 = vmul.f32 %v6729, %v6729
  %v6755 = vsel %vm1002, %v6747, 0.0
  %v6756 = vsel %vm1002, %v6748, 0.0
  %v6757 = vadd.f32 %v6755, %v6756
  %v6758 = vsel %vm1002, %v6749, 0.0
  %v6759 = vadd.f32 %v6757, %v6758
  %v6760 = vsel %vm3344, %v6750, 0.0
  %v6761 = vadd.f32 %v6759, %v6760
  %v6762 = vsel %vm1002, %v6751, 0.0
  %v6763 = vadd.f32 %v6761, %v6762
  %v6764 = vsel %vm1002, %v6752, 0.0
  %v6765 = vadd.f32 %v6763, %v6764
  %v6766 = vsel %vm1002, %v6753, 0.0
  %v6767 = vadd.f32 %v6765, %v6766
  %v6768 = vsel %vm3344, %v6754, 0.0
  %v6769 = vadd.f32 %v6767, %v6768
  %6770 = vadd.xlane.f32.xlu0 %v6769
  %v6771 = vpop.xlane.xlu0 %6770
  %v6772 = vmul.f32 %v6746, 0.001953125
  %v6773 = vmul.f32 %v6771, 0.001953125
  %v6774 = vmul.f32 %v6772, %v6772
  %v6775 = vsub.f32 %v6773, %v6774
  %v6776 = vsub.f32 %v6710, %v6772
  %v6777 = vsub.f32 %v6711, %v6772
  %v6778 = vsub.f32 %v6712, %v6772
  %v6779 = vsub.f32 %v6713, %v6772
  %v6780 = vsub.f32 %v6714, %v6772
  %v6781 = vsub.f32 %v6715, %v6772
  %v6782 = vsub.f32 %v6716, %v6772
  %v6783 = vsub.f32 %v6717, %v6772
  %v6784 = vadd.f32 %v6775, 1e-05
  %v6785 = vrsqrt.pop %v6784
  %v6786 = vmul.f32 %v6776, %v6785
  %v6787 = vmul.f32 %v6777, %v6785
  %v6788 = vmul.f32 %v6778, %v6785
  %v6789 = vmul.f32 %v6779, %v6785
  %v6790 = vmul.f32 %v6780, %v6785
  %v6791 = vmul.f32 %v6781, %v6785
  %v6792 = vmul.f32 %v6782, %v6785
  %v6793 = vmul.f32 %v6783, %v6785
  %6795 = vset.pattern.permute.xlu0 0
  %6796 = vperm.xlu0 %6795, %v6719
  %v6797 = vpop.permute.xlu0 %6796
  %v6799 = vmul.f32 %v6786, %v6797
  %v6800 = vmul.f32 %v6787, %v6797
  %v6801 = vmul.f32 %v6788, %v6797
  %v6802 = vmul.f32 %v6789, %v6797
  %v6803 = vmul.f32 %v6790, %v6797
  %v6804 = vmul.f32 %v6791, %v6797
  %v6805 = vmul.f32 %v6792, %v6797
  %v6806 = vmul.f32 %v6793, %v6797
  %6808 = vset.pattern.permute.xlu0 0
  %6809 = vperm.xlu0 %6808, %v6721
  %v6810 = vpop.permute.xlu0 %6809
  %v6812 = vadd.f32 %v6799, %v6810
  %v6813 = vadd.f32 %v6800, %v6810
  %v6814 = vadd.f32 %v6801, %v6810
  %v6815 = vadd.f32 %v6802, %v6810
  %v6816 = vadd.f32 %v6803, %v6810
  %v6817 = vadd.f32 %v6804, %v6810
  %v6818 = vadd.f32 %v6805, %v6810
  %v6819 = vadd.f32 %v6806, %v6810
  %v6824 = vcombine.high %v27, %v27
  %v6825 = vcombine.high %v28, %v28
  %v6826 = vcombine.high %v29, %v29
  %v6827 = vcombine.high %v30, %v30
  %6828 = vrot.lane.b32.xlu0 %v27, 86
  %v6829 = vpop.permute.xlu0 %6828
  %6830 = vrot.lane.b32.xlu0 %v6824, 86
  %v6831 = vpop.permute.xlu0 %6830
  %6832 = vrot.lane.b32.xlu0 %v28, 86
  %v6833 = vpop.permute.xlu0 %6832
  %6834 = vrot.lane.b32.xlu0 %v6825, 86
  %v6835 = vpop.permute.xlu0 %6834
  %6836 = vrot.lane.b32.xlu0 %v29, 86
  %v6837 = vpop.permute.xlu0 %6836
  %6838 = vrot.lane.b32.xlu0 %v6826, 86
  %v6839 = vpop.permute.xlu0 %6838
  %6840 = vrot.lane.b32.xlu0 %v30, 86
  %v6841 = vpop.permute.xlu0 %6840
  %6842 = vrot.lane.b32.xlu0 %v6827, 86
  %v6843 = vpop.permute.xlu0 %6842
  %v6844 = vsel %vm865, %v6829, %v6831
  %v6845 = vsel %vm865, %v6831, %v6833
  %v6846 = vsel %vm865, %v6833, %v6835
  %v6847 = vsel %vm865, %v6837, %v6839
  %v6848 = vsel %vm865, %v6839, %v6841
  %v6849 = vsel %vm865, %v6841, %v6843
  %v6858 = vadd.f32 %v6812, %v6844
  %v6859 = vadd.f32 %v6813, %v6845
  %v6860 = vadd.f32 %v6814, %v6846
  %v6861 = vadd.f32 %v6815, %v6835
  %v6862 = vadd.f32 %v6816, %v6847
  %v6863 = vadd.f32 %v6817, %v6848
  %v6864 = vadd.f32 %v6818, %v6849
  %v6865 = vadd.f32 %v6819, %v6843
  %v6866 = vmax.f32 %v6858, 0.0
  %v6867 = vmax.f32 %v6859, 0.0
  %v6868 = vmax.f32 %v6860, 0.0
  %v6869 = vmax.f32 %v6861, 0.0
  %v6870 = vmax.f32 %v6862, 0.0
  %v6871 = vmax.f32 %v6863, 0.0
  %v6872 = vmax.f32 %v6864, 0.0
  %v6873 = vmax.f32 %v6865, 0.0
  %v6882 = vcombine.low %v6866, %v6867
  %v6883 = vcombine.low %v6868, %v6869
  %v6884 = vcombine.low %v6870, %v6871
  %v6885 = vcombine.low %v6872, %v6873
  %6890 = vst [vmem:[%s5] sm:$0xff] %v6882
  %vm6891 = vcmask 130052
  %vm6892 = vmor %vm6891, %vm1002
  %6893 = vst.msk [vmem:[%s5 + $0x8] sm:$0xff] %vm6892, %v6883
  %6894 = vst [vmem:[%s5 + $0x10] sm:$0xff] %v6884
  %6895 = vst.msk [vmem:[%s5 + $0x18] sm:$0xff] %vm6892, %v6885
  // Predicated region
  $region22: #{sdrb_forward.1} parent=0 // pred_check
    _
  $region23: #{sdrb_forward.1} parent=0 // pred_check_branch
    %6897 = sbr.rel (0) target = $region25
  $region24: #{sdrb_forward.1} parent=0 // pred_region
    _
  $region25: #{sdrb_forward.1} parent=0 // pred_fallthru
    _
  // Predicated region
  $region26: #{sdrb_forward.1} parent=0 // pred_check
    _
  $region27: #{sdrb_forward.1} parent=0 // pred_check_branch
    %6899 = sbr.rel (0) target = $region29
  $region28: #{sdrb_forward.1} parent=0 // pred_region
    _
  $region29: #{sdrb_forward.1} parent=0 // pred_fallthru
    _

</llo_original>
